<compile_context>
chip_gen: v7x
topology: tpu7x:2x2x1
jax: 0.10.0
libtpu: 0.0.40
codegen_flags: <defaults>
</compile_context>

<pallas_src>
import functools
import math

import jax
import jax.numpy as jnp
from jax import lax
from jax.experimental import pallas as pl
from jax.experimental.pallas import tpu as pltpu


# ---------------------------------------------------------------------------
# Pallas kernels
# ---------------------------------------------------------------------------
def _decoder_layer_kernel(
    q_ref, k_ref, qpos_ref, kpos_ref,
    spe_w1, spe_b1, spe_w2, spe_b2,
    cpe_w1, cpe_b1, cpe_w2, cpe_b2,
    sa_qkv_w, sa_qkv_b, sa_o_w, sa_o_b,
    ca_qkv_w, ca_qkv_b, ca_o_w, ca_o_b,
    ffn_w1, ffn_b1, ffn_w2, ffn_b2,
    ln1_g, ln1_b, ln2_g, ln2_b, ln3_g, ln3_b,
    out_ref, *, num_heads, eps):
    """One full TransformerDecoderLayer for one batch element.

    q_ref: (Pq, C) query feats, k_ref: (Pk, C) key feats,
    qpos_ref/kpos_ref: (Pq/Pk, pos_dim).  Weights are pre-transposed (Cin, Cout)
    with BatchNorm folded; MHA projections are packed per head on the leading
    axis: qkv_w (3H, C, D), qkv_b (3H, 1, D), o_w (H, D, C), o_b (1, C).
    """
    f32 = jnp.float32

    def linear(x, w_ref, b_ref, relu=False):
        y = jnp.dot(x, w_ref[...], preferred_element_type=f32) + b_ref[...]
        if relu:
            y = jnp.maximum(y, 0.0)
        return y

    def layernorm(x, g_ref, b_ref):
        mean = jnp.mean(x, axis=-1, keepdims=True)
        cent = x - mean
        var = jnp.mean(cent * cent, axis=-1, keepdims=True)
        return cent * lax.rsqrt(var + eps) * g_ref[...] + b_ref[...]

    def mha(xq, xkv, qkv_w_ref, qkv_b_ref, o_w_ref, o_b_ref):
        # heads 0..H-1 = Q, H..2H-1 = K, 2H..3H-1 = V (leading axis of qkv refs).
        H = num_heads
        D = qkv_w_ref.shape[-1]
        scale = 1.0 / math.sqrt(D)
        out = None
        for h in range(H):  # static unroll; H is tiny
            qh = jnp.dot(xq, qkv_w_ref[h], preferred_element_type=f32) + qkv_b_ref[h]
            kh = jnp.dot(xkv, qkv_w_ref[H + h], preferred_element_type=f32) + qkv_b_ref[H + h]
            vh = jnp.dot(xkv, qkv_w_ref[2 * H + h], preferred_element_type=f32) + qkv_b_ref[2 * H + h]
            # (Nq, D) x (Nk, D)^T -> (Nq, Nk) without materializing the transpose.
            s = lax.dot_general(qh * scale, kh, (((1,), (1,)), ((), ())),
                                preferred_element_type=f32)
            s = s - jnp.max(s, axis=-1, keepdims=True)
            p = jnp.exp(s)
            p = p * pl.reciprocal(jnp.sum(p, axis=-1, keepdims=True), approx=True)
            oh = jnp.dot(p, vh, preferred_element_type=f32)                 # (Nq, D)
            contrib = jnp.dot(oh, o_w_ref[h], preferred_element_type=f32)   # (Nq, C)
            out = contrib if out is None else out + contrib
        return out + o_b_ref[...]

    query = q_ref[...]
    key = k_ref[...]

    # learned position embeddings: Conv1d -> BN(folded) -> ReLU -> Conv1d
    qpe = linear(linear(qpos_ref[...], spe_w1, spe_b1, relu=True), spe_w2, spe_b2)
    kpe = linear(linear(kpos_ref[...], cpe_w1, cpe_b1, relu=True), cpe_w2, cpe_b2)

    # --- self attention (q = k = v = query + pos_embed) ---
    q_in = query + qpe
    sa = mha(q_in, q_in, sa_qkv_w, sa_qkv_b, sa_o_w, sa_o_b)
    query = layernorm(query + sa, ln1_g, ln1_b)

    # --- cross attention (q = query + qpe ; k = v = key + kpe) ---
    ca = mha(query + qpe, key + kpe, ca_qkv_w, ca_qkv_b, ca_o_w, ca_o_b)
    query = layernorm(query + ca, ln2_g, ln2_b)

    # --- FFN ---
    ffn = linear(linear(query, ffn_w1, ffn_b1, relu=True), ffn_w2, ffn_b2)
    query = layernorm(query + ffn, ln3_g, ln3_b)

    out_ref[...] = query


def _pred_heads_kernel(x_ref, w1_ref, b1_ref, w2_ref, b2_ref, o_ref):
    """All prediction heads fused: relu(x @ W1_cat + b1) @ W2_blockdiag + b2."""
    f32 = jnp.float32
    h = jnp.dot(x_ref[...], w1_ref[...], preferred_element_type=f32) + b1_ref[...]
    h = jnp.maximum(h, 0.0)
    o_ref[...] = jnp.dot(h, w2_ref[...], preferred_element_type=f32) + b2_ref[...]


# ---------------------------------------------------------------------------
# Pallas wrappers
# ---------------------------------------------------------------------------
_PARALLEL_B = pltpu.CompilerParams(dimension_semantics=("parallel",))


def decoder_layer_forward(query, key, query_pos, key_pos, lp, num_heads):
    """query: [B, Pq, C], key: [B, Pk, C], query_pos: [B, Pq, P2], key_pos: [B, Pk, P2]."""
    B, Pq, C = query.shape
    Pk = key.shape[1]
    P2 = query_pos.shape[2]

    weight_names = [
        "spe_w1", "spe_b1", "spe_w2", "spe_b2",
        "cpe_w1", "cpe_b1", "cpe_w2", "cpe_b2",
        "sa_qkv_w", "sa_qkv_b", "sa_o_w", "sa_o_b",
        "ca_qkv_w", "ca_qkv_b", "ca_o_w", "ca_o_b",
        "ffn_w1", "ffn_b1", "ffn_w2", "ffn_b2",
        "ln1_g", "ln1_b", "ln2_g", "ln2_b", "ln3_g", "ln3_b",
    ]
    weights = [lp[n] for n in weight_names]

    def full_spec(arr):
        nd = arr.ndim
        return pl.BlockSpec(arr.shape, lambda b, _n=nd: (0,) * _n)

    in_specs = [
        pl.BlockSpec((None, Pq, C), lambda b: (b, 0, 0)),
        pl.BlockSpec((None, Pk, C), lambda b: (b, 0, 0)),
        pl.BlockSpec((None, Pq, P2), lambda b: (b, 0, 0)),
        pl.BlockSpec((None, Pk, P2), lambda b: (b, 0, 0)),
    ] + [full_spec(w) for w in weights]

    return pl.pallas_call(
        functools.partial(_decoder_layer_kernel, num_heads=num_heads, eps=1e-5),
        out_shape=jax.ShapeDtypeStruct((B, Pq, C), jnp.float32),
        grid=(B,),
        in_specs=in_specs,
        out_specs=pl.BlockSpec((None, Pq, C), lambda b: (b, 0, 0)),
        compiler_params=_PARALLEL_B,
    )(query, key, query_pos, key_pos, *weights)


def prediction_heads_forward(feat_bnc, hp, head_layout):
    """feat_bnc: [B, P, C] -> dict of [B, n_out, P] (PyTorch layout)."""
    B, P, C = feat_bnc.shape
    sum_hc = hp["w1"].shape[1]
    sum_out = hp["w2"].shape[1]
    fused = pl.pallas_call(
        _pred_heads_kernel,
        out_shape=jax.ShapeDtypeStruct((B, P, sum_out), jnp.float32),
        grid=(B,),
        in_specs=[
            pl.BlockSpec((None, P, C), lambda b: (b, 0, 0)),
            pl.BlockSpec((C, sum_hc), lambda b: (0, 0)),
            pl.BlockSpec((1, sum_hc), lambda b: (0, 0)),
            pl.BlockSpec((sum_hc, sum_out), lambda b: (0, 0)),
            pl.BlockSpec((1, sum_out), lambda b: (0, 0)),
        ],
        out_specs=pl.BlockSpec((None, P, sum_out), lambda b: (b, 0, 0)),
        compiler_params=_PARALLEL_B,
    )(feat_bnc, hp["w1"], hp["b1"], hp["w2"], hp["b2"])

    ret = {}
    off = 0
    for name, n_out in head_layout:
        ret[name] = fused[:, :, off:off + n_out].transpose(0, 2, 1)  # [B, n_out, P]
        off += n_out
    return ret


# ---------------------------------------------------------------------------
# Full forward (jit-ed; glue in plain JAX, hot paths in the fused kernels)
# ---------------------------------------------------------------------------
@functools.partial(jax.jit, static_argnums=(1, 2, 3))
def point_transformer_forward(prepared, num_decoder_layers, num_heads, head_layout,
                              pts_query_feat, pts_query_pos, lidar_feat_flatten,
                              bev_pos):
    """
    pts_query_feat:     [B, C, Pq]
    pts_query_pos:      [B, Pq, 2]
    lidar_feat_flatten: [B, C, Pk]
    bev_pos:            [B, Pk, 2]
    """
    query = pts_query_feat.transpose(0, 2, 1)     # [B, Pq, C]
    key = lidar_feat_flatten.transpose(0, 2, 1)   # [B, Pk, C]

    # NOTE: the original module runs prediction_heads once before the loop, but
    # that result is fully discarded (its 'center' is overwritten and the dict
    # re-assigned inside the loop), so the dead compute is elided here.
    ret_dicts = []
    for i in range(num_decoder_layers):
        query = decoder_layer_forward(query, key, pts_query_pos, bev_pos,
                                      prepared["decoder"][i], num_heads)
        res_layer = prediction_heads_forward(query, prepared["heads"], head_layout)
        res_layer["center"] = res_layer["center"] + pts_query_pos.transpose(0, 2, 1)
        ret_dicts.append(res_layer)
        pts_query_pos = res_layer["center"].transpose(0, 2, 1)

    return query.transpose(0, 2, 1), pts_query_pos, ret_dicts


# ---------------------------------------------------------------------------
# One-time parameter preparation (transpose, fold BN, pack heads)
# ---------------------------------------------------------------------------
def _fold_linear_bn(lin, bn=None):
    """PyTorch Conv1d(k=1)/Linear (+ optional eval BatchNorm1d) -> (W^T, b) folded."""
    w = jnp.asarray(lin["w"], jnp.float32)      # (Cout, Cin)
    b = jnp.asarray(lin["b"], jnp.float32)      # (Cout,)
    if bn is not None:
        scale = bn["gamma"] * lax.rsqrt(bn["var"] + bn["eps"])
        shift = bn["beta"] - bn["mean"] * scale
        w = w * scale[:, None]
        b = b * scale + shift
    return w.T, b.reshape(1, -1)                # (Cin, Cout), (1, Cout)


def prepare_params(params, num_heads, head_layout):
    def prep_posembed(p):
        w1, b1 = _fold_linear_bn(p["l1"], p["bn"])
        w2, b2 = _fold_linear_bn(p["l2"])
        return w1, b1, w2, b2

    def prep_mha(p):
        C = p["q"]["w"].shape[0]
        D = C // num_heads

        def per_head(name):
            w = jnp.asarray(p[name]["w"], jnp.float32)   # (C, C)
            b = jnp.asarray(p[name]["b"], jnp.float32)   # (C,)
            # head h uses output channels [h*D, (h+1)*D): x @ W[hD:(h+1)D, :].T
            return (w.reshape(num_heads, D, C).transpose(0, 2, 1),   # (H, C, D)
                    b.reshape(num_heads, 1, D))                      # (H, 1, D)

        qw, qb = per_head("q")
        kw, kb = per_head("k")
        vw, vb = per_head("v")
        qkv_w = jnp.concatenate([qw, kw, vw], axis=0)   # (3H, C, D)
        qkv_b = jnp.concatenate([qb, kb, vb], axis=0)   # (3H, 1, D)
        # out proj: concat_h(o_h) @ Wo^T + bo == sum_h o_h @ (Wo^T)[hD:(h+1)D, :]
        o_w = jnp.asarray(p["o"]["w"], jnp.float32).T.reshape(num_heads, D, C)
        o_b = jnp.asarray(p["o"]["b"], jnp.float32).reshape(1, C)
        return qkv_w, qkv_b, o_w, o_b

    decoder = []
    for lp in params["decoder"]:
        spe_w1, spe_b1, spe_w2, spe_b2 = prep_posembed(lp["self_posembed"])
        cpe_w1, cpe_b1, cpe_w2, cpe_b2 = prep_posembed(lp["cross_posembed"])
        sa_qkv_w, sa_qkv_b, sa_o_w, sa_o_b = prep_mha(lp["self_attn"])
        ca_qkv_w, ca_qkv_b, ca_o_w, ca_o_b = prep_mha(lp["cross_attn"])
        ffn_w1, ffn_b1 = _fold_linear_bn(lp["ffn_l1"])
        ffn_w2, ffn_b2 = _fold_linear_bn(lp["ffn_l2"])
        decoder.append(dict(
            spe_w1=spe_w1, spe_b1=spe_b1, spe_w2=spe_w2, spe_b2=spe_b2,
            cpe_w1=cpe_w1, cpe_b1=cpe_b1, cpe_w2=cpe_w2, cpe_b2=cpe_b2,
            sa_qkv_w=sa_qkv_w, sa_qkv_b=sa_qkv_b, sa_o_w=sa_o_w, sa_o_b=sa_o_b,
            ca_qkv_w=ca_qkv_w, ca_qkv_b=ca_qkv_b, ca_o_w=ca_o_w, ca_o_b=ca_o_b,
            ffn_w1=ffn_w1, ffn_b1=ffn_b1, ffn_w2=ffn_w2, ffn_b2=ffn_b2,
            ln1_g=lp["ln1"]["g"].reshape(1, -1), ln1_b=lp["ln1"]["b"].reshape(1, -1),
            ln2_g=lp["ln2"]["g"].reshape(1, -1), ln2_b=lp["ln2"]["b"].reshape(1, -1),
            ln3_g=lp["ln3"]["g"].reshape(1, -1), ln3_b=lp["ln3"]["b"].reshape(1, -1)))

    # fuse all prediction heads: shared first matmul + block-diagonal second matmul
    w1s, b1s, w2s, b2s, hcs, outs = [], [], [], [], [], []
    for name, n_out in head_layout:
        hp = params["prediction_heads"][name]
        w1, b1 = _fold_linear_bn(hp["l1"], hp["bn"])   # (C, hc), (1, hc)
        w2, b2 = _fold_linear_bn(hp["l2"])             # (hc, n_out), (1, n_out)
        w1s.append(w1); b1s.append(b1); w2s.append(w2); b2s.append(b2)
        hcs.append(w1.shape[1]); outs.append(n_out)
    sum_hc, sum_out = sum(hcs), sum(outs)
    w2_cat = jnp.zeros((sum_hc, sum_out), jnp.float32)
    r = c = 0
    for w2, hc, no in zip(w2s, hcs, outs):
        w2_cat = w2_cat.at[r:r + hc, c:c + no].set(w2)
        r += hc
        c += no
    heads = dict(w1=jnp.concatenate(w1s, axis=1),
                 b1=jnp.concatenate(b1s, axis=1),
                 w2=w2_cat,
                 b2=jnp.concatenate(b2s, axis=1))

    return {"decoder": decoder, "heads": heads}


# ---------------------------------------------------------------------------
# Deterministic parameter init (PyTorch-like raw parameters)
# ---------------------------------------------------------------------------
def init_params(key, hidden_channel, num_heads, num_decoder_layers, ffn_channel,
                pos_dim, heads, head_conv):
    keys = list(jax.random.split(key, 4096))
    ctr = [0]

    def nk():
        k = keys[ctr[0]]
        ctr[0] += 1
        return k

    def lin(cin, cout, scale=0.05):
        return {"w": scale * jax.random.normal(nk(), (cout, cin), jnp.float32),
                "b": scale * jax.random.normal(nk(), (cout,), jnp.float32)}

    def bn(c):
        return {"gamma": jnp.ones((c,), jnp.float32), "beta": jnp.zeros((c,), jnp.float32),
                "mean": jnp.zeros((c,), jnp.float32), "var": jnp.ones((c,), jnp.float32),
                "eps": 1e-5}

    def posembed(cin):
        return {"l1": lin(cin, hidden_channel), "bn": bn(hidden_channel),
                "l2": lin(hidden_channel, hidden_channel)}

    def mha():
        return {"q": lin(hidden_channel, hidden_channel),
                "k": lin(hidden_channel, hidden_channel),
                "v": lin(hidden_channel, hidden_channel),
                "o": lin(hidden_channel, hidden_channel)}

    def ln():
        return {"g": jnp.ones((hidden_channel,), jnp.float32),
                "b": jnp.zeros((hidden_channel,), jnp.float32)}

    decoder = []
    for _ in range(num_decoder_layers):
        decoder.append({
            "self_posembed": posembed(pos_dim),
            "cross_posembed": posembed(pos_dim),
            "self_attn": mha(),
            "cross_attn": mha(),
            "ffn_l1": lin(hidden_channel, ffn_channel),
            "ffn_l2": lin(ffn_channel, hidden_channel),
            "ln1": ln(), "ln2": ln(), "ln3": ln(),
        })

    p_heads = {}
    for name, n_out in heads.items():
        p_heads[name] = {"l1": lin(hidden_channel, head_conv), "bn": bn(head_conv),
                         "l2": lin(head_conv, n_out)}

    return {"decoder": decoder, "prediction_heads": p_heads}


# ---------------------------------------------------------------------------
# Main
# ---------------------------------------------------------------------------
if __name__ == "__main__":
    B = 2
    hidden_channel = 32
    num_heads = 4
    num_decoder_layers = 2
    ffn_channel = 64
    num_query = 8         # Pq
    num_bev = 16          # Pk (flattened BEV positions)
    pos_dim = 2
    heads = {"center": 2, "heatmap": 3}
    head_conv = 32

    key = jax.random.PRNGKey(0)
    kp, k1, k2, k3, k4 = jax.random.split(key, 5)

    params = init_params(kp, hidden_channel, num_heads, num_decoder_layers,
                         ffn_channel, pos_dim, heads, head_conv)
    head_layout = tuple(heads.items())
    prepared = prepare_params(params, num_heads, head_layout)

    pts_query_feat = jax.random.normal(k1, (B, hidden_channel, num_query), jnp.float32)
    pts_query_pos = jax.random.normal(k2, (B, num_query, pos_dim), jnp.float32)
    lidar_feat_flatten = jax.random.normal(k3, (B, hidden_channel, num_bev), jnp.float32)
    bev_pos = jax.random.normal(k4, (B, num_bev, pos_dim), jnp.float32)

    feat, pos, ret_dicts = point_transformer_forward(
        prepared, num_decoder_layers, num_heads, head_layout,
        pts_query_feat, pts_query_pos, lidar_feat_flatten, bev_pos)

    jax.block_until_ready((feat, pos, ret_dicts))

    assert feat.shape == (B, hidden_channel, num_query)
    assert pos.shape == (B, num_query, pos_dim)
    assert len(ret_dicts) == num_decoder_layers
    assert ret_dicts[0]["center"].shape == (B, 2, num_query)
    assert ret_dicts[0]["heatmap"].shape == (B, 3, num_query)

    print("KERNEL_OK")
</pallas_src>

<mosaic_0001>
module attributes {stable_mosaic.version = 11 : i64} {
  func.func @_pred_heads_kernel(%arg0: i32, %arg1: memref<1x8x32xf32, #tpu.memory_space<vmem>>, %arg2: memref<32x64xf32, #tpu.memory_space<vmem>>, %arg3: memref<1x64xf32, #tpu.memory_space<vmem>>, %arg4: memref<64x5xf32, #tpu.memory_space<vmem>>, %arg5: memref<1x5xf32, #tpu.memory_space<vmem>>, %arg6: memref<1x8x5xf32, #tpu.memory_space<vmem>>) attributes {dimension_semantics = [#tpu.dimension_semantics<parallel>], iteration_bounds = array<i64: 2>, scalar_prefetch = 0 : i64, scratch_operands = 0 : i64, tpu.core_type = #tpu.core_type<tc>, window_params = [{transform_indices = @transform_0, window_bounds = array<i64: 1, 8, 32>}, {pipeline_mode = #tpu.pipeline_mode<synchronous>, transform_indices = @transform_1, window_bounds = array<i64: 32, 64>}, {pipeline_mode = #tpu.pipeline_mode<synchronous>, transform_indices = @transform_2, window_bounds = array<i64: 1, 64>}, {pipeline_mode = #tpu.pipeline_mode<synchronous>, transform_indices = @transform_3, window_bounds = array<i64: 64, 5>}, {pipeline_mode = #tpu.pipeline_mode<synchronous>, transform_indices = @transform_4, window_bounds = array<i64: 1, 5>}, {transform_indices = @transform_5, window_bounds = array<i64: 1, 8, 5>}]} {
    %c0 = arith.constant 0 : index
    %c0_0 = arith.constant 0 : index
    %c0_1 = arith.constant 0 : index
    %0 = vector.load %arg1[%c0, %c0_0, %c0_1] : memref<1x8x32xf32, #tpu.memory_space<vmem>>, vector<1x8x32xf32>
    %1 = vector.shape_cast %0 : vector<1x8x32xf32> to vector<8x32xf32>
    %c0_2 = arith.constant 0 : index
    %c0_3 = arith.constant 0 : index
    %2 = vector.load %arg2[%c0_2, %c0_3] : memref<32x64xf32, #tpu.memory_space<vmem>>, vector<32x64xf32>
    %cst = arith.constant dense<0.000000e+00> : vector<8x64xf32>
    %3 = tpu.matmul %1, %2, %cst {dimension_numbers = #tpu.dot_dimension_numbers<[1], [0], [0], [1], [0, 0, 1, 1], [], []>} : vector<8x32xf32>, vector<32x64xf32>, vector<8x64xf32> -> vector<8x64xf32>
    %c0_4 = arith.constant 0 : index
    %c0_5 = arith.constant 0 : index
    %4 = vector.load %arg3[%c0_4, %c0_5] : memref<1x64xf32, #tpu.memory_space<vmem>>, vector<1x64xf32>
    %5 = vector.broadcast %4 : vector<1x64xf32> to vector<8x64xf32>
    %6 = arith.addf %3, %5 : vector<8x64xf32>
    %cst_6 = arith.constant 0.000000e+00 : f32
    %7 = vector.broadcast %cst_6 : f32 to vector<8x64xf32>
    %8 = arith.maximumf %6, %7 : vector<8x64xf32>
    %c0_7 = arith.constant 0 : index
    %c0_8 = arith.constant 0 : index
    %9 = vector.load %arg4[%c0_7, %c0_8] : memref<64x5xf32, #tpu.memory_space<vmem>>, vector<64x5xf32>
    %cst_9 = arith.constant dense<0.000000e+00> : vector<8x5xf32>
    %10 = tpu.matmul %8, %9, %cst_9 {dimension_numbers = #tpu.dot_dimension_numbers<[1], [0], [0], [1], [0, 0, 1, 1], [], []>} : vector<8x64xf32>, vector<64x5xf32>, vector<8x5xf32> -> vector<8x5xf32>
    %c0_10 = arith.constant 0 : index
    %c0_11 = arith.constant 0 : index
    %11 = vector.load %arg5[%c0_10, %c0_11] : memref<1x5xf32, #tpu.memory_space<vmem>>, vector<1x5xf32>
    %12 = vector.broadcast %11 : vector<1x5xf32> to vector<8x5xf32>
    %13 = arith.addf %10, %12 : vector<8x5xf32>
    %c0_12 = arith.constant 0 : index
    %c0_13 = arith.constant 0 : index
    %c0_14 = arith.constant 0 : index
    %14 = vector.load %arg6[%c0_12, %c0_13, %c0_14] : memref<1x8x5xf32, #tpu.memory_space<vmem>>, vector<1x8x5xf32>
    %15 = vector.shape_cast %14 : vector<1x8x5xf32> to vector<8x5xf32>
    %16 = vector.shape_cast %13 : vector<8x5xf32> to vector<1x8x5xf32>
    tpu.vector_store %arg6[%c0_12, %c0_13, %c0_14], %16 {strides = array<i32>} : memref<1x8x5xf32, #tpu.memory_space<vmem>>, vector<1x8x5xf32>,
    return
  }
  func.func @transform_0(%arg0: i32) -> (i32, i32, i32) {
    %c0_i32 = arith.constant 0 : i32
    %c0_i32_0 = arith.constant 0 : i32
    %c0_i32_1 = arith.constant 0 : i32
    return %arg0, %c0_i32, %c0_i32_0 : i32, i32, i32
  }
  func.func @transform_1(%arg0: i32) -> (i32, i32) {
    %c0_i32 = arith.constant 0 : i32
    %c0_i32_0 = arith.constant 0 : i32
    %c0_i32_1 = arith.constant 0 : i32
    return %c0_i32, %c0_i32_0 : i32, i32
  }
  func.func @transform_2(%arg0: i32) -> (i32, i32) {
    %c0_i32 = arith.constant 0 : i32
    %c0_i32_0 = arith.constant 0 : i32
    %c0_i32_1 = arith.constant 0 : i32
    return %c0_i32, %c0_i32_0 : i32, i32
  }
  func.func @transform_3(%arg0: i32) -> (i32, i32) {
    %c0_i32 = arith.constant 0 : i32
    %c0_i32_0 = arith.constant 0 : i32
    %c0_i32_1 = arith.constant 0 : i32
    return %c0_i32, %c0_i32_0 : i32, i32
  }
  func.func @transform_4(%arg0: i32) -> (i32, i32) {
    %c0_i32 = arith.constant 0 : i32
    %c0_i32_0 = arith.constant 0 : i32
    %c0_i32_1 = arith.constant 0 : i32
    return %c0_i32, %c0_i32_0 : i32, i32
  }
  func.func @transform_5(%arg0: i32) -> (i32, i32, i32) {
    %c0_i32 = arith.constant 0 : i32
    %c0_i32_0 = arith.constant 0 : i32
    %c0_i32_1 = arith.constant 0 : i32
    return %arg0, %c0_i32, %c0_i32_0 : i32, i32, i32
  }
}

module attributes {stable_mosaic.version = 11 : i64} {
  func.func @_decoder_layer_kernel(%arg0: i32, %arg1: memref<1x8x32xf32, #tpu.memory_space<vmem>>, %arg2: memref<1x16x32xf32, #tpu.memory_space<vmem>>, %arg3: memref<1x8x2xf32, #tpu.memory_space<vmem>>, %arg4: memref<1x16x2xf32, #tpu.memory_space<vmem>>, %arg5: memref<2x32xf32, #tpu.memory_space<vmem>>, %arg6: memref<1x32xf32, #tpu.memory_space<vmem>>, %arg7: memref<32x32xf32, #tpu.memory_space<vmem>>, %arg8: memref<1x32xf32, #tpu.memory_space<vmem>>, %arg9: memref<2x32xf32, #tpu.memory_space<vmem>>, %arg10: memref<1x32xf32, #tpu.memory_space<vmem>>, %arg11: memref<32x32xf32, #tpu.memory_space<vmem>>, %arg12: memref<1x32xf32, #tpu.memory_space<vmem>>, %arg13: memref<12x32x8xf32, #tpu.memory_space<vmem>>, %arg14: memref<12x1x8xf32, #tpu.memory_space<vmem>>, %arg15: memref<4x8x32xf32, #tpu.memory_space<vmem>>, %arg16: memref<1x32xf32, #tpu.memory_space<vmem>>, %arg17: memref<12x32x8xf32, #tpu.memory_space<vmem>>, %arg18: memref<12x1x8xf32, #tpu.memory_space<vmem>>, %arg19: memref<4x8x32xf32, #tpu.memory_space<vmem>>, %arg20: memref<1x32xf32, #tpu.memory_space<vmem>>, %arg21: memref<32x64xf32, #tpu.memory_space<vmem>>, %arg22: memref<1x64xf32, #tpu.memory_space<vmem>>, %arg23: memref<64x32xf32, #tpu.memory_space<vmem>>, %arg24: memref<1x32xf32, #tpu.memory_space<vmem>>, %arg25: memref<1x32xf32, #tpu.memory_space<vmem>>, %arg26: memref<1x32xf32, #tpu.memory_space<vmem>>, %arg27: memref<1x32xf32, #tpu.memory_space<vmem>>, %arg28: memref<1x32xf32, #tpu.memory_space<vmem>>, %arg29: memref<1x32xf32, #tpu.memory_space<vmem>>, %arg30: memref<1x32xf32, #tpu.memory_space<vmem>>, %arg31: memref<1x8x32xf32, #tpu.memory_space<vmem>>) attributes {dimension_semantics = [#tpu.dimension_semantics<parallel>], iteration_bounds = array<i64: 2>, scalar_prefetch = 0 : i64, scratch_operands = 0 : i64, tpu.core_type = #tpu.core_type<tc>, window_params = [{transform_indices = @transform_0, window_bounds = array<i64: 1, 8, 32>}, {transform_indices = @transform_1, window_bounds = array<i64: 1, 16, 32>}, {transform_indices = @transform_2, window_bounds = array<i64: 1, 8, 2>}, {transform_indices = @transform_3, window_bounds = array<i64: 1, 16, 2>}, {pipeline_mode = #tpu.pipeline_mode<synchronous>, transform_indices = @transform_4, window_bounds = array<i64: 2, 32>}, {pipeline_mode = #tpu.pipeline_mode<synchronous>, transform_indices = @transform_5, window_bounds = array<i64: 1, 32>}, {pipeline_mode = #tpu.pipeline_mode<synchronous>, transform_indices = @transform_6, window_bounds = array<i64: 32, 32>}, {pipeline_mode = #tpu.pipeline_mode<synchronous>, transform_indices = @transform_7, window_bounds = array<i64: 1, 32>}, {pipeline_mode = #tpu.pipeline_mode<synchronous>, transform_indices = @transform_8, window_bounds = array<i64: 2, 32>}, {pipeline_mode = #tpu.pipeline_mode<synchronous>, transform_indices = @transform_9, window_bounds = array<i64: 1, 32>}, {pipeline_mode = #tpu.pipeline_mode<synchronous>, transform_indices = @transform_10, window_bounds = array<i64: 32, 32>}, {pipeline_mode = #tpu.pipeline_mode<synchronous>, transform_indices = @transform_11, window_bounds = array<i64: 1, 32>}, {pipeline_mode = #tpu.pipeline_mode<synchronous>, transform_indices = @transform_12, window_bounds = array<i64: 12, 32, 8>}, {pipeline_mode = #tpu.pipeline_mode<synchronous>, transform_indices = @transform_13, window_bounds = array<i64: 12, 1, 8>}, {pipeline_mode = #tpu.pipeline_mode<synchronous>, transform_indices = @transform_14, window_bounds = array<i64: 4, 8, 32>}, {pipeline_mode = #tpu.pipeline_mode<synchronous>, transform_indices = @transform_15, window_bounds = array<i64: 1, 32>}, {pipeline_mode = #tpu.pipeline_mode<synchronous>, transform_indices = @transform_16, window_bounds = array<i64: 12, 32, 8>}, {pipeline_mode = #tpu.pipeline_mode<synchronous>, transform_indices = @transform_17, window_bounds = array<i64: 12, 1, 8>}, {pipeline_mode = #tpu.pipeline_mode<synchronous>, transform_indices = @transform_18, window_bounds = array<i64: 4, 8, 32>}, {pipeline_mode = #tpu.pipeline_mode<synchronous>, transform_indices = @transform_19, window_bounds = array<i64: 1, 32>}, {pipeline_mode = #tpu.pipeline_mode<synchronous>, transform_indices = @transform_20, window_bounds = array<i64: 32, 64>}, {pipeline_mode = #tpu.pipeline_mode<synchronous>, transform_indices = @transform_21, window_bounds = array<i64: 1, 64>}, {pipeline_mode = #tpu.pipeline_mode<synchronous>, transform_indices = @transform_22, window_bounds = array<i64: 64, 32>}, {pipeline_mode = #tpu.pipeline_mode<synchronous>, transform_indices = @transform_23, window_bounds = array<i64: 1, 32>}, {pipeline_mode = #tpu.pipeline_mode<synchronous>, transform_indices = @transform_24, window_bounds = array<i64: 1, 32>}, {pipeline_mode = #tpu.pipeline_mode<synchronous>, transform_indices = @transform_25, window_bounds = array<i64: 1, 32>}, {pipeline_mode = #tpu.pipeline_mode<synchronous>, transform_indices = @transform_26, window_bounds = array<i64: 1, 32>}, {pipeline_mode = #tpu.pipeline_mode<synchronous>, transform_indices = @transform_27, window_bounds = array<i64: 1, 32>}, {pipeline_mode = #tpu.pipeline_mode<synchronous>, transform_indices = @transform_28, window_bounds = array<i64: 1, 32>}, {pipeline_mode = #tpu.pipeline_mode<synchronous>, transform_indices = @transform_29, window_bounds = array<i64: 1, 32>}, {transform_indices = @transform_30, window_bounds = array<i64: 1, 8, 32>}]} {
    %c0 = arith.constant 0 : index
    %c0_0 = arith.constant 0 : index
    %c0_1 = arith.constant 0 : index
    %0 = vector.load %arg1[%c0, %c0_0, %c0_1] : memref<1x8x32xf32, #tpu.memory_space<vmem>>, vector<1x8x32xf32>
    %1 = vector.shape_cast %0 : vector<1x8x32xf32> to vector<8x32xf32>
    %c0_2 = arith.constant 0 : index
    %c0_3 = arith.constant 0 : index
    %c0_4 = arith.constant 0 : index
    %2 = vector.load %arg2[%c0_2, %c0_3, %c0_4] : memref<1x16x32xf32, #tpu.memory_space<vmem>>, vector<1x16x32xf32>
    %3 = vector.shape_cast %2 : vector<1x16x32xf32> to vector<16x32xf32>
    %c0_5 = arith.constant 0 : index
    %c0_6 = arith.constant 0 : index
    %c0_7 = arith.constant 0 : index
    %4 = vector.load %arg3[%c0_5, %c0_6, %c0_7] : memref<1x8x2xf32, #tpu.memory_space<vmem>>, vector<1x8x2xf32>
    %5 = vector.shape_cast %4 : vector<1x8x2xf32> to vector<8x2xf32>
    %c0_8 = arith.constant 0 : index
    %c0_9 = arith.constant 0 : index
    %6 = vector.load %arg5[%c0_8, %c0_9] : memref<2x32xf32, #tpu.memory_space<vmem>>, vector<2x32xf32>
    %cst = arith.constant dense<0.000000e+00> : vector<8x32xf32>
    %7 = tpu.matmul %5, %6, %cst {dimension_numbers = #tpu.dot_dimension_numbers<[1], [0], [0], [1], [0, 0, 1, 1], [], []>} : vector<8x2xf32>, vector<2x32xf32>, vector<8x32xf32> -> vector<8x32xf32>
    %c0_10 = arith.constant 0 : index
    %c0_11 = arith.constant 0 : index
    %8 = vector.load %arg6[%c0_10, %c0_11] : memref<1x32xf32, #tpu.memory_space<vmem>>, vector<1x32xf32>
    %9 = vector.broadcast %8 : vector<1x32xf32> to vector<8x32xf32>
    %10 = arith.addf %7, %9 : vector<8x32xf32>
    %cst_12 = arith.constant 0.000000e+00 : f32
    %11 = vector.broadcast %cst_12 : f32 to vector<8x32xf32>
    %12 = arith.maximumf %10, %11 : vector<8x32xf32>
    %c0_13 = arith.constant 0 : index
    %c0_14 = arith.constant 0 : index
    %13 = vector.load %arg7[%c0_13, %c0_14] : memref<32x32xf32, #tpu.memory_space<vmem>>, vector<32x32xf32>
    %cst_15 = arith.constant dense<0.000000e+00> : vector<8x32xf32>
    %14 = tpu.matmul %12, %13, %cst_15 {dimension_numbers = #tpu.dot_dimension_numbers<[1], [0], [0], [1], [0, 0, 1, 1], [], []>} : vector<8x32xf32>, vector<32x32xf32>, vector<8x32xf32> -> vector<8x32xf32>
    %c0_16 = arith.constant 0 : index
    %c0_17 = arith.constant 0 : index
    %15 = vector.load %arg8[%c0_16, %c0_17] : memref<1x32xf32, #tpu.memory_space<vmem>>, vector<1x32xf32>
    %16 = vector.broadcast %15 : vector<1x32xf32> to vector<8x32xf32>
    %17 = arith.addf %14, %16 : vector<8x32xf32>
    %c0_18 = arith.constant 0 : index
    %c0_19 = arith.constant 0 : index
    %c0_20 = arith.constant 0 : index
    %18 = vector.load %arg4[%c0_18, %c0_19, %c0_20] : memref<1x16x2xf32, #tpu.memory_space<vmem>>, vector<1x16x2xf32>
    %19 = vector.shape_cast %18 : vector<1x16x2xf32> to vector<16x2xf32>
    %c0_21 = arith.constant 0 : index
    %c0_22 = arith.constant 0 : index
    %20 = vector.load %arg9[%c0_21, %c0_22] : memref<2x32xf32, #tpu.memory_space<vmem>>, vector<2x32xf32>
    %cst_23 = arith.constant dense<0.000000e+00> : vector<16x32xf32>
    %21 = tpu.matmul %19, %20, %cst_23 {dimension_numbers = #tpu.dot_dimension_numbers<[1], [0], [0], [1], [0, 0, 1, 1], [], []>} : vector<16x2xf32>, vector<2x32xf32>, vector<16x32xf32> -> vector<16x32xf32>
    %c0_24 = arith.constant 0 : index
    %c0_25 = arith.constant 0 : index
    %22 = vector.load %arg10[%c0_24, %c0_25] : memref<1x32xf32, #tpu.memory_space<vmem>>, vector<1x32xf32>
    %23 = vector.broadcast %22 : vector<1x32xf32> to vector<16x32xf32>
    %24 = arith.addf %21, %23 : vector<16x32xf32>
    %cst_26 = arith.constant 0.000000e+00 : f32
    %25 = vector.broadcast %cst_26 : f32 to vector<16x32xf32>
    %26 = arith.maximumf %24, %25 : vector<16x32xf32>
    %c0_27 = arith.constant 0 : index
    %c0_28 = arith.constant 0 : index
    %27 = vector.load %arg11[%c0_27, %c0_28] : memref<32x32xf32, #tpu.memory_space<vmem>>, vector<32x32xf32>
    %cst_29 = arith.constant dense<0.000000e+00> : vector<16x32xf32>
    %28 = tpu.matmul %26, %27, %cst_29 {dimension_numbers = #tpu.dot_dimension_numbers<[1], [0], [0], [1], [0, 0, 1, 1], [], []>} : vector<16x32xf32>, vector<32x32xf32>, vector<16x32xf32> -> vector<16x32xf32>
    %c0_30 = arith.constant 0 : index
    %c0_31 = arith.constant 0 : index
    %29 = vector.load %arg12[%c0_30, %c0_31] : memref<1x32xf32, #tpu.memory_space<vmem>>, vector<1x32xf32>
    %30 = vector.broadcast %29 : vector<1x32xf32> to vector<16x32xf32>
    %31 = arith.addf %28, %30 : vector<16x32xf32>
    %32 = arith.addf %1, %17 : vector<8x32xf32>
    %c0_32 = arith.constant 0 : index
    %c0_33 = arith.constant 0 : index
    %c0_34 = arith.constant 0 : index
    %33 = vector.load %arg13[%c0_32, %c0_33, %c0_34] : memref<12x32x8xf32, #tpu.memory_space<vmem>>, vector<1x32x8xf32>
    %34 = vector.shape_cast %33 : vector<1x32x8xf32> to vector<32x8xf32>
    %cst_35 = arith.constant dense<0.000000e+00> : vector<8x8xf32>
    %35 = tpu.matmul %32, %34, %cst_35 {dimension_numbers = #tpu.dot_dimension_numbers<[1], [0], [0], [1], [0, 0, 1, 1], [], []>} : vector<8x32xf32>, vector<32x8xf32>, vector<8x8xf32> -> vector<8x8xf32>
    %c0_36 = arith.constant 0 : index
    %c0_37 = arith.constant 0 : index
    %c0_38 = arith.constant 0 : index
    %36 = vector.load %arg14[%c0_36, %c0_37, %c0_38] : memref<12x1x8xf32, #tpu.memory_space<vmem>>, vector<1x1x8xf32>
    %37 = vector.shape_cast %36 : vector<1x1x8xf32> to vector<1x8xf32>
    %38 = vector.broadcast %37 : vector<1x8xf32> to vector<8x8xf32>
    %39 = arith.addf %35, %38 : vector<8x8xf32>
    %c4 = arith.constant 4 : index
    %c0_39 = arith.constant 0 : index
    %c0_40 = arith.constant 0 : index
    %40 = vector.load %arg13[%c4, %c0_39, %c0_40] : memref<12x32x8xf32, #tpu.memory_space<vmem>>, vector<1x32x8xf32>
    %41 = vector.shape_cast %40 : vector<1x32x8xf32> to vector<32x8xf32>
    %cst_41 = arith.constant dense<0.000000e+00> : vector<8x8xf32>
    %42 = tpu.matmul %32, %41, %cst_41 {dimension_numbers = #tpu.dot_dimension_numbers<[1], [0], [0], [1], [0, 0, 1, 1], [], []>} : vector<8x32xf32>, vector<32x8xf32>, vector<8x8xf32> -> vector<8x8xf32>
    %c4_42 = arith.constant 4 : index
    %c0_43 = arith.constant 0 : index
    %c0_44 = arith.constant 0 : index
    %43 = vector.load %arg14[%c4_42, %c0_43, %c0_44] : memref<12x1x8xf32, #tpu.memory_space<vmem>>, vector<1x1x8xf32>
    %44 = vector.shape_cast %43 : vector<1x1x8xf32> to vector<1x8xf32>
    %45 = vector.broadcast %44 : vector<1x8xf32> to vector<8x8xf32>
    %46 = arith.addf %42, %45 : vector<8x8xf32>
    %c8 = arith.constant 8 : index
    %c0_45 = arith.constant 0 : index
    %c0_46 = arith.constant 0 : index
    %47 = vector.load %arg13[%c8, %c0_45, %c0_46] : memref<12x32x8xf32, #tpu.memory_space<vmem>>, vector<1x32x8xf32>
    %48 = vector.shape_cast %47 : vector<1x32x8xf32> to vector<32x8xf32>
    %cst_47 = arith.constant dense<0.000000e+00> : vector<8x8xf32>
    %49 = tpu.matmul %32, %48, %cst_47 {dimension_numbers = #tpu.dot_dimension_numbers<[1], [0], [0], [1], [0, 0, 1, 1], [], []>} : vector<8x32xf32>, vector<32x8xf32>, vector<8x8xf32> -> vector<8x8xf32>
    %c8_48 = arith.constant 8 : index
    %c0_49 = arith.constant 0 : index
    %c0_50 = arith.constant 0 : index
    %50 = vector.load %arg14[%c8_48, %c0_49, %c0_50] : memref<12x1x8xf32, #tpu.memory_space<vmem>>, vector<1x1x8xf32>
    %51 = vector.shape_cast %50 : vector<1x1x8xf32> to vector<1x8xf32>
    %52 = vector.broadcast %51 : vector<1x8xf32> to vector<8x8xf32>
    %53 = arith.addf %49, %52 : vector<8x8xf32>
    %cst_51 = arith.constant 0.353553385 : f32
    %54 = vector.broadcast %cst_51 : f32 to vector<8x8xf32>
    %55 = arith.mulf %39, %54 : vector<8x8xf32>
    %cst_52 = arith.constant dense<0.000000e+00> : vector<8x8xf32>
    %56 = tpu.matmul %55, %46, %cst_52 {dimension_numbers = #tpu.dot_dimension_numbers<[1], [1], [0], [0], [0, 0, 1, 0], [], []>} : vector<8x8xf32>, vector<8x8xf32>, vector<8x8xf32> -> vector<8x8xf32>
    %cst_53 = arith.constant dense<0xFF800000> : vector<8xf32>
    %57 = vector.multi_reduction <maximumf>, %56, %cst_53 [1] : vector<8x8xf32> to vector<8xf32>
    %58 = vector.shape_cast %57 : vector<8xf32> to vector<8x1xf32>
    %59 = vector.broadcast %58 : vector<8x1xf32> to vector<8x8xf32>
    %60 = arith.subf %56, %59 : vector<8x8xf32>
    %61 = math.exp %60 : vector<8x8xf32>
    %cst_54 = arith.constant dense<0.000000e+00> : vector<8xf32>
    %62 = vector.multi_reduction <add>, %61, %cst_54 [1] : vector<8x8xf32> to vector<8xf32>
    %63 = vector.shape_cast %62 : vector<8xf32> to vector<8x1xf32>
    %64 = tpu.reciprocal %63 {approx = true} : vector<8x1xf32> -> vector<8x1xf32>
    %65 = vector.broadcast %64 : vector<8x1xf32> to vector<8x8xf32>
    %66 = arith.mulf %61, %65 : vector<8x8xf32>
    %cst_55 = arith.constant dense<0.000000e+00> : vector<8x8xf32>
    %67 = tpu.matmul %66, %53, %cst_55 {dimension_numbers = #tpu.dot_dimension_numbers<[1], [0], [0], [1], [0, 0, 1, 1], [], []>} : vector<8x8xf32>, vector<8x8xf32>, vector<8x8xf32> -> vector<8x8xf32>
    %c0_56 = arith.constant 0 : index
    %c0_57 = arith.constant 0 : index
    %c0_58 = arith.constant 0 : index
    %68 = vector.load %arg15[%c0_56, %c0_57, %c0_58] : memref<4x8x32xf32, #tpu.memory_space<vmem>>, vector<1x8x32xf32>
    %69 = vector.shape_cast %68 : vector<1x8x32xf32> to vector<8x32xf32>
    %cst_59 = arith.constant dense<0.000000e+00> : vector<8x32xf32>
    %70 = tpu.matmul %67, %69, %cst_59 {dimension_numbers = #tpu.dot_dimension_numbers<[1], [0], [0], [1], [0, 0, 1, 1], [], []>} : vector<8x8xf32>, vector<8x32xf32>, vector<8x32xf32> -> vector<8x32xf32>
    %c1 = arith.constant 1 : index
    %c0_60 = arith.constant 0 : index
    %c0_61 = arith.constant 0 : index
    %71 = vector.load %arg13[%c1, %c0_60, %c0_61] : memref<12x32x8xf32, #tpu.memory_space<vmem>>, vector<1x32x8xf32>
    %72 = vector.shape_cast %71 : vector<1x32x8xf32> to vector<32x8xf32>
    %cst_62 = arith.constant dense<0.000000e+00> : vector<8x8xf32>
    %73 = tpu.matmul %32, %72, %cst_62 {dimension_numbers = #tpu.dot_dimension_numbers<[1], [0], [0], [1], [0, 0, 1, 1], [], []>} : vector<8x32xf32>, vector<32x8xf32>, vector<8x8xf32> -> vector<8x8xf32>
    %c1_63 = arith.constant 1 : index
    %c0_64 = arith.constant 0 : index
    %c0_65 = arith.constant 0 : index
    %74 = vector.load %arg14[%c1_63, %c0_64, %c0_65] : memref<12x1x8xf32, #tpu.memory_space<vmem>>, vector<1x1x8xf32>
    %75 = vector.shape_cast %74 : vector<1x1x8xf32> to vector<1x8xf32>
    %76 = vector.broadcast %75 : vector<1x8xf32> to vector<8x8xf32>
    %77 = arith.addf %73, %76 : vector<8x8xf32>
    %c5 = arith.constant 5 : index
    %c0_66 = arith.constant 0 : index
    %c0_67 = arith.constant 0 : index
    %78 = vector.load %arg13[%c5, %c0_66, %c0_67] : memref<12x32x8xf32, #tpu.memory_space<vmem>>, vector<1x32x8xf32>
    %79 = vector.shape_cast %78 : vector<1x32x8xf32> to vector<32x8xf32>
    %cst_68 = arith.constant dense<0.000000e+00> : vector<8x8xf32>
    %80 = tpu.matmul %32, %79, %cst_68 {dimension_numbers = #tpu.dot_dimension_numbers<[1], [0], [0], [1], [0, 0, 1, 1], [], []>} : vector<8x32xf32>, vector<32x8xf32>, vector<8x8xf32> -> vector<8x8xf32>
    %c5_69 = arith.constant 5 : index
    %c0_70 = arith.constant 0 : index
    %c0_71 = arith.constant 0 : index
    %81 = vector.load %arg14[%c5_69, %c0_70, %c0_71] : memref<12x1x8xf32, #tpu.memory_space<vmem>>, vector<1x1x8xf32>
    %82 = vector.shape_cast %81 : vector<1x1x8xf32> to vector<1x8xf32>
    %83 = vector.broadcast %82 : vector<1x8xf32> to vector<8x8xf32>
    %84 = arith.addf %80, %83 : vector<8x8xf32>
    %c9 = arith.constant 9 : index
    %c0_72 = arith.constant 0 : index
    %c0_73 = arith.constant 0 : index
    %85 = vector.load %arg13[%c9, %c0_72, %c0_73] : memref<12x32x8xf32, #tpu.memory_space<vmem>>, vector<1x32x8xf32>
    %86 = vector.shape_cast %85 : vector<1x32x8xf32> to vector<32x8xf32>
    %cst_74 = arith.constant dense<0.000000e+00> : vector<8x8xf32>
    %87 = tpu.matmul %32, %86, %cst_74 {dimension_numbers = #tpu.dot_dimension_numbers<[1], [0], [0], [1], [0, 0, 1, 1], [], []>} : vector<8x32xf32>, vector<32x8xf32>, vector<8x8xf32> -> vector<8x8xf32>
    %c9_75 = arith.constant 9 : index
    %c0_76 = arith.constant 0 : index
    %c0_77 = arith.constant 0 : index
    %88 = vector.load %arg14[%c9_75, %c0_76, %c0_77] : memref<12x1x8xf32, #tpu.memory_space<vmem>>, vector<1x1x8xf32>
    %89 = vector.shape_cast %88 : vector<1x1x8xf32> to vector<1x8xf32>
    %90 = vector.broadcast %89 : vector<1x8xf32> to vector<8x8xf32>
    %91 = arith.addf %87, %90 : vector<8x8xf32>
    %cst_78 = arith.constant 0.353553385 : f32
    %92 = vector.broadcast %cst_78 : f32 to vector<8x8xf32>
    %93 = arith.mulf %77, %92 : vector<8x8xf32>
    %cst_79 = arith.constant dense<0.000000e+00> : vector<8x8xf32>
    %94 = tpu.matmul %93, %84, %cst_79 {dimension_numbers = #tpu.dot_dimension_numbers<[1], [1], [0], [0], [0, 0, 1, 0], [], []>} : vector<8x8xf32>, vector<8x8xf32>, vector<8x8xf32> -> vector<8x8xf32>
    %cst_80 = arith.constant dense<0xFF800000> : vector<8xf32>
    %95 = vector.multi_reduction <maximumf>, %94, %cst_80 [1] : vector<8x8xf32> to vector<8xf32>
    %96 = vector.shape_cast %95 : vector<8xf32> to vector<8x1xf32>
    %97 = vector.broadcast %96 : vector<8x1xf32> to vector<8x8xf32>
    %98 = arith.subf %94, %97 : vector<8x8xf32>
    %99 = math.exp %98 : vector<8x8xf32>
    %cst_81 = arith.constant dense<0.000000e+00> : vector<8xf32>
    %100 = vector.multi_reduction <add>, %99, %cst_81 [1] : vector<8x8xf32> to vector<8xf32>
    %101 = vector.shape_cast %100 : vector<8xf32> to vector<8x1xf32>
    %102 = tpu.reciprocal %101 {approx = true} : vector<8x1xf32> -> vector<8x1xf32>
    %103 = vector.broadcast %102 : vector<8x1xf32> to vector<8x8xf32>
    %104 = arith.mulf %99, %103 : vector<8x8xf32>
    %cst_82 = arith.constant dense<0.000000e+00> : vector<8x8xf32>
    %105 = tpu.matmul %104, %91, %cst_82 {dimension_numbers = #tpu.dot_dimension_numbers<[1], [0], [0], [1], [0, 0, 1, 1], [], []>} : vector<8x8xf32>, vector<8x8xf32>, vector<8x8xf32> -> vector<8x8xf32>
    %c1_83 = arith.constant 1 : index
    %c0_84 = arith.constant 0 : index
    %c0_85 = arith.constant 0 : index
    %106 = vector.load %arg15[%c1_83, %c0_84, %c0_85] : memref<4x8x32xf32, #tpu.memory_space<vmem>>, vector<1x8x32xf32>
    %107 = vector.shape_cast %106 : vector<1x8x32xf32> to vector<8x32xf32>
    %cst_86 = arith.constant dense<0.000000e+00> : vector<8x32xf32>
    %108 = tpu.matmul %105, %107, %cst_86 {dimension_numbers = #tpu.dot_dimension_numbers<[1], [0], [0], [1], [0, 0, 1, 1], [], []>} : vector<8x8xf32>, vector<8x32xf32>, vector<8x32xf32> -> vector<8x32xf32>
    %109 = arith.addf %70, %108 : vector<8x32xf32>
    %c2 = arith.constant 2 : index
    %c0_87 = arith.constant 0 : index
    %c0_88 = arith.constant 0 : index
    %110 = vector.load %arg13[%c2, %c0_87, %c0_88] : memref<12x32x8xf32, #tpu.memory_space<vmem>>, vector<1x32x8xf32>
    %111 = vector.shape_cast %110 : vector<1x32x8xf32> to vector<32x8xf32>
    %cst_89 = arith.constant dense<0.000000e+00> : vector<8x8xf32>
    %112 = tpu.matmul %32, %111, %cst_89 {dimension_numbers = #tpu.dot_dimension_numbers<[1], [0], [0], [1], [0, 0, 1, 1], [], []>} : vector<8x32xf32>, vector<32x8xf32>, vector<8x8xf32> -> vector<8x8xf32>
    %c2_90 = arith.constant 2 : index
    %c0_91 = arith.constant 0 : index
    %c0_92 = arith.constant 0 : index
    %113 = vector.load %arg14[%c2_90, %c0_91, %c0_92] : memref<12x1x8xf32, #tpu.memory_space<vmem>>, vector<1x1x8xf32>
    %114 = vector.shape_cast %113 : vector<1x1x8xf32> to vector<1x8xf32>
    %115 = vector.broadcast %114 : vector<1x8xf32> to vector<8x8xf32>
    %116 = arith.addf %112, %115 : vector<8x8xf32>
    %c6 = arith.constant 6 : index
    %c0_93 = arith.constant 0 : index
    %c0_94 = arith.constant 0 : index
    %117 = vector.load %arg13[%c6, %c0_93, %c0_94] : memref<12x32x8xf32, #tpu.memory_space<vmem>>, vector<1x32x8xf32>
    %118 = vector.shape_cast %117 : vector<1x32x8xf32> to vector<32x8xf32>
    %cst_95 = arith.constant dense<0.000000e+00> : vector<8x8xf32>
    %119 = tpu.matmul %32, %118, %cst_95 {dimension_numbers = #tpu.dot_dimension_numbers<[1], [0], [0], [1], [0, 0, 1, 1], [], []>} : vector<8x32xf32>, vector<32x8xf32>, vector<8x8xf32> -> vector<8x8xf32>
    %c6_96 = arith.constant 6 : index
    %c0_97 = arith.constant 0 : index
    %c0_98 = arith.constant 0 : index
    %120 = vector.load %arg14[%c6_96, %c0_97, %c0_98] : memref<12x1x8xf32, #tpu.memory_space<vmem>>, vector<1x1x8xf32>
    %121 = vector.shape_cast %120 : vector<1x1x8xf32> to vector<1x8xf32>
    %122 = vector.broadcast %121 : vector<1x8xf32> to vector<8x8xf32>
    %123 = arith.addf %119, %122 : vector<8x8xf32>
    %c10 = arith.constant 10 : index
    %c0_99 = arith.constant 0 : index
    %c0_100 = arith.constant 0 : index
    %124 = vector.load %arg13[%c10, %c0_99, %c0_100] : memref<12x32x8xf32, #tpu.memory_space<vmem>>, vector<1x32x8xf32>
    %125 = vector.shape_cast %124 : vector<1x32x8xf32> to vector<32x8xf32>
    %cst_101 = arith.constant dense<0.000000e+00> : vector<8x8xf32>
    %126 = tpu.matmul %32, %125, %cst_101 {dimension_numbers = #tpu.dot_dimension_numbers<[1], [0], [0], [1], [0, 0, 1, 1], [], []>} : vector<8x32xf32>, vector<32x8xf32>, vector<8x8xf32> -> vector<8x8xf32>
    %c10_102 = arith.constant 10 : index
    %c0_103 = arith.constant 0 : index
    %c0_104 = arith.constant 0 : index
    %127 = vector.load %arg14[%c10_102, %c0_103, %c0_104] : memref<12x1x8xf32, #tpu.memory_space<vmem>>, vector<1x1x8xf32>
    %128 = vector.shape_cast %127 : vector<1x1x8xf32> to vector<1x8xf32>
    %129 = vector.broadcast %128 : vector<1x8xf32> to vector<8x8xf32>
    %130 = arith.addf %126, %129 : vector<8x8xf32>
    %cst_105 = arith.constant 0.353553385 : f32
    %131 = vector.broadcast %cst_105 : f32 to vector<8x8xf32>
    %132 = arith.mulf %116, %131 : vector<8x8xf32>
    %cst_106 = arith.constant dense<0.000000e+00> : vector<8x8xf32>
    %133 = tpu.matmul %132, %123, %cst_106 {dimension_numbers = #tpu.dot_dimension_numbers<[1], [1], [0], [0], [0, 0, 1, 0], [], []>} : vector<8x8xf32>, vector<8x8xf32>, vector<8x8xf32> -> vector<8x8xf32>
    %cst_107 = arith.constant dense<0xFF800000> : vector<8xf32>
    %134 = vector.multi_reduction <maximumf>, %133, %cst_107 [1] : vector<8x8xf32> to vector<8xf32>
    %135 = vector.shape_cast %134 : vector<8xf32> to vector<8x1xf32>
    %136 = vector.broadcast %135 : vector<8x1xf32> to vector<8x8xf32>
    %137 = arith.subf %133, %136 : vector<8x8xf32>
    %138 = math.exp %137 : vector<8x8xf32>
    %cst_108 = arith.constant dense<0.000000e+00> : vector<8xf32>
    %139 = vector.multi_reduction <add>, %138, %cst_108 [1] : vector<8x8xf32> to vector<8xf32>
    %140 = vector.shape_cast %139 : vector<8xf32> to vector<8x1xf32>
    %141 = tpu.reciprocal %140 {approx = true} : vector<8x1xf32> -> vector<8x1xf32>
    %142 = vector.broadcast %141 : vector<8x1xf32> to vector<8x8xf32>
    %143 = arith.mulf %138, %142 : vector<8x8xf32>
    %cst_109 = arith.constant dense<0.000000e+00> : vector<8x8xf32>
    %144 = tpu.matmul %143, %130, %cst_109 {dimension_numbers = #tpu.dot_dimension_numbers<[1], [0], [0], [1], [0, 0, 1, 1], [], []>} : vector<8x8xf32>, vector<8x8xf32>, vector<8x8xf32> -> vector<8x8xf32>
    %c2_110 = arith.constant 2 : index
    %c0_111 = arith.constant 0 : index
    %c0_112 = arith.constant 0 : index
    %145 = vector.load %arg15[%c2_110, %c0_111, %c0_112] : memref<4x8x32xf32, #tpu.memory_space<vmem>>, vector<1x8x32xf32>
    %146 = vector.shape_cast %145 : vector<1x8x32xf32> to vector<8x32xf32>
    %cst_113 = arith.constant dense<0.000000e+00> : vector<8x32xf32>
    %147 = tpu.matmul %144, %146, %cst_113 {dimension_numbers = #tpu.dot_dimension_numbers<[1], [0], [0], [1], [0, 0, 1, 1], [], []>} : vector<8x8xf32>, vector<8x32xf32>, vector<8x32xf32> -> vector<8x32xf32>
    %148 = arith.addf %109, %147 : vector<8x32xf32>
    %c3 = arith.constant 3 : index
    %c0_114 = arith.constant 0 : index
    %c0_115 = arith.constant 0 : index
    %149 = vector.load %arg13[%c3, %c0_114, %c0_115] : memref<12x32x8xf32, #tpu.memory_space<vmem>>, vector<1x32x8xf32>
    %150 = vector.shape_cast %149 : vector<1x32x8xf32> to vector<32x8xf32>
    %cst_116 = arith.constant dense<0.000000e+00> : vector<8x8xf32>
    %151 = tpu.matmul %32, %150, %cst_116 {dimension_numbers = #tpu.dot_dimension_numbers<[1], [0], [0], [1], [0, 0, 1, 1], [], []>} : vector<8x32xf32>, vector<32x8xf32>, vector<8x8xf32> -> vector<8x8xf32>
    %c3_117 = arith.constant 3 : index
    %c0_118 = arith.constant 0 : index
    %c0_119 = arith.constant 0 : index
    %152 = vector.load %arg14[%c3_117, %c0_118, %c0_119] : memref<12x1x8xf32, #tpu.memory_space<vmem>>, vector<1x1x8xf32>
    %153 = vector.shape_cast %152 : vector<1x1x8xf32> to vector<1x8xf32>
    %154 = vector.broadcast %153 : vector<1x8xf32> to vector<8x8xf32>
    %155 = arith.addf %151, %154 : vector<8x8xf32>
    %c7 = arith.constant 7 : index
    %c0_120 = arith.constant 0 : index
    %c0_121 = arith.constant 0 : index
    %156 = vector.load %arg13[%c7, %c0_120, %c0_121] : memref<12x32x8xf32, #tpu.memory_space<vmem>>, vector<1x32x8xf32>
    %157 = vector.shape_cast %156 : vector<1x32x8xf32> to vector<32x8xf32>
    %cst_122 = arith.constant dense<0.000000e+00> : vector<8x8xf32>
    %158 = tpu.matmul %32, %157, %cst_122 {dimension_numbers = #tpu.dot_dimension_numbers<[1], [0], [0], [1], [0, 0, 1, 1], [], []>} : vector<8x32xf32>, vector<32x8xf32>, vector<8x8xf32> -> vector<8x8xf32>
    %c7_123 = arith.constant 7 : index
    %c0_124 = arith.constant 0 : index
    %c0_125 = arith.constant 0 : index
    %159 = vector.load %arg14[%c7_123, %c0_124, %c0_125] : memref<12x1x8xf32, #tpu.memory_space<vmem>>, vector<1x1x8xf32>
    %160 = vector.shape_cast %159 : vector<1x1x8xf32> to vector<1x8xf32>
    %161 = vector.broadcast %160 : vector<1x8xf32> to vector<8x8xf32>
    %162 = arith.addf %158, %161 : vector<8x8xf32>
    %c11 = arith.constant 11 : index
    %c0_126 = arith.constant 0 : index
    %c0_127 = arith.constant 0 : index
    %163 = vector.load %arg13[%c11, %c0_126, %c0_127] : memref<12x32x8xf32, #tpu.memory_space<vmem>>, vector<1x32x8xf32>
    %164 = vector.shape_cast %163 : vector<1x32x8xf32> to vector<32x8xf32>
    %cst_128 = arith.constant dense<0.000000e+00> : vector<8x8xf32>
    %165 = tpu.matmul %32, %164, %cst_128 {dimension_numbers = #tpu.dot_dimension_numbers<[1], [0], [0], [1], [0, 0, 1, 1], [], []>} : vector<8x32xf32>, vector<32x8xf32>, vector<8x8xf32> -> vector<8x8xf32>
    %c11_129 = arith.constant 11 : index
    %c0_130 = arith.constant 0 : index
    %c0_131 = arith.constant 0 : index
    %166 = vector.load %arg14[%c11_129, %c0_130, %c0_131] : memref<12x1x8xf32, #tpu.memory_space<vmem>>, vector<1x1x8xf32>
    %167 = vector.shape_cast %166 : vector<1x1x8xf32> to vector<1x8xf32>
    %168 = vector.broadcast %167 : vector<1x8xf32> to vector<8x8xf32>
    %169 = arith.addf %165, %168 : vector<8x8xf32>
    %cst_132 = arith.constant 0.353553385 : f32
    %170 = vector.broadcast %cst_132 : f32 to vector<8x8xf32>
    %171 = arith.mulf %155, %170 : vector<8x8xf32>
    %cst_133 = arith.constant dense<0.000000e+00> : vector<8x8xf32>
    %172 = tpu.matmul %171, %162, %cst_133 {dimension_numbers = #tpu.dot_dimension_numbers<[1], [1], [0], [0], [0, 0, 1, 0], [], []>} : vector<8x8xf32>, vector<8x8xf32>, vector<8x8xf32> -> vector<8x8xf32>
    %cst_134 = arith.constant dense<0xFF800000> : vector<8xf32>
    %173 = vector.multi_reduction <maximumf>, %172, %cst_134 [1] : vector<8x8xf32> to vector<8xf32>
    %174 = vector.shape_cast %173 : vector<8xf32> to vector<8x1xf32>
    %175 = vector.broadcast %174 : vector<8x1xf32> to vector<8x8xf32>
    %176 = arith.subf %172, %175 : vector<8x8xf32>
    %177 = math.exp %176 : vector<8x8xf32>
    %cst_135 = arith.constant dense<0.000000e+00> : vector<8xf32>
    %178 = vector.multi_reduction <add>, %177, %cst_135 [1] : vector<8x8xf32> to vector<8xf32>
    %179 = vector.shape_cast %178 : vector<8xf32> to vector<8x1xf32>
    %180 = tpu.reciprocal %179 {approx = true} : vector<8x1xf32> -> vector<8x1xf32>
    %181 = vector.broadcast %180 : vector<8x1xf32> to vector<8x8xf32>
    %182 = arith.mulf %177, %181 : vector<8x8xf32>
    %cst_136 = arith.constant dense<0.000000e+00> : vector<8x8xf32>
    %183 = tpu.matmul %182, %169, %cst_136 {dimension_numbers = #tpu.dot_dimension_numbers<[1], [0], [0], [1], [0, 0, 1, 1], [], []>} : vector<8x8xf32>, vector<8x8xf32>, vector<8x8xf32> -> vector<8x8xf32>
    %c3_137 = arith.constant 3 : index
    %c0_138 = arith.constant 0 : index
    %c0_139 = arith.constant 0 : index
    %184 = vector.load %arg15[%c3_137, %c0_138, %c0_139] : memref<4x8x32xf32, #tpu.memory_space<vmem>>, vector<1x8x32xf32>
    %185 = vector.shape_cast %184 : vector<1x8x32xf32> to vector<8x32xf32>
    %cst_140 = arith.constant dense<0.000000e+00> : vector<8x32xf32>
    %186 = tpu.matmul %183, %185, %cst_140 {dimension_numbers = #tpu.dot_dimension_numbers<[1], [0], [0], [1], [0, 0, 1, 1], [], []>} : vector<8x8xf32>, vector<8x32xf32>, vector<8x32xf32> -> vector<8x32xf32>
    %187 = arith.addf %148, %186 : vector<8x32xf32>
    %c0_141 = arith.constant 0 : index
    %c0_142 = arith.constant 0 : index
    %188 = vector.load %arg16[%c0_141, %c0_142] : memref<1x32xf32, #tpu.memory_space<vmem>>, vector<1x32xf32>
    %189 = vector.broadcast %188 : vector<1x32xf32> to vector<8x32xf32>
    %190 = arith.addf %187, %189 : vector<8x32xf32>
    %191 = arith.addf %1, %190 : vector<8x32xf32>
    %cst_143 = arith.constant dense<0.000000e+00> : vector<8xf32>
    %192 = vector.multi_reduction <add>, %191, %cst_143 [1] : vector<8x32xf32> to vector<8xf32>
    %193 = vector.shape_cast %192 : vector<8xf32> to vector<8x1xf32>
    %cst_144 = arith.constant 3.200000e+01 : f32
    %194 = vector.broadcast %cst_144 : f32 to vector<8x1xf32>
    %195 = arith.divf %193, %194 : vector<8x1xf32>
    %196 = vector.broadcast %195 : vector<8x1xf32> to vector<8x32xf32>
    %197 = arith.subf %191, %196 : vector<8x32xf32>
    %198 = arith.mulf %197, %197 : vector<8x32xf32>
    %cst_145 = arith.constant dense<0.000000e+00> : vector<8xf32>
    %199 = vector.multi_reduction <add>, %198, %cst_145 [1] : vector<8x32xf32> to vector<8xf32>
    %200 = vector.shape_cast %199 : vector<8xf32> to vector<8x1xf32>
    %cst_146 = arith.constant 3.200000e+01 : f32
    %201 = vector.broadcast %cst_146 : f32 to vector<8x1xf32>
    %202 = arith.divf %200, %201 : vector<8x1xf32>
    %cst_147 = arith.constant 9.99999974E-6 : f32
    %203 = vector.broadcast %cst_147 : f32 to vector<8x1xf32>
    %204 = arith.addf %202, %203 : vector<8x1xf32>
    %205 = math.rsqrt %204 : vector<8x1xf32>
    %206 = vector.broadcast %205 : vector<8x1xf32> to vector<8x32xf32>
    %207 = arith.mulf %197, %206 : vector<8x32xf32>
    %c0_148 = arith.constant 0 : index
    %c0_149 = arith.constant 0 : index
    %208 = vector.load %arg25[%c0_148, %c0_149] : memref<1x32xf32, #tpu.memory_space<vmem>>, vector<1x32xf32>
    %209 = vector.broadcast %208 : vector<1x32xf32> to vector<8x32xf32>
    %210 = arith.mulf %207, %209 : vector<8x32xf32>
    %c0_150 = arith.constant 0 : index
    %c0_151 = arith.constant 0 : index
    %211 = vector.load %arg26[%c0_150, %c0_151] : memref<1x32xf32, #tpu.memory_space<vmem>>, vector<1x32xf32>
    %212 = vector.broadcast %211 : vector<1x32xf32> to vector<8x32xf32>
    %213 = arith.addf %210, %212 : vector<8x32xf32>
    %214 = arith.addf %213, %17 : vector<8x32xf32>
    %215 = arith.addf %3, %31 : vector<16x32xf32>
    %c0_152 = arith.constant 0 : index
    %c0_153 = arith.constant 0 : index
    %c0_154 = arith.constant 0 : index
    %216 = vector.load %arg17[%c0_152, %c0_153, %c0_154] : memref<12x32x8xf32, #tpu.memory_space<vmem>>, vector<1x32x8xf32>
    %217 = vector.shape_cast %216 : vector<1x32x8xf32> to vector<32x8xf32>
    %cst_155 = arith.constant dense<0.000000e+00> : vector<8x8xf32>
    %218 = tpu.matmul %214, %217, %cst_155 {dimension_numbers = #tpu.dot_dimension_numbers<[1], [0], [0], [1], [0, 0, 1, 1], [], []>} : vector<8x32xf32>, vector<32x8xf32>, vector<8x8xf32> -> vector<8x8xf32>
    %c0_156 = arith.constant 0 : index
    %c0_157 = arith.constant 0 : index
    %c0_158 = arith.constant 0 : index
    %219 = vector.load %arg18[%c0_156, %c0_157, %c0_158] : memref<12x1x8xf32, #tpu.memory_space<vmem>>, vector<1x1x8xf32>
    %220 = vector.shape_cast %219 : vector<1x1x8xf32> to vector<1x8xf32>
    %221 = vector.broadcast %220 : vector<1x8xf32> to vector<8x8xf32>
    %222 = arith.addf %218, %221 : vector<8x8xf32>
    %c4_159 = arith.constant 4 : index
    %c0_160 = arith.constant 0 : index
    %c0_161 = arith.constant 0 : index
    %223 = vector.load %arg17[%c4_159, %c0_160, %c0_161] : memref<12x32x8xf32, #tpu.memory_space<vmem>>, vector<1x32x8xf32>
    %224 = vector.shape_cast %223 : vector<1x32x8xf32> to vector<32x8xf32>
    %cst_162 = arith.constant dense<0.000000e+00> : vector<16x8xf32>
    %225 = tpu.matmul %215, %224, %cst_162 {dimension_numbers = #tpu.dot_dimension_numbers<[1], [0], [0], [1], [0, 0, 1, 1], [], []>} : vector<16x32xf32>, vector<32x8xf32>, vector<16x8xf32> -> vector<16x8xf32>
    %c4_163 = arith.constant 4 : index
    %c0_164 = arith.constant 0 : index
    %c0_165 = arith.constant 0 : index
    %226 = vector.load %arg18[%c4_163, %c0_164, %c0_165] : memref<12x1x8xf32, #tpu.memory_space<vmem>>, vector<1x1x8xf32>
    %227 = vector.shape_cast %226 : vector<1x1x8xf32> to vector<1x8xf32>
    %228 = vector.broadcast %227 : vector<1x8xf32> to vector<16x8xf32>
    %229 = arith.addf %225, %228 : vector<16x8xf32>
    %c8_166 = arith.constant 8 : index
    %c0_167 = arith.constant 0 : index
    %c0_168 = arith.constant 0 : index
    %230 = vector.load %arg17[%c8_166, %c0_167, %c0_168] : memref<12x32x8xf32, #tpu.memory_space<vmem>>, vector<1x32x8xf32>
    %231 = vector.shape_cast %230 : vector<1x32x8xf32> to vector<32x8xf32>
    %cst_169 = arith.constant dense<0.000000e+00> : vector<16x8xf32>
    %232 = tpu.matmul %215, %231, %cst_169 {dimension_numbers = #tpu.dot_dimension_numbers<[1], [0], [0], [1], [0, 0, 1, 1], [], []>} : vector<16x32xf32>, vector<32x8xf32>, vector<16x8xf32> -> vector<16x8xf32>
    %c8_170 = arith.constant 8 : index
    %c0_171 = arith.constant 0 : index
    %c0_172 = arith.constant 0 : index
    %233 = vector.load %arg18[%c8_170, %c0_171, %c0_172] : memref<12x1x8xf32, #tpu.memory_space<vmem>>, vector<1x1x8xf32>
    %234 = vector.shape_cast %233 : vector<1x1x8xf32> to vector<1x8xf32>
    %235 = vector.broadcast %234 : vector<1x8xf32> to vector<16x8xf32>
    %236 = arith.addf %232, %235 : vector<16x8xf32>
    %cst_173 = arith.constant 0.353553385 : f32
    %237 = vector.broadcast %cst_173 : f32 to vector<8x8xf32>
    %238 = arith.mulf %222, %237 : vector<8x8xf32>
    %cst_174 = arith.constant dense<0.000000e+00> : vector<8x16xf32>
    %239 = tpu.matmul %238, %229, %cst_174 {dimension_numbers = #tpu.dot_dimension_numbers<[1], [1], [0], [0], [0, 0, 1, 0], [], []>} : vector<8x8xf32>, vector<16x8xf32>, vector<8x16xf32> -> vector<8x16xf32>
    %cst_175 = arith.constant dense<0xFF800000> : vector<8xf32>
    %240 = vector.multi_reduction <maximumf>, %239, %cst_175 [1] : vector<8x16xf32> to vector<8xf32>
    %241 = vector.shape_cast %240 : vector<8xf32> to vector<8x1xf32>
    %242 = vector.broadcast %241 : vector<8x1xf32> to vector<8x16xf32>
    %243 = arith.subf %239, %242 : vector<8x16xf32>
    %244 = math.exp %243 : vector<8x16xf32>
    %cst_176 = arith.constant dense<0.000000e+00> : vector<8xf32>
    %245 = vector.multi_reduction <add>, %244, %cst_176 [1] : vector<8x16xf32> to vector<8xf32>
    %246 = vector.shape_cast %245 : vector<8xf32> to vector<8x1xf32>
    %247 = tpu.reciprocal %246 {approx = true} : vector<8x1xf32> -> vector<8x1xf32>
    %248 = vector.broadcast %247 : vector<8x1xf32> to vector<8x16xf32>
    %249 = arith.mulf %244, %248 : vector<8x16xf32>
    %cst_177 = arith.constant dense<0.000000e+00> : vector<8x8xf32>
    %250 = tpu.matmul %249, %236, %cst_177 {dimension_numbers = #tpu.dot_dimension_numbers<[1], [0], [0], [1], [0, 0, 1, 1], [], []>} : vector<8x16xf32>, vector<16x8xf32>, vector<8x8xf32> -> vector<8x8xf32>
    %c0_178 = arith.constant 0 : index
    %c0_179 = arith.constant 0 : index
    %c0_180 = arith.constant 0 : index
    %251 = vector.load %arg19[%c0_178, %c0_179, %c0_180] : memref<4x8x32xf32, #tpu.memory_space<vmem>>, vector<1x8x32xf32>
    %252 = vector.shape_cast %251 : vector<1x8x32xf32> to vector<8x32xf32>
    %cst_181 = arith.constant dense<0.000000e+00> : vector<8x32xf32>
    %253 = tpu.matmul %250, %252, %cst_181 {dimension_numbers = #tpu.dot_dimension_numbers<[1], [0], [0], [1], [0, 0, 1, 1], [], []>} : vector<8x8xf32>, vector<8x32xf32>, vector<8x32xf32> -> vector<8x32xf32>
    %c1_182 = arith.constant 1 : index
    %c0_183 = arith.constant 0 : index
    %c0_184 = arith.constant 0 : index
    %254 = vector.load %arg17[%c1_182, %c0_183, %c0_184] : memref<12x32x8xf32, #tpu.memory_space<vmem>>, vector<1x32x8xf32>
    %255 = vector.shape_cast %254 : vector<1x32x8xf32> to vector<32x8xf32>
    %cst_185 = arith.constant dense<0.000000e+00> : vector<8x8xf32>
    %256 = tpu.matmul %214, %255, %cst_185 {dimension_numbers = #tpu.dot_dimension_numbers<[1], [0], [0], [1], [0, 0, 1, 1], [], []>} : vector<8x32xf32>, vector<32x8xf32>, vector<8x8xf32> -> vector<8x8xf32>
    %c1_186 = arith.constant 1 : index
    %c0_187 = arith.constant 0 : index
    %c0_188 = arith.constant 0 : index
    %257 = vector.load %arg18[%c1_186, %c0_187, %c0_188] : memref<12x1x8xf32, #tpu.memory_space<vmem>>, vector<1x1x8xf32>
    %258 = vector.shape_cast %257 : vector<1x1x8xf32> to vector<1x8xf32>
    %259 = vector.broadcast %258 : vector<1x8xf32> to vector<8x8xf32>
    %260 = arith.addf %256, %259 : vector<8x8xf32>
    %c5_189 = arith.constant 5 : index
    %c0_190 = arith.constant 0 : index
    %c0_191 = arith.constant 0 : index
    %261 = vector.load %arg17[%c5_189, %c0_190, %c0_191] : memref<12x32x8xf32, #tpu.memory_space<vmem>>, vector<1x32x8xf32>
    %262 = vector.shape_cast %261 : vector<1x32x8xf32> to vector<32x8xf32>
    %cst_192 = arith.constant dense<0.000000e+00> : vector<16x8xf32>
    %263 = tpu.matmul %215, %262, %cst_192 {dimension_numbers = #tpu.dot_dimension_numbers<[1], [0], [0], [1], [0, 0, 1, 1], [], []>} : vector<16x32xf32>, vector<32x8xf32>, vector<16x8xf32> -> vector<16x8xf32>
    %c5_193 = arith.constant 5 : index
    %c0_194 = arith.constant 0 : index
    %c0_195 = arith.constant 0 : index
    %264 = vector.load %arg18[%c5_193, %c0_194, %c0_195] : memref<12x1x8xf32, #tpu.memory_space<vmem>>, vector<1x1x8xf32>
    %265 = vector.shape_cast %264 : vector<1x1x8xf32> to vector<1x8xf32>
    %266 = vector.broadcast %265 : vector<1x8xf32> to vector<16x8xf32>
    %267 = arith.addf %263, %266 : vector<16x8xf32>
    %c9_196 = arith.constant 9 : index
    %c0_197 = arith.constant 0 : index
    %c0_198 = arith.constant 0 : index
    %268 = vector.load %arg17[%c9_196, %c0_197, %c0_198] : memref<12x32x8xf32, #tpu.memory_space<vmem>>, vector<1x32x8xf32>
    %269 = vector.shape_cast %268 : vector<1x32x8xf32> to vector<32x8xf32>
    %cst_199 = arith.constant dense<0.000000e+00> : vector<16x8xf32>
    %270 = tpu.matmul %215, %269, %cst_199 {dimension_numbers = #tpu.dot_dimension_numbers<[1], [0], [0], [1], [0, 0, 1, 1], [], []>} : vector<16x32xf32>, vector<32x8xf32>, vector<16x8xf32> -> vector<16x8xf32>
    %c9_200 = arith.constant 9 : index
    %c0_201 = arith.constant 0 : index
    %c0_202 = arith.constant 0 : index
    %271 = vector.load %arg18[%c9_200, %c0_201, %c0_202] : memref<12x1x8xf32, #tpu.memory_space<vmem>>, vector<1x1x8xf32>
    %272 = vector.shape_cast %271 : vector<1x1x8xf32> to vector<1x8xf32>
    %273 = vector.broadcast %272 : vector<1x8xf32> to vector<16x8xf32>
    %274 = arith.addf %270, %273 : vector<16x8xf32>
    %cst_203 = arith.constant 0.353553385 : f32
    %275 = vector.broadcast %cst_203 : f32 to vector<8x8xf32>
    %276 = arith.mulf %260, %275 : vector<8x8xf32>
    %cst_204 = arith.constant dense<0.000000e+00> : vector<8x16xf32>
    %277 = tpu.matmul %276, %267, %cst_204 {dimension_numbers = #tpu.dot_dimension_numbers<[1], [1], [0], [0], [0, 0, 1, 0], [], []>} : vector<8x8xf32>, vector<16x8xf32>, vector<8x16xf32> -> vector<8x16xf32>
    %cst_205 = arith.constant dense<0xFF800000> : vector<8xf32>
    %278 = vector.multi_reduction <maximumf>, %277, %cst_205 [1] : vector<8x16xf32> to vector<8xf32>
    %279 = vector.shape_cast %278 : vector<8xf32> to vector<8x1xf32>
    %280 = vector.broadcast %279 : vector<8x1xf32> to vector<8x16xf32>
    %281 = arith.subf %277, %280 : vector<8x16xf32>
    %282 = math.exp %281 : vector<8x16xf32>
    %cst_206 = arith.constant dense<0.000000e+00> : vector<8xf32>
    %283 = vector.multi_reduction <add>, %282, %cst_206 [1] : vector<8x16xf32> to vector<8xf32>
    %284 = vector.shape_cast %283 : vector<8xf32> to vector<8x1xf32>
    %285 = tpu.reciprocal %284 {approx = true} : vector<8x1xf32> -> vector<8x1xf32>
    %286 = vector.broadcast %285 : vector<8x1xf32> to vector<8x16xf32>
    %287 = arith.mulf %282, %286 : vector<8x16xf32>
    %cst_207 = arith.constant dense<0.000000e+00> : vector<8x8xf32>
    %288 = tpu.matmul %287, %274, %cst_207 {dimension_numbers = #tpu.dot_dimension_numbers<[1], [0], [0], [1], [0, 0, 1, 1], [], []>} : vector<8x16xf32>, vector<16x8xf32>, vector<8x8xf32> -> vector<8x8xf32>
    %c1_208 = arith.constant 1 : index
    %c0_209 = arith.constant 0 : index
    %c0_210 = arith.constant 0 : index
    %289 = vector.load %arg19[%c1_208, %c0_209, %c0_210] : memref<4x8x32xf32, #tpu.memory_space<vmem>>, vector<1x8x32xf32>
    %290 = vector.shape_cast %289 : vector<1x8x32xf32> to vector<8x32xf32>
    %cst_211 = arith.constant dense<0.000000e+00> : vector<8x32xf32>
    %291 = tpu.matmul %288, %290, %cst_211 {dimension_numbers = #tpu.dot_dimension_numbers<[1], [0], [0], [1], [0, 0, 1, 1], [], []>} : vector<8x8xf32>, vector<8x32xf32>, vector<8x32xf32> -> vector<8x32xf32>
    %292 = arith.addf %253, %291 : vector<8x32xf32>
    %c2_212 = arith.constant 2 : index
    %c0_213 = arith.constant 0 : index
    %c0_214 = arith.constant 0 : index
    %293 = vector.load %arg17[%c2_212, %c0_213, %c0_214] : memref<12x32x8xf32, #tpu.memory_space<vmem>>, vector<1x32x8xf32>
    %294 = vector.shape_cast %293 : vector<1x32x8xf32> to vector<32x8xf32>
    %cst_215 = arith.constant dense<0.000000e+00> : vector<8x8xf32>
    %295 = tpu.matmul %214, %294, %cst_215 {dimension_numbers = #tpu.dot_dimension_numbers<[1], [0], [0], [1], [0, 0, 1, 1], [], []>} : vector<8x32xf32>, vector<32x8xf32>, vector<8x8xf32> -> vector<8x8xf32>
    %c2_216 = arith.constant 2 : index
    %c0_217 = arith.constant 0 : index
    %c0_218 = arith.constant 0 : index
    %296 = vector.load %arg18[%c2_216, %c0_217, %c0_218] : memref<12x1x8xf32, #tpu.memory_space<vmem>>, vector<1x1x8xf32>
    %297 = vector.shape_cast %296 : vector<1x1x8xf32> to vector<1x8xf32>
    %298 = vector.broadcast %297 : vector<1x8xf32> to vector<8x8xf32>
    %299 = arith.addf %295, %298 : vector<8x8xf32>
    %c6_219 = arith.constant 6 : index
    %c0_220 = arith.constant 0 : index
    %c0_221 = arith.constant 0 : index
    %300 = vector.load %arg17[%c6_219, %c0_220, %c0_221] : memref<12x32x8xf32, #tpu.memory_space<vmem>>, vector<1x32x8xf32>
    %301 = vector.shape_cast %300 : vector<1x32x8xf32> to vector<32x8xf32>
    %cst_222 = arith.constant dense<0.000000e+00> : vector<16x8xf32>
    %302 = tpu.matmul %215, %301, %cst_222 {dimension_numbers = #tpu.dot_dimension_numbers<[1], [0], [0], [1], [0, 0, 1, 1], [], []>} : vector<16x32xf32>, vector<32x8xf32>, vector<16x8xf32> -> vector<16x8xf32>
    %c6_223 = arith.constant 6 : index
    %c0_224 = arith.constant 0 : index
    %c0_225 = arith.constant 0 : index
    %303 = vector.load %arg18[%c6_223, %c0_224, %c0_225] : memref<12x1x8xf32, #tpu.memory_space<vmem>>, vector<1x1x8xf32>
    %304 = vector.shape_cast %303 : vector<1x1x8xf32> to vector<1x8xf32>
    %305 = vector.broadcast %304 : vector<1x8xf32> to vector<16x8xf32>
    %306 = arith.addf %302, %305 : vector<16x8xf32>
    %c10_226 = arith.constant 10 : index
    %c0_227 = arith.constant 0 : index
    %c0_228 = arith.constant 0 : index
    %307 = vector.load %arg17[%c10_226, %c0_227, %c0_228] : memref<12x32x8xf32, #tpu.memory_space<vmem>>, vector<1x32x8xf32>
    %308 = vector.shape_cast %307 : vector<1x32x8xf32> to vector<32x8xf32>
    %cst_229 = arith.constant dense<0.000000e+00> : vector<16x8xf32>
    %309 = tpu.matmul %215, %308, %cst_229 {dimension_numbers = #tpu.dot_dimension_numbers<[1], [0], [0], [1], [0, 0, 1, 1], [], []>} : vector<16x32xf32>, vector<32x8xf32>, vector<16x8xf32> -> vector<16x8xf32>
    %c10_230 = arith.constant 10 : index
    %c0_231 = arith.constant 0 : index
    %c0_232 = arith.constant 0 : index
    %310 = vector.load %arg18[%c10_230, %c0_231, %c0_232] : memref<12x1x8xf32, #tpu.memory_space<vmem>>, vector<1x1x8xf32>
    %311 = vector.shape_cast %310 : vector<1x1x8xf32> to vector<1x8xf32>
    %312 = vector.broadcast %311 : vector<1x8xf32> to vector<16x8xf32>
    %313 = arith.addf %309, %312 : vector<16x8xf32>
    %cst_233 = arith.constant 0.353553385 : f32
    %314 = vector.broadcast %cst_233 : f32 to vector<8x8xf32>
    %315 = arith.mulf %299, %314 : vector<8x8xf32>
    %cst_234 = arith.constant dense<0.000000e+00> : vector<8x16xf32>
    %316 = tpu.matmul %315, %306, %cst_234 {dimension_numbers = #tpu.dot_dimension_numbers<[1], [1], [0], [0], [0, 0, 1, 0], [], []>} : vector<8x8xf32>, vector<16x8xf32>, vector<8x16xf32> -> vector<8x16xf32>
    %cst_235 = arith.constant dense<0xFF800000> : vector<8xf32>
    %317 = vector.multi_reduction <maximumf>, %316, %cst_235 [1] : vector<8x16xf32> to vector<8xf32>
    %318 = vector.shape_cast %317 : vector<8xf32> to vector<8x1xf32>
    %319 = vector.broadcast %318 : vector<8x1xf32> to vector<8x16xf32>
    %320 = arith.subf %316, %319 : vector<8x16xf32>
    %321 = math.exp %320 : vector<8x16xf32>
    %cst_236 = arith.constant dense<0.000000e+00> : vector<8xf32>
    %322 = vector.multi_reduction <add>, %321, %cst_236 [1] : vector<8x16xf32> to vector<8xf32>
    %323 = vector.shape_cast %322 : vector<8xf32> to vector<8x1xf32>
    %324 = tpu.reciprocal %323 {approx = true} : vector<8x1xf32> -> vector<8x1xf32>
    %325 = vector.broadcast %324 : vector<8x1xf32> to vector<8x16xf32>
    %326 = arith.mulf %321, %325 : vector<8x16xf32>
    %cst_237 = arith.constant dense<0.000000e+00> : vector<8x8xf32>
    %327 = tpu.matmul %326, %313, %cst_237 {dimension_numbers = #tpu.dot_dimension_numbers<[1], [0], [0], [1], [0, 0, 1, 1], [], []>} : vector<8x16xf32>, vector<16x8xf32>, vector<8x8xf32> -> vector<8x8xf32>
    %c2_238 = arith.constant 2 : index
    %c0_239 = arith.constant 0 : index
    %c0_240 = arith.constant 0 : index
    %328 = vector.load %arg19[%c2_238, %c0_239, %c0_240] : memref<4x8x32xf32, #tpu.memory_space<vmem>>, vector<1x8x32xf32>
    %329 = vector.shape_cast %328 : vector<1x8x32xf32> to vector<8x32xf32>
    %cst_241 = arith.constant dense<0.000000e+00> : vector<8x32xf32>
    %330 = tpu.matmul %327, %329, %cst_241 {dimension_numbers = #tpu.dot_dimension_numbers<[1], [0], [0], [1], [0, 0, 1, 1], [], []>} : vector<8x8xf32>, vector<8x32xf32>, vector<8x32xf32> -> vector<8x32xf32>
    %331 = arith.addf %292, %330 : vector<8x32xf32>
    %c3_242 = arith.constant 3 : index
    %c0_243 = arith.constant 0 : index
    %c0_244 = arith.constant 0 : index
    %332 = vector.load %arg17[%c3_242, %c0_243, %c0_244] : memref<12x32x8xf32, #tpu.memory_space<vmem>>, vector<1x32x8xf32>
    %333 = vector.shape_cast %332 : vector<1x32x8xf32> to vector<32x8xf32>
    %cst_245 = arith.constant dense<0.000000e+00> : vector<8x8xf32>
    %334 = tpu.matmul %214, %333, %cst_245 {dimension_numbers = #tpu.dot_dimension_numbers<[1], [0], [0], [1], [0, 0, 1, 1], [], []>} : vector<8x32xf32>, vector<32x8xf32>, vector<8x8xf32> -> vector<8x8xf32>
    %c3_246 = arith.constant 3 : index
    %c0_247 = arith.constant 0 : index
    %c0_248 = arith.constant 0 : index
    %335 = vector.load %arg18[%c3_246, %c0_247, %c0_248] : memref<12x1x8xf32, #tpu.memory_space<vmem>>, vector<1x1x8xf32>
    %336 = vector.shape_cast %335 : vector<1x1x8xf32> to vector<1x8xf32>
    %337 = vector.broadcast %336 : vector<1x8xf32> to vector<8x8xf32>
    %338 = arith.addf %334, %337 : vector<8x8xf32>
    %c7_249 = arith.constant 7 : index
    %c0_250 = arith.constant 0 : index
    %c0_251 = arith.constant 0 : index
    %339 = vector.load %arg17[%c7_249, %c0_250, %c0_251] : memref<12x32x8xf32, #tpu.memory_space<vmem>>, vector<1x32x8xf32>
    %340 = vector.shape_cast %339 : vector<1x32x8xf32> to vector<32x8xf32>
    %cst_252 = arith.constant dense<0.000000e+00> : vector<16x8xf32>
    %341 = tpu.matmul %215, %340, %cst_252 {dimension_numbers = #tpu.dot_dimension_numbers<[1], [0], [0], [1], [0, 0, 1, 1], [], []>} : vector<16x32xf32>, vector<32x8xf32>, vector<16x8xf32> -> vector<16x8xf32>
    %c7_253 = arith.constant 7 : index
    %c0_254 = arith.constant 0 : index
    %c0_255 = arith.constant 0 : index
    %342 = vector.load %arg18[%c7_253, %c0_254, %c0_255] : memref<12x1x8xf32, #tpu.memory_space<vmem>>, vector<1x1x8xf32>
    %343 = vector.shape_cast %342 : vector<1x1x8xf32> to vector<1x8xf32>
    %344 = vector.broadcast %343 : vector<1x8xf32> to vector<16x8xf32>
    %345 = arith.addf %341, %344 : vector<16x8xf32>
    %c11_256 = arith.constant 11 : index
    %c0_257 = arith.constant 0 : index
    %c0_258 = arith.constant 0 : index
    %346 = vector.load %arg17[%c11_256, %c0_257, %c0_258] : memref<12x32x8xf32, #tpu.memory_space<vmem>>, vector<1x32x8xf32>
    %347 = vector.shape_cast %346 : vector<1x32x8xf32> to vector<32x8xf32>
    %cst_259 = arith.constant dense<0.000000e+00> : vector<16x8xf32>
    %348 = tpu.matmul %215, %347, %cst_259 {dimension_numbers = #tpu.dot_dimension_numbers<[1], [0], [0], [1], [0, 0, 1, 1], [], []>} : vector<16x32xf32>, vector<32x8xf32>, vector<16x8xf32> -> vector<16x8xf32>
    %c11_260 = arith.constant 11 : index
    %c0_261 = arith.constant 0 : index
    %c0_262 = arith.constant 0 : index
    %349 = vector.load %arg18[%c11_260, %c0_261, %c0_262] : memref<12x1x8xf32, #tpu.memory_space<vmem>>, vector<1x1x8xf32>
    %350 = vector.shape_cast %349 : vector<1x1x8xf32> to vector<1x8xf32>
    %351 = vector.broadcast %350 : vector<1x8xf32> to vector<16x8xf32>
    %352 = arith.addf %348, %351 : vector<16x8xf32>
    %cst_263 = arith.constant 0.353553385 : f32
    %353 = vector.broadcast %cst_263 : f32 to vector<8x8xf32>
    %354 = arith.mulf %338, %353 : vector<8x8xf32>
    %cst_264 = arith.constant dense<0.000000e+00> : vector<8x16xf32>
    %355 = tpu.matmul %354, %345, %cst_264 {dimension_numbers = #tpu.dot_dimension_numbers<[1], [1], [0], [0], [0, 0, 1, 0], [], []>} : vector<8x8xf32>, vector<16x8xf32>, vector<8x16xf32> -> vector<8x16xf32>
    %cst_265 = arith.constant dense<0xFF800000> : vector<8xf32>
    %356 = vector.multi_reduction <maximumf>, %355, %cst_265 [1] : vector<8x16xf32> to vector<8xf32>
    %357 = vector.shape_cast %356 : vector<8xf32> to vector<8x1xf32>
    %358 = vector.broadcast %357 : vector<8x1xf32> to vector<8x16xf32>
    %359 = arith.subf %355, %358 : vector<8x16xf32>
    %360 = math.exp %359 : vector<8x16xf32>
    %cst_266 = arith.constant dense<0.000000e+00> : vector<8xf32>
    %361 = vector.multi_reduction <add>, %360, %cst_266 [1] : vector<8x16xf32> to vector<8xf32>
    %362 = vector.shape_cast %361 : vector<8xf32> to vector<8x1xf32>
    %363 = tpu.reciprocal %362 {approx = true} : vector<8x1xf32> -> vector<8x1xf32>
    %364 = vector.broadcast %363 : vector<8x1xf32> to vector<8x16xf32>
    %365 = arith.mulf %360, %364 : vector<8x16xf32>
    %cst_267 = arith.constant dense<0.000000e+00> : vector<8x8xf32>
    %366 = tpu.matmul %365, %352, %cst_267 {dimension_numbers = #tpu.dot_dimension_numbers<[1], [0], [0], [1], [0, 0, 1, 1], [], []>} : vector<8x16xf32>, vector<16x8xf32>, vector<8x8xf32> -> vector<8x8xf32>
    %c3_268 = arith.constant 3 : index
    %c0_269 = arith.constant 0 : index
    %c0_270 = arith.constant 0 : index
    %367 = vector.load %arg19[%c3_268, %c0_269, %c0_270] : memref<4x8x32xf32, #tpu.memory_space<vmem>>, vector<1x8x32xf32>
    %368 = vector.shape_cast %367 : vector<1x8x32xf32> to vector<8x32xf32>
    %cst_271 = arith.constant dense<0.000000e+00> : vector<8x32xf32>
    %369 = tpu.matmul %366, %368, %cst_271 {dimension_numbers = #tpu.dot_dimension_numbers<[1], [0], [0], [1], [0, 0, 1, 1], [], []>} : vector<8x8xf32>, vector<8x32xf32>, vector<8x32xf32> -> vector<8x32xf32>
    %370 = arith.addf %331, %369 : vector<8x32xf32>
    %c0_272 = arith.constant 0 : index
    %c0_273 = arith.constant 0 : index
    %371 = vector.load %arg20[%c0_272, %c0_273] : memref<1x32xf32, #tpu.memory_space<vmem>>, vector<1x32xf32>
    %372 = vector.broadcast %371 : vector<1x32xf32> to vector<8x32xf32>
    %373 = arith.addf %370, %372 : vector<8x32xf32>
    %374 = arith.addf %213, %373 : vector<8x32xf32>
    %cst_274 = arith.constant dense<0.000000e+00> : vector<8xf32>
    %375 = vector.multi_reduction <add>, %374, %cst_274 [1] : vector<8x32xf32> to vector<8xf32>
    %376 = vector.shape_cast %375 : vector<8xf32> to vector<8x1xf32>
    %cst_275 = arith.constant 3.200000e+01 : f32
    %377 = vector.broadcast %cst_275 : f32 to vector<8x1xf32>
    %378 = arith.divf %376, %377 : vector<8x1xf32>
    %379 = vector.broadcast %378 : vector<8x1xf32> to vector<8x32xf32>
    %380 = arith.subf %374, %379 : vector<8x32xf32>
    %381 = arith.mulf %380, %380 : vector<8x32xf32>
    %cst_276 = arith.constant dense<0.000000e+00> : vector<8xf32>
    %382 = vector.multi_reduction <add>, %381, %cst_276 [1] : vector<8x32xf32> to vector<8xf32>
    %383 = vector.shape_cast %382 : vector<8xf32> to vector<8x1xf32>
    %cst_277 = arith.constant 3.200000e+01 : f32
    %384 = vector.broadcast %cst_277 : f32 to vector<8x1xf32>
    %385 = arith.divf %383, %384 : vector<8x1xf32>
    %cst_278 = arith.constant 9.99999974E-6 : f32
    %386 = vector.broadcast %cst_278 : f32 to vector<8x1xf32>
    %387 = arith.addf %385, %386 : vector<8x1xf32>
    %388 = math.rsqrt %387 : vector<8x1xf32>
    %389 = vector.broadcast %388 : vector<8x1xf32> to vector<8x32xf32>
    %390 = arith.mulf %380, %389 : vector<8x32xf32>
    %c0_279 = arith.constant 0 : index
    %c0_280 = arith.constant 0 : index
    %391 = vector.load %arg27[%c0_279, %c0_280] : memref<1x32xf32, #tpu.memory_space<vmem>>, vector<1x32xf32>
    %392 = vector.broadcast %391 : vector<1x32xf32> to vector<8x32xf32>
    %393 = arith.mulf %390, %392 : vector<8x32xf32>
    %c0_281 = arith.constant 0 : index
    %c0_282 = arith.constant 0 : index
    %394 = vector.load %arg28[%c0_281, %c0_282] : memref<1x32xf32, #tpu.memory_space<vmem>>, vector<1x32xf32>
    %395 = vector.broadcast %394 : vector<1x32xf32> to vector<8x32xf32>
    %396 = arith.addf %393, %395 : vector<8x32xf32>
    %c0_283 = arith.constant 0 : index
    %c0_284 = arith.constant 0 : index
    %397 = vector.load %arg21[%c0_283, %c0_284] : memref<32x64xf32, #tpu.memory_space<vmem>>, vector<32x64xf32>
    %cst_285 = arith.constant dense<0.000000e+00> : vector<8x64xf32>
    %398 = tpu.matmul %396, %397, %cst_285 {dimension_numbers = #tpu.dot_dimension_numbers<[1], [0], [0], [1], [0, 0, 1, 1], [], []>} : vector<8x32xf32>, vector<32x64xf32>, vector<8x64xf32> -> vector<8x64xf32>
    %c0_286 = arith.constant 0 : index
    %c0_287 = arith.constant 0 : index
    %399 = vector.load %arg22[%c0_286, %c0_287] : memref<1x64xf32, #tpu.memory_space<vmem>>, vector<1x64xf32>
    %400 = vector.broadcast %399 : vector<1x64xf32> to vector<8x64xf32>
    %401 = arith.addf %398, %400 : vector<8x64xf32>
    %cst_288 = arith.constant 0.000000e+00 : f32
    %402 = vector.broadcast %cst_288 : f32 to vector<8x64xf32>
    %403 = arith.maximumf %401, %402 : vector<8x64xf32>
    %c0_289 = arith.constant 0 : index
    %c0_290 = arith.constant 0 : index
    %404 = vector.load %arg23[%c0_289, %c0_290] : memref<64x32xf32, #tpu.memory_space<vmem>>, vector<64x32xf32>
    %cst_291 = arith.constant dense<0.000000e+00> : vector<8x32xf32>
    %405 = tpu.matmul %403, %404, %cst_291 {dimension_numbers = #tpu.dot_dimension_numbers<[1], [0], [0], [1], [0, 0, 1, 1], [], []>} : vector<8x64xf32>, vector<64x32xf32>, vector<8x32xf32> -> vector<8x32xf32>
    %c0_292 = arith.constant 0 : index
    %c0_293 = arith.constant 0 : index
    %406 = vector.load %arg24[%c0_292, %c0_293] : memref<1x32xf32, #tpu.memory_space<vmem>>, vector<1x32xf32>
    %407 = vector.broadcast %406 : vector<1x32xf32> to vector<8x32xf32>
    %408 = arith.addf %405, %407 : vector<8x32xf32>
    %409 = arith.addf %396, %408 : vector<8x32xf32>
    %cst_294 = arith.constant dense<0.000000e+00> : vector<8xf32>
    %410 = vector.multi_reduction <add>, %409, %cst_294 [1] : vector<8x32xf32> to vector<8xf32>
    %411 = vector.shape_cast %410 : vector<8xf32> to vector<8x1xf32>
    %cst_295 = arith.constant 3.200000e+01 : f32
    %412 = vector.broadcast %cst_295 : f32 to vector<8x1xf32>
    %413 = arith.divf %411, %412 : vector<8x1xf32>
    %414 = vector.broadcast %413 : vector<8x1xf32> to vector<8x32xf32>
    %415 = arith.subf %409, %414 : vector<8x32xf32>
    %416 = arith.mulf %415, %415 : vector<8x32xf32>
    %cst_296 = arith.constant dense<0.000000e+00> : vector<8xf32>
    %417 = vector.multi_reduction <add>, %416, %cst_296 [1] : vector<8x32xf32> to vector<8xf32>
    %418 = vector.shape_cast %417 : vector<8xf32> to vector<8x1xf32>
    %cst_297 = arith.constant 3.200000e+01 : f32
    %419 = vector.broadcast %cst_297 : f32 to vector<8x1xf32>
    %420 = arith.divf %418, %419 : vector<8x1xf32>
    %cst_298 = arith.constant 9.99999974E-6 : f32
    %421 = vector.broadcast %cst_298 : f32 to vector<8x1xf32>
    %422 = arith.addf %420, %421 : vector<8x1xf32>
    %423 = math.rsqrt %422 : vector<8x1xf32>
    %424 = vector.broadcast %423 : vector<8x1xf32> to vector<8x32xf32>
    %425 = arith.mulf %415, %424 : vector<8x32xf32>
    %c0_299 = arith.constant 0 : index
    %c0_300 = arith.constant 0 : index
    %426 = vector.load %arg29[%c0_299, %c0_300] : memref<1x32xf32, #tpu.memory_space<vmem>>, vector<1x32xf32>
    %427 = vector.broadcast %426 : vector<1x32xf32> to vector<8x32xf32>
    %428 = arith.mulf %425, %427 : vector<8x32xf32>
    %c0_301 = arith.constant 0 : index
    %c0_302 = arith.constant 0 : index
    %429 = vector.load %arg30[%c0_301, %c0_302] : memref<1x32xf32, #tpu.memory_space<vmem>>, vector<1x32xf32>
    %430 = vector.broadcast %429 : vector<1x32xf32> to vector<8x32xf32>
    %431 = arith.addf %428, %430 : vector<8x32xf32>
    %c0_303 = arith.constant 0 : index
    %c0_304 = arith.constant 0 : index
    %c0_305 = arith.constant 0 : index
    %432 = vector.load %arg31[%c0_303, %c0_304, %c0_305] : memref<1x8x32xf32, #tpu.memory_space<vmem>>, vector<1x8x32xf32>
    %433 = vector.shape_cast %432 : vector<1x8x32xf32> to vector<8x32xf32>
    %434 = vector.shape_cast %431 : vector<8x32xf32> to vector<1x8x32xf32>
    tpu.vector_store %arg31[%c0_303, %c0_304, %c0_305], %434 {strides = array<i32>} : memref<1x8x32xf32, #tpu.memory_space<vmem>>, vector<1x8x32xf32>,
    return
  }
  func.func @transform_0(%arg0: i32) -> (i32, i32, i32) {
    %c0_i32 = arith.constant 0 : i32
    %c0_i32_0 = arith.constant 0 : i32
    %c0_i32_1 = arith.constant 0 : i32
    return %arg0, %c0_i32, %c0_i32_0 : i32, i32, i32
  }
  func.func @transform_1(%arg0: i32) -> (i32, i32, i32) {
    %c0_i32 = arith.constant 0 : i32
    %c0_i32_0 = arith.constant 0 : i32
    %c0_i32_1 = arith.constant 0 : i32
    return %arg0, %c0_i32, %c0_i32_0 : i32, i32, i32
  }
  func.func @transform_2(%arg0: i32) -> (i32, i32, i32) {
    %c0_i32 = arith.constant 0 : i32
    %c0_i32_0 = arith.constant 0 : i32
    %c0_i32_1 = arith.constant 0 : i32
    return %arg0, %c0_i32, %c0_i32_0 : i32, i32, i32
  }
  func.func @transform_3(%arg0: i32) -> (i32, i32, i32) {
    %c0_i32 = arith.constant 0 : i32
    %c0_i32_0 = arith.constant 0 : i32
    %c0_i32_1 = arith.constant 0 : i32
    return %arg0, %c0_i32, %c0_i32_0 : i32, i32, i32
  }
  func.func @transform_4(%arg0: i32) -> (i32, i32) {
    %c0_i32 = arith.constant 0 : i32
    %c0_i32_0 = arith.constant 0 : i32
    %c0_i32_1 = arith.constant 0 : i32
    return %c0_i32, %c0_i32_0 : i32, i32
  }
  func.func @transform_5(%arg0: i32) -> (i32, i32) {
    %c0_i32 = arith.constant 0 : i32
    %c0_i32_0 = arith.constant 0 : i32
    %c0_i32_1 = arith.constant 0 : i32
    return %c0_i32, %c0_i32_0 : i32, i32
  }
  func.func @transform_6(%arg0: i32) -> (i32, i32) {
    %c0_i32 = arith.constant 0 : i32
    %c0_i32_0 = arith.constant 0 : i32
    %c0_i32_1 = arith.constant 0 : i32
    return %c0_i32, %c0_i32_0 : i32, i32
  }
  func.func @transform_7(%arg0: i32) -> (i32, i32) {
    %c0_i32 = arith.constant 0 : i32
    %c0_i32_0 = arith.constant 0 : i32
    %c0_i32_1 = arith.constant 0 : i32
    return %c0_i32, %c0_i32_0 : i32, i32
  }
  func.func @transform_8(%arg0: i32) -> (i32, i32) {
    %c0_i32 = arith.constant 0 : i32
    %c0_i32_0 = arith.constant 0 : i32
    %c0_i32_1 = arith.constant 0 : i32
    return %c0_i32, %c0_i32_0 : i32, i32
  }
  func.func @transform_9(%arg0: i32) -> (i32, i32) {
    %c0_i32 = arith.constant 0 : i32
    %c0_i32_0 = arith.constant 0 : i32
    %c0_i32_1 = arith.constant 0 : i32
    return %c0_i32, %c0_i32_0 : i32, i32
  }
  func.func @transform_10(%arg0: i32) -> (i32, i32) {
    %c0_i32 = arith.constant 0 : i32
    %c0_i32_0 = arith.constant 0 : i32
    %c0_i32_1 = arith.constant 0 : i32
    return %c0_i32, %c0_i32_0 : i32, i32
  }
  func.func @transform_11(%arg0: i32) -> (i32, i32) {
    %c0_i32 = arith.constant 0 : i32
    %c0_i32_0 = arith.constant 0 : i32
    %c0_i32_1 = arith.constant 0 : i32
    return %c0_i32, %c0_i32_0 : i32, i32
  }
  func.func @transform_12(%arg0: i32) -> (i32, i32, i32) {
    %c0_i32 = arith.constant 0 : i32
    %c0_i32_0 = arith.constant 0 : i32
    %c0_i32_1 = arith.constant 0 : i32
    %c0_i32_2 = arith.constant 0 : i32
    return %c0_i32, %c0_i32_0, %c0_i32_1 : i32, i32, i32
  }
  func.func @transform_13(%arg0: i32) -> (i32, i32, i32) {
    %c0_i32 = arith.constant 0 : i32
    %c0_i32_0 = arith.constant 0 : i32
    %c0_i32_1 = arith.constant 0 : i32
    %c0_i32_2 = arith.constant 0 : i32
    return %c0_i32, %c0_i32_0, %c0_i32_1 : i32, i32, i32
  }
  func.func @transform_14(%arg0: i32) -> (i32, i32, i32) {
    %c0_i32 = arith.constant 0 : i32
    %c0_i32_0 = arith.constant 0 : i32
    %c0_i32_1 = arith.constant 0 : i32
    %c0_i32_2 = arith.constant 0 : i32
    return %c0_i32, %c0_i32_0, %c0_i32_1 : i32, i32, i32
  }
  func.func @transform_15(%arg0: i32) -> (i32, i32) {
    %c0_i32 = arith.constant 0 : i32
    %c0_i32_0 = arith.constant 0 : i32
    %c0_i32_1 = arith.constant 0 : i32
    return %c0_i32, %c0_i32_0 : i32, i32
  }
  func.func @transform_16(%arg0: i32) -> (i32, i32, i32) {
    %c0_i32 = arith.constant 0 : i32
    %c0_i32_0 = arith.constant 0 : i32
    %c0_i32_1 = arith.constant 0 : i32
    %c0_i32_2 = arith.constant 0 : i32
    return %c0_i32, %c0_i32_0, %c0_i32_1 : i32, i32, i32
  }
  func.func @transform_17(%arg0: i32) -> (i32, i32, i32) {
    %c0_i32 = arith.constant 0 : i32
    %c0_i32_0 = arith.constant 0 : i32
    %c0_i32_1 = arith.constant 0 : i32
    %c0_i32_2 = arith.constant 0 : i32
    return %c0_i32, %c0_i32_0, %c0_i32_1 : i32, i32, i32
  }
  func.func @transform_18(%arg0: i32) -> (i32, i32, i32) {
    %c0_i32 = arith.constant 0 : i32
    %c0_i32_0 = arith.constant 0 : i32
    %c0_i32_1 = arith.constant 0 : i32
    %c0_i32_2 = arith.constant 0 : i32
    return %c0_i32, %c0_i32_0, %c0_i32_1 : i32, i32, i32
  }
  func.func @transform_19(%arg0: i32) -> (i32, i32) {
    %c0_i32 = arith.constant 0 : i32
    %c0_i32_0 = arith.constant 0 : i32
    %c0_i32_1 = arith.constant 0 : i32
    return %c0_i32, %c0_i32_0 : i32, i32
  }
  func.func @transform_20(%arg0: i32) -> (i32, i32) {
    %c0_i32 = arith.constant 0 : i32
    %c0_i32_0 = arith.constant 0 : i32
    %c0_i32_1 = arith.constant 0 : i32
    return %c0_i32, %c0_i32_0 : i32, i32
  }
  func.func @transform_21(%arg0: i32) -> (i32, i32) {
    %c0_i32 = arith.constant 0 : i32
    %c0_i32_0 = arith.constant 0 : i32
    %c0_i32_1 = arith.constant 0 : i32
    return %c0_i32, %c0_i32_0 : i32, i32
  }
  func.func @transform_22(%arg0: i32) -> (i32, i32) {
    %c0_i32 = arith.constant 0 : i32
    %c0_i32_0 = arith.constant 0 : i32
    %c0_i32_1 = arith.constant 0 : i32
    return %c0_i32, %c0_i32_0 : i32, i32
  }
  func.func @transform_23(%arg0: i32) -> (i32, i32) {
    %c0_i32 = arith.constant 0 : i32
    %c0_i32_0 = arith.constant 0 : i32
    %c0_i32_1 = arith.constant 0 : i32
    return %c0_i32, %c0_i32_0 : i32, i32
  }
  func.func @transform_24(%arg0: i32) -> (i32, i32) {
    %c0_i32 = arith.constant 0 : i32
    %c0_i32_0 = arith.constant 0 : i32
    %c0_i32_1 = arith.constant 0 : i32
    return %c0_i32, %c0_i32_0 : i32, i32
  }
  func.func @transform_25(%arg0: i32) -> (i32, i32) {
    %c0_i32 = arith.constant 0 : i32
    %c0_i32_0 = arith.constant 0 : i32
    %c0_i32_1 = arith.constant 0 : i32
    return %c0_i32, %c0_i32_0 : i32, i32
  }
  func.func @transform_26(%arg0: i32) -> (i32, i32) {
    %c0_i32 = arith.constant 0 : i32
    %c0_i32_0 = arith.constant 0 : i32
    %c0_i32_1 = arith.constant 0 : i32
    return %c0_i32, %c0_i32_0 : i32, i32
  }
  func.func @transform_27(%arg0: i32) -> (i32, i32) {
    %c0_i32 = arith.constant 0 : i32
    %c0_i32_0 = arith.constant 0 : i32
    %c0_i32_1 = arith.constant 0 : i32
    return %c0_i32, %c0_i32_0 : i32, i32
  }
  func.func @transform_28(%arg0: i32) -> (i32, i32) {
    %c0_i32 = arith.constant 0 : i32
    %c0_i32_0 = arith.constant 0 : i32
    %c0_i32_1 = arith.constant 0 : i32
    return %c0_i32, %c0_i32_0 : i32, i32
  }
  func.func @transform_29(%arg0: i32) -> (i32, i32) {
    %c0_i32 = arith.constant 0 : i32
    %c0_i32_0 = arith.constant 0 : i32
    %c0_i32_1 = arith.constant 0 : i32
    return %c0_i32, %c0_i32_0 : i32, i32
  }
  func.func @transform_30(%arg0: i32) -> (i32, i32, i32) {
    %c0_i32 = arith.constant 0 : i32
    %c0_i32_0 = arith.constant 0 : i32
    %c0_i32_1 = arith.constant 0 : i32
    return %arg0, %c0_i32, %c0_i32_0 : i32, i32, i32
  }
}

</mosaic_0001>

<llo_original>
// kernel: point_transformer_forward.5
$region0: #{point_transformer_forward.5}
  #allocation0 [shape = 'u32[]', space=smem, size = 0x4, offset = 0x4, fixed_abs, tag = 'smem constant byte address 0x4 - core index']
  #allocation1 [shape = 'u32[144,128]{1,0:T(1,128)}', space=vmem, size = 0x12000, scoped, tag = 'internal scratch']
  %s0 = inlined_call_operand.vmem [shape: f32[2,8,32], index: 0, kind: input, shape index: {}]
  %s1 = inlined_call_operand.vmem [shape: f32[32,64], index: 1, kind: input, shape index: {}]
  %s2 = inlined_call_operand.vmem [shape: f32[1,64], index: 2, kind: input, shape index: {}]
  %s3 = inlined_call_operand.vmem [shape: f32[64,5], index: 3, kind: input, shape index: {}]
  %s4 = inlined_call_operand.vmem [shape: f32[1,5], index: 4, kind: input, shape index: {}]
  %s5 = inlined_call_operand.vmem [shape: f32[2,8,5], index: 5, kind: output, shape index: {}]
  %s6 = sld [smem:[#allocation0]]
  $region53: #{point_transformer_forward.5} parent=0
    _
  %s8 = ssub.s32 1, %s6
  %s9 = scalar_select 0, %s8, %s6
  loop: start=0, step=1, limit=4
  $region2: #{point_transformer_forward.5} parent=0 // loop_pre_header
    _
  $region3: #{point_transformer_forward.5} parent=0 // loop_header
    %s11 = sphi 0, %s15
    %p12 = scmp.ge.s32.totalorder %s11, 4
    %s21 = sphi 0, %s23
    %s24 = sphi 0, %s21
    %s25 = sphi 0, %s24
    %s41 = sphi 0, %s25
    %s45 = sphi 0, %s45
    %s47 = sphi 0, %s45
    %s48 = sphi 0, %s47
    %s62 = sphi 0, %s48
    %s66 = sphi 0, %s66
    %s68 = sphi 0, %s66
    %s69 = sphi 0, %s68
    %s83 = sphi 0, %s69
    %s87 = sphi 0, %s87
    %s89 = sphi 0, %s87
    %s90 = sphi 0, %s89
    %s104 = sphi 0, %s90
    %s108 = sphi 0, %s108
    %s110 = sphi 0, %s108
    %s111 = sphi 0, %s110
    %s125 = sphi 0, %s111
    %s131 = sphi 0, %s133
    %s134 = sphi 0, %s131
    %s135 = sphi 0, %s134
    %s151 = sphi 0, %s135
  $region4: #{point_transformer_forward.5} parent=0 // loop_header_branch
    %14 = sbr.rel (%p12) target = $region8
  $region5: #{point_transformer_forward.5} parent=0 // loop_body
    %s16 = ssub.s32 %s11, 1
    %s17 = ssub.s32 %s11, 2
    %s18 = sadd.s32 %s11, 1
    %s19 = ssub.s32 %s11, %s18
    %p20 = scmp.eq.s32.totalorder %s19, 0
    %s22 = sadd.s32 %s21, 1
    %s23 = scalar_select %p20, %s21, %s22
    %p26 = pneg %p20
    %p27 = scmp.eq.s32.totalorder %s11, 1
    %p28 = por %p26, %p27
    %p29 = scmp.ne.s32.totalorder %s21, %s24
    %p30 = scmp.eq.s32.totalorder %s11, 0
    %p31 = por %p29, %p30
    %p32 = scmp.ne.s32.totalorder %s21, %s24
    %p33 = scmp.eq.s32.totalorder %s16, 1
    %p34 = por %p32, %p33
    %p35 = scmp.ne.s32.totalorder %s24, %s25
    %p36 = scmp.eq.s32.totalorder %s16, 0
    %p37 = por %p35, %p36
    %p38 = scmp.ne.s32.totalorder %s24, %s25
    %p39 = scmp.eq.s32.totalorder %s17, 1
    %p40 = por %p38, %p39
    %p42 = scmp.ne.s32.totalorder %s25, %s41
    %p43 = scmp.eq.s32.totalorder %s17, 0
    %p44 = por %p42, %p43
    %s46 = sadd.s32 %s45, 1
    %p49 = scmp.eq.s32.totalorder %s11, 1
    %p50 = scmp.ne.s32.totalorder %s45, %s47
    %p51 = scmp.eq.s32.totalorder %s11, 0
    %p52 = por %p50, %p51
    %p53 = scmp.ne.s32.totalorder %s45, %s47
    %p54 = scmp.eq.s32.totalorder %s16, 1
    %p55 = por %p53, %p54
    %p56 = scmp.ne.s32.totalorder %s47, %s48
    %p57 = scmp.eq.s32.totalorder %s16, 0
    %p58 = por %p56, %p57
    %p59 = scmp.ne.s32.totalorder %s47, %s48
    %p60 = scmp.eq.s32.totalorder %s17, 1
    %p61 = por %p59, %p60
    %p63 = scmp.ne.s32.totalorder %s48, %s62
    %p64 = scmp.eq.s32.totalorder %s17, 0
    %p65 = por %p63, %p64
    %s67 = sadd.s32 %s66, 1
    %p70 = scmp.eq.s32.totalorder %s11, 1
    %p71 = scmp.ne.s32.totalorder %s66, %s68
    %p72 = scmp.eq.s32.totalorder %s11, 0
    %p73 = por %p71, %p72
    %p74 = scmp.ne.s32.totalorder %s66, %s68
    %p75 = scmp.eq.s32.totalorder %s16, 1
    %p76 = por %p74, %p75
    %p77 = scmp.ne.s32.totalorder %s68, %s69
    %p78 = scmp.eq.s32.totalorder %s16, 0
    %p79 = por %p77, %p78
    %p80 = scmp.ne.s32.totalorder %s68, %s69
    %p81 = scmp.eq.s32.totalorder %s17, 1
    %p82 = por %p80, %p81
    %p84 = scmp.ne.s32.totalorder %s69, %s83
    %p85 = scmp.eq.s32.totalorder %s17, 0
    %p86 = por %p84, %p85
    %s88 = sadd.s32 %s87, 1
    %p91 = scmp.eq.s32.totalorder %s11, 1
    %p92 = scmp.ne.s32.totalorder %s87, %s89
    %p93 = scmp.eq.s32.totalorder %s11, 0
    %p94 = por %p92, %p93
    %p95 = scmp.ne.s32.totalorder %s87, %s89
    %p96 = scmp.eq.s32.totalorder %s16, 1
    %p97 = por %p95, %p96
    %p98 = scmp.ne.s32.totalorder %s89, %s90
    %p99 = scmp.eq.s32.totalorder %s16, 0
    %p100 = por %p98, %p99
    %p101 = scmp.ne.s32.totalorder %s89, %s90
    %p102 = scmp.eq.s32.totalorder %s17, 1
    %p103 = por %p101, %p102
    %p105 = scmp.ne.s32.totalorder %s90, %s104
    %p106 = scmp.eq.s32.totalorder %s17, 0
    %p107 = por %p105, %p106
    %s109 = sadd.s32 %s108, 1
    %p112 = scmp.eq.s32.totalorder %s11, 1
    %p113 = scmp.ne.s32.totalorder %s108, %s110
    %p114 = scmp.eq.s32.totalorder %s11, 0
    %p115 = por %p113, %p114
    %p116 = scmp.ne.s32.totalorder %s108, %s110
    %p117 = scmp.eq.s32.totalorder %s16, 1
    %p118 = por %p116, %p117
    %p119 = scmp.ne.s32.totalorder %s110, %s111
    %p120 = scmp.eq.s32.totalorder %s16, 0
    %p121 = por %p119, %p120
    %p122 = scmp.ne.s32.totalorder %s110, %s111
    %p123 = scmp.eq.s32.totalorder %s17, 1
    %p124 = por %p122, %p123
    %p126 = scmp.ne.s32.totalorder %s111, %s125
    %p127 = scmp.eq.s32.totalorder %s17, 0
    %p128 = por %p126, %p127
    %s129 = ssub.s32 %s11, %s18
    %p130 = scmp.eq.s32.totalorder %s129, 0
    %s132 = sadd.s32 %s131, 1
    %s133 = scalar_select %p130, %s131, %s132
    %p136 = pneg %p130
    %p137 = scmp.eq.s32.totalorder %s11, 1
    %p138 = por %p136, %p137
    %p139 = scmp.ne.s32.totalorder %s131, %s134
    %p140 = scmp.eq.s32.totalorder %s11, 0
    %p141 = por %p139, %p140
    %p142 = scmp.ne.s32.totalorder %s131, %s134
    %p143 = scmp.eq.s32.totalorder %s16, 1
    %p144 = por %p142, %p143
    %p145 = scmp.ne.s32.totalorder %s134, %s135
    %p146 = scmp.eq.s32.totalorder %s16, 0
    %p147 = por %p145, %p146
    %p148 = scmp.ne.s32.totalorder %s134, %s135
    %p149 = scmp.eq.s32.totalorder %s17, 1
    %p150 = por %p148, %p149
    %p152 = scmp.ne.s32.totalorder %s135, %s151
    %p153 = scmp.eq.s32.totalorder %s17, 0
    %p154 = por %p152, %p153
    %p155 = scmp.le.s32.totalorder 1, %s11
    %p156 = scmp.lt.s32.totalorder %s11, 3
    %p157 = pnand %p155, %p156
    %p158 = pneg %p157
    // Predicated region
    $region9: #{point_transformer_forward.5} parent=5 // pred_check
      _
    $region10: #{point_transformer_forward.5} parent=5 // pred_check_branch
      %160 = sbr.rel (%p157) target = $region12
    $region11: #{point_transformer_forward.5} parent=5 // pred_region
      %s161 = ssub.s32 %s11, 1
      // Predicated region
      $region13: #{point_transformer_forward.5} parent=11 // pred_check
        %p162 = pneg %p58
      $region14: #{point_transformer_forward.5} parent=11 // pred_check_branch
        %164 = sbr.rel (%p162) target = $region16
      $region15: #{point_transformer_forward.5} parent=11 // pred_region
        _
      $region16: #{point_transformer_forward.5} parent=11 // pred_fallthru
        _
      // Predicated region
      $region17: #{point_transformer_forward.5} parent=11 // pred_check
        %p165 = pneg %p79
      $region18: #{point_transformer_forward.5} parent=11 // pred_check_branch
        %167 = sbr.rel (%p165) target = $region20
      $region19: #{point_transformer_forward.5} parent=11 // pred_region
        _
      $region20: #{point_transformer_forward.5} parent=11 // pred_fallthru
        _
      // Predicated region
      $region21: #{point_transformer_forward.5} parent=11 // pred_check
        %p168 = pneg %p100
      $region22: #{point_transformer_forward.5} parent=11 // pred_check_branch
        %170 = sbr.rel (%p168) target = $region24
      $region23: #{point_transformer_forward.5} parent=11 // pred_region
        _
      $region24: #{point_transformer_forward.5} parent=11 // pred_fallthru
        _
      // Predicated region
      $region25: #{point_transformer_forward.5} parent=11 // pred_check
        %p171 = pneg %p121
      $region26: #{point_transformer_forward.5} parent=11 // pred_check_branch
        %173 = sbr.rel (%p171) target = $region28
      $region27: #{point_transformer_forward.5} parent=11 // pred_region
        _
      $region28: #{point_transformer_forward.5} parent=11 // pred_fallthru
        _
    $region12: #{point_transformer_forward.5} parent=5 // pred_fallthru
      _
    %p174 = scmp.lt.s32.totalorder %s11, 2
    // Predicated region
    $region29: #{point_transformer_forward.5} parent=5 // pred_check
      %p175 = pneg %p174
    $region30: #{point_transformer_forward.5} parent=5 // pred_check_branch
      %177 = sbr.rel (%p175) target = $region32
    $region31: #{point_transformer_forward.5} parent=5 // pred_region
      // Predicated region
      $region33: #{point_transformer_forward.5} parent=31 // pred_check
        %p178 = pneg %p31
      $region34: #{point_transformer_forward.5} parent=31 // pred_check_branch
        %180 = sbr.rel (%p178) target = $region36
      $region35: #{point_transformer_forward.5} parent=31 // pred_region
        %p181 = scmp.lt.s32.totalorder %s11, 1
        %s182 = scalar_select %p181, %s11, 1
        %s183 = smul.addr %s182, 8
        %s184 = scalar_lea.vmem %s0, %s183
      $region36: #{point_transformer_forward.5} parent=31 // pred_fallthru
        _
    $region32: #{point_transformer_forward.5} parent=5 // pred_fallthru
      _
    %p185 = scmp.le.s32.totalorder 1, %s11
    %p186 = scmp.lt.s32.totalorder %s11, 3
    %p187 = pnand %p185, %p186
    %p188 = pneg %p187
    // Predicated region
    $region37: #{point_transformer_forward.5} parent=5 // pred_check
      _
    $region38: #{point_transformer_forward.5} parent=5 // pred_check_branch
      %190 = sbr.rel (%p187) target = $region40
    $region39: #{point_transformer_forward.5} parent=5 // pred_region
      %s191 = ssub.s32 %s11, 1
      %p192 = scmp.lt.s32.totalorder %s16, 1
      %s193 = scalar_select %p192, %s16, 1
      %s194 = smul.addr %s193, 8
      %s195 = scalar_lea.vmem %s0, %s194
      %p196 = pneg %p37
      %p197 = pneg %p34
      %p198 = pneg %p58
      %p199 = pneg %p55
      %p200 = pneg %p79
      %p201 = pneg %p76
      %p202 = pneg %p100
      %p203 = pneg %p97
      %p204 = pneg %p121
      %p205 = pneg %p118
      %p206 = pneg %p147
      %p207 = pneg %p144
      %p208 = scmp.lt.s32.totalorder %s16, 1
      %s209 = scalar_select %p208, %s16, 1
      %s210 = smul.addr %s209, 8
      %s211 = scalar_lea.vmem %s5, %s210
      %p212 = scmp.lt.s32.totalorder %s16, 1
      %s213 = scalar_select %p212, %s16, 1
      %s214 = smul.addr %s213, 8
      %s215 = scalar_lea.vmem %s0, %s214
      %p216 = scmp.lt.s32.totalorder %s16, 1
      %s217 = scalar_select %p216, %s16, 1
      %s218 = smul.addr %s217, 8
      %s219 = scalar_lea.vmem %s5, %s218
      %v220 = vld [vmem:[%s215] sm:$0xff]
      %v221 = vld [vmem:[%s1] sm:$0xff]
      %v222 = vld [vmem:[%s1 + $0x8] sm:$0xff]
      %v223 = vld [vmem:[%s1 + $0x10] sm:$0xff]
      %v224 = vld [vmem:[%s1 + $0x18] sm:$0xff]
      %v225 = vld [vmem:[%s2] sm:$0x1]
      %v227 = vlaneseq
      %v228 = vshrl.u32 %v227, 7
      %v229 = vsub.s32 0, %v228
      %v230 = vrot.slane %v225, %v229
      %vm232 = vcmask 261120
      %v234 = vsel %vm232, %v220, 0
      %236 = vmatprep.subr.mxu0 0.0
      %237 = vmatpush1.msra.mxu0 %v221
      %238 = vmatprep.subr.mxu0 0.0
      %239 = vmatpush1.msra.mxu0 %v222
      %240 = vmatprep.subr.mxu0 0.0
      %241 = vmatpush1.msra.mxu0 %v223
      %242 = vmatprep.subr.mxu0 0.0
      %243 = vmatpush1.msra.mxu0 %v224
      %244 = vmatprep.subr.mxu0 0.0
      %245 = vmatpush1.msra.mxu0 0.0
      %246 = vmatprep.subr.mxu0 0.0
      %247 = vmatpush1.msra.mxu0 0.0
      %248 = vmatprep.subr.mxu0 0.0
      %249 = vmatpush1.msra.mxu0 0.0
      %250 = vmatprep.subr.mxu0 0.0
      %251 = vmatpush1.msra.mxu0 0.0
      %252 = vmatprep.subr.mxu0 0.0
      %253 = vmatpush1.msra.mxu0 0.0
      %254 = vmatprep.subr.mxu0 0.0
      %255 = vmatpush1.msra.mxu0 0.0
      %256 = vmatprep.subr.mxu0 0.0
      %257 = vmatpush1.msra.mxu0 0.0
      %258 = vmatprep.subr.mxu0 0.0
      %259 = vmatpush1.msra.mxu0 0.0
      %260 = vmatprep.subr.mxu0 0.0
      %261 = vmatpush1.msra.mxu0 0.0
      %262 = vmatprep.subr.mxu0 0.0
      %263 = vmatpush1.msra.mxu0 0.0
      %264 = vmatprep.subr.mxu0 0.0
      %265 = vmatpush1.msra.mxu0 0.0
      %266 = vmatprep.subr.mxu0 0.0
      %267 = vmatpush1.msra.mxu0 0.0
      %268 = vmatprep.subr.mxu0 0.0
      %269 = vmatpush1.msra.mxu0 0.0
      %270 = vmatprep.subr.mxu0 0.0
      %271 = vmatpush1.msra.mxu0 0.0
      %272 = vmatprep.subr.mxu0 0.0
      %273 = vmatpush1.msra.mxu0 0.0
      %274 = vmatprep.subr.mxu0 0.0
      %275 = vmatpush1.msra.mxu0 0.0
      %276 = vmatprep.subr.mxu0 0.0
      %277 = vmatpush1.msra.mxu0 0.0
      %278 = vmatprep.subr.mxu0 0.0
      %279 = vmatpush1.msra.mxu0 0.0
      %280 = vmatprep.subr.mxu0 0.0
      %281 = vmatpush1.msra.mxu0 0.0
      %282 = vmatprep.subr.mxu0 0.0
      %283 = vmatpush1.msra.mxu0 0.0
      %284 = vmatprep.subr.mxu0 0.0
      %285 = vmatpush1.msra.mxu0 0.0
      %286 = vmatprep.subr.mxu0 0.0
      %287 = vmatpush1.msra.mxu0 0.0
      %288 = vmatprep.subr.mxu0 0.0
      %289 = vmatpush1.msra.mxu0 0.0
      %290 = vmatprep.subr.mxu0 0.0
      %291 = vmatpush1.msra.mxu0 0.0
      %292 = vmatprep.subr.mxu0 0.0
      %293 = vmatpush1.msra.mxu0 0.0
      %294 = vmatprep.subr.mxu0 0.0
      %295 = vmatpush1.msra.mxu0 0.0
      %296 = vmatprep.subr.mxu0 0.0
      %297 = vmatpush1.msra.mxu0 0.0
      %298 = vmatprep.subr.mxu0 0.0
      %299 = vmatpush1.msra.mxu0 0.0
      %300 = vmatprep.mubr.f32.mxu0 0.0
      %301 = vmatmul.mubr.f32.gmra.mrb[0].mxu0 %v234
      %v302 = vpop.f32.mrb[0].mxu0
      %v303 = vadd.f32 %v230, %v302
      %v304 = vpop.f32.mrb[0].mxu0
      %305 = vdwg.mxu0
      %v306 = vmax.f32 %v303, 0.0
      %v307 = vld [vmem:[%s3] sm:$0xff]
      %v308 = vld [vmem:[%s3 + $0x8] sm:$0xff]
      %v309 = vld [vmem:[%s3 + $0x10] sm:$0xff]
      %v310 = vld [vmem:[%s3 + $0x18] sm:$0xff]
      %v311 = vld [vmem:[%s3 + $0x20] sm:$0xff]
      %v312 = vld [vmem:[%s3 + $0x28] sm:$0xff]
      %v313 = vld [vmem:[%s3 + $0x30] sm:$0xff]
      %v314 = vld [vmem:[%s3 + $0x38] sm:$0xff]
      %v315 = vld [vmem:[%s4] sm:$0x1]
      %v317 = vlaneseq
      %v318 = vshrl.u32 %v317, 7
      %v319 = vsub.s32 0, %v318
      %v320 = vrot.slane %v315, %v319
      %vm322 = vcmask 523264
      %v324 = vsel %vm322, %v306, 0
      %326 = vmatprep.subr.mxu0 0.0
      %327 = vmatpush1.msra.mxu0 %v307
      %328 = vmatprep.subr.mxu0 0.0
      %329 = vmatpush1.msra.mxu0 %v308
      %330 = vmatprep.subr.mxu0 0.0
      %331 = vmatpush1.msra.mxu0 %v309
      %332 = vmatprep.subr.mxu0 0.0
      %333 = vmatpush1.msra.mxu0 %v310
      %334 = vmatprep.subr.mxu0 0.0
      %335 = vmatpush1.msra.mxu0 %v311
      %336 = vmatprep.subr.mxu0 0.0
      %337 = vmatpush1.msra.mxu0 %v312
      %338 = vmatprep.subr.mxu0 0.0
      %339 = vmatpush1.msra.mxu0 %v313
      %340 = vmatprep.subr.mxu0 0.0
      %341 = vmatpush1.msra.mxu0 %v314
      %342 = vmatprep.subr.mxu0 0.0
      %343 = vmatpush1.msra.mxu0 0.0
      %344 = vmatprep.subr.mxu0 0.0
      %345 = vmatpush1.msra.mxu0 0.0
      %346 = vmatprep.subr.mxu0 0.0
      %347 = vmatpush1.msra.mxu0 0.0
      %348 = vmatprep.subr.mxu0 0.0
      %349 = vmatpush1.msra.mxu0 0.0
      %350 = vmatprep.subr.mxu0 0.0
      %351 = vmatpush1.msra.mxu0 0.0
      %352 = vmatprep.subr.mxu0 0.0
      %353 = vmatpush1.msra.mxu0 0.0
      %354 = vmatprep.subr.mxu0 0.0
      %355 = vmatpush1.msra.mxu0 0.0
      %356 = vmatprep.subr.mxu0 0.0
      %357 = vmatpush1.msra.mxu0 0.0
      %358 = vmatprep.subr.mxu0 0.0
      %359 = vmatpush1.msra.mxu0 0.0
      %360 = vmatprep.subr.mxu0 0.0
      %361 = vmatpush1.msra.mxu0 0.0
      %362 = vmatprep.subr.mxu0 0.0
      %363 = vmatpush1.msra.mxu0 0.0
      %364 = vmatprep.subr.mxu0 0.0
      %365 = vmatpush1.msra.mxu0 0.0
      %366 = vmatprep.subr.mxu0 0.0
      %367 = vmatpush1.msra.mxu0 0.0
      %368 = vmatprep.subr.mxu0 0.0
      %369 = vmatpush1.msra.mxu0 0.0
      %370 = vmatprep.subr.mxu0 0.0
      %371 = vmatpush1.msra.mxu0 0.0
      %372 = vmatprep.subr.mxu0 0.0
      %373 = vmatpush1.msra.mxu0 0.0
      %374 = vmatprep.subr.mxu0 0.0
      %375 = vmatpush1.msra.mxu0 0.0
      %376 = vmatprep.subr.mxu0 0.0
      %377 = vmatpush1.msra.mxu0 0.0
      %378 = vmatprep.subr.mxu0 0.0
      %379 = vmatpush1.msra.mxu0 0.0
      %380 = vmatprep.subr.mxu0 0.0
      %381 = vmatpush1.msra.mxu0 0.0
      %382 = vmatprep.subr.mxu0 0.0
      %383 = vmatpush1.msra.mxu0 0.0
      %384 = vmatprep.subr.mxu0 0.0
      %385 = vmatpush1.msra.mxu0 0.0
      %386 = vmatprep.subr.mxu0 0.0
      %387 = vmatpush1.msra.mxu0 0.0
      %388 = vmatprep.subr.mxu0 0.0
      %389 = vmatpush1.msra.mxu0 0.0
      %390 = vmatprep.mubr.f32.mxu0 0.0
      %391 = vmatmul.mubr.f32.gmra.mrb[0].mxu0 %v324
      %v392 = vpop.f32.mrb[0].mxu0
      %v393 = vadd.f32 %v320, %v392
      %v394 = vpop.f32.mrb[0].mxu0
      %395 = vdwg.mxu0
      %vm396 = vcmask 39936
      %397 = vst.msk [vmem:[%s219] sm:$0xff] %vm396, %v393
      %p398 = scmp.lt.s32.totalorder %s16, 1
      %s399 = scalar_select %p398, %s16, 1
      %s400 = smul.addr %s399, 8
      %s401 = scalar_lea.vmem %s5, %s400
      // Predicated region
      $region41: #{point_transformer_forward.5} parent=39 // pred_check
        %p402 = pneg %p144
      $region42: #{point_transformer_forward.5} parent=39 // pred_check_branch
        %404 = sbr.rel (%p402) target = $region44
      $region43: #{point_transformer_forward.5} parent=39 // pred_region
        _
      $region44: #{point_transformer_forward.5} parent=39 // pred_fallthru
        _
    $region40: #{point_transformer_forward.5} parent=5 // pred_fallthru
      _
    %p405 = scmp.le.s32.totalorder 2, %s11
    // Predicated region
    $region45: #{point_transformer_forward.5} parent=5 // pred_check
      %p406 = pneg %p405
    $region46: #{point_transformer_forward.5} parent=5 // pred_check_branch
      %408 = sbr.rel (%p406) target = $region48
    $region47: #{point_transformer_forward.5} parent=5 // pred_region
      %s409 = ssub.s32 %s11, 2
      // Predicated region
      $region49: #{point_transformer_forward.5} parent=47 // pred_check
        %p410 = pneg %p150
      $region50: #{point_transformer_forward.5} parent=47 // pred_check_branch
        %412 = sbr.rel (%p410) target = $region52
      $region51: #{point_transformer_forward.5} parent=47 // pred_region
        %p413 = scmp.lt.s32.totalorder %s17, 1
        %s414 = scalar_select %p413, %s17, 1
        %s415 = smul.addr %s414, 8
        %s416 = scalar_lea.vmem %s5, %s415
      $region52: #{point_transformer_forward.5} parent=47 // pred_fallthru
        _
    $region48: #{point_transformer_forward.5} parent=5 // pred_fallthru
      _
  $region6: #{point_transformer_forward.5} parent=0 // loop_footer
    %s15 = sadd.s32 1, %s11
  $region7: #{point_transformer_forward.5} parent=0 // loop_footer_branch
    %10 = sbr.rel target = $region3
  $region8: #{point_transformer_forward.5} parent=0 // loop_exit
    _

// kernel: point_transformer_forward.4
$region0: #{point_transformer_forward.4}
  #allocation0 [shape = 'u32[]', space=smem, size = 0x4, offset = 0x4, fixed_abs, tag = 'smem constant byte address 0x4 - core index']
  #allocation1 [shape = 'u32[144,128]{1,0:T(1,128)}', space=vmem, size = 0x12000, scoped, tag = 'internal scratch']
  %s0 = inlined_call_operand.smem [shape: u32[31], index: -1, kind: input, shape index: {}]
  %s1 = sld [smem:[%s0]]
  %s2 = scalar_lea.smem %s0, 1
  %s3 = sld [smem:[%s2]]
  %s4 = scalar_lea.smem %s0, 2
  %s5 = sld [smem:[%s4]]
  %s6 = scalar_lea.smem %s0, 3
  %s7 = sld [smem:[%s6]]
  %s8 = scalar_lea.smem %s0, 4
  %s9 = sld [smem:[%s8]]
  %s10 = scalar_lea.smem %s0, 5
  %s11 = sld [smem:[%s10]]
  %s12 = scalar_lea.smem %s0, 6
  %s13 = sld [smem:[%s12]]
  %s14 = scalar_lea.smem %s0, 7
  %s15 = sld [smem:[%s14]]
  %s16 = scalar_lea.smem %s0, 8
  %s17 = sld [smem:[%s16]]
  %s18 = scalar_lea.smem %s0, 9
  %s19 = sld [smem:[%s18]]
  %s20 = scalar_lea.smem %s0, 10
  %s21 = sld [smem:[%s20]]
  %s22 = scalar_lea.smem %s0, 11
  %s23 = sld [smem:[%s22]]
  %s24 = scalar_lea.smem %s0, 12
  %s25 = sld [smem:[%s24]]
  %s26 = scalar_lea.smem %s0, 13
  %s27 = sld [smem:[%s26]]
  %s28 = scalar_lea.smem %s0, 14
  %s29 = sld [smem:[%s28]]
  %s30 = scalar_lea.smem %s0, 15
  %s31 = sld [smem:[%s30]]
  %s32 = scalar_lea.smem %s0, 16
  %s33 = sld [smem:[%s32]]
  %s34 = scalar_lea.smem %s0, 17
  %s35 = sld [smem:[%s34]]
  %s36 = scalar_lea.smem %s0, 18
  %s37 = sld [smem:[%s36]]
  %s38 = scalar_lea.smem %s0, 19
  %s39 = sld [smem:[%s38]]
  %s40 = scalar_lea.smem %s0, 20
  %s41 = sld [smem:[%s40]]
  %s42 = scalar_lea.smem %s0, 21
  %s43 = sld [smem:[%s42]]
  %s44 = scalar_lea.smem %s0, 22
  %s45 = sld [smem:[%s44]]
  %s46 = scalar_lea.smem %s0, 23
  %s47 = sld [smem:[%s46]]
  %s48 = scalar_lea.smem %s0, 24
  %s49 = sld [smem:[%s48]]
  %s50 = scalar_lea.smem %s0, 25
  %s51 = sld [smem:[%s50]]
  %s52 = scalar_lea.smem %s0, 26
  %s53 = sld [smem:[%s52]]
  %s54 = scalar_lea.smem %s0, 27
  %s55 = sld [smem:[%s54]]
  %s56 = scalar_lea.smem %s0, 28
  %s57 = sld [smem:[%s56]]
  %s58 = scalar_lea.smem %s0, 29
  %s59 = sld [smem:[%s58]]
  %s60 = scalar_lea.smem %s0, 30
  %s61 = sld [smem:[%s60]]
  %s62 = sld [smem:[#allocation0]]
  $region153: #{point_transformer_forward.4} parent=0
    _
  %s64 = ssub.s32 1, %s62
  %s65 = scalar_select 0, %s64, %s62
  loop: start=0, step=1, limit=4
  $region2: #{point_transformer_forward.4} parent=0 // loop_pre_header
    _
  $region3: #{point_transformer_forward.4} parent=0 // loop_header
    %s67 = sphi 0, %s71
    %p68 = scmp.ge.s32.totalorder %s67, 4
    %s77 = sphi 0, %s79
    %s80 = sphi 0, %s77
    %s81 = sphi 0, %s80
    %s97 = sphi 0, %s81
    %s103 = sphi 0, %s105
    %s106 = sphi 0, %s103
    %s107 = sphi 0, %s106
    %s123 = sphi 0, %s107
    %s129 = sphi 0, %s131
    %s132 = sphi 0, %s129
    %s133 = sphi 0, %s132
    %s149 = sphi 0, %s133
    %s155 = sphi 0, %s157
    %s158 = sphi 0, %s155
    %s159 = sphi 0, %s158
    %s175 = sphi 0, %s159
    %s179 = sphi 0, %s179
    %s181 = sphi 0, %s179
    %s182 = sphi 0, %s181
    %s196 = sphi 0, %s182
    %s200 = sphi 0, %s200
    %s202 = sphi 0, %s200
    %s203 = sphi 0, %s202
    %s217 = sphi 0, %s203
    %s221 = sphi 0, %s221
    %s223 = sphi 0, %s221
    %s224 = sphi 0, %s223
    %s238 = sphi 0, %s224
    %s242 = sphi 0, %s242
    %s244 = sphi 0, %s242
    %s245 = sphi 0, %s244
    %s259 = sphi 0, %s245
    %s263 = sphi 0, %s263
    %s265 = sphi 0, %s263
    %s266 = sphi 0, %s265
    %s280 = sphi 0, %s266
    %s284 = sphi 0, %s284
    %s286 = sphi 0, %s284
    %s287 = sphi 0, %s286
    %s301 = sphi 0, %s287
    %s305 = sphi 0, %s305
    %s307 = sphi 0, %s305
    %s308 = sphi 0, %s307
    %s322 = sphi 0, %s308
    %s326 = sphi 0, %s326
    %s328 = sphi 0, %s326
    %s329 = sphi 0, %s328
    %s343 = sphi 0, %s329
    %s347 = sphi 0, %s347
    %s349 = sphi 0, %s347
    %s350 = sphi 0, %s349
    %s364 = sphi 0, %s350
    %s368 = sphi 0, %s368
    %s370 = sphi 0, %s368
    %s371 = sphi 0, %s370
    %s385 = sphi 0, %s371
    %s389 = sphi 0, %s389
    %s391 = sphi 0, %s389
    %s392 = sphi 0, %s391
    %s406 = sphi 0, %s392
    %s410 = sphi 0, %s410
    %s412 = sphi 0, %s410
    %s413 = sphi 0, %s412
    %s427 = sphi 0, %s413
    %s431 = sphi 0, %s431
    %s433 = sphi 0, %s431
    %s434 = sphi 0, %s433
    %s448 = sphi 0, %s434
    %s452 = sphi 0, %s452
    %s454 = sphi 0, %s452
    %s455 = sphi 0, %s454
    %s469 = sphi 0, %s455
    %s473 = sphi 0, %s473
    %s475 = sphi 0, %s473
    %s476 = sphi 0, %s475
    %s490 = sphi 0, %s476
    %s494 = sphi 0, %s494
    %s496 = sphi 0, %s494
    %s497 = sphi 0, %s496
    %s511 = sphi 0, %s497
    %s515 = sphi 0, %s515
    %s517 = sphi 0, %s515
    %s518 = sphi 0, %s517
    %s532 = sphi 0, %s518
    %s536 = sphi 0, %s536
    %s538 = sphi 0, %s536
    %s539 = sphi 0, %s538
    %s553 = sphi 0, %s539
    %s557 = sphi 0, %s557
    %s559 = sphi 0, %s557
    %s560 = sphi 0, %s559
    %s574 = sphi 0, %s560
    %s578 = sphi 0, %s578
    %s580 = sphi 0, %s578
    %s581 = sphi 0, %s580
    %s595 = sphi 0, %s581
    %s599 = sphi 0, %s599
    %s601 = sphi 0, %s599
    %s602 = sphi 0, %s601
    %s616 = sphi 0, %s602
    %s620 = sphi 0, %s620
    %s622 = sphi 0, %s620
    %s623 = sphi 0, %s622
    %s637 = sphi 0, %s623
    %s641 = sphi 0, %s641
    %s643 = sphi 0, %s641
    %s644 = sphi 0, %s643
    %s658 = sphi 0, %s644
    %s662 = sphi 0, %s662
    %s664 = sphi 0, %s662
    %s665 = sphi 0, %s664
    %s679 = sphi 0, %s665
    %s683 = sphi 0, %s683
    %s685 = sphi 0, %s683
    %s686 = sphi 0, %s685
    %s700 = sphi 0, %s686
    %s704 = sphi 0, %s704
    %s706 = sphi 0, %s704
    %s707 = sphi 0, %s706
    %s721 = sphi 0, %s707
    %s727 = sphi 0, %s729
    %s730 = sphi 0, %s727
    %s731 = sphi 0, %s730
    %s747 = sphi 0, %s731
  $region4: #{point_transformer_forward.4} parent=0 // loop_header_branch
    %70 = sbr.rel (%p68) target = $region8
  $region5: #{point_transformer_forward.4} parent=0 // loop_body
    %s72 = ssub.s32 %s67, 1
    %s73 = ssub.s32 %s67, 2
    %s74 = sadd.s32 %s67, 1
    %s75 = ssub.s32 %s67, %s74
    %p76 = scmp.eq.s32.totalorder %s75, 0
    %s78 = sadd.s32 %s77, 1
    %s79 = scalar_select %p76, %s77, %s78
    %p82 = pneg %p76
    %p83 = scmp.eq.s32.totalorder %s67, 1
    %p84 = por %p82, %p83
    %p85 = scmp.ne.s32.totalorder %s77, %s80
    %p86 = scmp.eq.s32.totalorder %s67, 0
    %p87 = por %p85, %p86
    %p88 = scmp.ne.s32.totalorder %s77, %s80
    %p89 = scmp.eq.s32.totalorder %s72, 1
    %p90 = por %p88, %p89
    %p91 = scmp.ne.s32.totalorder %s80, %s81
    %p92 = scmp.eq.s32.totalorder %s72, 0
    %p93 = por %p91, %p92
    %p94 = scmp.ne.s32.totalorder %s80, %s81
    %p95 = scmp.eq.s32.totalorder %s73, 1
    %p96 = por %p94, %p95
    %p98 = scmp.ne.s32.totalorder %s81, %s97
    %p99 = scmp.eq.s32.totalorder %s73, 0
    %p100 = por %p98, %p99
    %s101 = ssub.s32 %s67, %s74
    %p102 = scmp.eq.s32.totalorder %s101, 0
    %s104 = sadd.s32 %s103, 1
    %s105 = scalar_select %p102, %s103, %s104
    %p108 = pneg %p102
    %p109 = scmp.eq.s32.totalorder %s67, 1
    %p110 = por %p108, %p109
    %p111 = scmp.ne.s32.totalorder %s103, %s106
    %p112 = scmp.eq.s32.totalorder %s67, 0
    %p113 = por %p111, %p112
    %p114 = scmp.ne.s32.totalorder %s103, %s106
    %p115 = scmp.eq.s32.totalorder %s72, 1
    %p116 = por %p114, %p115
    %p117 = scmp.ne.s32.totalorder %s106, %s107
    %p118 = scmp.eq.s32.totalorder %s72, 0
    %p119 = por %p117, %p118
    %p120 = scmp.ne.s32.totalorder %s106, %s107
    %p121 = scmp.eq.s32.totalorder %s73, 1
    %p122 = por %p120, %p121
    %p124 = scmp.ne.s32.totalorder %s107, %s123
    %p125 = scmp.eq.s32.totalorder %s73, 0
    %p126 = por %p124, %p125
    %s127 = ssub.s32 %s67, %s74
    %p128 = scmp.eq.s32.totalorder %s127, 0
    %s130 = sadd.s32 %s129, 1
    %s131 = scalar_select %p128, %s129, %s130
    %p134 = pneg %p128
    %p135 = scmp.eq.s32.totalorder %s67, 1
    %p136 = por %p134, %p135
    %p137 = scmp.ne.s32.totalorder %s129, %s132
    %p138 = scmp.eq.s32.totalorder %s67, 0
    %p139 = por %p137, %p138
    %p140 = scmp.ne.s32.totalorder %s129, %s132
    %p141 = scmp.eq.s32.totalorder %s72, 1
    %p142 = por %p140, %p141
    %p143 = scmp.ne.s32.totalorder %s132, %s133
    %p144 = scmp.eq.s32.totalorder %s72, 0
    %p145 = por %p143, %p144
    %p146 = scmp.ne.s32.totalorder %s132, %s133
    %p147 = scmp.eq.s32.totalorder %s73, 1
    %p148 = por %p146, %p147
    %p150 = scmp.ne.s32.totalorder %s133, %s149
    %p151 = scmp.eq.s32.totalorder %s73, 0
    %p152 = por %p150, %p151
    %s153 = ssub.s32 %s67, %s74
    %p154 = scmp.eq.s32.totalorder %s153, 0
    %s156 = sadd.s32 %s155, 1
    %s157 = scalar_select %p154, %s155, %s156
    %p160 = pneg %p154
    %p161 = scmp.eq.s32.totalorder %s67, 1
    %p162 = por %p160, %p161
    %p163 = scmp.ne.s32.totalorder %s155, %s158
    %p164 = scmp.eq.s32.totalorder %s67, 0
    %p165 = por %p163, %p164
    %p166 = scmp.ne.s32.totalorder %s155, %s158
    %p167 = scmp.eq.s32.totalorder %s72, 1
    %p168 = por %p166, %p167
    %p169 = scmp.ne.s32.totalorder %s158, %s159
    %p170 = scmp.eq.s32.totalorder %s72, 0
    %p171 = por %p169, %p170
    %p172 = scmp.ne.s32.totalorder %s158, %s159
    %p173 = scmp.eq.s32.totalorder %s73, 1
    %p174 = por %p172, %p173
    %p176 = scmp.ne.s32.totalorder %s159, %s175
    %p177 = scmp.eq.s32.totalorder %s73, 0
    %p178 = por %p176, %p177
    %s180 = sadd.s32 %s179, 1
    %p183 = scmp.eq.s32.totalorder %s67, 1
    %p184 = scmp.ne.s32.totalorder %s179, %s181
    %p185 = scmp.eq.s32.totalorder %s67, 0
    %p186 = por %p184, %p185
    %p187 = scmp.ne.s32.totalorder %s179, %s181
    %p188 = scmp.eq.s32.totalorder %s72, 1
    %p189 = por %p187, %p188
    %p190 = scmp.ne.s32.totalorder %s181, %s182
    %p191 = scmp.eq.s32.totalorder %s72, 0
    %p192 = por %p190, %p191
    %p193 = scmp.ne.s32.totalorder %s181, %s182
    %p194 = scmp.eq.s32.totalorder %s73, 1
    %p195 = por %p193, %p194
    %p197 = scmp.ne.s32.totalorder %s182, %s196
    %p198 = scmp.eq.s32.totalorder %s73, 0
    %p199 = por %p197, %p198
    %s201 = sadd.s32 %s200, 1
    %p204 = scmp.eq.s32.totalorder %s67, 1
    %p205 = scmp.ne.s32.totalorder %s200, %s202
    %p206 = scmp.eq.s32.totalorder %s67, 0
    %p207 = por %p205, %p206
    %p208 = scmp.ne.s32.totalorder %s200, %s202
    %p209 = scmp.eq.s32.totalorder %s72, 1
    %p210 = por %p208, %p209
    %p211 = scmp.ne.s32.totalorder %s202, %s203
    %p212 = scmp.eq.s32.totalorder %s72, 0
    %p213 = por %p211, %p212
    %p214 = scmp.ne.s32.totalorder %s202, %s203
    %p215 = scmp.eq.s32.totalorder %s73, 1
    %p216 = por %p214, %p215
    %p218 = scmp.ne.s32.totalorder %s203, %s217
    %p219 = scmp.eq.s32.totalorder %s73, 0
    %p220 = por %p218, %p219
    %s222 = sadd.s32 %s221, 1
    %p225 = scmp.eq.s32.totalorder %s67, 1
    %p226 = scmp.ne.s32.totalorder %s221, %s223
    %p227 = scmp.eq.s32.totalorder %s67, 0
    %p228 = por %p226, %p227
    %p229 = scmp.ne.s32.totalorder %s221, %s223
    %p230 = scmp.eq.s32.totalorder %s72, 1
    %p231 = por %p229, %p230
    %p232 = scmp.ne.s32.totalorder %s223, %s224
    %p233 = scmp.eq.s32.totalorder %s72, 0
    %p234 = por %p232, %p233
    %p235 = scmp.ne.s32.totalorder %s223, %s224
    %p236 = scmp.eq.s32.totalorder %s73, 1
    %p237 = por %p235, %p236
    %p239 = scmp.ne.s32.totalorder %s224, %s238
    %p240 = scmp.eq.s32.totalorder %s73, 0
    %p241 = por %p239, %p240
    %s243 = sadd.s32 %s242, 1
    %p246 = scmp.eq.s32.totalorder %s67, 1
    %p247 = scmp.ne.s32.totalorder %s242, %s244
    %p248 = scmp.eq.s32.totalorder %s67, 0
    %p249 = por %p247, %p248
    %p250 = scmp.ne.s32.totalorder %s242, %s244
    %p251 = scmp.eq.s32.totalorder %s72, 1
    %p252 = por %p250, %p251
    %p253 = scmp.ne.s32.totalorder %s244, %s245
    %p254 = scmp.eq.s32.totalorder %s72, 0
    %p255 = por %p253, %p254
    %p256 = scmp.ne.s32.totalorder %s244, %s245
    %p257 = scmp.eq.s32.totalorder %s73, 1
    %p258 = por %p256, %p257
    %p260 = scmp.ne.s32.totalorder %s245, %s259
    %p261 = scmp.eq.s32.totalorder %s73, 0
    %p262 = por %p260, %p261
    %s264 = sadd.s32 %s263, 1
    %p267 = scmp.eq.s32.totalorder %s67, 1
    %p268 = scmp.ne.s32.totalorder %s263, %s265
    %p269 = scmp.eq.s32.totalorder %s67, 0
    %p270 = por %p268, %p269
    %p271 = scmp.ne.s32.totalorder %s263, %s265
    %p272 = scmp.eq.s32.totalorder %s72, 1
    %p273 = por %p271, %p272
    %p274 = scmp.ne.s32.totalorder %s265, %s266
    %p275 = scmp.eq.s32.totalorder %s72, 0
    %p276 = por %p274, %p275
    %p277 = scmp.ne.s32.totalorder %s265, %s266
    %p278 = scmp.eq.s32.totalorder %s73, 1
    %p279 = por %p277, %p278
    %p281 = scmp.ne.s32.totalorder %s266, %s280
    %p282 = scmp.eq.s32.totalorder %s73, 0
    %p283 = por %p281, %p282
    %s285 = sadd.s32 %s284, 1
    %p288 = scmp.eq.s32.totalorder %s67, 1
    %p289 = scmp.ne.s32.totalorder %s284, %s286
    %p290 = scmp.eq.s32.totalorder %s67, 0
    %p291 = por %p289, %p290
    %p292 = scmp.ne.s32.totalorder %s284, %s286
    %p293 = scmp.eq.s32.totalorder %s72, 1
    %p294 = por %p292, %p293
    %p295 = scmp.ne.s32.totalorder %s286, %s287
    %p296 = scmp.eq.s32.totalorder %s72, 0
    %p297 = por %p295, %p296
    %p298 = scmp.ne.s32.totalorder %s286, %s287
    %p299 = scmp.eq.s32.totalorder %s73, 1
    %p300 = por %p298, %p299
    %p302 = scmp.ne.s32.totalorder %s287, %s301
    %p303 = scmp.eq.s32.totalorder %s73, 0
    %p304 = por %p302, %p303
    %s306 = sadd.s32 %s305, 1
    %p309 = scmp.eq.s32.totalorder %s67, 1
    %p310 = scmp.ne.s32.totalorder %s305, %s307
    %p311 = scmp.eq.s32.totalorder %s67, 0
    %p312 = por %p310, %p311
    %p313 = scmp.ne.s32.totalorder %s305, %s307
    %p314 = scmp.eq.s32.totalorder %s72, 1
    %p315 = por %p313, %p314
    %p316 = scmp.ne.s32.totalorder %s307, %s308
    %p317 = scmp.eq.s32.totalorder %s72, 0
    %p318 = por %p316, %p317
    %p319 = scmp.ne.s32.totalorder %s307, %s308
    %p320 = scmp.eq.s32.totalorder %s73, 1
    %p321 = por %p319, %p320
    %p323 = scmp.ne.s32.totalorder %s308, %s322
    %p324 = scmp.eq.s32.totalorder %s73, 0
    %p325 = por %p323, %p324
    %s327 = sadd.s32 %s326, 1
    %p330 = scmp.eq.s32.totalorder %s67, 1
    %p331 = scmp.ne.s32.totalorder %s326, %s328
    %p332 = scmp.eq.s32.totalorder %s67, 0
    %p333 = por %p331, %p332
    %p334 = scmp.ne.s32.totalorder %s326, %s328
    %p335 = scmp.eq.s32.totalorder %s72, 1
    %p336 = por %p334, %p335
    %p337 = scmp.ne.s32.totalorder %s328, %s329
    %p338 = scmp.eq.s32.totalorder %s72, 0
    %p339 = por %p337, %p338
    %p340 = scmp.ne.s32.totalorder %s328, %s329
    %p341 = scmp.eq.s32.totalorder %s73, 1
    %p342 = por %p340, %p341
    %p344 = scmp.ne.s32.totalorder %s329, %s343
    %p345 = scmp.eq.s32.totalorder %s73, 0
    %p346 = por %p344, %p345
    %s348 = sadd.s32 %s347, 1
    %p351 = scmp.eq.s32.totalorder %s67, 1
    %p352 = scmp.ne.s32.totalorder %s347, %s349
    %p353 = scmp.eq.s32.totalorder %s67, 0
    %p354 = por %p352, %p353
    %p355 = scmp.ne.s32.totalorder %s347, %s349
    %p356 = scmp.eq.s32.totalorder %s72, 1
    %p357 = por %p355, %p356
    %p358 = scmp.ne.s32.totalorder %s349, %s350
    %p359 = scmp.eq.s32.totalorder %s72, 0
    %p360 = por %p358, %p359
    %p361 = scmp.ne.s32.totalorder %s349, %s350
    %p362 = scmp.eq.s32.totalorder %s73, 1
    %p363 = por %p361, %p362
    %p365 = scmp.ne.s32.totalorder %s350, %s364
    %p366 = scmp.eq.s32.totalorder %s73, 0
    %p367 = por %p365, %p366
    %s369 = sadd.s32 %s368, 1
    %p372 = scmp.eq.s32.totalorder %s67, 1
    %p373 = scmp.ne.s32.totalorder %s368, %s370
    %p374 = scmp.eq.s32.totalorder %s67, 0
    %p375 = por %p373, %p374
    %p376 = scmp.ne.s32.totalorder %s368, %s370
    %p377 = scmp.eq.s32.totalorder %s72, 1
    %p378 = por %p376, %p377
    %p379 = scmp.ne.s32.totalorder %s370, %s371
    %p380 = scmp.eq.s32.totalorder %s72, 0
    %p381 = por %p379, %p380
    %p382 = scmp.ne.s32.totalorder %s370, %s371
    %p383 = scmp.eq.s32.totalorder %s73, 1
    %p384 = por %p382, %p383
    %p386 = scmp.ne.s32.totalorder %s371, %s385
    %p387 = scmp.eq.s32.totalorder %s73, 0
    %p388 = por %p386, %p387
    %s390 = sadd.s32 %s389, 1
    %p393 = scmp.eq.s32.totalorder %s67, 1
    %p394 = scmp.ne.s32.totalorder %s389, %s391
    %p395 = scmp.eq.s32.totalorder %s67, 0
    %p396 = por %p394, %p395
    %p397 = scmp.ne.s32.totalorder %s389, %s391
    %p398 = scmp.eq.s32.totalorder %s72, 1
    %p399 = por %p397, %p398
    %p400 = scmp.ne.s32.totalorder %s391, %s392
    %p401 = scmp.eq.s32.totalorder %s72, 0
    %p402 = por %p400, %p401
    %p403 = scmp.ne.s32.totalorder %s391, %s392
    %p404 = scmp.eq.s32.totalorder %s73, 1
    %p405 = por %p403, %p404
    %p407 = scmp.ne.s32.totalorder %s392, %s406
    %p408 = scmp.eq.s32.totalorder %s73, 0
    %p409 = por %p407, %p408
    %s411 = sadd.s32 %s410, 1
    %p414 = scmp.eq.s32.totalorder %s67, 1
    %p415 = scmp.ne.s32.totalorder %s410, %s412
    %p416 = scmp.eq.s32.totalorder %s67, 0
    %p417 = por %p415, %p416
    %p418 = scmp.ne.s32.totalorder %s410, %s412
    %p419 = scmp.eq.s32.totalorder %s72, 1
    %p420 = por %p418, %p419
    %p421 = scmp.ne.s32.totalorder %s412, %s413
    %p422 = scmp.eq.s32.totalorder %s72, 0
    %p423 = por %p421, %p422
    %p424 = scmp.ne.s32.totalorder %s412, %s413
    %p425 = scmp.eq.s32.totalorder %s73, 1
    %p426 = por %p424, %p425
    %p428 = scmp.ne.s32.totalorder %s413, %s427
    %p429 = scmp.eq.s32.totalorder %s73, 0
    %p430 = por %p428, %p429
    %s432 = sadd.s32 %s431, 1
    %p435 = scmp.eq.s32.totalorder %s67, 1
    %p436 = scmp.ne.s32.totalorder %s431, %s433
    %p437 = scmp.eq.s32.totalorder %s67, 0
    %p438 = por %p436, %p437
    %p439 = scmp.ne.s32.totalorder %s431, %s433
    %p440 = scmp.eq.s32.totalorder %s72, 1
    %p441 = por %p439, %p440
    %p442 = scmp.ne.s32.totalorder %s433, %s434
    %p443 = scmp.eq.s32.totalorder %s72, 0
    %p444 = por %p442, %p443
    %p445 = scmp.ne.s32.totalorder %s433, %s434
    %p446 = scmp.eq.s32.totalorder %s73, 1
    %p447 = por %p445, %p446
    %p449 = scmp.ne.s32.totalorder %s434, %s448
    %p450 = scmp.eq.s32.totalorder %s73, 0
    %p451 = por %p449, %p450
    %s453 = sadd.s32 %s452, 1
    %p456 = scmp.eq.s32.totalorder %s67, 1
    %p457 = scmp.ne.s32.totalorder %s452, %s454
    %p458 = scmp.eq.s32.totalorder %s67, 0
    %p459 = por %p457, %p458
    %p460 = scmp.ne.s32.totalorder %s452, %s454
    %p461 = scmp.eq.s32.totalorder %s72, 1
    %p462 = por %p460, %p461
    %p463 = scmp.ne.s32.totalorder %s454, %s455
    %p464 = scmp.eq.s32.totalorder %s72, 0
    %p465 = por %p463, %p464
    %p466 = scmp.ne.s32.totalorder %s454, %s455
    %p467 = scmp.eq.s32.totalorder %s73, 1
    %p468 = por %p466, %p467
    %p470 = scmp.ne.s32.totalorder %s455, %s469
    %p471 = scmp.eq.s32.totalorder %s73, 0
    %p472 = por %p470, %p471
    %s474 = sadd.s32 %s473, 1
    %p477 = scmp.eq.s32.totalorder %s67, 1
    %p478 = scmp.ne.s32.totalorder %s473, %s475
    %p479 = scmp.eq.s32.totalorder %s67, 0
    %p480 = por %p478, %p479
    %p481 = scmp.ne.s32.totalorder %s473, %s475
    %p482 = scmp.eq.s32.totalorder %s72, 1
    %p483 = por %p481, %p482
    %p484 = scmp.ne.s32.totalorder %s475, %s476
    %p485 = scmp.eq.s32.totalorder %s72, 0
    %p486 = por %p484, %p485
    %p487 = scmp.ne.s32.totalorder %s475, %s476
    %p488 = scmp.eq.s32.totalorder %s73, 1
    %p489 = por %p487, %p488
    %p491 = scmp.ne.s32.totalorder %s476, %s490
    %p492 = scmp.eq.s32.totalorder %s73, 0
    %p493 = por %p491, %p492
    %s495 = sadd.s32 %s494, 1
    %p498 = scmp.eq.s32.totalorder %s67, 1
    %p499 = scmp.ne.s32.totalorder %s494, %s496
    %p500 = scmp.eq.s32.totalorder %s67, 0
    %p501 = por %p499, %p500
    %p502 = scmp.ne.s32.totalorder %s494, %s496
    %p503 = scmp.eq.s32.totalorder %s72, 1
    %p504 = por %p502, %p503
    %p505 = scmp.ne.s32.totalorder %s496, %s497
    %p506 = scmp.eq.s32.totalorder %s72, 0
    %p507 = por %p505, %p506
    %p508 = scmp.ne.s32.totalorder %s496, %s497
    %p509 = scmp.eq.s32.totalorder %s73, 1
    %p510 = por %p508, %p509
    %p512 = scmp.ne.s32.totalorder %s497, %s511
    %p513 = scmp.eq.s32.totalorder %s73, 0
    %p514 = por %p512, %p513
    %s516 = sadd.s32 %s515, 1
    %p519 = scmp.eq.s32.totalorder %s67, 1
    %p520 = scmp.ne.s32.totalorder %s515, %s517
    %p521 = scmp.eq.s32.totalorder %s67, 0
    %p522 = por %p520, %p521
    %p523 = scmp.ne.s32.totalorder %s515, %s517
    %p524 = scmp.eq.s32.totalorder %s72, 1
    %p525 = por %p523, %p524
    %p526 = scmp.ne.s32.totalorder %s517, %s518
    %p527 = scmp.eq.s32.totalorder %s72, 0
    %p528 = por %p526, %p527
    %p529 = scmp.ne.s32.totalorder %s517, %s518
    %p530 = scmp.eq.s32.totalorder %s73, 1
    %p531 = por %p529, %p530
    %p533 = scmp.ne.s32.totalorder %s518, %s532
    %p534 = scmp.eq.s32.totalorder %s73, 0
    %p535 = por %p533, %p534
    %s537 = sadd.s32 %s536, 1
    %p540 = scmp.eq.s32.totalorder %s67, 1
    %p541 = scmp.ne.s32.totalorder %s536, %s538
    %p542 = scmp.eq.s32.totalorder %s67, 0
    %p543 = por %p541, %p542
    %p544 = scmp.ne.s32.totalorder %s536, %s538
    %p545 = scmp.eq.s32.totalorder %s72, 1
    %p546 = por %p544, %p545
    %p547 = scmp.ne.s32.totalorder %s538, %s539
    %p548 = scmp.eq.s32.totalorder %s72, 0
    %p549 = por %p547, %p548
    %p550 = scmp.ne.s32.totalorder %s538, %s539
    %p551 = scmp.eq.s32.totalorder %s73, 1
    %p552 = por %p550, %p551
    %p554 = scmp.ne.s32.totalorder %s539, %s553
    %p555 = scmp.eq.s32.totalorder %s73, 0
    %p556 = por %p554, %p555
    %s558 = sadd.s32 %s557, 1
    %p561 = scmp.eq.s32.totalorder %s67, 1
    %p562 = scmp.ne.s32.totalorder %s557, %s559
    %p563 = scmp.eq.s32.totalorder %s67, 0
    %p564 = por %p562, %p563
    %p565 = scmp.ne.s32.totalorder %s557, %s559
    %p566 = scmp.eq.s32.totalorder %s72, 1
    %p567 = por %p565, %p566
    %p568 = scmp.ne.s32.totalorder %s559, %s560
    %p569 = scmp.eq.s32.totalorder %s72, 0
    %p570 = por %p568, %p569
    %p571 = scmp.ne.s32.totalorder %s559, %s560
    %p572 = scmp.eq.s32.totalorder %s73, 1
    %p573 = por %p571, %p572
    %p575 = scmp.ne.s32.totalorder %s560, %s574
    %p576 = scmp.eq.s32.totalorder %s73, 0
    %p577 = por %p575, %p576
    %s579 = sadd.s32 %s578, 1
    %p582 = scmp.eq.s32.totalorder %s67, 1
    %p583 = scmp.ne.s32.totalorder %s578, %s580
    %p584 = scmp.eq.s32.totalorder %s67, 0
    %p585 = por %p583, %p584
    %p586 = scmp.ne.s32.totalorder %s578, %s580
    %p587 = scmp.eq.s32.totalorder %s72, 1
    %p588 = por %p586, %p587
    %p589 = scmp.ne.s32.totalorder %s580, %s581
    %p590 = scmp.eq.s32.totalorder %s72, 0
    %p591 = por %p589, %p590
    %p592 = scmp.ne.s32.totalorder %s580, %s581
    %p593 = scmp.eq.s32.totalorder %s73, 1
    %p594 = por %p592, %p593
    %p596 = scmp.ne.s32.totalorder %s581, %s595
    %p597 = scmp.eq.s32.totalorder %s73, 0
    %p598 = por %p596, %p597
    %s600 = sadd.s32 %s599, 1
    %p603 = scmp.eq.s32.totalorder %s67, 1
    %p604 = scmp.ne.s32.totalorder %s599, %s601
    %p605 = scmp.eq.s32.totalorder %s67, 0
    %p606 = por %p604, %p605
    %p607 = scmp.ne.s32.totalorder %s599, %s601
    %p608 = scmp.eq.s32.totalorder %s72, 1
    %p609 = por %p607, %p608
    %p610 = scmp.ne.s32.totalorder %s601, %s602
    %p611 = scmp.eq.s32.totalorder %s72, 0
    %p612 = por %p610, %p611
    %p613 = scmp.ne.s32.totalorder %s601, %s602
    %p614 = scmp.eq.s32.totalorder %s73, 1
    %p615 = por %p613, %p614
    %p617 = scmp.ne.s32.totalorder %s602, %s616
    %p618 = scmp.eq.s32.totalorder %s73, 0
    %p619 = por %p617, %p618
    %s621 = sadd.s32 %s620, 1
    %p624 = scmp.eq.s32.totalorder %s67, 1
    %p625 = scmp.ne.s32.totalorder %s620, %s622
    %p626 = scmp.eq.s32.totalorder %s67, 0
    %p627 = por %p625, %p626
    %p628 = scmp.ne.s32.totalorder %s620, %s622
    %p629 = scmp.eq.s32.totalorder %s72, 1
    %p630 = por %p628, %p629
    %p631 = scmp.ne.s32.totalorder %s622, %s623
    %p632 = scmp.eq.s32.totalorder %s72, 0
    %p633 = por %p631, %p632
    %p634 = scmp.ne.s32.totalorder %s622, %s623
    %p635 = scmp.eq.s32.totalorder %s73, 1
    %p636 = por %p634, %p635
    %p638 = scmp.ne.s32.totalorder %s623, %s637
    %p639 = scmp.eq.s32.totalorder %s73, 0
    %p640 = por %p638, %p639
    %s642 = sadd.s32 %s641, 1
    %p645 = scmp.eq.s32.totalorder %s67, 1
    %p646 = scmp.ne.s32.totalorder %s641, %s643
    %p647 = scmp.eq.s32.totalorder %s67, 0
    %p648 = por %p646, %p647
    %p649 = scmp.ne.s32.totalorder %s641, %s643
    %p650 = scmp.eq.s32.totalorder %s72, 1
    %p651 = por %p649, %p650
    %p652 = scmp.ne.s32.totalorder %s643, %s644
    %p653 = scmp.eq.s32.totalorder %s72, 0
    %p654 = por %p652, %p653
    %p655 = scmp.ne.s32.totalorder %s643, %s644
    %p656 = scmp.eq.s32.totalorder %s73, 1
    %p657 = por %p655, %p656
    %p659 = scmp.ne.s32.totalorder %s644, %s658
    %p660 = scmp.eq.s32.totalorder %s73, 0
    %p661 = por %p659, %p660
    %s663 = sadd.s32 %s662, 1
    %p666 = scmp.eq.s32.totalorder %s67, 1
    %p667 = scmp.ne.s32.totalorder %s662, %s664
    %p668 = scmp.eq.s32.totalorder %s67, 0
    %p669 = por %p667, %p668
    %p670 = scmp.ne.s32.totalorder %s662, %s664
    %p671 = scmp.eq.s32.totalorder %s72, 1
    %p672 = por %p670, %p671
    %p673 = scmp.ne.s32.totalorder %s664, %s665
    %p674 = scmp.eq.s32.totalorder %s72, 0
    %p675 = por %p673, %p674
    %p676 = scmp.ne.s32.totalorder %s664, %s665
    %p677 = scmp.eq.s32.totalorder %s73, 1
    %p678 = por %p676, %p677
    %p680 = scmp.ne.s32.totalorder %s665, %s679
    %p681 = scmp.eq.s32.totalorder %s73, 0
    %p682 = por %p680, %p681
    %s684 = sadd.s32 %s683, 1
    %p687 = scmp.eq.s32.totalorder %s67, 1
    %p688 = scmp.ne.s32.totalorder %s683, %s685
    %p689 = scmp.eq.s32.totalorder %s67, 0
    %p690 = por %p688, %p689
    %p691 = scmp.ne.s32.totalorder %s683, %s685
    %p692 = scmp.eq.s32.totalorder %s72, 1
    %p693 = por %p691, %p692
    %p694 = scmp.ne.s32.totalorder %s685, %s686
    %p695 = scmp.eq.s32.totalorder %s72, 0
    %p696 = por %p694, %p695
    %p697 = scmp.ne.s32.totalorder %s685, %s686
    %p698 = scmp.eq.s32.totalorder %s73, 1
    %p699 = por %p697, %p698
    %p701 = scmp.ne.s32.totalorder %s686, %s700
    %p702 = scmp.eq.s32.totalorder %s73, 0
    %p703 = por %p701, %p702
    %s705 = sadd.s32 %s704, 1
    %p708 = scmp.eq.s32.totalorder %s67, 1
    %p709 = scmp.ne.s32.totalorder %s704, %s706
    %p710 = scmp.eq.s32.totalorder %s67, 0
    %p711 = por %p709, %p710
    %p712 = scmp.ne.s32.totalorder %s704, %s706
    %p713 = scmp.eq.s32.totalorder %s72, 1
    %p714 = por %p712, %p713
    %p715 = scmp.ne.s32.totalorder %s706, %s707
    %p716 = scmp.eq.s32.totalorder %s72, 0
    %p717 = por %p715, %p716
    %p718 = scmp.ne.s32.totalorder %s706, %s707
    %p719 = scmp.eq.s32.totalorder %s73, 1
    %p720 = por %p718, %p719
    %p722 = scmp.ne.s32.totalorder %s707, %s721
    %p723 = scmp.eq.s32.totalorder %s73, 0
    %p724 = por %p722, %p723
    %s725 = ssub.s32 %s67, %s74
    %p726 = scmp.eq.s32.totalorder %s725, 0
    %s728 = sadd.s32 %s727, 1
    %s729 = scalar_select %p726, %s727, %s728
    %p732 = pneg %p726
    %p733 = scmp.eq.s32.totalorder %s67, 1
    %p734 = por %p732, %p733
    %p735 = scmp.ne.s32.totalorder %s727, %s730
    %p736 = scmp.eq.s32.totalorder %s67, 0
    %p737 = por %p735, %p736
    %p738 = scmp.ne.s32.totalorder %s727, %s730
    %p739 = scmp.eq.s32.totalorder %s72, 1
    %p740 = por %p738, %p739
    %p741 = scmp.ne.s32.totalorder %s730, %s731
    %p742 = scmp.eq.s32.totalorder %s72, 0
    %p743 = por %p741, %p742
    %p744 = scmp.ne.s32.totalorder %s730, %s731
    %p745 = scmp.eq.s32.totalorder %s73, 1
    %p746 = por %p744, %p745
    %p748 = scmp.ne.s32.totalorder %s731, %s747
    %p749 = scmp.eq.s32.totalorder %s73, 0
    %p750 = por %p748, %p749
    %p751 = scmp.le.s32.totalorder 1, %s67
    %p752 = scmp.lt.s32.totalorder %s67, 3
    %p753 = pnand %p751, %p752
    %p754 = pneg %p753
    // Predicated region
    $region9: #{point_transformer_forward.4} parent=5 // pred_check
      _
    $region10: #{point_transformer_forward.4} parent=5 // pred_check_branch
      %756 = sbr.rel (%p753) target = $region12
    $region11: #{point_transformer_forward.4} parent=5 // pred_region
      %s757 = ssub.s32 %s67, 1
      // Predicated region
      $region13: #{point_transformer_forward.4} parent=11 // pred_check
        %p758 = pneg %p192
      $region14: #{point_transformer_forward.4} parent=11 // pred_check_branch
        %760 = sbr.rel (%p758) target = $region16
      $region15: #{point_transformer_forward.4} parent=11 // pred_region
        _
      $region16: #{point_transformer_forward.4} parent=11 // pred_fallthru
        _
      // Predicated region
      $region17: #{point_transformer_forward.4} parent=11 // pred_check
        %p761 = pneg %p213
      $region18: #{point_transformer_forward.4} parent=11 // pred_check_branch
        %763 = sbr.rel (%p761) target = $region20
      $region19: #{point_transformer_forward.4} parent=11 // pred_region
        _
      $region20: #{point_transformer_forward.4} parent=11 // pred_fallthru
        _
      // Predicated region
      $region21: #{point_transformer_forward.4} parent=11 // pred_check
        %p764 = pneg %p234
      $region22: #{point_transformer_forward.4} parent=11 // pred_check_branch
        %766 = sbr.rel (%p764) target = $region24
      $region23: #{point_transformer_forward.4} parent=11 // pred_region
        _
      $region24: #{point_transformer_forward.4} parent=11 // pred_fallthru
        _
      // Predicated region
      $region25: #{point_transformer_forward.4} parent=11 // pred_check
        %p767 = pneg %p255
      $region26: #{point_transformer_forward.4} parent=11 // pred_check_branch
        %769 = sbr.rel (%p767) target = $region28
      $region27: #{point_transformer_forward.4} parent=11 // pred_region
        _
      $region28: #{point_transformer_forward.4} parent=11 // pred_fallthru
        _
      // Predicated region
      $region29: #{point_transformer_forward.4} parent=11 // pred_check
        %p770 = pneg %p276
      $region30: #{point_transformer_forward.4} parent=11 // pred_check_branch
        %772 = sbr.rel (%p770) target = $region32
      $region31: #{point_transformer_forward.4} parent=11 // pred_region
        _
      $region32: #{point_transformer_forward.4} parent=11 // pred_fallthru
        _
      // Predicated region
      $region33: #{point_transformer_forward.4} parent=11 // pred_check
        %p773 = pneg %p297
      $region34: #{point_transformer_forward.4} parent=11 // pred_check_branch
        %775 = sbr.rel (%p773) target = $region36
      $region35: #{point_transformer_forward.4} parent=11 // pred_region
        _
      $region36: #{point_transformer_forward.4} parent=11 // pred_fallthru
        _
      // Predicated region
      $region37: #{point_transformer_forward.4} parent=11 // pred_check
        %p776 = pneg %p318
      $region38: #{point_transformer_forward.4} parent=11 // pred_check_branch
        %778 = sbr.rel (%p776) target = $region40
      $region39: #{point_transformer_forward.4} parent=11 // pred_region
        _
      $region40: #{point_transformer_forward.4} parent=11 // pred_fallthru
        _
      // Predicated region
      $region41: #{point_transformer_forward.4} parent=11 // pred_check
        %p779 = pneg %p339
      $region42: #{point_transformer_forward.4} parent=11 // pred_check_branch
        %781 = sbr.rel (%p779) target = $region44
      $region43: #{point_transformer_forward.4} parent=11 // pred_region
        _
      $region44: #{point_transformer_forward.4} parent=11 // pred_fallthru
        _
      // Predicated region
      $region45: #{point_transformer_forward.4} parent=11 // pred_check
        %p782 = pneg %p360
      $region46: #{point_transformer_forward.4} parent=11 // pred_check_branch
        %784 = sbr.rel (%p782) target = $region48
      $region47: #{point_transformer_forward.4} parent=11 // pred_region
        _
      $region48: #{point_transformer_forward.4} parent=11 // pred_fallthru
        _
      // Predicated region
      $region49: #{point_transformer_forward.4} parent=11 // pred_check
        %p785 = pneg %p381
      $region50: #{point_transformer_forward.4} parent=11 // pred_check_branch
        %787 = sbr.rel (%p785) target = $region52
      $region51: #{point_transformer_forward.4} parent=11 // pred_region
        _
      $region52: #{point_transformer_forward.4} parent=11 // pred_fallthru
        _
      // Predicated region
      $region53: #{point_transformer_forward.4} parent=11 // pred_check
        %p788 = pneg %p402
      $region54: #{point_transformer_forward.4} parent=11 // pred_check_branch
        %790 = sbr.rel (%p788) target = $region56
      $region55: #{point_transformer_forward.4} parent=11 // pred_region
        _
      $region56: #{point_transformer_forward.4} parent=11 // pred_fallthru
        _
      // Predicated region
      $region57: #{point_transformer_forward.4} parent=11 // pred_check
        %p791 = pneg %p423
      $region58: #{point_transformer_forward.4} parent=11 // pred_check_branch
        %793 = sbr.rel (%p791) target = $region60
      $region59: #{point_transformer_forward.4} parent=11 // pred_region
        _
      $region60: #{point_transformer_forward.4} parent=11 // pred_fallthru
        _
      // Predicated region
      $region61: #{point_transformer_forward.4} parent=11 // pred_check
        %p794 = pneg %p444
      $region62: #{point_transformer_forward.4} parent=11 // pred_check_branch
        %796 = sbr.rel (%p794) target = $region64
      $region63: #{point_transformer_forward.4} parent=11 // pred_region
        _
      $region64: #{point_transformer_forward.4} parent=11 // pred_fallthru
        _
      // Predicated region
      $region65: #{point_transformer_forward.4} parent=11 // pred_check
        %p797 = pneg %p465
      $region66: #{point_transformer_forward.4} parent=11 // pred_check_branch
        %799 = sbr.rel (%p797) target = $region68
      $region67: #{point_transformer_forward.4} parent=11 // pred_region
        _
      $region68: #{point_transformer_forward.4} parent=11 // pred_fallthru
        _
      // Predicated region
      $region69: #{point_transformer_forward.4} parent=11 // pred_check
        %p800 = pneg %p486
      $region70: #{point_transformer_forward.4} parent=11 // pred_check_branch
        %802 = sbr.rel (%p800) target = $region72
      $region71: #{point_transformer_forward.4} parent=11 // pred_region
        _
      $region72: #{point_transformer_forward.4} parent=11 // pred_fallthru
        _
      // Predicated region
      $region73: #{point_transformer_forward.4} parent=11 // pred_check
        %p803 = pneg %p507
      $region74: #{point_transformer_forward.4} parent=11 // pred_check_branch
        %805 = sbr.rel (%p803) target = $region76
      $region75: #{point_transformer_forward.4} parent=11 // pred_region
        _
      $region76: #{point_transformer_forward.4} parent=11 // pred_fallthru
        _
      // Predicated region
      $region77: #{point_transformer_forward.4} parent=11 // pred_check
        %p806 = pneg %p528
      $region78: #{point_transformer_forward.4} parent=11 // pred_check_branch
        %808 = sbr.rel (%p806) target = $region80
      $region79: #{point_transformer_forward.4} parent=11 // pred_region
        _
      $region80: #{point_transformer_forward.4} parent=11 // pred_fallthru
        _
      // Predicated region
      $region81: #{point_transformer_forward.4} parent=11 // pred_check
        %p809 = pneg %p549
      $region82: #{point_transformer_forward.4} parent=11 // pred_check_branch
        %811 = sbr.rel (%p809) target = $region84
      $region83: #{point_transformer_forward.4} parent=11 // pred_region
        _
      $region84: #{point_transformer_forward.4} parent=11 // pred_fallthru
        _
      // Predicated region
      $region85: #{point_transformer_forward.4} parent=11 // pred_check
        %p812 = pneg %p570
      $region86: #{point_transformer_forward.4} parent=11 // pred_check_branch
        %814 = sbr.rel (%p812) target = $region88
      $region87: #{point_transformer_forward.4} parent=11 // pred_region
        _
      $region88: #{point_transformer_forward.4} parent=11 // pred_fallthru
        _
      // Predicated region
      $region89: #{point_transformer_forward.4} parent=11 // pred_check
        %p815 = pneg %p591
      $region90: #{point_transformer_forward.4} parent=11 // pred_check_branch
        %817 = sbr.rel (%p815) target = $region92
      $region91: #{point_transformer_forward.4} parent=11 // pred_region
        _
      $region92: #{point_transformer_forward.4} parent=11 // pred_fallthru
        _
      // Predicated region
      $region93: #{point_transformer_forward.4} parent=11 // pred_check
        %p818 = pneg %p612
      $region94: #{point_transformer_forward.4} parent=11 // pred_check_branch
        %820 = sbr.rel (%p818) target = $region96
      $region95: #{point_transformer_forward.4} parent=11 // pred_region
        _
      $region96: #{point_transformer_forward.4} parent=11 // pred_fallthru
        _
      // Predicated region
      $region97: #{point_transformer_forward.4} parent=11 // pred_check
        %p821 = pneg %p633
      $region98: #{point_transformer_forward.4} parent=11 // pred_check_branch
        %823 = sbr.rel (%p821) target = $region100
      $region99: #{point_transformer_forward.4} parent=11 // pred_region
        _
      $region100: #{point_transformer_forward.4} parent=11 // pred_fallthru
        _
      // Predicated region
      $region101: #{point_transformer_forward.4} parent=11 // pred_check
        %p824 = pneg %p654
      $region102: #{point_transformer_forward.4} parent=11 // pred_check_branch
        %826 = sbr.rel (%p824) target = $region104
      $region103: #{point_transformer_forward.4} parent=11 // pred_region
        _
      $region104: #{point_transformer_forward.4} parent=11 // pred_fallthru
        _
      // Predicated region
      $region105: #{point_transformer_forward.4} parent=11 // pred_check
        %p827 = pneg %p675
      $region106: #{point_transformer_forward.4} parent=11 // pred_check_branch
        %829 = sbr.rel (%p827) target = $region108
      $region107: #{point_transformer_forward.4} parent=11 // pred_region
        _
      $region108: #{point_transformer_forward.4} parent=11 // pred_fallthru
        _
      // Predicated region
      $region109: #{point_transformer_forward.4} parent=11 // pred_check
        %p830 = pneg %p696
      $region110: #{point_transformer_forward.4} parent=11 // pred_check_branch
        %832 = sbr.rel (%p830) target = $region112
      $region111: #{point_transformer_forward.4} parent=11 // pred_region
        _
      $region112: #{point_transformer_forward.4} parent=11 // pred_fallthru
        _
      // Predicated region
      $region113: #{point_transformer_forward.4} parent=11 // pred_check
        %p833 = pneg %p717
      $region114: #{point_transformer_forward.4} parent=11 // pred_check_branch
        %835 = sbr.rel (%p833) target = $region116
      $region115: #{point_transformer_forward.4} parent=11 // pred_region
        _
      $region116: #{point_transformer_forward.4} parent=11 // pred_fallthru
        _
    $region12: #{point_transformer_forward.4} parent=5 // pred_fallthru
      _
    %p836 = scmp.lt.s32.totalorder %s67, 2
    // Predicated region
    $region117: #{point_transformer_forward.4} parent=5 // pred_check
      %p837 = pneg %p836
    $region118: #{point_transformer_forward.4} parent=5 // pred_check_branch
      %839 = sbr.rel (%p837) target = $region120
    $region119: #{point_transformer_forward.4} parent=5 // pred_region
      // Predicated region
      $region121: #{point_transformer_forward.4} parent=119 // pred_check
        %p840 = pneg %p87
      $region122: #{point_transformer_forward.4} parent=119 // pred_check_branch
        %842 = sbr.rel (%p840) target = $region124
      $region123: #{point_transformer_forward.4} parent=119 // pred_region
        %p843 = scmp.lt.s32.totalorder %s67, 1
        %s844 = scalar_select %p843, %s67, 1
        %s845 = smul.addr %s844, 8
        %s846 = scalar_lea.vmem %s1, %s845
      $region124: #{point_transformer_forward.4} parent=119 // pred_fallthru
        _
      // Predicated region
      $region125: #{point_transformer_forward.4} parent=119 // pred_check
        %p847 = pneg %p113
      $region126: #{point_transformer_forward.4} parent=119 // pred_check_branch
        %849 = sbr.rel (%p847) target = $region128
      $region127: #{point_transformer_forward.4} parent=119 // pred_region
        %p850 = scmp.lt.s32.totalorder %s67, 1
        %s851 = scalar_select %p850, %s67, 1
        %s852 = smul.addr %s851, 2
        %s853 = smul.addr %s852, 8
        %s854 = scalar_lea.vmem %s3, %s853
      $region128: #{point_transformer_forward.4} parent=119 // pred_fallthru
        _
      // Predicated region
      $region129: #{point_transformer_forward.4} parent=119 // pred_check
        %p855 = pneg %p139
      $region130: #{point_transformer_forward.4} parent=119 // pred_check_branch
        %857 = sbr.rel (%p855) target = $region132
      $region131: #{point_transformer_forward.4} parent=119 // pred_region
        %p858 = scmp.lt.s32.totalorder %s67, 1
        %s859 = scalar_select %p858, %s67, 1
        %s860 = smul.addr %s859, 8
        %s861 = scalar_lea.vmem %s5, %s860
      $region132: #{point_transformer_forward.4} parent=119 // pred_fallthru
        _
      // Predicated region
      $region133: #{point_transformer_forward.4} parent=119 // pred_check
        %p862 = pneg %p165
      $region134: #{point_transformer_forward.4} parent=119 // pred_check_branch
        %864 = sbr.rel (%p862) target = $region136
      $region135: #{point_transformer_forward.4} parent=119 // pred_region
        %p865 = scmp.lt.s32.totalorder %s67, 1
        %s866 = scalar_select %p865, %s67, 1
        %s867 = smul.addr %s866, 2
        %s868 = smul.addr %s867, 8
        %s869 = scalar_lea.vmem %s7, %s868
      $region136: #{point_transformer_forward.4} parent=119 // pred_fallthru
        _
    $region120: #{point_transformer_forward.4} parent=5 // pred_fallthru
      _
    %p870 = scmp.le.s32.totalorder 1, %s67
    %p871 = scmp.lt.s32.totalorder %s67, 3
    %p872 = pnand %p870, %p871
    %p873 = pneg %p872
    // Predicated region
    $region137: #{point_transformer_forward.4} parent=5 // pred_check
      _
    $region138: #{point_transformer_forward.4} parent=5 // pred_check_branch
      %875 = sbr.rel (%p872) target = $region140
    $region139: #{point_transformer_forward.4} parent=5 // pred_region
      %s876 = ssub.s32 %s67, 1
      %p877 = scmp.lt.s32.totalorder %s72, 1
      %s878 = scalar_select %p877, %s72, 1
      %s879 = smul.addr %s878, 8
      %s880 = scalar_lea.vmem %s1, %s879
      %p881 = pneg %p93
      %p882 = pneg %p90
      %p883 = scmp.lt.s32.totalorder %s72, 1
      %s884 = scalar_select %p883, %s72, 1
      %s885 = smul.addr %s884, 2
      %s886 = smul.addr %s885, 8
      %s887 = scalar_lea.vmem %s3, %s886
      %p888 = pneg %p119
      %p889 = pneg %p116
      %p890 = scmp.lt.s32.totalorder %s72, 1
      %s891 = scalar_select %p890, %s72, 1
      %s892 = smul.addr %s891, 8
      %s893 = scalar_lea.vmem %s5, %s892
      %p894 = pneg %p145
      %p895 = pneg %p142
      %p896 = scmp.lt.s32.totalorder %s72, 1
      %s897 = scalar_select %p896, %s72, 1
      %s898 = smul.addr %s897, 2
      %s899 = smul.addr %s898, 8
      %s900 = scalar_lea.vmem %s7, %s899
      %p901 = pneg %p171
      %p902 = pneg %p168
      %p903 = pneg %p192
      %p904 = pneg %p189
      %p905 = pneg %p213
      %p906 = pneg %p210
      %p907 = pneg %p234
      %p908 = pneg %p231
      %p909 = pneg %p255
      %p910 = pneg %p252
      %p911 = pneg %p276
      %p912 = pneg %p273
      %p913 = pneg %p297
      %p914 = pneg %p294
      %p915 = pneg %p318
      %p916 = pneg %p315
      %p917 = pneg %p339
      %p918 = pneg %p336
      %p919 = pneg %p360
      %p920 = pneg %p357
      %p921 = pneg %p381
      %p922 = pneg %p378
      %p923 = pneg %p402
      %p924 = pneg %p399
      %p925 = pneg %p423
      %p926 = pneg %p420
      %p927 = pneg %p444
      %p928 = pneg %p441
      %p929 = pneg %p465
      %p930 = pneg %p462
      %p931 = pneg %p486
      %p932 = pneg %p483
      %p933 = pneg %p507
      %p934 = pneg %p504
      %p935 = pneg %p528
      %p936 = pneg %p525
      %p937 = pneg %p549
      %p938 = pneg %p546
      %p939 = pneg %p570
      %p940 = pneg %p567
      %p941 = pneg %p591
      %p942 = pneg %p588
      %p943 = pneg %p612
      %p944 = pneg %p609
      %p945 = pneg %p633
      %p946 = pneg %p630
      %p947 = pneg %p654
      %p948 = pneg %p651
      %p949 = pneg %p675
      %p950 = pneg %p672
      %p951 = pneg %p696
      %p952 = pneg %p693
      %p953 = pneg %p717
      %p954 = pneg %p714
      %p955 = pneg %p743
      %p956 = pneg %p740
      %p957 = scmp.lt.s32.totalorder %s72, 1
      %s958 = scalar_select %p957, %s72, 1
      %s959 = smul.addr %s958, 8
      %s960 = scalar_lea.vmem %s61, %s959
      %p961 = scmp.lt.s32.totalorder %s72, 1
      %s962 = scalar_select %p961, %s72, 1
      %s963 = smul.addr %s962, 8
      %s964 = scalar_lea.vmem %s1, %s963
      %p965 = scmp.lt.s32.totalorder %s72, 1
      %s966 = scalar_select %p965, %s72, 1
      %s967 = smul.addr %s966, 2
      %s968 = smul.addr %s967, 8
      %s969 = scalar_lea.vmem %s3, %s968
      %p970 = scmp.lt.s32.totalorder %s72, 1
      %s971 = scalar_select %p970, %s72, 1
      %s972 = smul.addr %s971, 8
      %s973 = scalar_lea.vmem %s5, %s972
      %p974 = scmp.lt.s32.totalorder %s72, 1
      %s975 = scalar_select %p974, %s72, 1
      %s976 = smul.addr %s975, 2
      %s977 = smul.addr %s976, 8
      %s978 = scalar_lea.vmem %s7, %s977
      %p979 = scmp.lt.s32.totalorder %s72, 1
      %s980 = scalar_select %p979, %s72, 1
      %s981 = smul.addr %s980, 8
      %s982 = scalar_lea.vmem %s61, %s981
      %v983 = vld [vmem:[%s964] sm:$0xff]
      %v984 = vld [vmem:[%s969] sm:$0xff]
      %v985 = vld [vmem:[%s969 + $0x8] sm:$0xff]
      %v986 = vld [vmem:[%s973] sm:$0xff]
      %v987 = vld [vmem:[%s9] sm:$0x3]
      %v988 = vld [vmem:[%s11] sm:$0x1]
      %v990 = vlaneseq
      %v991 = vshrl.u32 %v990, 7
      %v992 = vsub.s32 0, %v991
      %v993 = vrot.slane %v988, %v992
      %vm995 = vcmask 15360
      %v997 = vsel %vm995, %v986, 0
      %vm999 = vcmask 1041408
      %v1001 = vsel %vm999, %v987, 0
      %1003 = vmatprep.subr.mxu0 0.0
      %1004 = vmatpush1.msra.mxu0 %v1001
      %1005 = vmatprep.subr.mxu0 0.0
      %1006 = vmatpush1.msra.mxu0 0.0
      %1007 = vmatprep.subr.mxu0 0.0
      %1008 = vmatpush1.msra.mxu0 0.0
      %1009 = vmatprep.subr.mxu0 0.0
      %1010 = vmatpush1.msra.mxu0 0.0
      %1011 = vmatprep.subr.mxu0 0.0
      %1012 = vmatpush1.msra.mxu0 0.0
      %1013 = vmatprep.subr.mxu0 0.0
      %1014 = vmatpush1.msra.mxu0 0.0
      %1015 = vmatprep.subr.mxu0 0.0
      %1016 = vmatpush1.msra.mxu0 0.0
      %1017 = vmatprep.subr.mxu0 0.0
      %1018 = vmatpush1.msra.mxu0 0.0
      %1019 = vmatprep.subr.mxu0 0.0
      %1020 = vmatpush1.msra.mxu0 0.0
      %1021 = vmatprep.subr.mxu0 0.0
      %1022 = vmatpush1.msra.mxu0 0.0
      %1023 = vmatprep.subr.mxu0 0.0
      %1024 = vmatpush1.msra.mxu0 0.0
      %1025 = vmatprep.subr.mxu0 0.0
      %1026 = vmatpush1.msra.mxu0 0.0
      %1027 = vmatprep.subr.mxu0 0.0
      %1028 = vmatpush1.msra.mxu0 0.0
      %1029 = vmatprep.subr.mxu0 0.0
      %1030 = vmatpush1.msra.mxu0 0.0
      %1031 = vmatprep.subr.mxu0 0.0
      %1032 = vmatpush1.msra.mxu0 0.0
      %1033 = vmatprep.subr.mxu0 0.0
      %1034 = vmatpush1.msra.mxu0 0.0
      %1035 = vmatprep.subr.mxu0 0.0
      %1036 = vmatpush1.msra.mxu0 0.0
      %1037 = vmatprep.subr.mxu0 0.0
      %1038 = vmatpush1.msra.mxu0 0.0
      %1039 = vmatprep.subr.mxu0 0.0
      %1040 = vmatpush1.msra.mxu0 0.0
      %1041 = vmatprep.subr.mxu0 0.0
      %1042 = vmatpush1.msra.mxu0 0.0
      %1043 = vmatprep.subr.mxu0 0.0
      %1044 = vmatpush1.msra.mxu0 0.0
      %1045 = vmatprep.subr.mxu0 0.0
      %1046 = vmatpush1.msra.mxu0 0.0
      %1047 = vmatprep.subr.mxu0 0.0
      %1048 = vmatpush1.msra.mxu0 0.0
      %1049 = vmatprep.subr.mxu0 0.0
      %1050 = vmatpush1.msra.mxu0 0.0
      %1051 = vmatprep.subr.mxu0 0.0
      %1052 = vmatpush1.msra.mxu0 0.0
      %1053 = vmatprep.subr.mxu0 0.0
      %1054 = vmatpush1.msra.mxu0 0.0
      %1055 = vmatprep.subr.mxu0 0.0
      %1056 = vmatpush1.msra.mxu0 0.0
      %1057 = vmatprep.subr.mxu0 0.0
      %1058 = vmatpush1.msra.mxu0 0.0
      %1059 = vmatprep.subr.mxu0 0.0
      %1060 = vmatpush1.msra.mxu0 0.0
      %1061 = vmatprep.subr.mxu0 0.0
      %1062 = vmatpush1.msra.mxu0 0.0
      %1063 = vmatprep.subr.mxu0 0.0
      %1064 = vmatpush1.msra.mxu0 0.0
      %1065 = vmatprep.subr.mxu0 0.0
      %1066 = vmatpush1.msra.mxu0 0.0
      %1067 = vmatprep.mubr.f32.mxu0 0.0
      %1068 = vmatmul.mubr.f32.gmra.mrb[0].mxu0 %v997
      %v1069 = vpop.f32.mrb[0].mxu0
      %v1070 = vadd.f32 %v993, %v1069
      %v1071 = vpop.f32.mrb[0].mxu0
      %1072 = vdwg.mxu0
      %v1073 = vmax.f32 %v1070, 0.0
      %v1074 = vld [vmem:[%s13] sm:$0xff]
      %v1075 = vld [vmem:[%s13 + $0x8] sm:$0xff]
      %v1076 = vld [vmem:[%s13 + $0x10] sm:$0xff]
      %v1077 = vld [vmem:[%s13 + $0x18] sm:$0xff]
      %v1078 = vld [vmem:[%s15] sm:$0x1]
      %v1080 = vlaneseq
      %v1081 = vshrl.u32 %v1080, 7
      %v1082 = vsub.s32 0, %v1081
      %v1083 = vrot.slane %v1078, %v1082
      %vm1085 = vcmask 261120
      %v1087 = vsel %vm1085, %v1073, 0
      %1089 = vmatprep.subr.mxu0 0.0
      %1090 = vmatpush1.msra.mxu0 %v1074
      %1091 = vmatprep.subr.mxu0 0.0
      %1092 = vmatpush1.msra.mxu0 %v1075
      %1093 = vmatprep.subr.mxu0 0.0
      %1094 = vmatpush1.msra.mxu0 %v1076
      %1095 = vmatprep.subr.mxu0 0.0
      %1096 = vmatpush1.msra.mxu0 %v1077
      %1097 = vmatprep.subr.mxu0 0.0
      %1098 = vmatpush1.msra.mxu0 0.0
      %1099 = vmatprep.subr.mxu0 0.0
      %1100 = vmatpush1.msra.mxu0 0.0
      %1101 = vmatprep.subr.mxu0 0.0
      %1102 = vmatpush1.msra.mxu0 0.0
      %1103 = vmatprep.subr.mxu0 0.0
      %1104 = vmatpush1.msra.mxu0 0.0
      %1105 = vmatprep.subr.mxu0 0.0
      %1106 = vmatpush1.msra.mxu0 0.0
      %1107 = vmatprep.subr.mxu0 0.0
      %1108 = vmatpush1.msra.mxu0 0.0
      %1109 = vmatprep.subr.mxu0 0.0
      %1110 = vmatpush1.msra.mxu0 0.0
      %1111 = vmatprep.subr.mxu0 0.0
      %1112 = vmatpush1.msra.mxu0 0.0
      %1113 = vmatprep.subr.mxu0 0.0
      %1114 = vmatpush1.msra.mxu0 0.0
      %1115 = vmatprep.subr.mxu0 0.0
      %1116 = vmatpush1.msra.mxu0 0.0
      %1117 = vmatprep.subr.mxu0 0.0
      %1118 = vmatpush1.msra.mxu0 0.0
      %1119 = vmatprep.subr.mxu0 0.0
      %1120 = vmatpush1.msra.mxu0 0.0
      %1121 = vmatprep.subr.mxu0 0.0
      %1122 = vmatpush1.msra.mxu0 0.0
      %1123 = vmatprep.subr.mxu0 0.0
      %1124 = vmatpush1.msra.mxu0 0.0
      %1125 = vmatprep.subr.mxu0 0.0
      %1126 = vmatpush1.msra.mxu0 0.0
      %1127 = vmatprep.subr.mxu0 0.0
      %1128 = vmatpush1.msra.mxu0 0.0
      %1129 = vmatprep.subr.mxu0 0.0
      %1130 = vmatpush1.msra.mxu0 0.0
      %1131 = vmatprep.subr.mxu0 0.0
      %1132 = vmatpush1.msra.mxu0 0.0
      %1133 = vmatprep.subr.mxu0 0.0
      %1134 = vmatpush1.msra.mxu0 0.0
      %1135 = vmatprep.subr.mxu0 0.0
      %1136 = vmatpush1.msra.mxu0 0.0
      %1137 = vmatprep.subr.mxu0 0.0
      %1138 = vmatpush1.msra.mxu0 0.0
      %1139 = vmatprep.subr.mxu0 0.0
      %1140 = vmatpush1.msra.mxu0 0.0
      %1141 = vmatprep.subr.mxu0 0.0
      %1142 = vmatpush1.msra.mxu0 0.0
      %1143 = vmatprep.subr.mxu0 0.0
      %1144 = vmatpush1.msra.mxu0 0.0
      %1145 = vmatprep.subr.mxu0 0.0
      %1146 = vmatpush1.msra.mxu0 0.0
      %1147 = vmatprep.subr.mxu0 0.0
      %1148 = vmatpush1.msra.mxu0 0.0
      %1149 = vmatprep.subr.mxu0 0.0
      %1150 = vmatpush1.msra.mxu0 0.0
      %1151 = vmatprep.subr.mxu0 0.0
      %1152 = vmatpush1.msra.mxu0 0.0
      %1153 = vmatprep.mubr.f32.mxu0 0.0
      %1154 = vmatmul.mubr.f32.gmra.mrb[0].mxu0 %v1087
      %v1155 = vpop.f32.mrb[0].mxu0
      %v1156 = vadd.f32 %v1083, %v1155
      %v1157 = vpop.f32.mrb[0].mxu0
      %1158 = vdwg.mxu0
      %v1159 = vld [vmem:[%s978] sm:$0xff]
      %v1160 = vld [vmem:[%s978 + $0x8] sm:$0xff]
      %v1161 = vld [vmem:[%s17] sm:$0x3]
      %v1162 = vld [vmem:[%s19] sm:$0x1]
      %v1164 = vlaneseq
      %v1165 = vshrl.u32 %v1164, 7
      %v1166 = vsub.s32 0, %v1165
      %v1167 = vrot.slane %v1162, %v1166
      %v1170 = vsel %vm995, %v1159, 0
      %v1173 = vsel %vm995, %v1160, 0
      %v1176 = vsel %vm999, %v1161, 0
      %1178 = vmatprep.subr.mxu0 0.0
      %1179 = vmatpush1.msra.mxu0 %v1176
      %1180 = vmatprep.subr.mxu0 0.0
      %1181 = vmatpush1.msra.mxu0 0.0
      %1182 = vmatprep.subr.mxu0 0.0
      %1183 = vmatpush1.msra.mxu0 0.0
      %1184 = vmatprep.subr.mxu0 0.0
      %1185 = vmatpush1.msra.mxu0 0.0
      %1186 = vmatprep.subr.mxu0 0.0
      %1187 = vmatpush1.msra.mxu0 0.0
      %1188 = vmatprep.subr.mxu0 0.0
      %1189 = vmatpush1.msra.mxu0 0.0
      %1190 = vmatprep.subr.mxu0 0.0
      %1191 = vmatpush1.msra.mxu0 0.0
      %1192 = vmatprep.subr.mxu0 0.0
      %1193 = vmatpush1.msra.mxu0 0.0
      %1194 = vmatprep.subr.mxu0 0.0
      %1195 = vmatpush1.msra.mxu0 0.0
      %1196 = vmatprep.subr.mxu0 0.0
      %1197 = vmatpush1.msra.mxu0 0.0
      %1198 = vmatprep.subr.mxu0 0.0
      %1199 = vmatpush1.msra.mxu0 0.0
      %1200 = vmatprep.subr.mxu0 0.0
      %1201 = vmatpush1.msra.mxu0 0.0
      %1202 = vmatprep.subr.mxu0 0.0
      %1203 = vmatpush1.msra.mxu0 0.0
      %1204 = vmatprep.subr.mxu0 0.0
      %1205 = vmatpush1.msra.mxu0 0.0
      %1206 = vmatprep.subr.mxu0 0.0
      %1207 = vmatpush1.msra.mxu0 0.0
      %1208 = vmatprep.subr.mxu0 0.0
      %1209 = vmatpush1.msra.mxu0 0.0
      %1210 = vmatprep.subr.mxu0 0.0
      %1211 = vmatpush1.msra.mxu0 0.0
      %1212 = vmatprep.subr.mxu0 0.0
      %1213 = vmatpush1.msra.mxu0 0.0
      %1214 = vmatprep.subr.mxu0 0.0
      %1215 = vmatpush1.msra.mxu0 0.0
      %1216 = vmatprep.subr.mxu0 0.0
      %1217 = vmatpush1.msra.mxu0 0.0
      %1218 = vmatprep.subr.mxu0 0.0
      %1219 = vmatpush1.msra.mxu0 0.0
      %1220 = vmatprep.subr.mxu0 0.0
      %1221 = vmatpush1.msra.mxu0 0.0
      %1222 = vmatprep.subr.mxu0 0.0
      %1223 = vmatpush1.msra.mxu0 0.0
      %1224 = vmatprep.subr.mxu0 0.0
      %1225 = vmatpush1.msra.mxu0 0.0
      %1226 = vmatprep.subr.mxu0 0.0
      %1227 = vmatpush1.msra.mxu0 0.0
      %1228 = vmatprep.subr.mxu0 0.0
      %1229 = vmatpush1.msra.mxu0 0.0
      %1230 = vmatprep.subr.mxu0 0.0
      %1231 = vmatpush1.msra.mxu0 0.0
      %1232 = vmatprep.subr.mxu0 0.0
      %1233 = vmatpush1.msra.mxu0 0.0
      %1234 = vmatprep.subr.mxu0 0.0
      %1235 = vmatpush1.msra.mxu0 0.0
      %1236 = vmatprep.subr.mxu0 0.0
      %1237 = vmatpush1.msra.mxu0 0.0
      %1238 = vmatprep.subr.mxu0 0.0
      %1239 = vmatpush1.msra.mxu0 0.0
      %1240 = vmatprep.subr.mxu0 0.0
      %1241 = vmatpush1.msra.mxu0 0.0
      %1242 = vmatprep.mubr.f32.mxu0 0.0
      %1243 = vmatmul.mubr.f32.gmra.mrb[0].mxu0 %v1170
      %v1244 = vpop.f32.mrb[0].mxu0
      %v1245 = vadd.f32 %v1167, %v1244
      %v1246 = vpop.f32.mrb[0].mxu0
      %1247 = vmatprep.mubr.f32.mxu0 0.0
      %1248 = vmatmul.mubr.f32.gmra.mrb[0].mxu0 %v1173
      %v1249 = vpop.f32.mrb[0].mxu0
      %v1250 = vadd.f32 %v1167, %v1249
      %v1251 = vpop.f32.mrb[0].mxu0
      %1252 = vdwg.mxu0
      %v1253 = vmax.f32 %v1245, 0.0
      %v1254 = vmax.f32 %v1250, 0.0
      %v1255 = vld [vmem:[%s21] sm:$0xff]
      %v1256 = vld [vmem:[%s21 + $0x8] sm:$0xff]
      %v1257 = vld [vmem:[%s21 + $0x10] sm:$0xff]
      %v1258 = vld [vmem:[%s21 + $0x18] sm:$0xff]
      %v1259 = vld [vmem:[%s23] sm:$0x1]
      %v1261 = vlaneseq
      %v1262 = vshrl.u32 %v1261, 7
      %v1263 = vsub.s32 0, %v1262
      %v1264 = vrot.slane %v1259, %v1263
      %v1267 = vsel %vm1085, %v1253, 0
      %v1270 = vsel %vm1085, %v1254, 0
      %1272 = vmatprep.subr.mxu0 0.0
      %1273 = vmatpush1.msra.mxu0 %v1255
      %1274 = vmatprep.subr.mxu0 0.0
      %1275 = vmatpush1.msra.mxu0 %v1256
      %1276 = vmatprep.subr.mxu0 0.0
      %1277 = vmatpush1.msra.mxu0 %v1257
      %1278 = vmatprep.subr.mxu0 0.0
      %1279 = vmatpush1.msra.mxu0 %v1258
      %1280 = vmatprep.subr.mxu0 0.0
      %1281 = vmatpush1.msra.mxu0 0.0
      %1282 = vmatprep.subr.mxu0 0.0
      %1283 = vmatpush1.msra.mxu0 0.0
      %1284 = vmatprep.subr.mxu0 0.0
      %1285 = vmatpush1.msra.mxu0 0.0
      %1286 = vmatprep.subr.mxu0 0.0
      %1287 = vmatpush1.msra.mxu0 0.0
      %1288 = vmatprep.subr.mxu0 0.0
      %1289 = vmatpush1.msra.mxu0 0.0
      %1290 = vmatprep.subr.mxu0 0.0
      %1291 = vmatpush1.msra.mxu0 0.0
      %1292 = vmatprep.subr.mxu0 0.0
      %1293 = vmatpush1.msra.mxu0 0.0
      %1294 = vmatprep.subr.mxu0 0.0
      %1295 = vmatpush1.msra.mxu0 0.0
      %1296 = vmatprep.subr.mxu0 0.0
      %1297 = vmatpush1.msra.mxu0 0.0
      %1298 = vmatprep.subr.mxu0 0.0
      %1299 = vmatpush1.msra.mxu0 0.0
      %1300 = vmatprep.subr.mxu0 0.0
      %1301 = vmatpush1.msra.mxu0 0.0
      %1302 = vmatprep.subr.mxu0 0.0
      %1303 = vmatpush1.msra.mxu0 0.0
      %1304 = vmatprep.subr.mxu0 0.0
      %1305 = vmatpush1.msra.mxu0 0.0
      %1306 = vmatprep.subr.mxu0 0.0
      %1307 = vmatpush1.msra.mxu0 0.0
      %1308 = vmatprep.subr.mxu0 0.0
      %1309 = vmatpush1.msra.mxu0 0.0
      %1310 = vmatprep.subr.mxu0 0.0
      %1311 = vmatpush1.msra.mxu0 0.0
      %1312 = vmatprep.subr.mxu0 0.0
      %1313 = vmatpush1.msra.mxu0 0.0
      %1314 = vmatprep.subr.mxu0 0.0
      %1315 = vmatpush1.msra.mxu0 0.0
      %1316 = vmatprep.subr.mxu0 0.0
      %1317 = vmatpush1.msra.mxu0 0.0
      %1318 = vmatprep.subr.mxu0 0.0
      %1319 = vmatpush1.msra.mxu0 0.0
      %1320 = vmatprep.subr.mxu0 0.0
      %1321 = vmatpush1.msra.mxu0 0.0
      %1322 = vmatprep.subr.mxu0 0.0
      %1323 = vmatpush1.msra.mxu0 0.0
      %1324 = vmatprep.subr.mxu0 0.0
      %1325 = vmatpush1.msra.mxu0 0.0
      %1326 = vmatprep.subr.mxu0 0.0
      %1327 = vmatpush1.msra.mxu0 0.0
      %1328 = vmatprep.subr.mxu0 0.0
      %1329 = vmatpush1.msra.mxu0 0.0
      %1330 = vmatprep.subr.mxu0 0.0
      %1331 = vmatpush1.msra.mxu0 0.0
      %1332 = vmatprep.subr.mxu0 0.0
      %1333 = vmatpush1.msra.mxu0 0.0
      %1334 = vmatprep.subr.mxu0 0.0
      %1335 = vmatpush1.msra.mxu0 0.0
      %1336 = vmatprep.mubr.f32.mxu0 0.0
      %1337 = vmatmul.mubr.f32.gmra.mrb[0].mxu0 %v1267
      %v1338 = vpop.f32.mrb[0].mxu0
      %v1339 = vadd.f32 %v1264, %v1338
      %v1340 = vpop.f32.mrb[0].mxu0
      %1341 = vmatprep.mubr.f32.mxu0 0.0
      %1342 = vmatmul.mubr.f32.gmra.mrb[0].mxu0 %v1270
      %v1343 = vpop.f32.mrb[0].mxu0
      %v1344 = vadd.f32 %v1264, %v1343
      %v1345 = vpop.f32.mrb[0].mxu0
      %1346 = vdwg.mxu0
      %v1347 = vadd.f32 %v983, %v1156
      %v1348 = vld [vmem:[%s25] sm:$0xff]
      %v1349 = vld [vmem:[%s25 + $0x8] sm:$0xff]
      %v1350 = vld [vmem:[%s25 + $0x10] sm:$0xff]
      %v1351 = vld [vmem:[%s25 + $0x18] sm:$0xff]
      %v1352 = vld [vmem:[%s27] sm:$0x1]
      %v1354 = vlaneseq
      %v1355 = vshrl.u32 %v1354, 7
      %v1356 = vsub.s32 0, %v1355
      %v1357 = vrot.slane %v1352, %v1356
      %v1360 = vsel %vm1085, %v1347, 0
      %1362 = vmatprep.subr.mxu0 0.0
      %1363 = vmatpush1.msra.mxu0 %v1348
      %1364 = vmatprep.subr.mxu0 0.0
      %1365 = vmatpush1.msra.mxu0 %v1349
      %1366 = vmatprep.subr.mxu0 0.0
      %1367 = vmatpush1.msra.mxu0 %v1350
      %1368 = vmatprep.subr.mxu0 0.0
      %1369 = vmatpush1.msra.mxu0 %v1351
      %1370 = vmatprep.subr.mxu0 0.0
      %1371 = vmatpush1.msra.mxu0 0.0
      %1372 = vmatprep.subr.mxu0 0.0
      %1373 = vmatpush1.msra.mxu0 0.0
      %1374 = vmatprep.subr.mxu0 0.0
      %1375 = vmatpush1.msra.mxu0 0.0
      %1376 = vmatprep.subr.mxu0 0.0
      %1377 = vmatpush1.msra.mxu0 0.0
      %1378 = vmatprep.subr.mxu0 0.0
      %1379 = vmatpush1.msra.mxu0 0.0
      %1380 = vmatprep.subr.mxu0 0.0
      %1381 = vmatpush1.msra.mxu0 0.0
      %1382 = vmatprep.subr.mxu0 0.0
      %1383 = vmatpush1.msra.mxu0 0.0
      %1384 = vmatprep.subr.mxu0 0.0
      %1385 = vmatpush1.msra.mxu0 0.0
      %1386 = vmatprep.subr.mxu0 0.0
      %1387 = vmatpush1.msra.mxu0 0.0
      %1388 = vmatprep.subr.mxu0 0.0
      %1389 = vmatpush1.msra.mxu0 0.0
      %1390 = vmatprep.subr.mxu0 0.0
      %1391 = vmatpush1.msra.mxu0 0.0
      %1392 = vmatprep.subr.mxu0 0.0
      %1393 = vmatpush1.msra.mxu0 0.0
      %1394 = vmatprep.subr.mxu0 0.0
      %1395 = vmatpush1.msra.mxu0 0.0
      %1396 = vmatprep.subr.mxu0 0.0
      %1397 = vmatpush1.msra.mxu0 0.0
      %1398 = vmatprep.subr.mxu0 0.0
      %1399 = vmatpush1.msra.mxu0 0.0
      %1400 = vmatprep.subr.mxu0 0.0
      %1401 = vmatpush1.msra.mxu0 0.0
      %1402 = vmatprep.subr.mxu0 0.0
      %1403 = vmatpush1.msra.mxu0 0.0
      %1404 = vmatprep.subr.mxu0 0.0
      %1405 = vmatpush1.msra.mxu0 0.0
      %1406 = vmatprep.subr.mxu0 0.0
      %1407 = vmatpush1.msra.mxu0 0.0
      %1408 = vmatprep.subr.mxu0 0.0
      %1409 = vmatpush1.msra.mxu0 0.0
      %1410 = vmatprep.subr.mxu0 0.0
      %1411 = vmatpush1.msra.mxu0 0.0
      %1412 = vmatprep.subr.mxu0 0.0
      %1413 = vmatpush1.msra.mxu0 0.0
      %1414 = vmatprep.subr.mxu0 0.0
      %1415 = vmatpush1.msra.mxu0 0.0
      %1416 = vmatprep.subr.mxu0 0.0
      %1417 = vmatpush1.msra.mxu0 0.0
      %1418 = vmatprep.subr.mxu0 0.0
      %1419 = vmatpush1.msra.mxu0 0.0
      %1420 = vmatprep.subr.mxu0 0.0
      %1421 = vmatpush1.msra.mxu0 0.0
      %1422 = vmatprep.subr.mxu0 0.0
      %1423 = vmatpush1.msra.mxu0 0.0
      %1424 = vmatprep.subr.mxu0 0.0
      %1425 = vmatpush1.msra.mxu0 0.0
      %1426 = vmatprep.mubr.f32.mxu0 0.0
      %1427 = vmatmul.mubr.f32.gmra.mrb[0].mxu0 %v1360
      %v1428 = vpop.f32.mrb[0].mxu0
      %v1429 = vadd.f32 %v1357, %v1428
      %v1430 = vpop.f32.mrb[0].mxu0
      %1431 = vdwg.mxu0
      %s1432 = scalar_lea.vmem %s25, 128
      %v1433 = vld [vmem:[%s1432] sm:$0xff]
      %v1434 = vld [vmem:[%s1432 + $0x8] sm:$0xff]
      %v1435 = vld [vmem:[%s1432 + $0x10] sm:$0xff]
      %v1436 = vld [vmem:[%s1432 + $0x18] sm:$0xff]
      %s1437 = scalar_lea.vmem %s27, 4
      %v1438 = vld [vmem:[%s1437] sm:$0x1]
      %v1440 = vlaneseq
      %v1441 = vshrl.u32 %v1440, 7
      %v1442 = vsub.s32 0, %v1441
      %v1443 = vrot.slane %v1438, %v1442
      %1445 = vmatprep.subr.mxu0 0.0
      %1446 = vmatpush1.msra.mxu0 %v1433
      %1447 = vmatprep.subr.mxu0 0.0
      %1448 = vmatpush1.msra.mxu0 %v1434
      %1449 = vmatprep.subr.mxu0 0.0
      %1450 = vmatpush1.msra.mxu0 %v1435
      %1451 = vmatprep.subr.mxu0 0.0
      %1452 = vmatpush1.msra.mxu0 %v1436
      %1453 = vmatprep.subr.mxu0 0.0
      %1454 = vmatpush1.msra.mxu0 0.0
      %1455 = vmatprep.subr.mxu0 0.0
      %1456 = vmatpush1.msra.mxu0 0.0
      %1457 = vmatprep.subr.mxu0 0.0
      %1458 = vmatpush1.msra.mxu0 0.0
      %1459 = vmatprep.subr.mxu0 0.0
      %1460 = vmatpush1.msra.mxu0 0.0
      %1461 = vmatprep.subr.mxu0 0.0
      %1462 = vmatpush1.msra.mxu0 0.0
      %1463 = vmatprep.subr.mxu0 0.0
      %1464 = vmatpush1.msra.mxu0 0.0
      %1465 = vmatprep.subr.mxu0 0.0
      %1466 = vmatpush1.msra.mxu0 0.0
      %1467 = vmatprep.subr.mxu0 0.0
      %1468 = vmatpush1.msra.mxu0 0.0
      %1469 = vmatprep.subr.mxu0 0.0
      %1470 = vmatpush1.msra.mxu0 0.0
      %1471 = vmatprep.subr.mxu0 0.0
      %1472 = vmatpush1.msra.mxu0 0.0
      %1473 = vmatprep.subr.mxu0 0.0
      %1474 = vmatpush1.msra.mxu0 0.0
      %1475 = vmatprep.subr.mxu0 0.0
      %1476 = vmatpush1.msra.mxu0 0.0
      %1477 = vmatprep.subr.mxu0 0.0
      %1478 = vmatpush1.msra.mxu0 0.0
      %1479 = vmatprep.subr.mxu0 0.0
      %1480 = vmatpush1.msra.mxu0 0.0
      %1481 = vmatprep.subr.mxu0 0.0
      %1482 = vmatpush1.msra.mxu0 0.0
      %1483 = vmatprep.subr.mxu0 0.0
      %1484 = vmatpush1.msra.mxu0 0.0
      %1485 = vmatprep.subr.mxu0 0.0
      %1486 = vmatpush1.msra.mxu0 0.0
      %1487 = vmatprep.subr.mxu0 0.0
      %1488 = vmatpush1.msra.mxu0 0.0
      %1489 = vmatprep.subr.mxu0 0.0
      %1490 = vmatpush1.msra.mxu0 0.0
      %1491 = vmatprep.subr.mxu0 0.0
      %1492 = vmatpush1.msra.mxu0 0.0
      %1493 = vmatprep.subr.mxu0 0.0
      %1494 = vmatpush1.msra.mxu0 0.0
      %1495 = vmatprep.subr.mxu0 0.0
      %1496 = vmatpush1.msra.mxu0 0.0
      %1497 = vmatprep.subr.mxu0 0.0
      %1498 = vmatpush1.msra.mxu0 0.0
      %1499 = vmatprep.subr.mxu0 0.0
      %1500 = vmatpush1.msra.mxu0 0.0
      %1501 = vmatprep.subr.mxu0 0.0
      %1502 = vmatpush1.msra.mxu0 0.0
      %1503 = vmatprep.subr.mxu0 0.0
      %1504 = vmatpush1.msra.mxu0 0.0
      %1505 = vmatprep.subr.mxu0 0.0
      %1506 = vmatpush1.msra.mxu0 0.0
      %1507 = vmatprep.subr.mxu0 0.0
      %1508 = vmatpush1.msra.mxu0 0.0
      %1509 = vmatprep.mubr.f32.mxu0 0.0
      %1510 = vmatmul.mubr.f32.gmra.mrb[0].mxu0 %v1360
      %v1511 = vpop.f32.mrb[0].mxu0
      %v1512 = vadd.f32 %v1443, %v1511
      %v1513 = vpop.f32.mrb[0].mxu0
      %1514 = vdwg.mxu0
      %s1515 = scalar_lea.vmem %s25, 256
      %v1516 = vld [vmem:[%s1515] sm:$0xff]
      %v1517 = vld [vmem:[%s1515 + $0x8] sm:$0xff]
      %v1518 = vld [vmem:[%s1515 + $0x10] sm:$0xff]
      %v1519 = vld [vmem:[%s1515 + $0x18] sm:$0xff]
      %s1520 = scalar_lea.vmem %s27, 8
      %v1521 = vld [vmem:[%s1520] sm:$0x1]
      %v1523 = vlaneseq
      %v1524 = vshrl.u32 %v1523, 7
      %v1525 = vsub.s32 0, %v1524
      %v1526 = vrot.slane %v1521, %v1525
      %1528 = vmatprep.subr.mxu0 0.0
      %1529 = vmatpush1.msra.mxu0 %v1516
      %1530 = vmatprep.subr.mxu0 0.0
      %1531 = vmatpush1.msra.mxu0 %v1517
      %1532 = vmatprep.subr.mxu0 0.0
      %1533 = vmatpush1.msra.mxu0 %v1518
      %1534 = vmatprep.subr.mxu0 0.0
      %1535 = vmatpush1.msra.mxu0 %v1519
      %1536 = vmatprep.subr.mxu0 0.0
      %1537 = vmatpush1.msra.mxu0 0.0
      %1538 = vmatprep.subr.mxu0 0.0
      %1539 = vmatpush1.msra.mxu0 0.0
      %1540 = vmatprep.subr.mxu0 0.0
      %1541 = vmatpush1.msra.mxu0 0.0
      %1542 = vmatprep.subr.mxu0 0.0
      %1543 = vmatpush1.msra.mxu0 0.0
      %1544 = vmatprep.subr.mxu0 0.0
      %1545 = vmatpush1.msra.mxu0 0.0
      %1546 = vmatprep.subr.mxu0 0.0
      %1547 = vmatpush1.msra.mxu0 0.0
      %1548 = vmatprep.subr.mxu0 0.0
      %1549 = vmatpush1.msra.mxu0 0.0
      %1550 = vmatprep.subr.mxu0 0.0
      %1551 = vmatpush1.msra.mxu0 0.0
      %1552 = vmatprep.subr.mxu0 0.0
      %1553 = vmatpush1.msra.mxu0 0.0
      %1554 = vmatprep.subr.mxu0 0.0
      %1555 = vmatpush1.msra.mxu0 0.0
      %1556 = vmatprep.subr.mxu0 0.0
      %1557 = vmatpush1.msra.mxu0 0.0
      %1558 = vmatprep.subr.mxu0 0.0
      %1559 = vmatpush1.msra.mxu0 0.0
      %1560 = vmatprep.subr.mxu0 0.0
      %1561 = vmatpush1.msra.mxu0 0.0
      %1562 = vmatprep.subr.mxu0 0.0
      %1563 = vmatpush1.msra.mxu0 0.0
      %1564 = vmatprep.subr.mxu0 0.0
      %1565 = vmatpush1.msra.mxu0 0.0
      %1566 = vmatprep.subr.mxu0 0.0
      %1567 = vmatpush1.msra.mxu0 0.0
      %1568 = vmatprep.subr.mxu0 0.0
      %1569 = vmatpush1.msra.mxu0 0.0
      %1570 = vmatprep.subr.mxu0 0.0
      %1571 = vmatpush1.msra.mxu0 0.0
      %1572 = vmatprep.subr.mxu0 0.0
      %1573 = vmatpush1.msra.mxu0 0.0
      %1574 = vmatprep.subr.mxu0 0.0
      %1575 = vmatpush1.msra.mxu0 0.0
      %1576 = vmatprep.subr.mxu0 0.0
      %1577 = vmatpush1.msra.mxu0 0.0
      %1578 = vmatprep.subr.mxu0 0.0
      %1579 = vmatpush1.msra.mxu0 0.0
      %1580 = vmatprep.subr.mxu0 0.0
      %1581 = vmatpush1.msra.mxu0 0.0
      %1582 = vmatprep.subr.mxu0 0.0
      %1583 = vmatpush1.msra.mxu0 0.0
      %1584 = vmatprep.subr.mxu0 0.0
      %1585 = vmatpush1.msra.mxu0 0.0
      %1586 = vmatprep.subr.mxu0 0.0
      %1587 = vmatpush1.msra.mxu0 0.0
      %1588 = vmatprep.subr.mxu0 0.0
      %1589 = vmatpush1.msra.mxu0 0.0
      %1590 = vmatprep.subr.mxu0 0.0
      %1591 = vmatpush1.msra.mxu0 0.0
      %1592 = vmatprep.mubr.f32.mxu0 0.0
      %1593 = vmatmul.mubr.f32.gmra.mrb[0].mxu0 %v1360
      %v1594 = vpop.f32.mrb[0].mxu0
      %v1595 = vadd.f32 %v1526, %v1594
      %v1596 = vpop.f32.mrb[0].mxu0
      %1597 = vdwg.mxu0
      %v1598 = vmul.f32 %v1429, 0.35355338
      %vm1599 = vcmask 64512
      %v1601 = vsel %vm1599, %v1598, 0
      %v1604 = vsel %vm1599, %v1512, 0
      %1606 = vmatprep.subr.mxu0 0.0
      %1607 = vmatpush1.xpose.msra.mxu0 %v1604
      %1608 = vmatprep.subr.mxu0 0.0
      %1609 = vmatpush1.xpose.msra.mxu0 0.0
      %1610 = vmatprep.subr.mxu0 0.0
      %1611 = vmatpush1.xpose.msra.mxu0 0.0
      %1612 = vmatprep.subr.mxu0 0.0
      %1613 = vmatpush1.xpose.msra.mxu0 0.0
      %1614 = vmatprep.subr.mxu0 0.0
      %1615 = vmatpush1.xpose.msra.mxu0 0.0
      %1616 = vmatprep.subr.mxu0 0.0
      %1617 = vmatpush1.xpose.msra.mxu0 0.0
      %1618 = vmatprep.subr.mxu0 0.0
      %1619 = vmatpush1.xpose.msra.mxu0 0.0
      %1620 = vmatprep.subr.mxu0 0.0
      %1621 = vmatpush1.xpose.msra.mxu0 0.0
      %1622 = vmatprep.subr.mxu0 0.0
      %1623 = vmatpush1.xpose.msra.mxu0 0.0
      %1624 = vmatprep.subr.mxu0 0.0
      %1625 = vmatpush1.xpose.msra.mxu0 0.0
      %1626 = vmatprep.subr.mxu0 0.0
      %1627 = vmatpush1.xpose.msra.mxu0 0.0
      %1628 = vmatprep.subr.mxu0 0.0
      %1629 = vmatpush1.xpose.msra.mxu0 0.0
      %1630 = vmatprep.subr.mxu0 0.0
      %1631 = vmatpush1.xpose.msra.mxu0 0.0
      %1632 = vmatprep.subr.mxu0 0.0
      %1633 = vmatpush1.xpose.msra.mxu0 0.0
      %1634 = vmatprep.subr.mxu0 0.0
      %1635 = vmatpush1.xpose.msra.mxu0 0.0
      %1636 = vmatprep.subr.mxu0 0.0
      %1637 = vmatpush1.xpose.msra.mxu0 0.0
      %1638 = vmatprep.subr.mxu0 0.0
      %1639 = vmatpush1.xpose.msra.mxu0 0.0
      %1640 = vmatprep.subr.mxu0 0.0
      %1641 = vmatpush1.xpose.msra.mxu0 0.0
      %1642 = vmatprep.subr.mxu0 0.0
      %1643 = vmatpush1.xpose.msra.mxu0 0.0
      %1644 = vmatprep.subr.mxu0 0.0
      %1645 = vmatpush1.xpose.msra.mxu0 0.0
      %1646 = vmatprep.subr.mxu0 0.0
      %1647 = vmatpush1.xpose.msra.mxu0 0.0
      %1648 = vmatprep.subr.mxu0 0.0
      %1649 = vmatpush1.xpose.msra.mxu0 0.0
      %1650 = vmatprep.subr.mxu0 0.0
      %1651 = vmatpush1.xpose.msra.mxu0 0.0
      %1652 = vmatprep.subr.mxu0 0.0
      %1653 = vmatpush1.xpose.msra.mxu0 0.0
      %1654 = vmatprep.subr.mxu0 0.0
      %1655 = vmatpush1.xpose.msra.mxu0 0.0
      %1656 = vmatprep.subr.mxu0 0.0
      %1657 = vmatpush1.xpose.msra.mxu0 0.0
      %1658 = vmatprep.subr.mxu0 0.0
      %1659 = vmatpush1.xpose.msra.mxu0 0.0
      %1660 = vmatprep.subr.mxu0 0.0
      %1661 = vmatpush1.xpose.msra.mxu0 0.0
      %1662 = vmatprep.subr.mxu0 0.0
      %1663 = vmatpush1.xpose.msra.mxu0 0.0
      %1664 = vmatprep.subr.mxu0 0.0
      %1665 = vmatpush1.xpose.msra.mxu0 0.0
      %1666 = vmatprep.subr.mxu0 0.0
      %1667 = vmatpush1.xpose.msra.mxu0 0.0
      %1668 = vmatprep.subr.mxu0 0.0
      %1669 = vmatpush1.xpose.msra.mxu0 0.0
      %1670 = vmatprep.mubr.f32.mxu0 0.0
      %1671 = vmatmul.mubr.f32.gmra.mrb[0].mxu0 %v1601
      %v1672 = vpop.f32.mrb[0].mxu0
      %v1673 = vadd.f32 0.0, %v1672
      %v1674 = vpop.f32.mrb[0].mxu0
      %1675 = vdwg.mxu0
      %v1676 = vsel %vm1599, %v1673, -inf
      %1677 = vmax.xlane.f32.xlu0 %v1676
      %v1678 = vpop.xlane.xlu0 %1677
      %v1679 = vsub.f32 %v1673, %v1678
      %v1680 = vmul.f32 %v1679, 1.442695
      %v1681 = vpow.pop %v1680
      %v1682 = vsel %vm1599, %v1681, 0.0
      %1683 = vadd.xlane.f32.xlu0 %v1682
      %v1684 = vpop.xlane.xlu0 %1683
      %v1685 = vrcp.pop %v1684
      %v1686 = vmul.f32 %v1681, %v1685
      %v1688 = vsel %vm1599, %v1686, 0
      %1690 = vmatprep.subr.mxu0 0.0
      %1691 = vmatpush1.msra.mxu0 %v1595
      %1692 = vmatprep.subr.mxu0 0.0
      %1693 = vmatpush1.msra.mxu0 0.0
      %1694 = vmatprep.subr.mxu0 0.0
      %1695 = vmatpush1.msra.mxu0 0.0
      %1696 = vmatprep.subr.mxu0 0.0
      %1697 = vmatpush1.msra.mxu0 0.0
      %1698 = vmatprep.subr.mxu0 0.0
      %1699 = vmatpush1.msra.mxu0 0.0
      %1700 = vmatprep.subr.mxu0 0.0
      %1701 = vmatpush1.msra.mxu0 0.0
      %1702 = vmatprep.subr.mxu0 0.0
      %1703 = vmatpush1.msra.mxu0 0.0
      %1704 = vmatprep.subr.mxu0 0.0
      %1705 = vmatpush1.msra.mxu0 0.0
      %1706 = vmatprep.subr.mxu0 0.0
      %1707 = vmatpush1.msra.mxu0 0.0
      %1708 = vmatprep.subr.mxu0 0.0
      %1709 = vmatpush1.msra.mxu0 0.0
      %1710 = vmatprep.subr.mxu0 0.0
      %1711 = vmatpush1.msra.mxu0 0.0
      %1712 = vmatprep.subr.mxu0 0.0
      %1713 = vmatpush1.msra.mxu0 0.0
      %1714 = vmatprep.subr.mxu0 0.0
      %1715 = vmatpush1.msra.mxu0 0.0
      %1716 = vmatprep.subr.mxu0 0.0
      %1717 = vmatpush1.msra.mxu0 0.0
      %1718 = vmatprep.subr.mxu0 0.0
      %1719 = vmatpush1.msra.mxu0 0.0
      %1720 = vmatprep.subr.mxu0 0.0
      %1721 = vmatpush1.msra.mxu0 0.0
      %1722 = vmatprep.subr.mxu0 0.0
      %1723 = vmatpush1.msra.mxu0 0.0
      %1724 = vmatprep.subr.mxu0 0.0
      %1725 = vmatpush1.msra.mxu0 0.0
      %1726 = vmatprep.subr.mxu0 0.0
      %1727 = vmatpush1.msra.mxu0 0.0
      %1728 = vmatprep.subr.mxu0 0.0
      %1729 = vmatpush1.msra.mxu0 0.0
      %1730 = vmatprep.subr.mxu0 0.0
      %1731 = vmatpush1.msra.mxu0 0.0
      %1732 = vmatprep.subr.mxu0 0.0
      %1733 = vmatpush1.msra.mxu0 0.0
      %1734 = vmatprep.subr.mxu0 0.0
      %1735 = vmatpush1.msra.mxu0 0.0
      %1736 = vmatprep.subr.mxu0 0.0
      %1737 = vmatpush1.msra.mxu0 0.0
      %1738 = vmatprep.subr.mxu0 0.0
      %1739 = vmatpush1.msra.mxu0 0.0
      %1740 = vmatprep.subr.mxu0 0.0
      %1741 = vmatpush1.msra.mxu0 0.0
      %1742 = vmatprep.subr.mxu0 0.0
      %1743 = vmatpush1.msra.mxu0 0.0
      %1744 = vmatprep.subr.mxu0 0.0
      %1745 = vmatpush1.msra.mxu0 0.0
      %1746 = vmatprep.subr.mxu0 0.0
      %1747 = vmatpush1.msra.mxu0 0.0
      %1748 = vmatprep.subr.mxu0 0.0
      %1749 = vmatpush1.msra.mxu0 0.0
      %1750 = vmatprep.subr.mxu0 0.0
      %1751 = vmatpush1.msra.mxu0 0.0
      %1752 = vmatprep.subr.mxu0 0.0
      %1753 = vmatpush1.msra.mxu0 0.0
      %1754 = vmatprep.mubr.f32.mxu0 0.0
      %1755 = vmatmul.mubr.f32.gmra.mrb[0].mxu0 %v1688
      %v1756 = vpop.f32.mrb[0].mxu0
      %v1757 = vadd.f32 0.0, %v1756
      %v1758 = vpop.f32.mrb[0].mxu0
      %1759 = vdwg.mxu0
      %v1760 = vld [vmem:[%s29] sm:$0xff]
      %s1761 = scalar_lea.vmem %s25, 32
      %v1762 = vld [vmem:[%s1761] sm:$0xff]
      %v1763 = vld [vmem:[%s1761 + $0x8] sm:$0xff]
      %v1764 = vld [vmem:[%s1761 + $0x10] sm:$0xff]
      %v1765 = vld [vmem:[%s1761 + $0x18] sm:$0xff]
      %s1766 = scalar_lea.vmem %s27, 1
      %v1767 = vld [vmem:[%s1766] sm:$0x1]
      %v1769 = vlaneseq
      %v1770 = vshrl.u32 %v1769, 7
      %v1771 = vsub.s32 0, %v1770
      %v1772 = vrot.slane %v1767, %v1771
      %1774 = vmatprep.subr.mxu0 0.0
      %1775 = vmatpush1.msra.mxu0 %v1762
      %1776 = vmatprep.subr.mxu0 0.0
      %1777 = vmatpush1.msra.mxu0 %v1763
      %1778 = vmatprep.subr.mxu0 0.0
      %1779 = vmatpush1.msra.mxu0 %v1764
      %1780 = vmatprep.subr.mxu0 0.0
      %1781 = vmatpush1.msra.mxu0 %v1765
      %1782 = vmatprep.subr.mxu0 0.0
      %1783 = vmatpush1.msra.mxu0 0.0
      %1784 = vmatprep.subr.mxu0 0.0
      %1785 = vmatpush1.msra.mxu0 0.0
      %1786 = vmatprep.subr.mxu0 0.0
      %1787 = vmatpush1.msra.mxu0 0.0
      %1788 = vmatprep.subr.mxu0 0.0
      %1789 = vmatpush1.msra.mxu0 0.0
      %1790 = vmatprep.subr.mxu0 0.0
      %1791 = vmatpush1.msra.mxu0 0.0
      %1792 = vmatprep.subr.mxu0 0.0
      %1793 = vmatpush1.msra.mxu0 0.0
      %1794 = vmatprep.subr.mxu0 0.0
      %1795 = vmatpush1.msra.mxu0 0.0
      %1796 = vmatprep.subr.mxu0 0.0
      %1797 = vmatpush1.msra.mxu0 0.0
      %1798 = vmatprep.subr.mxu0 0.0
      %1799 = vmatpush1.msra.mxu0 0.0
      %1800 = vmatprep.subr.mxu0 0.0
      %1801 = vmatpush1.msra.mxu0 0.0
      %1802 = vmatprep.subr.mxu0 0.0
      %1803 = vmatpush1.msra.mxu0 0.0
      %1804 = vmatprep.subr.mxu0 0.0
      %1805 = vmatpush1.msra.mxu0 0.0
      %1806 = vmatprep.subr.mxu0 0.0
      %1807 = vmatpush1.msra.mxu0 0.0
      %1808 = vmatprep.subr.mxu0 0.0
      %1809 = vmatpush1.msra.mxu0 0.0
      %1810 = vmatprep.subr.mxu0 0.0
      %1811 = vmatpush1.msra.mxu0 0.0
      %1812 = vmatprep.subr.mxu0 0.0
      %1813 = vmatpush1.msra.mxu0 0.0
      %1814 = vmatprep.subr.mxu0 0.0
      %1815 = vmatpush1.msra.mxu0 0.0
      %1816 = vmatprep.subr.mxu0 0.0
      %1817 = vmatpush1.msra.mxu0 0.0
      %1818 = vmatprep.subr.mxu0 0.0
      %1819 = vmatpush1.msra.mxu0 0.0
      %1820 = vmatprep.subr.mxu0 0.0
      %1821 = vmatpush1.msra.mxu0 0.0
      %1822 = vmatprep.subr.mxu0 0.0
      %1823 = vmatpush1.msra.mxu0 0.0
      %1824 = vmatprep.subr.mxu0 0.0
      %1825 = vmatpush1.msra.mxu0 0.0
      %1826 = vmatprep.subr.mxu0 0.0
      %1827 = vmatpush1.msra.mxu0 0.0
      %1828 = vmatprep.subr.mxu0 0.0
      %1829 = vmatpush1.msra.mxu0 0.0
      %1830 = vmatprep.subr.mxu0 0.0
      %1831 = vmatpush1.msra.mxu0 0.0
      %1832 = vmatprep.subr.mxu0 0.0
      %1833 = vmatpush1.msra.mxu0 0.0
      %1834 = vmatprep.subr.mxu0 0.0
      %1835 = vmatpush1.msra.mxu0 0.0
      %1836 = vmatprep.subr.mxu0 0.0
      %1837 = vmatpush1.msra.mxu0 0.0
      %1838 = vmatprep.mubr.f32.mxu0 0.0
      %1839 = vmatmul.mubr.f32.gmra.mrb[0].mxu0 %v1360
      %v1840 = vpop.f32.mrb[0].mxu0
      %v1841 = vadd.f32 %v1772, %v1840
      %v1842 = vpop.f32.mrb[0].mxu0
      %1843 = vdwg.mxu0
      %s1844 = scalar_lea.vmem %s25, 160
      %v1845 = vld [vmem:[%s1844] sm:$0xff]
      %v1846 = vld [vmem:[%s1844 + $0x8] sm:$0xff]
      %v1847 = vld [vmem:[%s1844 + $0x10] sm:$0xff]
      %v1848 = vld [vmem:[%s1844 + $0x18] sm:$0xff]
      %s1849 = scalar_lea.vmem %s27, 5
      %v1850 = vld [vmem:[%s1849] sm:$0x1]
      %v1852 = vlaneseq
      %v1853 = vshrl.u32 %v1852, 7
      %v1854 = vsub.s32 0, %v1853
      %v1855 = vrot.slane %v1850, %v1854
      %1857 = vmatprep.subr.mxu0 0.0
      %1858 = vmatpush1.msra.mxu0 %v1845
      %1859 = vmatprep.subr.mxu0 0.0
      %1860 = vmatpush1.msra.mxu0 %v1846
      %1861 = vmatprep.subr.mxu0 0.0
      %1862 = vmatpush1.msra.mxu0 %v1847
      %1863 = vmatprep.subr.mxu0 0.0
      %1864 = vmatpush1.msra.mxu0 %v1848
      %1865 = vmatprep.subr.mxu0 0.0
      %1866 = vmatpush1.msra.mxu0 0.0
      %1867 = vmatprep.subr.mxu0 0.0
      %1868 = vmatpush1.msra.mxu0 0.0
      %1869 = vmatprep.subr.mxu0 0.0
      %1870 = vmatpush1.msra.mxu0 0.0
      %1871 = vmatprep.subr.mxu0 0.0
      %1872 = vmatpush1.msra.mxu0 0.0
      %1873 = vmatprep.subr.mxu0 0.0
      %1874 = vmatpush1.msra.mxu0 0.0
      %1875 = vmatprep.subr.mxu0 0.0
      %1876 = vmatpush1.msra.mxu0 0.0
      %1877 = vmatprep.subr.mxu0 0.0
      %1878 = vmatpush1.msra.mxu0 0.0
      %1879 = vmatprep.subr.mxu0 0.0
      %1880 = vmatpush1.msra.mxu0 0.0
      %1881 = vmatprep.subr.mxu0 0.0
      %1882 = vmatpush1.msra.mxu0 0.0
      %1883 = vmatprep.subr.mxu0 0.0
      %1884 = vmatpush1.msra.mxu0 0.0
      %1885 = vmatprep.subr.mxu0 0.0
      %1886 = vmatpush1.msra.mxu0 0.0
      %1887 = vmatprep.subr.mxu0 0.0
      %1888 = vmatpush1.msra.mxu0 0.0
      %1889 = vmatprep.subr.mxu0 0.0
      %1890 = vmatpush1.msra.mxu0 0.0
      %1891 = vmatprep.subr.mxu0 0.0
      %1892 = vmatpush1.msra.mxu0 0.0
      %1893 = vmatprep.subr.mxu0 0.0
      %1894 = vmatpush1.msra.mxu0 0.0
      %1895 = vmatprep.subr.mxu0 0.0
      %1896 = vmatpush1.msra.mxu0 0.0
      %1897 = vmatprep.subr.mxu0 0.0
      %1898 = vmatpush1.msra.mxu0 0.0
      %1899 = vmatprep.subr.mxu0 0.0
      %1900 = vmatpush1.msra.mxu0 0.0
      %1901 = vmatprep.subr.mxu0 0.0
      %1902 = vmatpush1.msra.mxu0 0.0
      %1903 = vmatprep.subr.mxu0 0.0
      %1904 = vmatpush1.msra.mxu0 0.0
      %1905 = vmatprep.subr.mxu0 0.0
      %1906 = vmatpush1.msra.mxu0 0.0
      %1907 = vmatprep.subr.mxu0 0.0
      %1908 = vmatpush1.msra.mxu0 0.0
      %1909 = vmatprep.subr.mxu0 0.0
      %1910 = vmatpush1.msra.mxu0 0.0
      %1911 = vmatprep.subr.mxu0 0.0
      %1912 = vmatpush1.msra.mxu0 0.0
      %1913 = vmatprep.subr.mxu0 0.0
      %1914 = vmatpush1.msra.mxu0 0.0
      %1915 = vmatprep.subr.mxu0 0.0
      %1916 = vmatpush1.msra.mxu0 0.0
      %1917 = vmatprep.subr.mxu0 0.0
      %1918 = vmatpush1.msra.mxu0 0.0
      %1919 = vmatprep.subr.mxu0 0.0
      %1920 = vmatpush1.msra.mxu0 0.0
      %1921 = vmatprep.mubr.f32.mxu0 0.0
      %1922 = vmatmul.mubr.f32.gmra.mrb[0].mxu0 %v1360
      %v1923 = vpop.f32.mrb[0].mxu0
      %v1924 = vadd.f32 %v1855, %v1923
      %v1925 = vpop.f32.mrb[0].mxu0
      %1926 = vdwg.mxu0
      %s1927 = scalar_lea.vmem %s25, 288
      %v1928 = vld [vmem:[%s1927] sm:$0xff]
      %v1929 = vld [vmem:[%s1927 + $0x8] sm:$0xff]
      %v1930 = vld [vmem:[%s1927 + $0x10] sm:$0xff]
      %v1931 = vld [vmem:[%s1927 + $0x18] sm:$0xff]
      %s1932 = scalar_lea.vmem %s27, 9
      %v1933 = vld [vmem:[%s1932] sm:$0x1]
      %v1935 = vlaneseq
      %v1936 = vshrl.u32 %v1935, 7
      %v1937 = vsub.s32 0, %v1936
      %v1938 = vrot.slane %v1933, %v1937
      %1940 = vmatprep.subr.mxu0 0.0
      %1941 = vmatpush1.msra.mxu0 %v1928
      %1942 = vmatprep.subr.mxu0 0.0
      %1943 = vmatpush1.msra.mxu0 %v1929
      %1944 = vmatprep.subr.mxu0 0.0
      %1945 = vmatpush1.msra.mxu0 %v1930
      %1946 = vmatprep.subr.mxu0 0.0
      %1947 = vmatpush1.msra.mxu0 %v1931
      %1948 = vmatprep.subr.mxu0 0.0
      %1949 = vmatpush1.msra.mxu0 0.0
      %1950 = vmatprep.subr.mxu0 0.0
      %1951 = vmatpush1.msra.mxu0 0.0
      %1952 = vmatprep.subr.mxu0 0.0
      %1953 = vmatpush1.msra.mxu0 0.0
      %1954 = vmatprep.subr.mxu0 0.0
      %1955 = vmatpush1.msra.mxu0 0.0
      %1956 = vmatprep.subr.mxu0 0.0
      %1957 = vmatpush1.msra.mxu0 0.0
      %1958 = vmatprep.subr.mxu0 0.0
      %1959 = vmatpush1.msra.mxu0 0.0
      %1960 = vmatprep.subr.mxu0 0.0
      %1961 = vmatpush1.msra.mxu0 0.0
      %1962 = vmatprep.subr.mxu0 0.0
      %1963 = vmatpush1.msra.mxu0 0.0
      %1964 = vmatprep.subr.mxu0 0.0
      %1965 = vmatpush1.msra.mxu0 0.0
      %1966 = vmatprep.subr.mxu0 0.0
      %1967 = vmatpush1.msra.mxu0 0.0
      %1968 = vmatprep.subr.mxu0 0.0
      %1969 = vmatpush1.msra.mxu0 0.0
      %1970 = vmatprep.subr.mxu0 0.0
      %1971 = vmatpush1.msra.mxu0 0.0
      %1972 = vmatprep.subr.mxu0 0.0
      %1973 = vmatpush1.msra.mxu0 0.0
      %1974 = vmatprep.subr.mxu0 0.0
      %1975 = vmatpush1.msra.mxu0 0.0
      %1976 = vmatprep.subr.mxu0 0.0
      %1977 = vmatpush1.msra.mxu0 0.0
      %1978 = vmatprep.subr.mxu0 0.0
      %1979 = vmatpush1.msra.mxu0 0.0
      %1980 = vmatprep.subr.mxu0 0.0
      %1981 = vmatpush1.msra.mxu0 0.0
      %1982 = vmatprep.subr.mxu0 0.0
      %1983 = vmatpush1.msra.mxu0 0.0
      %1984 = vmatprep.subr.mxu0 0.0
      %1985 = vmatpush1.msra.mxu0 0.0
      %1986 = vmatprep.subr.mxu0 0.0
      %1987 = vmatpush1.msra.mxu0 0.0
      %1988 = vmatprep.subr.mxu0 0.0
      %1989 = vmatpush1.msra.mxu0 0.0
      %1990 = vmatprep.subr.mxu0 0.0
      %1991 = vmatpush1.msra.mxu0 0.0
      %1992 = vmatprep.subr.mxu0 0.0
      %1993 = vmatpush1.msra.mxu0 0.0
      %1994 = vmatprep.subr.mxu0 0.0
      %1995 = vmatpush1.msra.mxu0 0.0
      %1996 = vmatprep.subr.mxu0 0.0
      %1997 = vmatpush1.msra.mxu0 0.0
      %1998 = vmatprep.subr.mxu0 0.0
      %1999 = vmatpush1.msra.mxu0 0.0
      %2000 = vmatprep.subr.mxu0 0.0
      %2001 = vmatpush1.msra.mxu0 0.0
      %2002 = vmatprep.subr.mxu0 0.0
      %2003 = vmatpush1.msra.mxu0 0.0
      %2004 = vmatprep.mubr.f32.mxu0 0.0
      %2005 = vmatmul.mubr.f32.gmra.mrb[0].mxu0 %v1360
      %v2006 = vpop.f32.mrb[0].mxu0
      %v2007 = vadd.f32 %v1938, %v2006
      %v2008 = vpop.f32.mrb[0].mxu0
      %2009 = vdwg.mxu0
      %v2010 = vmul.f32 %v1841, 0.35355338
      %v2012 = vsel %vm1599, %v2010, 0
      %v2015 = vsel %vm1599, %v1924, 0
      %2017 = vmatprep.subr.mxu0 0.0
      %2018 = vmatpush1.xpose.msra.mxu0 %v2015
      %2019 = vmatprep.subr.mxu0 0.0
      %2020 = vmatpush1.xpose.msra.mxu0 0.0
      %2021 = vmatprep.subr.mxu0 0.0
      %2022 = vmatpush1.xpose.msra.mxu0 0.0
      %2023 = vmatprep.subr.mxu0 0.0
      %2024 = vmatpush1.xpose.msra.mxu0 0.0
      %2025 = vmatprep.subr.mxu0 0.0
      %2026 = vmatpush1.xpose.msra.mxu0 0.0
      %2027 = vmatprep.subr.mxu0 0.0
      %2028 = vmatpush1.xpose.msra.mxu0 0.0
      %2029 = vmatprep.subr.mxu0 0.0
      %2030 = vmatpush1.xpose.msra.mxu0 0.0
      %2031 = vmatprep.subr.mxu0 0.0
      %2032 = vmatpush1.xpose.msra.mxu0 0.0
      %2033 = vmatprep.subr.mxu0 0.0
      %2034 = vmatpush1.xpose.msra.mxu0 0.0
      %2035 = vmatprep.subr.mxu0 0.0
      %2036 = vmatpush1.xpose.msra.mxu0 0.0
      %2037 = vmatprep.subr.mxu0 0.0
      %2038 = vmatpush1.xpose.msra.mxu0 0.0
      %2039 = vmatprep.subr.mxu0 0.0
      %2040 = vmatpush1.xpose.msra.mxu0 0.0
      %2041 = vmatprep.subr.mxu0 0.0
      %2042 = vmatpush1.xpose.msra.mxu0 0.0
      %2043 = vmatprep.subr.mxu0 0.0
      %2044 = vmatpush1.xpose.msra.mxu0 0.0
      %2045 = vmatprep.subr.mxu0 0.0
      %2046 = vmatpush1.xpose.msra.mxu0 0.0
      %2047 = vmatprep.subr.mxu0 0.0
      %2048 = vmatpush1.xpose.msra.mxu0 0.0
      %2049 = vmatprep.subr.mxu0 0.0
      %2050 = vmatpush1.xpose.msra.mxu0 0.0
      %2051 = vmatprep.subr.mxu0 0.0
      %2052 = vmatpush1.xpose.msra.mxu0 0.0
      %2053 = vmatprep.subr.mxu0 0.0
      %2054 = vmatpush1.xpose.msra.mxu0 0.0
      %2055 = vmatprep.subr.mxu0 0.0
      %2056 = vmatpush1.xpose.msra.mxu0 0.0
      %2057 = vmatprep.subr.mxu0 0.0
      %2058 = vmatpush1.xpose.msra.mxu0 0.0
      %2059 = vmatprep.subr.mxu0 0.0
      %2060 = vmatpush1.xpose.msra.mxu0 0.0
      %2061 = vmatprep.subr.mxu0 0.0
      %2062 = vmatpush1.xpose.msra.mxu0 0.0
      %2063 = vmatprep.subr.mxu0 0.0
      %2064 = vmatpush1.xpose.msra.mxu0 0.0
      %2065 = vmatprep.subr.mxu0 0.0
      %2066 = vmatpush1.xpose.msra.mxu0 0.0
      %2067 = vmatprep.subr.mxu0 0.0
      %2068 = vmatpush1.xpose.msra.mxu0 0.0
      %2069 = vmatprep.subr.mxu0 0.0
      %2070 = vmatpush1.xpose.msra.mxu0 0.0
      %2071 = vmatprep.subr.mxu0 0.0
      %2072 = vmatpush1.xpose.msra.mxu0 0.0
      %2073 = vmatprep.subr.mxu0 0.0
      %2074 = vmatpush1.xpose.msra.mxu0 0.0
      %2075 = vmatprep.subr.mxu0 0.0
      %2076 = vmatpush1.xpose.msra.mxu0 0.0
      %2077 = vmatprep.subr.mxu0 0.0
      %2078 = vmatpush1.xpose.msra.mxu0 0.0
      %2079 = vmatprep.subr.mxu0 0.0
      %2080 = vmatpush1.xpose.msra.mxu0 0.0
      %2081 = vmatprep.mubr.f32.mxu0 0.0
      %2082 = vmatmul.mubr.f32.gmra.mrb[0].mxu0 %v2012
      %v2083 = vpop.f32.mrb[0].mxu0
      %v2084 = vadd.f32 0.0, %v2083
      %v2085 = vpop.f32.mrb[0].mxu0
      %2086 = vdwg.mxu0
      %v2087 = vsel %vm1599, %v2084, -inf
      %2088 = vmax.xlane.f32.xlu0 %v2087
      %v2089 = vpop.xlane.xlu0 %2088
      %v2090 = vsub.f32 %v2084, %v2089
      %v2091 = vmul.f32 %v2090, 1.442695
      %v2092 = vpow.pop %v2091
      %v2093 = vsel %vm1599, %v2092, 0.0
      %2094 = vadd.xlane.f32.xlu0 %v2093
      %v2095 = vpop.xlane.xlu0 %2094
      %v2096 = vrcp.pop %v2095
      %v2097 = vmul.f32 %v2092, %v2096
      %v2099 = vsel %vm1599, %v2097, 0
      %2101 = vmatprep.subr.mxu0 0.0
      %2102 = vmatpush1.msra.mxu0 %v2007
      %2103 = vmatprep.subr.mxu0 0.0
      %2104 = vmatpush1.msra.mxu0 0.0
      %2105 = vmatprep.subr.mxu0 0.0
      %2106 = vmatpush1.msra.mxu0 0.0
      %2107 = vmatprep.subr.mxu0 0.0
      %2108 = vmatpush1.msra.mxu0 0.0
      %2109 = vmatprep.subr.mxu0 0.0
      %2110 = vmatpush1.msra.mxu0 0.0
      %2111 = vmatprep.subr.mxu0 0.0
      %2112 = vmatpush1.msra.mxu0 0.0
      %2113 = vmatprep.subr.mxu0 0.0
      %2114 = vmatpush1.msra.mxu0 0.0
      %2115 = vmatprep.subr.mxu0 0.0
      %2116 = vmatpush1.msra.mxu0 0.0
      %2117 = vmatprep.subr.mxu0 0.0
      %2118 = vmatpush1.msra.mxu0 0.0
      %2119 = vmatprep.subr.mxu0 0.0
      %2120 = vmatpush1.msra.mxu0 0.0
      %2121 = vmatprep.subr.mxu0 0.0
      %2122 = vmatpush1.msra.mxu0 0.0
      %2123 = vmatprep.subr.mxu0 0.0
      %2124 = vmatpush1.msra.mxu0 0.0
      %2125 = vmatprep.subr.mxu0 0.0
      %2126 = vmatpush1.msra.mxu0 0.0
      %2127 = vmatprep.subr.mxu0 0.0
      %2128 = vmatpush1.msra.mxu0 0.0
      %2129 = vmatprep.subr.mxu0 0.0
      %2130 = vmatpush1.msra.mxu0 0.0
      %2131 = vmatprep.subr.mxu0 0.0
      %2132 = vmatpush1.msra.mxu0 0.0
      %2133 = vmatprep.subr.mxu0 0.0
      %2134 = vmatpush1.msra.mxu0 0.0
      %2135 = vmatprep.subr.mxu0 0.0
      %2136 = vmatpush1.msra.mxu0 0.0
      %2137 = vmatprep.subr.mxu0 0.0
      %2138 = vmatpush1.msra.mxu0 0.0
      %2139 = vmatprep.subr.mxu0 0.0
      %2140 = vmatpush1.msra.mxu0 0.0
      %2141 = vmatprep.subr.mxu0 0.0
      %2142 = vmatpush1.msra.mxu0 0.0
      %2143 = vmatprep.subr.mxu0 0.0
      %2144 = vmatpush1.msra.mxu0 0.0
      %2145 = vmatprep.subr.mxu0 0.0
      %2146 = vmatpush1.msra.mxu0 0.0
      %2147 = vmatprep.subr.mxu0 0.0
      %2148 = vmatpush1.msra.mxu0 0.0
      %2149 = vmatprep.subr.mxu0 0.0
      %2150 = vmatpush1.msra.mxu0 0.0
      %2151 = vmatprep.subr.mxu0 0.0
      %2152 = vmatpush1.msra.mxu0 0.0
      %2153 = vmatprep.subr.mxu0 0.0
      %2154 = vmatpush1.msra.mxu0 0.0
      %2155 = vmatprep.subr.mxu0 0.0
      %2156 = vmatpush1.msra.mxu0 0.0
      %2157 = vmatprep.subr.mxu0 0.0
      %2158 = vmatpush1.msra.mxu0 0.0
      %2159 = vmatprep.subr.mxu0 0.0
      %2160 = vmatpush1.msra.mxu0 0.0
      %2161 = vmatprep.subr.mxu0 0.0
      %2162 = vmatpush1.msra.mxu0 0.0
      %2163 = vmatprep.subr.mxu0 0.0
      %2164 = vmatpush1.msra.mxu0 0.0
      %2165 = vmatprep.mubr.f32.mxu0 0.0
      %2166 = vmatmul.mubr.f32.gmra.mrb[0].mxu0 %v2099
      %v2167 = vpop.f32.mrb[0].mxu0
      %v2168 = vadd.f32 0.0, %v2167
      %v2169 = vpop.f32.mrb[0].mxu0
      %2170 = vdwg.mxu0
      %s2171 = scalar_lea.vmem %s29, 8
      %v2172 = vld [vmem:[%s2171] sm:$0xff]
      %v2174 = vsel %vm1599, %v2168, 0
      %2176 = vmatprep.subr.mxu0 0.0
      %2177 = vmatpush1.msra.mxu0 %v2172
      %2178 = vmatprep.subr.mxu0 0.0
      %2179 = vmatpush1.msra.mxu0 0.0
      %2180 = vmatprep.subr.mxu0 0.0
      %2181 = vmatpush1.msra.mxu0 0.0
      %2182 = vmatprep.subr.mxu0 0.0
      %2183 = vmatpush1.msra.mxu0 0.0
      %2184 = vmatprep.subr.mxu0 0.0
      %2185 = vmatpush1.msra.mxu0 0.0
      %2186 = vmatprep.subr.mxu0 0.0
      %2187 = vmatpush1.msra.mxu0 0.0
      %2188 = vmatprep.subr.mxu0 0.0
      %2189 = vmatpush1.msra.mxu0 0.0
      %2190 = vmatprep.subr.mxu0 0.0
      %2191 = vmatpush1.msra.mxu0 0.0
      %2192 = vmatprep.subr.mxu0 0.0
      %2193 = vmatpush1.msra.mxu0 0.0
      %2194 = vmatprep.subr.mxu0 0.0
      %2195 = vmatpush1.msra.mxu0 0.0
      %2196 = vmatprep.subr.mxu0 0.0
      %2197 = vmatpush1.msra.mxu0 0.0
      %2198 = vmatprep.subr.mxu0 0.0
      %2199 = vmatpush1.msra.mxu0 0.0
      %2200 = vmatprep.subr.mxu0 0.0
      %2201 = vmatpush1.msra.mxu0 0.0
      %2202 = vmatprep.subr.mxu0 0.0
      %2203 = vmatpush1.msra.mxu0 0.0
      %2204 = vmatprep.subr.mxu0 0.0
      %2205 = vmatpush1.msra.mxu0 0.0
      %2206 = vmatprep.subr.mxu0 0.0
      %2207 = vmatpush1.msra.mxu0 0.0
      %2208 = vmatprep.subr.mxu0 0.0
      %2209 = vmatpush1.msra.mxu0 0.0
      %2210 = vmatprep.subr.mxu0 0.0
      %2211 = vmatpush1.msra.mxu0 0.0
      %2212 = vmatprep.subr.mxu0 0.0
      %2213 = vmatpush1.msra.mxu0 0.0
      %2214 = vmatprep.subr.mxu0 0.0
      %2215 = vmatpush1.msra.mxu0 0.0
      %2216 = vmatprep.subr.mxu0 0.0
      %2217 = vmatpush1.msra.mxu0 0.0
      %2218 = vmatprep.subr.mxu0 0.0
      %2219 = vmatpush1.msra.mxu0 0.0
      %2220 = vmatprep.subr.mxu0 0.0
      %2221 = vmatpush1.msra.mxu0 0.0
      %2222 = vmatprep.subr.mxu0 0.0
      %2223 = vmatpush1.msra.mxu0 0.0
      %2224 = vmatprep.subr.mxu0 0.0
      %2225 = vmatpush1.msra.mxu0 0.0
      %2226 = vmatprep.subr.mxu0 0.0
      %2227 = vmatpush1.msra.mxu0 0.0
      %2228 = vmatprep.subr.mxu0 0.0
      %2229 = vmatpush1.msra.mxu0 0.0
      %2230 = vmatprep.subr.mxu0 0.0
      %2231 = vmatpush1.msra.mxu0 0.0
      %2232 = vmatprep.subr.mxu0 0.0
      %2233 = vmatpush1.msra.mxu0 0.0
      %2234 = vmatprep.subr.mxu0 0.0
      %2235 = vmatpush1.msra.mxu0 0.0
      %2236 = vmatprep.subr.mxu0 0.0
      %2237 = vmatpush1.msra.mxu0 0.0
      %2238 = vmatprep.subr.mxu0 0.0
      %2239 = vmatpush1.msra.mxu0 0.0
      %2240 = vmatprep.mubr.f32.mxu0 0.0
      %2241 = vmatmul.mubr.f32.gmra.mrb[0].mxu0 %v2174
      %v2242 = vpop.f32.mrb[0].mxu0
      %v2243 = vadd.f32 0.0, %v2242
      %v2244 = vpop.f32.mrb[0].mxu0
      %2245 = vdwg.mxu0
      %v2247 = vsel %vm1599, %v1757, 0
      %2249 = vmatprep.subr.mxu0 0.0
      %2250 = vmatpush1.msra.mxu0 %v1760
      %2251 = vmatprep.subr.mxu0 0.0
      %2252 = vmatpush1.msra.mxu0 0.0
      %2253 = vmatprep.subr.mxu0 0.0
      %2254 = vmatpush1.msra.mxu0 0.0
      %2255 = vmatprep.subr.mxu0 0.0
      %2256 = vmatpush1.msra.mxu0 0.0
      %2257 = vmatprep.subr.mxu0 0.0
      %2258 = vmatpush1.msra.mxu0 0.0
      %2259 = vmatprep.subr.mxu0 0.0
      %2260 = vmatpush1.msra.mxu0 0.0
      %2261 = vmatprep.subr.mxu0 0.0
      %2262 = vmatpush1.msra.mxu0 0.0
      %2263 = vmatprep.subr.mxu0 0.0
      %2264 = vmatpush1.msra.mxu0 0.0
      %2265 = vmatprep.subr.mxu0 0.0
      %2266 = vmatpush1.msra.mxu0 0.0
      %2267 = vmatprep.subr.mxu0 0.0
      %2268 = vmatpush1.msra.mxu0 0.0
      %2269 = vmatprep.subr.mxu0 0.0
      %2270 = vmatpush1.msra.mxu0 0.0
      %2271 = vmatprep.subr.mxu0 0.0
      %2272 = vmatpush1.msra.mxu0 0.0
      %2273 = vmatprep.subr.mxu0 0.0
      %2274 = vmatpush1.msra.mxu0 0.0
      %2275 = vmatprep.subr.mxu0 0.0
      %2276 = vmatpush1.msra.mxu0 0.0
      %2277 = vmatprep.subr.mxu0 0.0
      %2278 = vmatpush1.msra.mxu0 0.0
      %2279 = vmatprep.subr.mxu0 0.0
      %2280 = vmatpush1.msra.mxu0 0.0
      %2281 = vmatprep.subr.mxu0 0.0
      %2282 = vmatpush1.msra.mxu0 0.0
      %2283 = vmatprep.subr.mxu0 0.0
      %2284 = vmatpush1.msra.mxu0 0.0
      %2285 = vmatprep.subr.mxu0 0.0
      %2286 = vmatpush1.msra.mxu0 0.0
      %2287 = vmatprep.subr.mxu0 0.0
      %2288 = vmatpush1.msra.mxu0 0.0
      %2289 = vmatprep.subr.mxu0 0.0
      %2290 = vmatpush1.msra.mxu0 0.0
      %2291 = vmatprep.subr.mxu0 0.0
      %2292 = vmatpush1.msra.mxu0 0.0
      %2293 = vmatprep.subr.mxu0 0.0
      %2294 = vmatpush1.msra.mxu0 0.0
      %2295 = vmatprep.subr.mxu0 0.0
      %2296 = vmatpush1.msra.mxu0 0.0
      %2297 = vmatprep.subr.mxu0 0.0
      %2298 = vmatpush1.msra.mxu0 0.0
      %2299 = vmatprep.subr.mxu0 0.0
      %2300 = vmatpush1.msra.mxu0 0.0
      %2301 = vmatprep.subr.mxu0 0.0
      %2302 = vmatpush1.msra.mxu0 0.0
      %2303 = vmatprep.subr.mxu0 0.0
      %2304 = vmatpush1.msra.mxu0 0.0
      %2305 = vmatprep.subr.mxu0 0.0
      %2306 = vmatpush1.msra.mxu0 0.0
      %2307 = vmatprep.subr.mxu0 0.0
      %2308 = vmatpush1.msra.mxu0 0.0
      %2309 = vmatprep.subr.mxu0 0.0
      %2310 = vmatpush1.msra.mxu0 0.0
      %2311 = vmatprep.subr.mxu0 0.0
      %2312 = vmatpush1.msra.mxu0 0.0
      %2313 = vmatprep.mubr.f32.mxu0 0.0
      %2314 = vmatmul.mubr.f32.gmra.mrb[0].mxu0 %v2247
      %v2315 = vpop.f32.mrb[0].mxu0
      %v2316 = vadd.f32 %v2243, %v2315
      %v2317 = vpop.f32.mrb[0].mxu0
      %2318 = vdwg.mxu0
      %s2319 = scalar_lea.vmem %s25, 64
      %v2320 = vld [vmem:[%s2319] sm:$0xff]
      %v2321 = vld [vmem:[%s2319 + $0x8] sm:$0xff]
      %v2322 = vld [vmem:[%s2319 + $0x10] sm:$0xff]
      %v2323 = vld [vmem:[%s2319 + $0x18] sm:$0xff]
      %s2324 = scalar_lea.vmem %s27, 2
      %v2325 = vld [vmem:[%s2324] sm:$0x1]
      %v2327 = vlaneseq
      %v2328 = vshrl.u32 %v2327, 7
      %v2329 = vsub.s32 0, %v2328
      %v2330 = vrot.slane %v2325, %v2329
      %2332 = vmatprep.subr.mxu0 0.0
      %2333 = vmatpush1.msra.mxu0 %v2320
      %2334 = vmatprep.subr.mxu0 0.0
      %2335 = vmatpush1.msra.mxu0 %v2321
      %2336 = vmatprep.subr.mxu0 0.0
      %2337 = vmatpush1.msra.mxu0 %v2322
      %2338 = vmatprep.subr.mxu0 0.0
      %2339 = vmatpush1.msra.mxu0 %v2323
      %2340 = vmatprep.subr.mxu0 0.0
      %2341 = vmatpush1.msra.mxu0 0.0
      %2342 = vmatprep.subr.mxu0 0.0
      %2343 = vmatpush1.msra.mxu0 0.0
      %2344 = vmatprep.subr.mxu0 0.0
      %2345 = vmatpush1.msra.mxu0 0.0
      %2346 = vmatprep.subr.mxu0 0.0
      %2347 = vmatpush1.msra.mxu0 0.0
      %2348 = vmatprep.subr.mxu0 0.0
      %2349 = vmatpush1.msra.mxu0 0.0
      %2350 = vmatprep.subr.mxu0 0.0
      %2351 = vmatpush1.msra.mxu0 0.0
      %2352 = vmatprep.subr.mxu0 0.0
      %2353 = vmatpush1.msra.mxu0 0.0
      %2354 = vmatprep.subr.mxu0 0.0
      %2355 = vmatpush1.msra.mxu0 0.0
      %2356 = vmatprep.subr.mxu0 0.0
      %2357 = vmatpush1.msra.mxu0 0.0
      %2358 = vmatprep.subr.mxu0 0.0
      %2359 = vmatpush1.msra.mxu0 0.0
      %2360 = vmatprep.subr.mxu0 0.0
      %2361 = vmatpush1.msra.mxu0 0.0
      %2362 = vmatprep.subr.mxu0 0.0
      %2363 = vmatpush1.msra.mxu0 0.0
      %2364 = vmatprep.subr.mxu0 0.0
      %2365 = vmatpush1.msra.mxu0 0.0
      %2366 = vmatprep.subr.mxu0 0.0
      %2367 = vmatpush1.msra.mxu0 0.0
      %2368 = vmatprep.subr.mxu0 0.0
      %2369 = vmatpush1.msra.mxu0 0.0
      %2370 = vmatprep.subr.mxu0 0.0
      %2371 = vmatpush1.msra.mxu0 0.0
      %2372 = vmatprep.subr.mxu0 0.0
      %2373 = vmatpush1.msra.mxu0 0.0
      %2374 = vmatprep.subr.mxu0 0.0
      %2375 = vmatpush1.msra.mxu0 0.0
      %2376 = vmatprep.subr.mxu0 0.0
      %2377 = vmatpush1.msra.mxu0 0.0
      %2378 = vmatprep.subr.mxu0 0.0
      %2379 = vmatpush1.msra.mxu0 0.0
      %2380 = vmatprep.subr.mxu0 0.0
      %2381 = vmatpush1.msra.mxu0 0.0
      %2382 = vmatprep.subr.mxu0 0.0
      %2383 = vmatpush1.msra.mxu0 0.0
      %2384 = vmatprep.subr.mxu0 0.0
      %2385 = vmatpush1.msra.mxu0 0.0
      %2386 = vmatprep.subr.mxu0 0.0
      %2387 = vmatpush1.msra.mxu0 0.0
      %2388 = vmatprep.subr.mxu0 0.0
      %2389 = vmatpush1.msra.mxu0 0.0
      %2390 = vmatprep.subr.mxu0 0.0
      %2391 = vmatpush1.msra.mxu0 0.0
      %2392 = vmatprep.subr.mxu0 0.0
      %2393 = vmatpush1.msra.mxu0 0.0
      %2394 = vmatprep.subr.mxu0 0.0
      %2395 = vmatpush1.msra.mxu0 0.0
      %2396 = vmatprep.mubr.f32.mxu0 0.0
      %2397 = vmatmul.mubr.f32.gmra.mrb[0].mxu0 %v1360
      %v2398 = vpop.f32.mrb[0].mxu0
      %v2399 = vadd.f32 %v2330, %v2398
      %v2400 = vpop.f32.mrb[0].mxu0
      %2401 = vdwg.mxu0
      %s2402 = scalar_lea.vmem %s25, 192
      %v2403 = vld [vmem:[%s2402] sm:$0xff]
      %v2404 = vld [vmem:[%s2402 + $0x8] sm:$0xff]
      %v2405 = vld [vmem:[%s2402 + $0x10] sm:$0xff]
      %v2406 = vld [vmem:[%s2402 + $0x18] sm:$0xff]
      %s2407 = scalar_lea.vmem %s27, 6
      %v2408 = vld [vmem:[%s2407] sm:$0x1]
      %v2410 = vlaneseq
      %v2411 = vshrl.u32 %v2410, 7
      %v2412 = vsub.s32 0, %v2411
      %v2413 = vrot.slane %v2408, %v2412
      %2415 = vmatprep.subr.mxu0 0.0
      %2416 = vmatpush1.msra.mxu0 %v2403
      %2417 = vmatprep.subr.mxu0 0.0
      %2418 = vmatpush1.msra.mxu0 %v2404
      %2419 = vmatprep.subr.mxu0 0.0
      %2420 = vmatpush1.msra.mxu0 %v2405
      %2421 = vmatprep.subr.mxu0 0.0
      %2422 = vmatpush1.msra.mxu0 %v2406
      %2423 = vmatprep.subr.mxu0 0.0
      %2424 = vmatpush1.msra.mxu0 0.0
      %2425 = vmatprep.subr.mxu0 0.0
      %2426 = vmatpush1.msra.mxu0 0.0
      %2427 = vmatprep.subr.mxu0 0.0
      %2428 = vmatpush1.msra.mxu0 0.0
      %2429 = vmatprep.subr.mxu0 0.0
      %2430 = vmatpush1.msra.mxu0 0.0
      %2431 = vmatprep.subr.mxu0 0.0
      %2432 = vmatpush1.msra.mxu0 0.0
      %2433 = vmatprep.subr.mxu0 0.0
      %2434 = vmatpush1.msra.mxu0 0.0
      %2435 = vmatprep.subr.mxu0 0.0
      %2436 = vmatpush1.msra.mxu0 0.0
      %2437 = vmatprep.subr.mxu0 0.0
      %2438 = vmatpush1.msra.mxu0 0.0
      %2439 = vmatprep.subr.mxu0 0.0
      %2440 = vmatpush1.msra.mxu0 0.0
      %2441 = vmatprep.subr.mxu0 0.0
      %2442 = vmatpush1.msra.mxu0 0.0
      %2443 = vmatprep.subr.mxu0 0.0
      %2444 = vmatpush1.msra.mxu0 0.0
      %2445 = vmatprep.subr.mxu0 0.0
      %2446 = vmatpush1.msra.mxu0 0.0
      %2447 = vmatprep.subr.mxu0 0.0
      %2448 = vmatpush1.msra.mxu0 0.0
      %2449 = vmatprep.subr.mxu0 0.0
      %2450 = vmatpush1.msra.mxu0 0.0
      %2451 = vmatprep.subr.mxu0 0.0
      %2452 = vmatpush1.msra.mxu0 0.0
      %2453 = vmatprep.subr.mxu0 0.0
      %2454 = vmatpush1.msra.mxu0 0.0
      %2455 = vmatprep.subr.mxu0 0.0
      %2456 = vmatpush1.msra.mxu0 0.0
      %2457 = vmatprep.subr.mxu0 0.0
      %2458 = vmatpush1.msra.mxu0 0.0
      %2459 = vmatprep.subr.mxu0 0.0
      %2460 = vmatpush1.msra.mxu0 0.0
      %2461 = vmatprep.subr.mxu0 0.0
      %2462 = vmatpush1.msra.mxu0 0.0
      %2463 = vmatprep.subr.mxu0 0.0
      %2464 = vmatpush1.msra.mxu0 0.0
      %2465 = vmatprep.subr.mxu0 0.0
      %2466 = vmatpush1.msra.mxu0 0.0
      %2467 = vmatprep.subr.mxu0 0.0
      %2468 = vmatpush1.msra.mxu0 0.0
      %2469 = vmatprep.subr.mxu0 0.0
      %2470 = vmatpush1.msra.mxu0 0.0
      %2471 = vmatprep.subr.mxu0 0.0
      %2472 = vmatpush1.msra.mxu0 0.0
      %2473 = vmatprep.subr.mxu0 0.0
      %2474 = vmatpush1.msra.mxu0 0.0
      %2475 = vmatprep.subr.mxu0 0.0
      %2476 = vmatpush1.msra.mxu0 0.0
      %2477 = vmatprep.subr.mxu0 0.0
      %2478 = vmatpush1.msra.mxu0 0.0
      %2479 = vmatprep.mubr.f32.mxu0 0.0
      %2480 = vmatmul.mubr.f32.gmra.mrb[0].mxu0 %v1360
      %v2481 = vpop.f32.mrb[0].mxu0
      %v2482 = vadd.f32 %v2413, %v2481
      %v2483 = vpop.f32.mrb[0].mxu0
      %2484 = vdwg.mxu0
      %s2485 = scalar_lea.vmem %s25, 320
      %v2486 = vld [vmem:[%s2485] sm:$0xff]
      %v2487 = vld [vmem:[%s2485 + $0x8] sm:$0xff]
      %v2488 = vld [vmem:[%s2485 + $0x10] sm:$0xff]
      %v2489 = vld [vmem:[%s2485 + $0x18] sm:$0xff]
      %s2490 = scalar_lea.vmem %s27, 10
      %v2491 = vld [vmem:[%s2490] sm:$0x1]
      %v2493 = vlaneseq
      %v2494 = vshrl.u32 %v2493, 7
      %v2495 = vsub.s32 0, %v2494
      %v2496 = vrot.slane %v2491, %v2495
      %2498 = vmatprep.subr.mxu0 0.0
      %2499 = vmatpush1.msra.mxu0 %v2486
      %2500 = vmatprep.subr.mxu0 0.0
      %2501 = vmatpush1.msra.mxu0 %v2487
      %2502 = vmatprep.subr.mxu0 0.0
      %2503 = vmatpush1.msra.mxu0 %v2488
      %2504 = vmatprep.subr.mxu0 0.0
      %2505 = vmatpush1.msra.mxu0 %v2489
      %2506 = vmatprep.subr.mxu0 0.0
      %2507 = vmatpush1.msra.mxu0 0.0
      %2508 = vmatprep.subr.mxu0 0.0
      %2509 = vmatpush1.msra.mxu0 0.0
      %2510 = vmatprep.subr.mxu0 0.0
      %2511 = vmatpush1.msra.mxu0 0.0
      %2512 = vmatprep.subr.mxu0 0.0
      %2513 = vmatpush1.msra.mxu0 0.0
      %2514 = vmatprep.subr.mxu0 0.0
      %2515 = vmatpush1.msra.mxu0 0.0
      %2516 = vmatprep.subr.mxu0 0.0
      %2517 = vmatpush1.msra.mxu0 0.0
      %2518 = vmatprep.subr.mxu0 0.0
      %2519 = vmatpush1.msra.mxu0 0.0
      %2520 = vmatprep.subr.mxu0 0.0
      %2521 = vmatpush1.msra.mxu0 0.0
      %2522 = vmatprep.subr.mxu0 0.0
      %2523 = vmatpush1.msra.mxu0 0.0
      %2524 = vmatprep.subr.mxu0 0.0
      %2525 = vmatpush1.msra.mxu0 0.0
      %2526 = vmatprep.subr.mxu0 0.0
      %2527 = vmatpush1.msra.mxu0 0.0
      %2528 = vmatprep.subr.mxu0 0.0
      %2529 = vmatpush1.msra.mxu0 0.0
      %2530 = vmatprep.subr.mxu0 0.0
      %2531 = vmatpush1.msra.mxu0 0.0
      %2532 = vmatprep.subr.mxu0 0.0
      %2533 = vmatpush1.msra.mxu0 0.0
      %2534 = vmatprep.subr.mxu0 0.0
      %2535 = vmatpush1.msra.mxu0 0.0
      %2536 = vmatprep.subr.mxu0 0.0
      %2537 = vmatpush1.msra.mxu0 0.0
      %2538 = vmatprep.subr.mxu0 0.0
      %2539 = vmatpush1.msra.mxu0 0.0
      %2540 = vmatprep.subr.mxu0 0.0
      %2541 = vmatpush1.msra.mxu0 0.0
      %2542 = vmatprep.subr.mxu0 0.0
      %2543 = vmatpush1.msra.mxu0 0.0
      %2544 = vmatprep.subr.mxu0 0.0
      %2545 = vmatpush1.msra.mxu0 0.0
      %2546 = vmatprep.subr.mxu0 0.0
      %2547 = vmatpush1.msra.mxu0 0.0
      %2548 = vmatprep.subr.mxu0 0.0
      %2549 = vmatpush1.msra.mxu0 0.0
      %2550 = vmatprep.subr.mxu0 0.0
      %2551 = vmatpush1.msra.mxu0 0.0
      %2552 = vmatprep.subr.mxu0 0.0
      %2553 = vmatpush1.msra.mxu0 0.0
      %2554 = vmatprep.subr.mxu0 0.0
      %2555 = vmatpush1.msra.mxu0 0.0
      %2556 = vmatprep.subr.mxu0 0.0
      %2557 = vmatpush1.msra.mxu0 0.0
      %2558 = vmatprep.subr.mxu0 0.0
      %2559 = vmatpush1.msra.mxu0 0.0
      %2560 = vmatprep.subr.mxu0 0.0
      %2561 = vmatpush1.msra.mxu0 0.0
      %2562 = vmatprep.mubr.f32.mxu0 0.0
      %2563 = vmatmul.mubr.f32.gmra.mrb[0].mxu0 %v1360
      %v2564 = vpop.f32.mrb[0].mxu0
      %v2565 = vadd.f32 %v2496, %v2564
      %v2566 = vpop.f32.mrb[0].mxu0
      %2567 = vdwg.mxu0
      %v2568 = vmul.f32 %v2399, 0.35355338
      %v2570 = vsel %vm1599, %v2568, 0
      %v2573 = vsel %vm1599, %v2482, 0
      %2575 = vmatprep.subr.mxu0 0.0
      %2576 = vmatpush1.xpose.msra.mxu0 %v2573
      %2577 = vmatprep.subr.mxu0 0.0
      %2578 = vmatpush1.xpose.msra.mxu0 0.0
      %2579 = vmatprep.subr.mxu0 0.0
      %2580 = vmatpush1.xpose.msra.mxu0 0.0
      %2581 = vmatprep.subr.mxu0 0.0
      %2582 = vmatpush1.xpose.msra.mxu0 0.0
      %2583 = vmatprep.subr.mxu0 0.0
      %2584 = vmatpush1.xpose.msra.mxu0 0.0
      %2585 = vmatprep.subr.mxu0 0.0
      %2586 = vmatpush1.xpose.msra.mxu0 0.0
      %2587 = vmatprep.subr.mxu0 0.0
      %2588 = vmatpush1.xpose.msra.mxu0 0.0
      %2589 = vmatprep.subr.mxu0 0.0
      %2590 = vmatpush1.xpose.msra.mxu0 0.0
      %2591 = vmatprep.subr.mxu0 0.0
      %2592 = vmatpush1.xpose.msra.mxu0 0.0
      %2593 = vmatprep.subr.mxu0 0.0
      %2594 = vmatpush1.xpose.msra.mxu0 0.0
      %2595 = vmatprep.subr.mxu0 0.0
      %2596 = vmatpush1.xpose.msra.mxu0 0.0
      %2597 = vmatprep.subr.mxu0 0.0
      %2598 = vmatpush1.xpose.msra.mxu0 0.0
      %2599 = vmatprep.subr.mxu0 0.0
      %2600 = vmatpush1.xpose.msra.mxu0 0.0
      %2601 = vmatprep.subr.mxu0 0.0
      %2602 = vmatpush1.xpose.msra.mxu0 0.0
      %2603 = vmatprep.subr.mxu0 0.0
      %2604 = vmatpush1.xpose.msra.mxu0 0.0
      %2605 = vmatprep.subr.mxu0 0.0
      %2606 = vmatpush1.xpose.msra.mxu0 0.0
      %2607 = vmatprep.subr.mxu0 0.0
      %2608 = vmatpush1.xpose.msra.mxu0 0.0
      %2609 = vmatprep.subr.mxu0 0.0
      %2610 = vmatpush1.xpose.msra.mxu0 0.0
      %2611 = vmatprep.subr.mxu0 0.0
      %2612 = vmatpush1.xpose.msra.mxu0 0.0
      %2613 = vmatprep.subr.mxu0 0.0
      %2614 = vmatpush1.xpose.msra.mxu0 0.0
      %2615 = vmatprep.subr.mxu0 0.0
      %2616 = vmatpush1.xpose.msra.mxu0 0.0
      %2617 = vmatprep.subr.mxu0 0.0
      %2618 = vmatpush1.xpose.msra.mxu0 0.0
      %2619 = vmatprep.subr.mxu0 0.0
      %2620 = vmatpush1.xpose.msra.mxu0 0.0
      %2621 = vmatprep.subr.mxu0 0.0
      %2622 = vmatpush1.xpose.msra.mxu0 0.0
      %2623 = vmatprep.subr.mxu0 0.0
      %2624 = vmatpush1.xpose.msra.mxu0 0.0
      %2625 = vmatprep.subr.mxu0 0.0
      %2626 = vmatpush1.xpose.msra.mxu0 0.0
      %2627 = vmatprep.subr.mxu0 0.0
      %2628 = vmatpush1.xpose.msra.mxu0 0.0
      %2629 = vmatprep.subr.mxu0 0.0
      %2630 = vmatpush1.xpose.msra.mxu0 0.0
      %2631 = vmatprep.subr.mxu0 0.0
      %2632 = vmatpush1.xpose.msra.mxu0 0.0
      %2633 = vmatprep.subr.mxu0 0.0
      %2634 = vmatpush1.xpose.msra.mxu0 0.0
      %2635 = vmatprep.subr.mxu0 0.0
      %2636 = vmatpush1.xpose.msra.mxu0 0.0
      %2637 = vmatprep.subr.mxu0 0.0
      %2638 = vmatpush1.xpose.msra.mxu0 0.0
      %2639 = vmatprep.mubr.f32.mxu0 0.0
      %2640 = vmatmul.mubr.f32.gmra.mrb[0].mxu0 %v2570
      %v2641 = vpop.f32.mrb[0].mxu0
      %v2642 = vadd.f32 0.0, %v2641
      %v2643 = vpop.f32.mrb[0].mxu0
      %2644 = vdwg.mxu0
      %v2645 = vsel %vm1599, %v2642, -inf
      %2646 = vmax.xlane.f32.xlu0 %v2645
      %v2647 = vpop.xlane.xlu0 %2646
      %v2648 = vsub.f32 %v2642, %v2647
      %v2649 = vmul.f32 %v2648, 1.442695
      %v2650 = vpow.pop %v2649
      %v2651 = vsel %vm1599, %v2650, 0.0
      %2652 = vadd.xlane.f32.xlu0 %v2651
      %v2653 = vpop.xlane.xlu0 %2652
      %v2654 = vrcp.pop %v2653
      %v2655 = vmul.f32 %v2650, %v2654
      %v2657 = vsel %vm1599, %v2655, 0
      %2659 = vmatprep.subr.mxu0 0.0
      %2660 = vmatpush1.msra.mxu0 %v2565
      %2661 = vmatprep.subr.mxu0 0.0
      %2662 = vmatpush1.msra.mxu0 0.0
      %2663 = vmatprep.subr.mxu0 0.0
      %2664 = vmatpush1.msra.mxu0 0.0
      %2665 = vmatprep.subr.mxu0 0.0
      %2666 = vmatpush1.msra.mxu0 0.0
      %2667 = vmatprep.subr.mxu0 0.0
      %2668 = vmatpush1.msra.mxu0 0.0
      %2669 = vmatprep.subr.mxu0 0.0
      %2670 = vmatpush1.msra.mxu0 0.0
      %2671 = vmatprep.subr.mxu0 0.0
      %2672 = vmatpush1.msra.mxu0 0.0
      %2673 = vmatprep.subr.mxu0 0.0
      %2674 = vmatpush1.msra.mxu0 0.0
      %2675 = vmatprep.subr.mxu0 0.0
      %2676 = vmatpush1.msra.mxu0 0.0
      %2677 = vmatprep.subr.mxu0 0.0
      %2678 = vmatpush1.msra.mxu0 0.0
      %2679 = vmatprep.subr.mxu0 0.0
      %2680 = vmatpush1.msra.mxu0 0.0
      %2681 = vmatprep.subr.mxu0 0.0
      %2682 = vmatpush1.msra.mxu0 0.0
      %2683 = vmatprep.subr.mxu0 0.0
      %2684 = vmatpush1.msra.mxu0 0.0
      %2685 = vmatprep.subr.mxu0 0.0
      %2686 = vmatpush1.msra.mxu0 0.0
      %2687 = vmatprep.subr.mxu0 0.0
      %2688 = vmatpush1.msra.mxu0 0.0
      %2689 = vmatprep.subr.mxu0 0.0
      %2690 = vmatpush1.msra.mxu0 0.0
      %2691 = vmatprep.subr.mxu0 0.0
      %2692 = vmatpush1.msra.mxu0 0.0
      %2693 = vmatprep.subr.mxu0 0.0
      %2694 = vmatpush1.msra.mxu0 0.0
      %2695 = vmatprep.subr.mxu0 0.0
      %2696 = vmatpush1.msra.mxu0 0.0
      %2697 = vmatprep.subr.mxu0 0.0
      %2698 = vmatpush1.msra.mxu0 0.0
      %2699 = vmatprep.subr.mxu0 0.0
      %2700 = vmatpush1.msra.mxu0 0.0
      %2701 = vmatprep.subr.mxu0 0.0
      %2702 = vmatpush1.msra.mxu0 0.0
      %2703 = vmatprep.subr.mxu0 0.0
      %2704 = vmatpush1.msra.mxu0 0.0
      %2705 = vmatprep.subr.mxu0 0.0
      %2706 = vmatpush1.msra.mxu0 0.0
      %2707 = vmatprep.subr.mxu0 0.0
      %2708 = vmatpush1.msra.mxu0 0.0
      %2709 = vmatprep.subr.mxu0 0.0
      %2710 = vmatpush1.msra.mxu0 0.0
      %2711 = vmatprep.subr.mxu0 0.0
      %2712 = vmatpush1.msra.mxu0 0.0
      %2713 = vmatprep.subr.mxu0 0.0
      %2714 = vmatpush1.msra.mxu0 0.0
      %2715 = vmatprep.subr.mxu0 0.0
      %2716 = vmatpush1.msra.mxu0 0.0
      %2717 = vmatprep.subr.mxu0 0.0
      %2718 = vmatpush1.msra.mxu0 0.0
      %2719 = vmatprep.subr.mxu0 0.0
      %2720 = vmatpush1.msra.mxu0 0.0
      %2721 = vmatprep.subr.mxu0 0.0
      %2722 = vmatpush1.msra.mxu0 0.0
      %2723 = vmatprep.mubr.f32.mxu0 0.0
      %2724 = vmatmul.mubr.f32.gmra.mrb[0].mxu0 %v2657
      %v2725 = vpop.f32.mrb[0].mxu0
      %v2726 = vadd.f32 0.0, %v2725
      %v2727 = vpop.f32.mrb[0].mxu0
      %2728 = vdwg.mxu0
      %s2729 = scalar_lea.vmem %s29, 16
      %v2730 = vld [vmem:[%s2729] sm:$0xff]
      %v2732 = vsel %vm1599, %v2726, 0
      %2734 = vmatprep.subr.mxu0 0.0
      %2735 = vmatpush1.msra.mxu0 %v2730
      %2736 = vmatprep.subr.mxu0 0.0
      %2737 = vmatpush1.msra.mxu0 0.0
      %2738 = vmatprep.subr.mxu0 0.0
      %2739 = vmatpush1.msra.mxu0 0.0
      %2740 = vmatprep.subr.mxu0 0.0
      %2741 = vmatpush1.msra.mxu0 0.0
      %2742 = vmatprep.subr.mxu0 0.0
      %2743 = vmatpush1.msra.mxu0 0.0
      %2744 = vmatprep.subr.mxu0 0.0
      %2745 = vmatpush1.msra.mxu0 0.0
      %2746 = vmatprep.subr.mxu0 0.0
      %2747 = vmatpush1.msra.mxu0 0.0
      %2748 = vmatprep.subr.mxu0 0.0
      %2749 = vmatpush1.msra.mxu0 0.0
      %2750 = vmatprep.subr.mxu0 0.0
      %2751 = vmatpush1.msra.mxu0 0.0
      %2752 = vmatprep.subr.mxu0 0.0
      %2753 = vmatpush1.msra.mxu0 0.0
      %2754 = vmatprep.subr.mxu0 0.0
      %2755 = vmatpush1.msra.mxu0 0.0
      %2756 = vmatprep.subr.mxu0 0.0
      %2757 = vmatpush1.msra.mxu0 0.0
      %2758 = vmatprep.subr.mxu0 0.0
      %2759 = vmatpush1.msra.mxu0 0.0
      %2760 = vmatprep.subr.mxu0 0.0
      %2761 = vmatpush1.msra.mxu0 0.0
      %2762 = vmatprep.subr.mxu0 0.0
      %2763 = vmatpush1.msra.mxu0 0.0
      %2764 = vmatprep.subr.mxu0 0.0
      %2765 = vmatpush1.msra.mxu0 0.0
      %2766 = vmatprep.subr.mxu0 0.0
      %2767 = vmatpush1.msra.mxu0 0.0
      %2768 = vmatprep.subr.mxu0 0.0
      %2769 = vmatpush1.msra.mxu0 0.0
      %2770 = vmatprep.subr.mxu0 0.0
      %2771 = vmatpush1.msra.mxu0 0.0
      %2772 = vmatprep.subr.mxu0 0.0
      %2773 = vmatpush1.msra.mxu0 0.0
      %2774 = vmatprep.subr.mxu0 0.0
      %2775 = vmatpush1.msra.mxu0 0.0
      %2776 = vmatprep.subr.mxu0 0.0
      %2777 = vmatpush1.msra.mxu0 0.0
      %2778 = vmatprep.subr.mxu0 0.0
      %2779 = vmatpush1.msra.mxu0 0.0
      %2780 = vmatprep.subr.mxu0 0.0
      %2781 = vmatpush1.msra.mxu0 0.0
      %2782 = vmatprep.subr.mxu0 0.0
      %2783 = vmatpush1.msra.mxu0 0.0
      %2784 = vmatprep.subr.mxu0 0.0
      %2785 = vmatpush1.msra.mxu0 0.0
      %2786 = vmatprep.subr.mxu0 0.0
      %2787 = vmatpush1.msra.mxu0 0.0
      %2788 = vmatprep.subr.mxu0 0.0
      %2789 = vmatpush1.msra.mxu0 0.0
      %2790 = vmatprep.subr.mxu0 0.0
      %2791 = vmatpush1.msra.mxu0 0.0
      %2792 = vmatprep.subr.mxu0 0.0
      %2793 = vmatpush1.msra.mxu0 0.0
      %2794 = vmatprep.subr.mxu0 0.0
      %2795 = vmatpush1.msra.mxu0 0.0
      %2796 = vmatprep.subr.mxu0 0.0
      %2797 = vmatpush1.msra.mxu0 0.0
      %2798 = vmatprep.mubr.f32.mxu0 0.0
      %2799 = vmatmul.mubr.f32.gmra.mrb[0].mxu0 %v2732
      %v2800 = vpop.f32.mrb[0].mxu0
      %v2801 = vadd.f32 0.0, %v2800
      %v2802 = vpop.f32.mrb[0].mxu0
      %2803 = vdwg.mxu0
      %v2804 = vadd.f32 %v2316, %v2801
      %s2805 = scalar_lea.vmem %s25, 96
      %v2806 = vld [vmem:[%s2805] sm:$0xff]
      %v2807 = vld [vmem:[%s2805 + $0x8] sm:$0xff]
      %v2808 = vld [vmem:[%s2805 + $0x10] sm:$0xff]
      %v2809 = vld [vmem:[%s2805 + $0x18] sm:$0xff]
      %s2810 = scalar_lea.vmem %s27, 3
      %v2811 = vld [vmem:[%s2810] sm:$0x1]
      %v2813 = vlaneseq
      %v2814 = vshrl.u32 %v2813, 7
      %v2815 = vsub.s32 0, %v2814
      %v2816 = vrot.slane %v2811, %v2815
      %2818 = vmatprep.subr.mxu0 0.0
      %2819 = vmatpush1.msra.mxu0 %v2806
      %2820 = vmatprep.subr.mxu0 0.0
      %2821 = vmatpush1.msra.mxu0 %v2807
      %2822 = vmatprep.subr.mxu0 0.0
      %2823 = vmatpush1.msra.mxu0 %v2808
      %2824 = vmatprep.subr.mxu0 0.0
      %2825 = vmatpush1.msra.mxu0 %v2809
      %2826 = vmatprep.subr.mxu0 0.0
      %2827 = vmatpush1.msra.mxu0 0.0
      %2828 = vmatprep.subr.mxu0 0.0
      %2829 = vmatpush1.msra.mxu0 0.0
      %2830 = vmatprep.subr.mxu0 0.0
      %2831 = vmatpush1.msra.mxu0 0.0
      %2832 = vmatprep.subr.mxu0 0.0
      %2833 = vmatpush1.msra.mxu0 0.0
      %2834 = vmatprep.subr.mxu0 0.0
      %2835 = vmatpush1.msra.mxu0 0.0
      %2836 = vmatprep.subr.mxu0 0.0
      %2837 = vmatpush1.msra.mxu0 0.0
      %2838 = vmatprep.subr.mxu0 0.0
      %2839 = vmatpush1.msra.mxu0 0.0
      %2840 = vmatprep.subr.mxu0 0.0
      %2841 = vmatpush1.msra.mxu0 0.0
      %2842 = vmatprep.subr.mxu0 0.0
      %2843 = vmatpush1.msra.mxu0 0.0
      %2844 = vmatprep.subr.mxu0 0.0
      %2845 = vmatpush1.msra.mxu0 0.0
      %2846 = vmatprep.subr.mxu0 0.0
      %2847 = vmatpush1.msra.mxu0 0.0
      %2848 = vmatprep.subr.mxu0 0.0
      %2849 = vmatpush1.msra.mxu0 0.0
      %2850 = vmatprep.subr.mxu0 0.0
      %2851 = vmatpush1.msra.mxu0 0.0
      %2852 = vmatprep.subr.mxu0 0.0
      %2853 = vmatpush1.msra.mxu0 0.0
      %2854 = vmatprep.subr.mxu0 0.0
      %2855 = vmatpush1.msra.mxu0 0.0
      %2856 = vmatprep.subr.mxu0 0.0
      %2857 = vmatpush1.msra.mxu0 0.0
      %2858 = vmatprep.subr.mxu0 0.0
      %2859 = vmatpush1.msra.mxu0 0.0
      %2860 = vmatprep.subr.mxu0 0.0
      %2861 = vmatpush1.msra.mxu0 0.0
      %2862 = vmatprep.subr.mxu0 0.0
      %2863 = vmatpush1.msra.mxu0 0.0
      %2864 = vmatprep.subr.mxu0 0.0
      %2865 = vmatpush1.msra.mxu0 0.0
      %2866 = vmatprep.subr.mxu0 0.0
      %2867 = vmatpush1.msra.mxu0 0.0
      %2868 = vmatprep.subr.mxu0 0.0
      %2869 = vmatpush1.msra.mxu0 0.0
      %2870 = vmatprep.subr.mxu0 0.0
      %2871 = vmatpush1.msra.mxu0 0.0
      %2872 = vmatprep.subr.mxu0 0.0
      %2873 = vmatpush1.msra.mxu0 0.0
      %2874 = vmatprep.subr.mxu0 0.0
      %2875 = vmatpush1.msra.mxu0 0.0
      %2876 = vmatprep.subr.mxu0 0.0
      %2877 = vmatpush1.msra.mxu0 0.0
      %2878 = vmatprep.subr.mxu0 0.0
      %2879 = vmatpush1.msra.mxu0 0.0
      %2880 = vmatprep.subr.mxu0 0.0
      %2881 = vmatpush1.msra.mxu0 0.0
      %2882 = vmatprep.mubr.f32.mxu0 0.0
      %2883 = vmatmul.mubr.f32.gmra.mrb[0].mxu0 %v1360
      %v2884 = vpop.f32.mrb[0].mxu0
      %v2885 = vadd.f32 %v2816, %v2884
      %v2886 = vpop.f32.mrb[0].mxu0
      %2887 = vdwg.mxu0
      %s2888 = scalar_lea.vmem %s25, 224
      %v2889 = vld [vmem:[%s2888] sm:$0xff]
      %v2890 = vld [vmem:[%s2888 + $0x8] sm:$0xff]
      %v2891 = vld [vmem:[%s2888 + $0x10] sm:$0xff]
      %v2892 = vld [vmem:[%s2888 + $0x18] sm:$0xff]
      %s2893 = scalar_lea.vmem %s27, 7
      %v2894 = vld [vmem:[%s2893] sm:$0x1]
      %v2896 = vlaneseq
      %v2897 = vshrl.u32 %v2896, 7
      %v2898 = vsub.s32 0, %v2897
      %v2899 = vrot.slane %v2894, %v2898
      %2901 = vmatprep.subr.mxu0 0.0
      %2902 = vmatpush1.msra.mxu0 %v2889
      %2903 = vmatprep.subr.mxu0 0.0
      %2904 = vmatpush1.msra.mxu0 %v2890
      %2905 = vmatprep.subr.mxu0 0.0
      %2906 = vmatpush1.msra.mxu0 %v2891
      %2907 = vmatprep.subr.mxu0 0.0
      %2908 = vmatpush1.msra.mxu0 %v2892
      %2909 = vmatprep.subr.mxu0 0.0
      %2910 = vmatpush1.msra.mxu0 0.0
      %2911 = vmatprep.subr.mxu0 0.0
      %2912 = vmatpush1.msra.mxu0 0.0
      %2913 = vmatprep.subr.mxu0 0.0
      %2914 = vmatpush1.msra.mxu0 0.0
      %2915 = vmatprep.subr.mxu0 0.0
      %2916 = vmatpush1.msra.mxu0 0.0
      %2917 = vmatprep.subr.mxu0 0.0
      %2918 = vmatpush1.msra.mxu0 0.0
      %2919 = vmatprep.subr.mxu0 0.0
      %2920 = vmatpush1.msra.mxu0 0.0
      %2921 = vmatprep.subr.mxu0 0.0
      %2922 = vmatpush1.msra.mxu0 0.0
      %2923 = vmatprep.subr.mxu0 0.0
      %2924 = vmatpush1.msra.mxu0 0.0
      %2925 = vmatprep.subr.mxu0 0.0
      %2926 = vmatpush1.msra.mxu0 0.0
      %2927 = vmatprep.subr.mxu0 0.0
      %2928 = vmatpush1.msra.mxu0 0.0
      %2929 = vmatprep.subr.mxu0 0.0
      %2930 = vmatpush1.msra.mxu0 0.0
      %2931 = vmatprep.subr.mxu0 0.0
      %2932 = vmatpush1.msra.mxu0 0.0
      %2933 = vmatprep.subr.mxu0 0.0
      %2934 = vmatpush1.msra.mxu0 0.0
      %2935 = vmatprep.subr.mxu0 0.0
      %2936 = vmatpush1.msra.mxu0 0.0
      %2937 = vmatprep.subr.mxu0 0.0
      %2938 = vmatpush1.msra.mxu0 0.0
      %2939 = vmatprep.subr.mxu0 0.0
      %2940 = vmatpush1.msra.mxu0 0.0
      %2941 = vmatprep.subr.mxu0 0.0
      %2942 = vmatpush1.msra.mxu0 0.0
      %2943 = vmatprep.subr.mxu0 0.0
      %2944 = vmatpush1.msra.mxu0 0.0
      %2945 = vmatprep.subr.mxu0 0.0
      %2946 = vmatpush1.msra.mxu0 0.0
      %2947 = vmatprep.subr.mxu0 0.0
      %2948 = vmatpush1.msra.mxu0 0.0
      %2949 = vmatprep.subr.mxu0 0.0
      %2950 = vmatpush1.msra.mxu0 0.0
      %2951 = vmatprep.subr.mxu0 0.0
      %2952 = vmatpush1.msra.mxu0 0.0
      %2953 = vmatprep.subr.mxu0 0.0
      %2954 = vmatpush1.msra.mxu0 0.0
      %2955 = vmatprep.subr.mxu0 0.0
      %2956 = vmatpush1.msra.mxu0 0.0
      %2957 = vmatprep.subr.mxu0 0.0
      %2958 = vmatpush1.msra.mxu0 0.0
      %2959 = vmatprep.subr.mxu0 0.0
      %2960 = vmatpush1.msra.mxu0 0.0
      %2961 = vmatprep.subr.mxu0 0.0
      %2962 = vmatpush1.msra.mxu0 0.0
      %2963 = vmatprep.subr.mxu0 0.0
      %2964 = vmatpush1.msra.mxu0 0.0
      %2965 = vmatprep.mubr.f32.mxu0 0.0
      %2966 = vmatmul.mubr.f32.gmra.mrb[0].mxu0 %v1360
      %v2967 = vpop.f32.mrb[0].mxu0
      %v2968 = vadd.f32 %v2899, %v2967
      %v2969 = vpop.f32.mrb[0].mxu0
      %2970 = vdwg.mxu0
      %s2971 = scalar_lea.vmem %s25, 352
      %v2972 = vld [vmem:[%s2971] sm:$0xff]
      %v2973 = vld [vmem:[%s2971 + $0x8] sm:$0xff]
      %v2974 = vld [vmem:[%s2971 + $0x10] sm:$0xff]
      %v2975 = vld [vmem:[%s2971 + $0x18] sm:$0xff]
      %s2976 = scalar_lea.vmem %s27, 11
      %v2977 = vld [vmem:[%s2976] sm:$0x1]
      %v2979 = vlaneseq
      %v2980 = vshrl.u32 %v2979, 7
      %v2981 = vsub.s32 0, %v2980
      %v2982 = vrot.slane %v2977, %v2981
      %2984 = vmatprep.subr.mxu0 0.0
      %2985 = vmatpush1.msra.mxu0 %v2972
      %2986 = vmatprep.subr.mxu0 0.0
      %2987 = vmatpush1.msra.mxu0 %v2973
      %2988 = vmatprep.subr.mxu0 0.0
      %2989 = vmatpush1.msra.mxu0 %v2974
      %2990 = vmatprep.subr.mxu0 0.0
      %2991 = vmatpush1.msra.mxu0 %v2975
      %2992 = vmatprep.subr.mxu0 0.0
      %2993 = vmatpush1.msra.mxu0 0.0
      %2994 = vmatprep.subr.mxu0 0.0
      %2995 = vmatpush1.msra.mxu0 0.0
      %2996 = vmatprep.subr.mxu0 0.0
      %2997 = vmatpush1.msra.mxu0 0.0
      %2998 = vmatprep.subr.mxu0 0.0
      %2999 = vmatpush1.msra.mxu0 0.0
      %3000 = vmatprep.subr.mxu0 0.0
      %3001 = vmatpush1.msra.mxu0 0.0
      %3002 = vmatprep.subr.mxu0 0.0
      %3003 = vmatpush1.msra.mxu0 0.0
      %3004 = vmatprep.subr.mxu0 0.0
      %3005 = vmatpush1.msra.mxu0 0.0
      %3006 = vmatprep.subr.mxu0 0.0
      %3007 = vmatpush1.msra.mxu0 0.0
      %3008 = vmatprep.subr.mxu0 0.0
      %3009 = vmatpush1.msra.mxu0 0.0
      %3010 = vmatprep.subr.mxu0 0.0
      %3011 = vmatpush1.msra.mxu0 0.0
      %3012 = vmatprep.subr.mxu0 0.0
      %3013 = vmatpush1.msra.mxu0 0.0
      %3014 = vmatprep.subr.mxu0 0.0
      %3015 = vmatpush1.msra.mxu0 0.0
      %3016 = vmatprep.subr.mxu0 0.0
      %3017 = vmatpush1.msra.mxu0 0.0
      %3018 = vmatprep.subr.mxu0 0.0
      %3019 = vmatpush1.msra.mxu0 0.0
      %3020 = vmatprep.subr.mxu0 0.0
      %3021 = vmatpush1.msra.mxu0 0.0
      %3022 = vmatprep.subr.mxu0 0.0
      %3023 = vmatpush1.msra.mxu0 0.0
      %3024 = vmatprep.subr.mxu0 0.0
      %3025 = vmatpush1.msra.mxu0 0.0
      %3026 = vmatprep.subr.mxu0 0.0
      %3027 = vmatpush1.msra.mxu0 0.0
      %3028 = vmatprep.subr.mxu0 0.0
      %3029 = vmatpush1.msra.mxu0 0.0
      %3030 = vmatprep.subr.mxu0 0.0
      %3031 = vmatpush1.msra.mxu0 0.0
      %3032 = vmatprep.subr.mxu0 0.0
      %3033 = vmatpush1.msra.mxu0 0.0
      %3034 = vmatprep.subr.mxu0 0.0
      %3035 = vmatpush1.msra.mxu0 0.0
      %3036 = vmatprep.subr.mxu0 0.0
      %3037 = vmatpush1.msra.mxu0 0.0
      %3038 = vmatprep.subr.mxu0 0.0
      %3039 = vmatpush1.msra.mxu0 0.0
      %3040 = vmatprep.subr.mxu0 0.0
      %3041 = vmatpush1.msra.mxu0 0.0
      %3042 = vmatprep.subr.mxu0 0.0
      %3043 = vmatpush1.msra.mxu0 0.0
      %3044 = vmatprep.subr.mxu0 0.0
      %3045 = vmatpush1.msra.mxu0 0.0
      %3046 = vmatprep.subr.mxu0 0.0
      %3047 = vmatpush1.msra.mxu0 0.0
      %3048 = vmatprep.mubr.f32.mxu0 0.0
      %3049 = vmatmul.mubr.f32.gmra.mrb[0].mxu0 %v1360
      %v3050 = vpop.f32.mrb[0].mxu0
      %v3051 = vadd.f32 %v2982, %v3050
      %v3052 = vpop.f32.mrb[0].mxu0
      %3053 = vdwg.mxu0
      %v3054 = vmul.f32 %v2885, 0.35355338
      %v3056 = vsel %vm1599, %v3054, 0
      %v3059 = vsel %vm1599, %v2968, 0
      %3061 = vmatprep.subr.mxu0 0.0
      %3062 = vmatpush1.xpose.msra.mxu0 %v3059
      %3063 = vmatprep.subr.mxu0 0.0
      %3064 = vmatpush1.xpose.msra.mxu0 0.0
      %3065 = vmatprep.subr.mxu0 0.0
      %3066 = vmatpush1.xpose.msra.mxu0 0.0
      %3067 = vmatprep.subr.mxu0 0.0
      %3068 = vmatpush1.xpose.msra.mxu0 0.0
      %3069 = vmatprep.subr.mxu0 0.0
      %3070 = vmatpush1.xpose.msra.mxu0 0.0
      %3071 = vmatprep.subr.mxu0 0.0
      %3072 = vmatpush1.xpose.msra.mxu0 0.0
      %3073 = vmatprep.subr.mxu0 0.0
      %3074 = vmatpush1.xpose.msra.mxu0 0.0
      %3075 = vmatprep.subr.mxu0 0.0
      %3076 = vmatpush1.xpose.msra.mxu0 0.0
      %3077 = vmatprep.subr.mxu0 0.0
      %3078 = vmatpush1.xpose.msra.mxu0 0.0
      %3079 = vmatprep.subr.mxu0 0.0
      %3080 = vmatpush1.xpose.msra.mxu0 0.0
      %3081 = vmatprep.subr.mxu0 0.0
      %3082 = vmatpush1.xpose.msra.mxu0 0.0
      %3083 = vmatprep.subr.mxu0 0.0
      %3084 = vmatpush1.xpose.msra.mxu0 0.0
      %3085 = vmatprep.subr.mxu0 0.0
      %3086 = vmatpush1.xpose.msra.mxu0 0.0
      %3087 = vmatprep.subr.mxu0 0.0
      %3088 = vmatpush1.xpose.msra.mxu0 0.0
      %3089 = vmatprep.subr.mxu0 0.0
      %3090 = vmatpush1.xpose.msra.mxu0 0.0
      %3091 = vmatprep.subr.mxu0 0.0
      %3092 = vmatpush1.xpose.msra.mxu0 0.0
      %3093 = vmatprep.subr.mxu0 0.0
      %3094 = vmatpush1.xpose.msra.mxu0 0.0
      %3095 = vmatprep.subr.mxu0 0.0
      %3096 = vmatpush1.xpose.msra.mxu0 0.0
      %3097 = vmatprep.subr.mxu0 0.0
      %3098 = vmatpush1.xpose.msra.mxu0 0.0
      %3099 = vmatprep.subr.mxu0 0.0
      %3100 = vmatpush1.xpose.msra.mxu0 0.0
      %3101 = vmatprep.subr.mxu0 0.0
      %3102 = vmatpush1.xpose.msra.mxu0 0.0
      %3103 = vmatprep.subr.mxu0 0.0
      %3104 = vmatpush1.xpose.msra.mxu0 0.0
      %3105 = vmatprep.subr.mxu0 0.0
      %3106 = vmatpush1.xpose.msra.mxu0 0.0
      %3107 = vmatprep.subr.mxu0 0.0
      %3108 = vmatpush1.xpose.msra.mxu0 0.0
      %3109 = vmatprep.subr.mxu0 0.0
      %3110 = vmatpush1.xpose.msra.mxu0 0.0
      %3111 = vmatprep.subr.mxu0 0.0
      %3112 = vmatpush1.xpose.msra.mxu0 0.0
      %3113 = vmatprep.subr.mxu0 0.0
      %3114 = vmatpush1.xpose.msra.mxu0 0.0
      %3115 = vmatprep.subr.mxu0 0.0
      %3116 = vmatpush1.xpose.msra.mxu0 0.0
      %3117 = vmatprep.subr.mxu0 0.0
      %3118 = vmatpush1.xpose.msra.mxu0 0.0
      %3119 = vmatprep.subr.mxu0 0.0
      %3120 = vmatpush1.xpose.msra.mxu0 0.0
      %3121 = vmatprep.subr.mxu0 0.0
      %3122 = vmatpush1.xpose.msra.mxu0 0.0
      %3123 = vmatprep.subr.mxu0 0.0
      %3124 = vmatpush1.xpose.msra.mxu0 0.0
      %3125 = vmatprep.mubr.f32.mxu0 0.0
      %3126 = vmatmul.mubr.f32.gmra.mrb[0].mxu0 %v3056
      %v3127 = vpop.f32.mrb[0].mxu0
      %v3128 = vadd.f32 0.0, %v3127
      %v3129 = vpop.f32.mrb[0].mxu0
      %3130 = vdwg.mxu0
      %v3131 = vsel %vm1599, %v3128, -inf
      %3132 = vmax.xlane.f32.xlu0 %v3131
      %v3133 = vpop.xlane.xlu0 %3132
      %v3134 = vsub.f32 %v3128, %v3133
      %v3135 = vmul.f32 %v3134, 1.442695
      %v3136 = vpow.pop %v3135
      %v3137 = vsel %vm1599, %v3136, 0.0
      %3138 = vadd.xlane.f32.xlu0 %v3137
      %v3139 = vpop.xlane.xlu0 %3138
      %v3140 = vrcp.pop %v3139
      %v3141 = vmul.f32 %v3136, %v3140
      %v3143 = vsel %vm1599, %v3141, 0
      %3145 = vmatprep.subr.mxu0 0.0
      %3146 = vmatpush1.msra.mxu0 %v3051
      %3147 = vmatprep.subr.mxu0 0.0
      %3148 = vmatpush1.msra.mxu0 0.0
      %3149 = vmatprep.subr.mxu0 0.0
      %3150 = vmatpush1.msra.mxu0 0.0
      %3151 = vmatprep.subr.mxu0 0.0
      %3152 = vmatpush1.msra.mxu0 0.0
      %3153 = vmatprep.subr.mxu0 0.0
      %3154 = vmatpush1.msra.mxu0 0.0
      %3155 = vmatprep.subr.mxu0 0.0
      %3156 = vmatpush1.msra.mxu0 0.0
      %3157 = vmatprep.subr.mxu0 0.0
      %3158 = vmatpush1.msra.mxu0 0.0
      %3159 = vmatprep.subr.mxu0 0.0
      %3160 = vmatpush1.msra.mxu0 0.0
      %3161 = vmatprep.subr.mxu0 0.0
      %3162 = vmatpush1.msra.mxu0 0.0
      %3163 = vmatprep.subr.mxu0 0.0
      %3164 = vmatpush1.msra.mxu0 0.0
      %3165 = vmatprep.subr.mxu0 0.0
      %3166 = vmatpush1.msra.mxu0 0.0
      %3167 = vmatprep.subr.mxu0 0.0
      %3168 = vmatpush1.msra.mxu0 0.0
      %3169 = vmatprep.subr.mxu0 0.0
      %3170 = vmatpush1.msra.mxu0 0.0
      %3171 = vmatprep.subr.mxu0 0.0
      %3172 = vmatpush1.msra.mxu0 0.0
      %3173 = vmatprep.subr.mxu0 0.0
      %3174 = vmatpush1.msra.mxu0 0.0
      %3175 = vmatprep.subr.mxu0 0.0
      %3176 = vmatpush1.msra.mxu0 0.0
      %3177 = vmatprep.subr.mxu0 0.0
      %3178 = vmatpush1.msra.mxu0 0.0
      %3179 = vmatprep.subr.mxu0 0.0
      %3180 = vmatpush1.msra.mxu0 0.0
      %3181 = vmatprep.subr.mxu0 0.0
      %3182 = vmatpush1.msra.mxu0 0.0
      %3183 = vmatprep.subr.mxu0 0.0
      %3184 = vmatpush1.msra.mxu0 0.0
      %3185 = vmatprep.subr.mxu0 0.0
      %3186 = vmatpush1.msra.mxu0 0.0
      %3187 = vmatprep.subr.mxu0 0.0
      %3188 = vmatpush1.msra.mxu0 0.0
      %3189 = vmatprep.subr.mxu0 0.0
      %3190 = vmatpush1.msra.mxu0 0.0
      %3191 = vmatprep.subr.mxu0 0.0
      %3192 = vmatpush1.msra.mxu0 0.0
      %3193 = vmatprep.subr.mxu0 0.0
      %3194 = vmatpush1.msra.mxu0 0.0
      %3195 = vmatprep.subr.mxu0 0.0
      %3196 = vmatpush1.msra.mxu0 0.0
      %3197 = vmatprep.subr.mxu0 0.0
      %3198 = vmatpush1.msra.mxu0 0.0
      %3199 = vmatprep.subr.mxu0 0.0
      %3200 = vmatpush1.msra.mxu0 0.0
      %3201 = vmatprep.subr.mxu0 0.0
      %3202 = vmatpush1.msra.mxu0 0.0
      %3203 = vmatprep.subr.mxu0 0.0
      %3204 = vmatpush1.msra.mxu0 0.0
      %3205 = vmatprep.subr.mxu0 0.0
      %3206 = vmatpush1.msra.mxu0 0.0
      %3207 = vmatprep.subr.mxu0 0.0
      %3208 = vmatpush1.msra.mxu0 0.0
      %3209 = vmatprep.mubr.f32.mxu0 0.0
      %3210 = vmatmul.mubr.f32.gmra.mrb[0].mxu0 %v3143
      %v3211 = vpop.f32.mrb[0].mxu0
      %v3212 = vadd.f32 0.0, %v3211
      %v3213 = vpop.f32.mrb[0].mxu0
      %3214 = vdwg.mxu0
      %s3215 = scalar_lea.vmem %s29, 24
      %v3216 = vld [vmem:[%s3215] sm:$0xff]
      %v3218 = vsel %vm1599, %v3212, 0
      %3220 = vmatprep.subr.mxu0 0.0
      %3221 = vmatpush1.msra.mxu0 %v3216
      %3222 = vmatprep.subr.mxu0 0.0
      %3223 = vmatpush1.msra.mxu0 0.0
      %3224 = vmatprep.subr.mxu0 0.0
      %3225 = vmatpush1.msra.mxu0 0.0
      %3226 = vmatprep.subr.mxu0 0.0
      %3227 = vmatpush1.msra.mxu0 0.0
      %3228 = vmatprep.subr.mxu0 0.0
      %3229 = vmatpush1.msra.mxu0 0.0
      %3230 = vmatprep.subr.mxu0 0.0
      %3231 = vmatpush1.msra.mxu0 0.0
      %3232 = vmatprep.subr.mxu0 0.0
      %3233 = vmatpush1.msra.mxu0 0.0
      %3234 = vmatprep.subr.mxu0 0.0
      %3235 = vmatpush1.msra.mxu0 0.0
      %3236 = vmatprep.subr.mxu0 0.0
      %3237 = vmatpush1.msra.mxu0 0.0
      %3238 = vmatprep.subr.mxu0 0.0
      %3239 = vmatpush1.msra.mxu0 0.0
      %3240 = vmatprep.subr.mxu0 0.0
      %3241 = vmatpush1.msra.mxu0 0.0
      %3242 = vmatprep.subr.mxu0 0.0
      %3243 = vmatpush1.msra.mxu0 0.0
      %3244 = vmatprep.subr.mxu0 0.0
      %3245 = vmatpush1.msra.mxu0 0.0
      %3246 = vmatprep.subr.mxu0 0.0
      %3247 = vmatpush1.msra.mxu0 0.0
      %3248 = vmatprep.subr.mxu0 0.0
      %3249 = vmatpush1.msra.mxu0 0.0
      %3250 = vmatprep.subr.mxu0 0.0
      %3251 = vmatpush1.msra.mxu0 0.0
      %3252 = vmatprep.subr.mxu0 0.0
      %3253 = vmatpush1.msra.mxu0 0.0
      %3254 = vmatprep.subr.mxu0 0.0
      %3255 = vmatpush1.msra.mxu0 0.0
      %3256 = vmatprep.subr.mxu0 0.0
      %3257 = vmatpush1.msra.mxu0 0.0
      %3258 = vmatprep.subr.mxu0 0.0
      %3259 = vmatpush1.msra.mxu0 0.0
      %3260 = vmatprep.subr.mxu0 0.0
      %3261 = vmatpush1.msra.mxu0 0.0
      %3262 = vmatprep.subr.mxu0 0.0
      %3263 = vmatpush1.msra.mxu0 0.0
      %3264 = vmatprep.subr.mxu0 0.0
      %3265 = vmatpush1.msra.mxu0 0.0
      %3266 = vmatprep.subr.mxu0 0.0
      %3267 = vmatpush1.msra.mxu0 0.0
      %3268 = vmatprep.subr.mxu0 0.0
      %3269 = vmatpush1.msra.mxu0 0.0
      %3270 = vmatprep.subr.mxu0 0.0
      %3271 = vmatpush1.msra.mxu0 0.0
      %3272 = vmatprep.subr.mxu0 0.0
      %3273 = vmatpush1.msra.mxu0 0.0
      %3274 = vmatprep.subr.mxu0 0.0
      %3275 = vmatpush1.msra.mxu0 0.0
      %3276 = vmatprep.subr.mxu0 0.0
      %3277 = vmatpush1.msra.mxu0 0.0
      %3278 = vmatprep.subr.mxu0 0.0
      %3279 = vmatpush1.msra.mxu0 0.0
      %3280 = vmatprep.subr.mxu0 0.0
      %3281 = vmatpush1.msra.mxu0 0.0
      %3282 = vmatprep.subr.mxu0 0.0
      %3283 = vmatpush1.msra.mxu0 0.0
      %3284 = vmatprep.mubr.f32.mxu0 0.0
      %3285 = vmatmul.mubr.f32.gmra.mrb[0].mxu0 %v3218
      %v3286 = vpop.f32.mrb[0].mxu0
      %v3287 = vadd.f32 0.0, %v3286
      %v3288 = vpop.f32.mrb[0].mxu0
      %3289 = vdwg.mxu0
      %v3290 = vadd.f32 %v2804, %v3287
      %v3291 = vld [vmem:[%s31] sm:$0x1]
      %v3293 = vlaneseq
      %v3294 = vshrl.u32 %v3293, 7
      %v3295 = vsub.s32 0, %v3294
      %v3296 = vrot.slane %v3291, %v3295
      %v3298 = vadd.f32 %v3290, %v3296
      %v3299 = vadd.f32 %v983, %v3298
      %v3300 = vsel %vm1085, %v3299, 0.0
      %3301 = vadd.xlane.f32.xlu0 %v3300
      %v3302 = vpop.xlane.xlu0 %3301
      %v3303 = vrcp.pop 32.0
      %v3304 = vmul.f32 %v3302, %v3303
      %v3305 = vsub.f32 %v3299, %v3304
      %v3306 = vmul.f32 %v3305, %v3305
      %v3307 = vsel %vm1085, %v3306, 0.0
      %3308 = vadd.xlane.f32.xlu0 %v3307
      %v3309 = vpop.xlane.xlu0 %3308
      %v3310 = vmul.f32 %v3309, %v3303
      %v3311 = vadd.f32 %v3310, 1e-05
      %v3312 = vrsqrt.pop %v3311
      %v3313 = vmul.f32 %v3305, %v3312
      %v3314 = vld [vmem:[%s49] sm:$0x1]
      %v3316 = vlaneseq
      %v3317 = vshrl.u32 %v3316, 7
      %v3318 = vsub.s32 0, %v3317
      %v3319 = vrot.slane %v3314, %v3318
      %v3321 = vmul.f32 %v3313, %v3319
      %v3322 = vld [vmem:[%s51] sm:$0x1]
      %v3324 = vlaneseq
      %v3325 = vshrl.u32 %v3324, 7
      %v3326 = vsub.s32 0, %v3325
      %v3327 = vrot.slane %v3322, %v3326
      %v3329 = vadd.f32 %v3321, %v3327
      %v3330 = vadd.f32 %v3329, %v1156
      %v3331 = vadd.f32 %v984, %v1339
      %v3332 = vadd.f32 %v985, %v1344
      %v3333 = vld [vmem:[%s33] sm:$0xff]
      %v3334 = vld [vmem:[%s33 + $0x8] sm:$0xff]
      %v3335 = vld [vmem:[%s33 + $0x10] sm:$0xff]
      %v3336 = vld [vmem:[%s33 + $0x18] sm:$0xff]
      %v3337 = vld [vmem:[%s35] sm:$0x1]
      %v3339 = vlaneseq
      %v3340 = vshrl.u32 %v3339, 7
      %v3341 = vsub.s32 0, %v3340
      %v3342 = vrot.slane %v3337, %v3341
      %v3345 = vsel %vm1085, %v3330, 0
      %3347 = vmatprep.subr.mxu0 0.0
      %3348 = vmatpush1.msra.mxu0 %v3333
      %3349 = vmatprep.subr.mxu0 0.0
      %3350 = vmatpush1.msra.mxu0 %v3334
      %3351 = vmatprep.subr.mxu0 0.0
      %3352 = vmatpush1.msra.mxu0 %v3335
      %3353 = vmatprep.subr.mxu0 0.0
      %3354 = vmatpush1.msra.mxu0 %v3336
      %3355 = vmatprep.subr.mxu0 0.0
      %3356 = vmatpush1.msra.mxu0 0.0
      %3357 = vmatprep.subr.mxu0 0.0
      %3358 = vmatpush1.msra.mxu0 0.0
      %3359 = vmatprep.subr.mxu0 0.0
      %3360 = vmatpush1.msra.mxu0 0.0
      %3361 = vmatprep.subr.mxu0 0.0
      %3362 = vmatpush1.msra.mxu0 0.0
      %3363 = vmatprep.subr.mxu0 0.0
      %3364 = vmatpush1.msra.mxu0 0.0
      %3365 = vmatprep.subr.mxu0 0.0
      %3366 = vmatpush1.msra.mxu0 0.0
      %3367 = vmatprep.subr.mxu0 0.0
      %3368 = vmatpush1.msra.mxu0 0.0
      %3369 = vmatprep.subr.mxu0 0.0
      %3370 = vmatpush1.msra.mxu0 0.0
      %3371 = vmatprep.subr.mxu0 0.0
      %3372 = vmatpush1.msra.mxu0 0.0
      %3373 = vmatprep.subr.mxu0 0.0
      %3374 = vmatpush1.msra.mxu0 0.0
      %3375 = vmatprep.subr.mxu0 0.0
      %3376 = vmatpush1.msra.mxu0 0.0
      %3377 = vmatprep.subr.mxu0 0.0
      %3378 = vmatpush1.msra.mxu0 0.0
      %3379 = vmatprep.subr.mxu0 0.0
      %3380 = vmatpush1.msra.mxu0 0.0
      %3381 = vmatprep.subr.mxu0 0.0
      %3382 = vmatpush1.msra.mxu0 0.0
      %3383 = vmatprep.subr.mxu0 0.0
      %3384 = vmatpush1.msra.mxu0 0.0
      %3385 = vmatprep.subr.mxu0 0.0
      %3386 = vmatpush1.msra.mxu0 0.0
      %3387 = vmatprep.subr.mxu0 0.0
      %3388 = vmatpush1.msra.mxu0 0.0
      %3389 = vmatprep.subr.mxu0 0.0
      %3390 = vmatpush1.msra.mxu0 0.0
      %3391 = vmatprep.subr.mxu0 0.0
      %3392 = vmatpush1.msra.mxu0 0.0
      %3393 = vmatprep.subr.mxu0 0.0
      %3394 = vmatpush1.msra.mxu0 0.0
      %3395 = vmatprep.subr.mxu0 0.0
      %3396 = vmatpush1.msra.mxu0 0.0
      %3397 = vmatprep.subr.mxu0 0.0
      %3398 = vmatpush1.msra.mxu0 0.0
      %3399 = vmatprep.subr.mxu0 0.0
      %3400 = vmatpush1.msra.mxu0 0.0
      %3401 = vmatprep.subr.mxu0 0.0
      %3402 = vmatpush1.msra.mxu0 0.0
      %3403 = vmatprep.subr.mxu0 0.0
      %3404 = vmatpush1.msra.mxu0 0.0
      %3405 = vmatprep.subr.mxu0 0.0
      %3406 = vmatpush1.msra.mxu0 0.0
      %3407 = vmatprep.subr.mxu0 0.0
      %3408 = vmatpush1.msra.mxu0 0.0
      %3409 = vmatprep.subr.mxu0 0.0
      %3410 = vmatpush1.msra.mxu0 0.0
      %3411 = vmatprep.mubr.f32.mxu0 0.0
      %3412 = vmatmul.mubr.f32.gmra.mrb[0].mxu0 %v3345
      %v3413 = vpop.f32.mrb[0].mxu0
      %v3414 = vadd.f32 %v3342, %v3413
      %v3415 = vpop.f32.mrb[0].mxu0
      %3416 = vdwg.mxu0
      %s3417 = scalar_lea.vmem %s33, 128
      %v3418 = vld [vmem:[%s3417] sm:$0xff]
      %v3419 = vld [vmem:[%s3417 + $0x8] sm:$0xff]
      %v3420 = vld [vmem:[%s3417 + $0x10] sm:$0xff]
      %v3421 = vld [vmem:[%s3417 + $0x18] sm:$0xff]
      %s3422 = scalar_lea.vmem %s35, 4
      %v3423 = vld [vmem:[%s3422] sm:$0x1]
      %v3425 = vlaneseq
      %v3426 = vshrl.u32 %v3425, 7
      %v3427 = vsub.s32 0, %v3426
      %v3428 = vrot.slane %v3423, %v3427
      %v3431 = vsel %vm1085, %v3331, 0
      %v3434 = vsel %vm1085, %v3332, 0
      %3436 = vmatprep.subr.mxu0 0.0
      %3437 = vmatpush1.msra.mxu0 %v3418
      %3438 = vmatprep.subr.mxu0 0.0
      %3439 = vmatpush1.msra.mxu0 %v3419
      %3440 = vmatprep.subr.mxu0 0.0
      %3441 = vmatpush1.msra.mxu0 %v3420
      %3442 = vmatprep.subr.mxu0 0.0
      %3443 = vmatpush1.msra.mxu0 %v3421
      %3444 = vmatprep.subr.mxu0 0.0
      %3445 = vmatpush1.msra.mxu0 0.0
      %3446 = vmatprep.subr.mxu0 0.0
      %3447 = vmatpush1.msra.mxu0 0.0
      %3448 = vmatprep.subr.mxu0 0.0
      %3449 = vmatpush1.msra.mxu0 0.0
      %3450 = vmatprep.subr.mxu0 0.0
      %3451 = vmatpush1.msra.mxu0 0.0
      %3452 = vmatprep.subr.mxu0 0.0
      %3453 = vmatpush1.msra.mxu0 0.0
      %3454 = vmatprep.subr.mxu0 0.0
      %3455 = vmatpush1.msra.mxu0 0.0
      %3456 = vmatprep.subr.mxu0 0.0
      %3457 = vmatpush1.msra.mxu0 0.0
      %3458 = vmatprep.subr.mxu0 0.0
      %3459 = vmatpush1.msra.mxu0 0.0
      %3460 = vmatprep.subr.mxu0 0.0
      %3461 = vmatpush1.msra.mxu0 0.0
      %3462 = vmatprep.subr.mxu0 0.0
      %3463 = vmatpush1.msra.mxu0 0.0
      %3464 = vmatprep.subr.mxu0 0.0
      %3465 = vmatpush1.msra.mxu0 0.0
      %3466 = vmatprep.subr.mxu0 0.0
      %3467 = vmatpush1.msra.mxu0 0.0
      %3468 = vmatprep.subr.mxu0 0.0
      %3469 = vmatpush1.msra.mxu0 0.0
      %3470 = vmatprep.subr.mxu0 0.0
      %3471 = vmatpush1.msra.mxu0 0.0
      %3472 = vmatprep.subr.mxu0 0.0
      %3473 = vmatpush1.msra.mxu0 0.0
      %3474 = vmatprep.subr.mxu0 0.0
      %3475 = vmatpush1.msra.mxu0 0.0
      %3476 = vmatprep.subr.mxu0 0.0
      %3477 = vmatpush1.msra.mxu0 0.0
      %3478 = vmatprep.subr.mxu0 0.0
      %3479 = vmatpush1.msra.mxu0 0.0
      %3480 = vmatprep.subr.mxu0 0.0
      %3481 = vmatpush1.msra.mxu0 0.0
      %3482 = vmatprep.subr.mxu0 0.0
      %3483 = vmatpush1.msra.mxu0 0.0
      %3484 = vmatprep.subr.mxu0 0.0
      %3485 = vmatpush1.msra.mxu0 0.0
      %3486 = vmatprep.subr.mxu0 0.0
      %3487 = vmatpush1.msra.mxu0 0.0
      %3488 = vmatprep.subr.mxu0 0.0
      %3489 = vmatpush1.msra.mxu0 0.0
      %3490 = vmatprep.subr.mxu0 0.0
      %3491 = vmatpush1.msra.mxu0 0.0
      %3492 = vmatprep.subr.mxu0 0.0
      %3493 = vmatpush1.msra.mxu0 0.0
      %3494 = vmatprep.subr.mxu0 0.0
      %3495 = vmatpush1.msra.mxu0 0.0
      %3496 = vmatprep.subr.mxu0 0.0
      %3497 = vmatpush1.msra.mxu0 0.0
      %3498 = vmatprep.subr.mxu0 0.0
      %3499 = vmatpush1.msra.mxu0 0.0
      %3500 = vmatprep.mubr.f32.mxu0 0.0
      %3501 = vmatmul.mubr.f32.gmra.mrb[0].mxu0 %v3431
      %v3502 = vpop.f32.mrb[0].mxu0
      %v3503 = vadd.f32 %v3428, %v3502
      %v3504 = vpop.f32.mrb[0].mxu0
      %3505 = vmatprep.mubr.f32.mxu0 0.0
      %3506 = vmatmul.mubr.f32.gmra.mrb[0].mxu0 %v3434
      %v3507 = vpop.f32.mrb[0].mxu0
      %v3508 = vadd.f32 %v3428, %v3507
      %v3509 = vpop.f32.mrb[0].mxu0
      %3510 = vdwg.mxu0
      %s3511 = scalar_lea.vmem %s33, 256
      %v3512 = vld [vmem:[%s3511] sm:$0xff]
      %v3513 = vld [vmem:[%s3511 + $0x8] sm:$0xff]
      %v3514 = vld [vmem:[%s3511 + $0x10] sm:$0xff]
      %v3515 = vld [vmem:[%s3511 + $0x18] sm:$0xff]
      %s3516 = scalar_lea.vmem %s35, 8
      %v3517 = vld [vmem:[%s3516] sm:$0x1]
      %v3519 = vlaneseq
      %v3520 = vshrl.u32 %v3519, 7
      %v3521 = vsub.s32 0, %v3520
      %v3522 = vrot.slane %v3517, %v3521
      %3524 = vmatprep.subr.mxu0 0.0
      %3525 = vmatpush1.msra.mxu0 %v3512
      %3526 = vmatprep.subr.mxu0 0.0
      %3527 = vmatpush1.msra.mxu0 %v3513
      %3528 = vmatprep.subr.mxu0 0.0
      %3529 = vmatpush1.msra.mxu0 %v3514
      %3530 = vmatprep.subr.mxu0 0.0
      %3531 = vmatpush1.msra.mxu0 %v3515
      %3532 = vmatprep.subr.mxu0 0.0
      %3533 = vmatpush1.msra.mxu0 0.0
      %3534 = vmatprep.subr.mxu0 0.0
      %3535 = vmatpush1.msra.mxu0 0.0
      %3536 = vmatprep.subr.mxu0 0.0
      %3537 = vmatpush1.msra.mxu0 0.0
      %3538 = vmatprep.subr.mxu0 0.0
      %3539 = vmatpush1.msra.mxu0 0.0
      %3540 = vmatprep.subr.mxu0 0.0
      %3541 = vmatpush1.msra.mxu0 0.0
      %3542 = vmatprep.subr.mxu0 0.0
      %3543 = vmatpush1.msra.mxu0 0.0
      %3544 = vmatprep.subr.mxu0 0.0
      %3545 = vmatpush1.msra.mxu0 0.0
      %3546 = vmatprep.subr.mxu0 0.0
      %3547 = vmatpush1.msra.mxu0 0.0
      %3548 = vmatprep.subr.mxu0 0.0
      %3549 = vmatpush1.msra.mxu0 0.0
      %3550 = vmatprep.subr.mxu0 0.0
      %3551 = vmatpush1.msra.mxu0 0.0
      %3552 = vmatprep.subr.mxu0 0.0
      %3553 = vmatpush1.msra.mxu0 0.0
      %3554 = vmatprep.subr.mxu0 0.0
      %3555 = vmatpush1.msra.mxu0 0.0
      %3556 = vmatprep.subr.mxu0 0.0
      %3557 = vmatpush1.msra.mxu0 0.0
      %3558 = vmatprep.subr.mxu0 0.0
      %3559 = vmatpush1.msra.mxu0 0.0
      %3560 = vmatprep.subr.mxu0 0.0
      %3561 = vmatpush1.msra.mxu0 0.0
      %3562 = vmatprep.subr.mxu0 0.0
      %3563 = vmatpush1.msra.mxu0 0.0
      %3564 = vmatprep.subr.mxu0 0.0
      %3565 = vmatpush1.msra.mxu0 0.0
      %3566 = vmatprep.subr.mxu0 0.0
      %3567 = vmatpush1.msra.mxu0 0.0
      %3568 = vmatprep.subr.mxu0 0.0
      %3569 = vmatpush1.msra.mxu0 0.0
      %3570 = vmatprep.subr.mxu0 0.0
      %3571 = vmatpush1.msra.mxu0 0.0
      %3572 = vmatprep.subr.mxu0 0.0
      %3573 = vmatpush1.msra.mxu0 0.0
      %3574 = vmatprep.subr.mxu0 0.0
      %3575 = vmatpush1.msra.mxu0 0.0
      %3576 = vmatprep.subr.mxu0 0.0
      %3577 = vmatpush1.msra.mxu0 0.0
      %3578 = vmatprep.subr.mxu0 0.0
      %3579 = vmatpush1.msra.mxu0 0.0
      %3580 = vmatprep.subr.mxu0 0.0
      %3581 = vmatpush1.msra.mxu0 0.0
      %3582 = vmatprep.subr.mxu0 0.0
      %3583 = vmatpush1.msra.mxu0 0.0
      %3584 = vmatprep.subr.mxu0 0.0
      %3585 = vmatpush1.msra.mxu0 0.0
      %3586 = vmatprep.subr.mxu0 0.0
      %3587 = vmatpush1.msra.mxu0 0.0
      %3588 = vmatprep.mubr.f32.mxu0 0.0
      %3589 = vmatmul.mubr.f32.gmra.mrb[0].mxu0 %v3431
      %v3590 = vpop.f32.mrb[0].mxu0
      %v3591 = vadd.f32 %v3522, %v3590
      %v3592 = vpop.f32.mrb[0].mxu0
      %3593 = vmatprep.mubr.f32.mxu0 0.0
      %3594 = vmatmul.mubr.f32.gmra.mrb[0].mxu0 %v3434
      %v3595 = vpop.f32.mrb[0].mxu0
      %v3596 = vadd.f32 %v3522, %v3595
      %v3597 = vpop.f32.mrb[0].mxu0
      %3598 = vdwg.mxu0
      %v3599 = vmul.f32 %v3414, 0.35355338
      %v3601 = vsel %vm1599, %v3599, 0
      %v3604 = vsel %vm1599, %v3503, 0
      %v3607 = vsel %vm1599, %v3508, 0
      %3609 = vmatprep.subr.mxu0 0.0
      %3610 = vmatpush1.xpose.msra.mxu0 %v3604
      %3611 = vmatprep.subr.mxu0 0.0
      %3612 = vmatpush1.xpose.msra.mxu0 %v3607
      %3613 = vmatprep.subr.mxu0 0.0
      %3614 = vmatpush1.xpose.msra.mxu0 0.0
      %3615 = vmatprep.subr.mxu0 0.0
      %3616 = vmatpush1.xpose.msra.mxu0 0.0
      %3617 = vmatprep.subr.mxu0 0.0
      %3618 = vmatpush1.xpose.msra.mxu0 0.0
      %3619 = vmatprep.subr.mxu0 0.0
      %3620 = vmatpush1.xpose.msra.mxu0 0.0
      %3621 = vmatprep.subr.mxu0 0.0
      %3622 = vmatpush1.xpose.msra.mxu0 0.0
      %3623 = vmatprep.subr.mxu0 0.0
      %3624 = vmatpush1.xpose.msra.mxu0 0.0
      %3625 = vmatprep.subr.mxu0 0.0
      %3626 = vmatpush1.xpose.msra.mxu0 0.0
      %3627 = vmatprep.subr.mxu0 0.0
      %3628 = vmatpush1.xpose.msra.mxu0 0.0
      %3629 = vmatprep.subr.mxu0 0.0
      %3630 = vmatpush1.xpose.msra.mxu0 0.0
      %3631 = vmatprep.subr.mxu0 0.0
      %3632 = vmatpush1.xpose.msra.mxu0 0.0
      %3633 = vmatprep.subr.mxu0 0.0
      %3634 = vmatpush1.xpose.msra.mxu0 0.0
      %3635 = vmatprep.subr.mxu0 0.0
      %3636 = vmatpush1.xpose.msra.mxu0 0.0
      %3637 = vmatprep.subr.mxu0 0.0
      %3638 = vmatpush1.xpose.msra.mxu0 0.0
      %3639 = vmatprep.subr.mxu0 0.0
      %3640 = vmatpush1.xpose.msra.mxu0 0.0
      %3641 = vmatprep.subr.mxu0 0.0
      %3642 = vmatpush1.xpose.msra.mxu0 0.0
      %3643 = vmatprep.subr.mxu0 0.0
      %3644 = vmatpush1.xpose.msra.mxu0 0.0
      %3645 = vmatprep.subr.mxu0 0.0
      %3646 = vmatpush1.xpose.msra.mxu0 0.0
      %3647 = vmatprep.subr.mxu0 0.0
      %3648 = vmatpush1.xpose.msra.mxu0 0.0
      %3649 = vmatprep.subr.mxu0 0.0
      %3650 = vmatpush1.xpose.msra.mxu0 0.0
      %3651 = vmatprep.subr.mxu0 0.0
      %3652 = vmatpush1.xpose.msra.mxu0 0.0
      %3653 = vmatprep.subr.mxu0 0.0
      %3654 = vmatpush1.xpose.msra.mxu0 0.0
      %3655 = vmatprep.subr.mxu0 0.0
      %3656 = vmatpush1.xpose.msra.mxu0 0.0
      %3657 = vmatprep.subr.mxu0 0.0
      %3658 = vmatpush1.xpose.msra.mxu0 0.0
      %3659 = vmatprep.subr.mxu0 0.0
      %3660 = vmatpush1.xpose.msra.mxu0 0.0
      %3661 = vmatprep.subr.mxu0 0.0
      %3662 = vmatpush1.xpose.msra.mxu0 0.0
      %3663 = vmatprep.subr.mxu0 0.0
      %3664 = vmatpush1.xpose.msra.mxu0 0.0
      %3665 = vmatprep.subr.mxu0 0.0
      %3666 = vmatpush1.xpose.msra.mxu0 0.0
      %3667 = vmatprep.subr.mxu0 0.0
      %3668 = vmatpush1.xpose.msra.mxu0 0.0
      %3669 = vmatprep.subr.mxu0 0.0
      %3670 = vmatpush1.xpose.msra.mxu0 0.0
      %3671 = vmatprep.subr.mxu0 0.0
      %3672 = vmatpush1.xpose.msra.mxu0 0.0
      %3673 = vmatprep.mubr.f32.mxu0 0.0
      %3674 = vmatmul.mubr.f32.gmra.mrb[0].mxu0 %v3601
      %v3675 = vpop.f32.mrb[0].mxu0
      %v3676 = vadd.f32 0.0, %v3675
      %v3677 = vpop.f32.mrb[0].mxu0
      %3678 = vdwg.mxu0
      %vm3679 = vcmask 130048
      %v3680 = vsel %vm3679, %v3676, -inf
      %3681 = vmax.xlane.f32.xlu0 %v3680
      %v3682 = vpop.xlane.xlu0 %3681
      %v3683 = vsub.f32 %v3676, %v3682
      %v3684 = vmul.f32 %v3683, 1.442695
      %v3685 = vpow.pop %v3684
      %v3686 = vsel %vm3679, %v3685, 0.0
      %3687 = vadd.xlane.f32.xlu0 %v3686
      %v3688 = vpop.xlane.xlu0 %3687
      %v3689 = vrcp.pop %v3688
      %v3690 = vmul.f32 %v3685, %v3689
      %v3692 = vsel %vm3679, %v3690, 0
      %3694 = vmatprep.subr.mxu0 0.0
      %3695 = vmatpush1.msra.mxu0 %v3591
      %3696 = vmatprep.subr.mxu0 0.0
      %3697 = vmatpush1.msra.mxu0 %v3596
      %3698 = vmatprep.subr.mxu0 0.0
      %3699 = vmatpush1.msra.mxu0 0.0
      %3700 = vmatprep.subr.mxu0 0.0
      %3701 = vmatpush1.msra.mxu0 0.0
      %3702 = vmatprep.subr.mxu0 0.0
      %3703 = vmatpush1.msra.mxu0 0.0
      %3704 = vmatprep.subr.mxu0 0.0
      %3705 = vmatpush1.msra.mxu0 0.0
      %3706 = vmatprep.subr.mxu0 0.0
      %3707 = vmatpush1.msra.mxu0 0.0
      %3708 = vmatprep.subr.mxu0 0.0
      %3709 = vmatpush1.msra.mxu0 0.0
      %3710 = vmatprep.subr.mxu0 0.0
      %3711 = vmatpush1.msra.mxu0 0.0
      %3712 = vmatprep.subr.mxu0 0.0
      %3713 = vmatpush1.msra.mxu0 0.0
      %3714 = vmatprep.subr.mxu0 0.0
      %3715 = vmatpush1.msra.mxu0 0.0
      %3716 = vmatprep.subr.mxu0 0.0
      %3717 = vmatpush1.msra.mxu0 0.0
      %3718 = vmatprep.subr.mxu0 0.0
      %3719 = vmatpush1.msra.mxu0 0.0
      %3720 = vmatprep.subr.mxu0 0.0
      %3721 = vmatpush1.msra.mxu0 0.0
      %3722 = vmatprep.subr.mxu0 0.0
      %3723 = vmatpush1.msra.mxu0 0.0
      %3724 = vmatprep.subr.mxu0 0.0
      %3725 = vmatpush1.msra.mxu0 0.0
      %3726 = vmatprep.subr.mxu0 0.0
      %3727 = vmatpush1.msra.mxu0 0.0
      %3728 = vmatprep.subr.mxu0 0.0
      %3729 = vmatpush1.msra.mxu0 0.0
      %3730 = vmatprep.subr.mxu0 0.0
      %3731 = vmatpush1.msra.mxu0 0.0
      %3732 = vmatprep.subr.mxu0 0.0
      %3733 = vmatpush1.msra.mxu0 0.0
      %3734 = vmatprep.subr.mxu0 0.0
      %3735 = vmatpush1.msra.mxu0 0.0
      %3736 = vmatprep.subr.mxu0 0.0
      %3737 = vmatpush1.msra.mxu0 0.0
      %3738 = vmatprep.subr.mxu0 0.0
      %3739 = vmatpush1.msra.mxu0 0.0
      %3740 = vmatprep.subr.mxu0 0.0
      %3741 = vmatpush1.msra.mxu0 0.0
      %3742 = vmatprep.subr.mxu0 0.0
      %3743 = vmatpush1.msra.mxu0 0.0
      %3744 = vmatprep.subr.mxu0 0.0
      %3745 = vmatpush1.msra.mxu0 0.0
      %3746 = vmatprep.subr.mxu0 0.0
      %3747 = vmatpush1.msra.mxu0 0.0
      %3748 = vmatprep.subr.mxu0 0.0
      %3749 = vmatpush1.msra.mxu0 0.0
      %3750 = vmatprep.subr.mxu0 0.0
      %3751 = vmatpush1.msra.mxu0 0.0
      %3752 = vmatprep.subr.mxu0 0.0
      %3753 = vmatpush1.msra.mxu0 0.0
      %3754 = vmatprep.subr.mxu0 0.0
      %3755 = vmatpush1.msra.mxu0 0.0
      %3756 = vmatprep.subr.mxu0 0.0
      %3757 = vmatpush1.msra.mxu0 0.0
      %3758 = vmatprep.mubr.f32.mxu0 0.0
      %3759 = vmatmul.mubr.f32.gmra.mrb[0].mxu0 %v3692
      %v3760 = vpop.f32.mrb[0].mxu0
      %v3761 = vadd.f32 0.0, %v3760
      %v3762 = vpop.f32.mrb[0].mxu0
      %3763 = vdwg.mxu0
      %v3764 = vld [vmem:[%s37] sm:$0xff]
      %s3765 = scalar_lea.vmem %s33, 32
      %v3766 = vld [vmem:[%s3765] sm:$0xff]
      %v3767 = vld [vmem:[%s3765 + $0x8] sm:$0xff]
      %v3768 = vld [vmem:[%s3765 + $0x10] sm:$0xff]
      %v3769 = vld [vmem:[%s3765 + $0x18] sm:$0xff]
      %s3770 = scalar_lea.vmem %s35, 1
      %v3771 = vld [vmem:[%s3770] sm:$0x1]
      %v3773 = vlaneseq
      %v3774 = vshrl.u32 %v3773, 7
      %v3775 = vsub.s32 0, %v3774
      %v3776 = vrot.slane %v3771, %v3775
      %3778 = vmatprep.subr.mxu0 0.0
      %3779 = vmatpush1.msra.mxu0 %v3766
      %3780 = vmatprep.subr.mxu0 0.0
      %3781 = vmatpush1.msra.mxu0 %v3767
      %3782 = vmatprep.subr.mxu0 0.0
      %3783 = vmatpush1.msra.mxu0 %v3768
      %3784 = vmatprep.subr.mxu0 0.0
      %3785 = vmatpush1.msra.mxu0 %v3769
      %3786 = vmatprep.subr.mxu0 0.0
      %3787 = vmatpush1.msra.mxu0 0.0
      %3788 = vmatprep.subr.mxu0 0.0
      %3789 = vmatpush1.msra.mxu0 0.0
      %3790 = vmatprep.subr.mxu0 0.0
      %3791 = vmatpush1.msra.mxu0 0.0
      %3792 = vmatprep.subr.mxu0 0.0
      %3793 = vmatpush1.msra.mxu0 0.0
      %3794 = vmatprep.subr.mxu0 0.0
      %3795 = vmatpush1.msra.mxu0 0.0
      %3796 = vmatprep.subr.mxu0 0.0
      %3797 = vmatpush1.msra.mxu0 0.0
      %3798 = vmatprep.subr.mxu0 0.0
      %3799 = vmatpush1.msra.mxu0 0.0
      %3800 = vmatprep.subr.mxu0 0.0
      %3801 = vmatpush1.msra.mxu0 0.0
      %3802 = vmatprep.subr.mxu0 0.0
      %3803 = vmatpush1.msra.mxu0 0.0
      %3804 = vmatprep.subr.mxu0 0.0
      %3805 = vmatpush1.msra.mxu0 0.0
      %3806 = vmatprep.subr.mxu0 0.0
      %3807 = vmatpush1.msra.mxu0 0.0
      %3808 = vmatprep.subr.mxu0 0.0
      %3809 = vmatpush1.msra.mxu0 0.0
      %3810 = vmatprep.subr.mxu0 0.0
      %3811 = vmatpush1.msra.mxu0 0.0
      %3812 = vmatprep.subr.mxu0 0.0
      %3813 = vmatpush1.msra.mxu0 0.0
      %3814 = vmatprep.subr.mxu0 0.0
      %3815 = vmatpush1.msra.mxu0 0.0
      %3816 = vmatprep.subr.mxu0 0.0
      %3817 = vmatpush1.msra.mxu0 0.0
      %3818 = vmatprep.subr.mxu0 0.0
      %3819 = vmatpush1.msra.mxu0 0.0
      %3820 = vmatprep.subr.mxu0 0.0
      %3821 = vmatpush1.msra.mxu0 0.0
      %3822 = vmatprep.subr.mxu0 0.0
      %3823 = vmatpush1.msra.mxu0 0.0
      %3824 = vmatprep.subr.mxu0 0.0
      %3825 = vmatpush1.msra.mxu0 0.0
      %3826 = vmatprep.subr.mxu0 0.0
      %3827 = vmatpush1.msra.mxu0 0.0
      %3828 = vmatprep.subr.mxu0 0.0
      %3829 = vmatpush1.msra.mxu0 0.0
      %3830 = vmatprep.subr.mxu0 0.0
      %3831 = vmatpush1.msra.mxu0 0.0
      %3832 = vmatprep.subr.mxu0 0.0
      %3833 = vmatpush1.msra.mxu0 0.0
      %3834 = vmatprep.subr.mxu0 0.0
      %3835 = vmatpush1.msra.mxu0 0.0
      %3836 = vmatprep.subr.mxu0 0.0
      %3837 = vmatpush1.msra.mxu0 0.0
      %3838 = vmatprep.subr.mxu0 0.0
      %3839 = vmatpush1.msra.mxu0 0.0
      %3840 = vmatprep.subr.mxu0 0.0
      %3841 = vmatpush1.msra.mxu0 0.0
      %3842 = vmatprep.mubr.f32.mxu0 0.0
      %3843 = vmatmul.mubr.f32.gmra.mrb[0].mxu0 %v3345
      %v3844 = vpop.f32.mrb[0].mxu0
      %v3845 = vadd.f32 %v3776, %v3844
      %v3846 = vpop.f32.mrb[0].mxu0
      %3847 = vdwg.mxu0
      %s3848 = scalar_lea.vmem %s33, 160
      %v3849 = vld [vmem:[%s3848] sm:$0xff]
      %v3850 = vld [vmem:[%s3848 + $0x8] sm:$0xff]
      %v3851 = vld [vmem:[%s3848 + $0x10] sm:$0xff]
      %v3852 = vld [vmem:[%s3848 + $0x18] sm:$0xff]
      %s3853 = scalar_lea.vmem %s35, 5
      %v3854 = vld [vmem:[%s3853] sm:$0x1]
      %v3856 = vlaneseq
      %v3857 = vshrl.u32 %v3856, 7
      %v3858 = vsub.s32 0, %v3857
      %v3859 = vrot.slane %v3854, %v3858
      %3861 = vmatprep.subr.mxu0 0.0
      %3862 = vmatpush1.msra.mxu0 %v3849
      %3863 = vmatprep.subr.mxu0 0.0
      %3864 = vmatpush1.msra.mxu0 %v3850
      %3865 = vmatprep.subr.mxu0 0.0
      %3866 = vmatpush1.msra.mxu0 %v3851
      %3867 = vmatprep.subr.mxu0 0.0
      %3868 = vmatpush1.msra.mxu0 %v3852
      %3869 = vmatprep.subr.mxu0 0.0
      %3870 = vmatpush1.msra.mxu0 0.0
      %3871 = vmatprep.subr.mxu0 0.0
      %3872 = vmatpush1.msra.mxu0 0.0
      %3873 = vmatprep.subr.mxu0 0.0
      %3874 = vmatpush1.msra.mxu0 0.0
      %3875 = vmatprep.subr.mxu0 0.0
      %3876 = vmatpush1.msra.mxu0 0.0
      %3877 = vmatprep.subr.mxu0 0.0
      %3878 = vmatpush1.msra.mxu0 0.0
      %3879 = vmatprep.subr.mxu0 0.0
      %3880 = vmatpush1.msra.mxu0 0.0
      %3881 = vmatprep.subr.mxu0 0.0
      %3882 = vmatpush1.msra.mxu0 0.0
      %3883 = vmatprep.subr.mxu0 0.0
      %3884 = vmatpush1.msra.mxu0 0.0
      %3885 = vmatprep.subr.mxu0 0.0
      %3886 = vmatpush1.msra.mxu0 0.0
      %3887 = vmatprep.subr.mxu0 0.0
      %3888 = vmatpush1.msra.mxu0 0.0
      %3889 = vmatprep.subr.mxu0 0.0
      %3890 = vmatpush1.msra.mxu0 0.0
      %3891 = vmatprep.subr.mxu0 0.0
      %3892 = vmatpush1.msra.mxu0 0.0
      %3893 = vmatprep.subr.mxu0 0.0
      %3894 = vmatpush1.msra.mxu0 0.0
      %3895 = vmatprep.subr.mxu0 0.0
      %3896 = vmatpush1.msra.mxu0 0.0
      %3897 = vmatprep.subr.mxu0 0.0
      %3898 = vmatpush1.msra.mxu0 0.0
      %3899 = vmatprep.subr.mxu0 0.0
      %3900 = vmatpush1.msra.mxu0 0.0
      %3901 = vmatprep.subr.mxu0 0.0
      %3902 = vmatpush1.msra.mxu0 0.0
      %3903 = vmatprep.subr.mxu0 0.0
      %3904 = vmatpush1.msra.mxu0 0.0
      %3905 = vmatprep.subr.mxu0 0.0
      %3906 = vmatpush1.msra.mxu0 0.0
      %3907 = vmatprep.subr.mxu0 0.0
      %3908 = vmatpush1.msra.mxu0 0.0
      %3909 = vmatprep.subr.mxu0 0.0
      %3910 = vmatpush1.msra.mxu0 0.0
      %3911 = vmatprep.subr.mxu0 0.0
      %3912 = vmatpush1.msra.mxu0 0.0
      %3913 = vmatprep.subr.mxu0 0.0
      %3914 = vmatpush1.msra.mxu0 0.0
      %3915 = vmatprep.subr.mxu0 0.0
      %3916 = vmatpush1.msra.mxu0 0.0
      %3917 = vmatprep.subr.mxu0 0.0
      %3918 = vmatpush1.msra.mxu0 0.0
      %3919 = vmatprep.subr.mxu0 0.0
      %3920 = vmatpush1.msra.mxu0 0.0
      %3921 = vmatprep.subr.mxu0 0.0
      %3922 = vmatpush1.msra.mxu0 0.0
      %3923 = vmatprep.subr.mxu0 0.0
      %3924 = vmatpush1.msra.mxu0 0.0
      %3925 = vmatprep.mubr.f32.mxu0 0.0
      %3926 = vmatmul.mubr.f32.gmra.mrb[0].mxu0 %v3431
      %v3927 = vpop.f32.mrb[0].mxu0
      %v3928 = vadd.f32 %v3859, %v3927
      %v3929 = vpop.f32.mrb[0].mxu0
      %3930 = vmatprep.mubr.f32.mxu0 0.0
      %3931 = vmatmul.mubr.f32.gmra.mrb[0].mxu0 %v3434
      %v3932 = vpop.f32.mrb[0].mxu0
      %v3933 = vadd.f32 %v3859, %v3932
      %v3934 = vpop.f32.mrb[0].mxu0
      %3935 = vdwg.mxu0
      %s3936 = scalar_lea.vmem %s33, 288
      %v3937 = vld [vmem:[%s3936] sm:$0xff]
      %v3938 = vld [vmem:[%s3936 + $0x8] sm:$0xff]
      %v3939 = vld [vmem:[%s3936 + $0x10] sm:$0xff]
      %v3940 = vld [vmem:[%s3936 + $0x18] sm:$0xff]
      %s3941 = scalar_lea.vmem %s35, 9
      %v3942 = vld [vmem:[%s3941] sm:$0x1]
      %v3944 = vlaneseq
      %v3945 = vshrl.u32 %v3944, 7
      %v3946 = vsub.s32 0, %v3945
      %v3947 = vrot.slane %v3942, %v3946
      %3949 = vmatprep.subr.mxu0 0.0
      %3950 = vmatpush1.msra.mxu0 %v3937
      %3951 = vmatprep.subr.mxu0 0.0
      %3952 = vmatpush1.msra.mxu0 %v3938
      %3953 = vmatprep.subr.mxu0 0.0
      %3954 = vmatpush1.msra.mxu0 %v3939
      %3955 = vmatprep.subr.mxu0 0.0
      %3956 = vmatpush1.msra.mxu0 %v3940
      %3957 = vmatprep.subr.mxu0 0.0
      %3958 = vmatpush1.msra.mxu0 0.0
      %3959 = vmatprep.subr.mxu0 0.0
      %3960 = vmatpush1.msra.mxu0 0.0
      %3961 = vmatprep.subr.mxu0 0.0
      %3962 = vmatpush1.msra.mxu0 0.0
      %3963 = vmatprep.subr.mxu0 0.0
      %3964 = vmatpush1.msra.mxu0 0.0
      %3965 = vmatprep.subr.mxu0 0.0
      %3966 = vmatpush1.msra.mxu0 0.0
      %3967 = vmatprep.subr.mxu0 0.0
      %3968 = vmatpush1.msra.mxu0 0.0
      %3969 = vmatprep.subr.mxu0 0.0
      %3970 = vmatpush1.msra.mxu0 0.0
      %3971 = vmatprep.subr.mxu0 0.0
      %3972 = vmatpush1.msra.mxu0 0.0
      %3973 = vmatprep.subr.mxu0 0.0
      %3974 = vmatpush1.msra.mxu0 0.0
      %3975 = vmatprep.subr.mxu0 0.0
      %3976 = vmatpush1.msra.mxu0 0.0
      %3977 = vmatprep.subr.mxu0 0.0
      %3978 = vmatpush1.msra.mxu0 0.0
      %3979 = vmatprep.subr.mxu0 0.0
      %3980 = vmatpush1.msra.mxu0 0.0
      %3981 = vmatprep.subr.mxu0 0.0
      %3982 = vmatpush1.msra.mxu0 0.0
      %3983 = vmatprep.subr.mxu0 0.0
      %3984 = vmatpush1.msra.mxu0 0.0
      %3985 = vmatprep.subr.mxu0 0.0
      %3986 = vmatpush1.msra.mxu0 0.0
      %3987 = vmatprep.subr.mxu0 0.0
      %3988 = vmatpush1.msra.mxu0 0.0
      %3989 = vmatprep.subr.mxu0 0.0
      %3990 = vmatpush1.msra.mxu0 0.0
      %3991 = vmatprep.subr.mxu0 0.0
      %3992 = vmatpush1.msra.mxu0 0.0
      %3993 = vmatprep.subr.mxu0 0.0
      %3994 = vmatpush1.msra.mxu0 0.0
      %3995 = vmatprep.subr.mxu0 0.0
      %3996 = vmatpush1.msra.mxu0 0.0
      %3997 = vmatprep.subr.mxu0 0.0
      %3998 = vmatpush1.msra.mxu0 0.0
      %3999 = vmatprep.subr.mxu0 0.0
      %4000 = vmatpush1.msra.mxu0 0.0
      %4001 = vmatprep.subr.mxu0 0.0
      %4002 = vmatpush1.msra.mxu0 0.0
      %4003 = vmatprep.subr.mxu0 0.0
      %4004 = vmatpush1.msra.mxu0 0.0
      %4005 = vmatprep.subr.mxu0 0.0
      %4006 = vmatpush1.msra.mxu0 0.0
      %4007 = vmatprep.subr.mxu0 0.0
      %4008 = vmatpush1.msra.mxu0 0.0
      %4009 = vmatprep.subr.mxu0 0.0
      %4010 = vmatpush1.msra.mxu0 0.0
      %4011 = vmatprep.subr.mxu0 0.0
      %4012 = vmatpush1.msra.mxu0 0.0
      %4013 = vmatprep.mubr.f32.mxu0 0.0
      %4014 = vmatmul.mubr.f32.gmra.mrb[0].mxu0 %v3431
      %v4015 = vpop.f32.mrb[0].mxu0
      %v4016 = vadd.f32 %v3947, %v4015
      %v4017 = vpop.f32.mrb[0].mxu0
      %4018 = vmatprep.mubr.f32.mxu0 0.0
      %4019 = vmatmul.mubr.f32.gmra.mrb[0].mxu0 %v3434
      %v4020 = vpop.f32.mrb[0].mxu0
      %v4021 = vadd.f32 %v3947, %v4020
      %v4022 = vpop.f32.mrb[0].mxu0
      %4023 = vdwg.mxu0
      %v4024 = vmul.f32 %v3845, 0.35355338
      %v4026 = vsel %vm1599, %v4024, 0
      %v4029 = vsel %vm1599, %v3928, 0
      %v4032 = vsel %vm1599, %v3933, 0
      %4034 = vmatprep.subr.mxu0 0.0
      %4035 = vmatpush1.xpose.msra.mxu0 %v4029
      %4036 = vmatprep.subr.mxu0 0.0
      %4037 = vmatpush1.xpose.msra.mxu0 %v4032
      %4038 = vmatprep.subr.mxu0 0.0
      %4039 = vmatpush1.xpose.msra.mxu0 0.0
      %4040 = vmatprep.subr.mxu0 0.0
      %4041 = vmatpush1.xpose.msra.mxu0 0.0
      %4042 = vmatprep.subr.mxu0 0.0
      %4043 = vmatpush1.xpose.msra.mxu0 0.0
      %4044 = vmatprep.subr.mxu0 0.0
      %4045 = vmatpush1.xpose.msra.mxu0 0.0
      %4046 = vmatprep.subr.mxu0 0.0
      %4047 = vmatpush1.xpose.msra.mxu0 0.0
      %4048 = vmatprep.subr.mxu0 0.0
      %4049 = vmatpush1.xpose.msra.mxu0 0.0
      %4050 = vmatprep.subr.mxu0 0.0
      %4051 = vmatpush1.xpose.msra.mxu0 0.0
      %4052 = vmatprep.subr.mxu0 0.0
      %4053 = vmatpush1.xpose.msra.mxu0 0.0
      %4054 = vmatprep.subr.mxu0 0.0
      %4055 = vmatpush1.xpose.msra.mxu0 0.0
      %4056 = vmatprep.subr.mxu0 0.0
      %4057 = vmatpush1.xpose.msra.mxu0 0.0
      %4058 = vmatprep.subr.mxu0 0.0
      %4059 = vmatpush1.xpose.msra.mxu0 0.0
      %4060 = vmatprep.subr.mxu0 0.0
      %4061 = vmatpush1.xpose.msra.mxu0 0.0
      %4062 = vmatprep.subr.mxu0 0.0
      %4063 = vmatpush1.xpose.msra.mxu0 0.0
      %4064 = vmatprep.subr.mxu0 0.0
      %4065 = vmatpush1.xpose.msra.mxu0 0.0
      %4066 = vmatprep.subr.mxu0 0.0
      %4067 = vmatpush1.xpose.msra.mxu0 0.0
      %4068 = vmatprep.subr.mxu0 0.0
      %4069 = vmatpush1.xpose.msra.mxu0 0.0
      %4070 = vmatprep.subr.mxu0 0.0
      %4071 = vmatpush1.xpose.msra.mxu0 0.0
      %4072 = vmatprep.subr.mxu0 0.0
      %4073 = vmatpush1.xpose.msra.mxu0 0.0
      %4074 = vmatprep.subr.mxu0 0.0
      %4075 = vmatpush1.xpose.msra.mxu0 0.0
      %4076 = vmatprep.subr.mxu0 0.0
      %4077 = vmatpush1.xpose.msra.mxu0 0.0
      %4078 = vmatprep.subr.mxu0 0.0
      %4079 = vmatpush1.xpose.msra.mxu0 0.0
      %4080 = vmatprep.subr.mxu0 0.0
      %4081 = vmatpush1.xpose.msra.mxu0 0.0
      %4082 = vmatprep.subr.mxu0 0.0
      %4083 = vmatpush1.xpose.msra.mxu0 0.0
      %4084 = vmatprep.subr.mxu0 0.0
      %4085 = vmatpush1.xpose.msra.mxu0 0.0
      %4086 = vmatprep.subr.mxu0 0.0
      %4087 = vmatpush1.xpose.msra.mxu0 0.0
      %4088 = vmatprep.subr.mxu0 0.0
      %4089 = vmatpush1.xpose.msra.mxu0 0.0
      %4090 = vmatprep.subr.mxu0 0.0
      %4091 = vmatpush1.xpose.msra.mxu0 0.0
      %4092 = vmatprep.subr.mxu0 0.0
      %4093 = vmatpush1.xpose.msra.mxu0 0.0
      %4094 = vmatprep.subr.mxu0 0.0
      %4095 = vmatpush1.xpose.msra.mxu0 0.0
      %4096 = vmatprep.subr.mxu0 0.0
      %4097 = vmatpush1.xpose.msra.mxu0 0.0
      %4098 = vmatprep.mubr.f32.mxu0 0.0
      %4099 = vmatmul.mubr.f32.gmra.mrb[0].mxu0 %v4026
      %v4100 = vpop.f32.mrb[0].mxu0
      %v4101 = vadd.f32 0.0, %v4100
      %v4102 = vpop.f32.mrb[0].mxu0
      %4103 = vdwg.mxu0
      %v4104 = vsel %vm3679, %v4101, -inf
      %4105 = vmax.xlane.f32.xlu0 %v4104
      %v4106 = vpop.xlane.xlu0 %4105
      %v4107 = vsub.f32 %v4101, %v4106
      %v4108 = vmul.f32 %v4107, 1.442695
      %v4109 = vpow.pop %v4108
      %v4110 = vsel %vm3679, %v4109, 0.0
      %4111 = vadd.xlane.f32.xlu0 %v4110
      %v4112 = vpop.xlane.xlu0 %4111
      %v4113 = vrcp.pop %v4112
      %v4114 = vmul.f32 %v4109, %v4113
      %v4116 = vsel %vm3679, %v4114, 0
      %4118 = vmatprep.subr.mxu0 0.0
      %4119 = vmatpush1.msra.mxu0 %v4016
      %4120 = vmatprep.subr.mxu0 0.0
      %4121 = vmatpush1.msra.mxu0 %v4021
      %4122 = vmatprep.subr.mxu0 0.0
      %4123 = vmatpush1.msra.mxu0 0.0
      %4124 = vmatprep.subr.mxu0 0.0
      %4125 = vmatpush1.msra.mxu0 0.0
      %4126 = vmatprep.subr.mxu0 0.0
      %4127 = vmatpush1.msra.mxu0 0.0
      %4128 = vmatprep.subr.mxu0 0.0
      %4129 = vmatpush1.msra.mxu0 0.0
      %4130 = vmatprep.subr.mxu0 0.0
      %4131 = vmatpush1.msra.mxu0 0.0
      %4132 = vmatprep.subr.mxu0 0.0
      %4133 = vmatpush1.msra.mxu0 0.0
      %4134 = vmatprep.subr.mxu0 0.0
      %4135 = vmatpush1.msra.mxu0 0.0
      %4136 = vmatprep.subr.mxu0 0.0
      %4137 = vmatpush1.msra.mxu0 0.0
      %4138 = vmatprep.subr.mxu0 0.0
      %4139 = vmatpush1.msra.mxu0 0.0
      %4140 = vmatprep.subr.mxu0 0.0
      %4141 = vmatpush1.msra.mxu0 0.0
      %4142 = vmatprep.subr.mxu0 0.0
      %4143 = vmatpush1.msra.mxu0 0.0
      %4144 = vmatprep.subr.mxu0 0.0
      %4145 = vmatpush1.msra.mxu0 0.0
      %4146 = vmatprep.subr.mxu0 0.0
      %4147 = vmatpush1.msra.mxu0 0.0
      %4148 = vmatprep.subr.mxu0 0.0
      %4149 = vmatpush1.msra.mxu0 0.0
      %4150 = vmatprep.subr.mxu0 0.0
      %4151 = vmatpush1.msra.mxu0 0.0
      %4152 = vmatprep.subr.mxu0 0.0
      %4153 = vmatpush1.msra.mxu0 0.0
      %4154 = vmatprep.subr.mxu0 0.0
      %4155 = vmatpush1.msra.mxu0 0.0
      %4156 = vmatprep.subr.mxu0 0.0
      %4157 = vmatpush1.msra.mxu0 0.0
      %4158 = vmatprep.subr.mxu0 0.0
      %4159 = vmatpush1.msra.mxu0 0.0
      %4160 = vmatprep.subr.mxu0 0.0
      %4161 = vmatpush1.msra.mxu0 0.0
      %4162 = vmatprep.subr.mxu0 0.0
      %4163 = vmatpush1.msra.mxu0 0.0
      %4164 = vmatprep.subr.mxu0 0.0
      %4165 = vmatpush1.msra.mxu0 0.0
      %4166 = vmatprep.subr.mxu0 0.0
      %4167 = vmatpush1.msra.mxu0 0.0
      %4168 = vmatprep.subr.mxu0 0.0
      %4169 = vmatpush1.msra.mxu0 0.0
      %4170 = vmatprep.subr.mxu0 0.0
      %4171 = vmatpush1.msra.mxu0 0.0
      %4172 = vmatprep.subr.mxu0 0.0
      %4173 = vmatpush1.msra.mxu0 0.0
      %4174 = vmatprep.subr.mxu0 0.0
      %4175 = vmatpush1.msra.mxu0 0.0
      %4176 = vmatprep.subr.mxu0 0.0
      %4177 = vmatpush1.msra.mxu0 0.0
      %4178 = vmatprep.subr.mxu0 0.0
      %4179 = vmatpush1.msra.mxu0 0.0
      %4180 = vmatprep.subr.mxu0 0.0
      %4181 = vmatpush1.msra.mxu0 0.0
      %4182 = vmatprep.mubr.f32.mxu0 0.0
      %4183 = vmatmul.mubr.f32.gmra.mrb[0].mxu0 %v4116
      %v4184 = vpop.f32.mrb[0].mxu0
      %v4185 = vadd.f32 0.0, %v4184
      %v4186 = vpop.f32.mrb[0].mxu0
      %4187 = vdwg.mxu0
      %s4188 = scalar_lea.vmem %s37, 8
      %v4189 = vld [vmem:[%s4188] sm:$0xff]
      %v4191 = vsel %vm1599, %v4185, 0
      %4193 = vmatprep.subr.mxu0 0.0
      %4194 = vmatpush1.msra.mxu0 %v4189
      %4195 = vmatprep.subr.mxu0 0.0
      %4196 = vmatpush1.msra.mxu0 0.0
      %4197 = vmatprep.subr.mxu0 0.0
      %4198 = vmatpush1.msra.mxu0 0.0
      %4199 = vmatprep.subr.mxu0 0.0
      %4200 = vmatpush1.msra.mxu0 0.0
      %4201 = vmatprep.subr.mxu0 0.0
      %4202 = vmatpush1.msra.mxu0 0.0
      %4203 = vmatprep.subr.mxu0 0.0
      %4204 = vmatpush1.msra.mxu0 0.0
      %4205 = vmatprep.subr.mxu0 0.0
      %4206 = vmatpush1.msra.mxu0 0.0
      %4207 = vmatprep.subr.mxu0 0.0
      %4208 = vmatpush1.msra.mxu0 0.0
      %4209 = vmatprep.subr.mxu0 0.0
      %4210 = vmatpush1.msra.mxu0 0.0
      %4211 = vmatprep.subr.mxu0 0.0
      %4212 = vmatpush1.msra.mxu0 0.0
      %4213 = vmatprep.subr.mxu0 0.0
      %4214 = vmatpush1.msra.mxu0 0.0
      %4215 = vmatprep.subr.mxu0 0.0
      %4216 = vmatpush1.msra.mxu0 0.0
      %4217 = vmatprep.subr.mxu0 0.0
      %4218 = vmatpush1.msra.mxu0 0.0
      %4219 = vmatprep.subr.mxu0 0.0
      %4220 = vmatpush1.msra.mxu0 0.0
      %4221 = vmatprep.subr.mxu0 0.0
      %4222 = vmatpush1.msra.mxu0 0.0
      %4223 = vmatprep.subr.mxu0 0.0
      %4224 = vmatpush1.msra.mxu0 0.0
      %4225 = vmatprep.subr.mxu0 0.0
      %4226 = vmatpush1.msra.mxu0 0.0
      %4227 = vmatprep.subr.mxu0 0.0
      %4228 = vmatpush1.msra.mxu0 0.0
      %4229 = vmatprep.subr.mxu0 0.0
      %4230 = vmatpush1.msra.mxu0 0.0
      %4231 = vmatprep.subr.mxu0 0.0
      %4232 = vmatpush1.msra.mxu0 0.0
      %4233 = vmatprep.subr.mxu0 0.0
      %4234 = vmatpush1.msra.mxu0 0.0
      %4235 = vmatprep.subr.mxu0 0.0
      %4236 = vmatpush1.msra.mxu0 0.0
      %4237 = vmatprep.subr.mxu0 0.0
      %4238 = vmatpush1.msra.mxu0 0.0
      %4239 = vmatprep.subr.mxu0 0.0
      %4240 = vmatpush1.msra.mxu0 0.0
      %4241 = vmatprep.subr.mxu0 0.0
      %4242 = vmatpush1.msra.mxu0 0.0
      %4243 = vmatprep.subr.mxu0 0.0
      %4244 = vmatpush1.msra.mxu0 0.0
      %4245 = vmatprep.subr.mxu0 0.0
      %4246 = vmatpush1.msra.mxu0 0.0
      %4247 = vmatprep.subr.mxu0 0.0
      %4248 = vmatpush1.msra.mxu0 0.0
      %4249 = vmatprep.subr.mxu0 0.0
      %4250 = vmatpush1.msra.mxu0 0.0
      %4251 = vmatprep.subr.mxu0 0.0
      %4252 = vmatpush1.msra.mxu0 0.0
      %4253 = vmatprep.subr.mxu0 0.0
      %4254 = vmatpush1.msra.mxu0 0.0
      %4255 = vmatprep.subr.mxu0 0.0
      %4256 = vmatpush1.msra.mxu0 0.0
      %4257 = vmatprep.mubr.f32.mxu0 0.0
      %4258 = vmatmul.mubr.f32.gmra.mrb[0].mxu0 %v4191
      %v4259 = vpop.f32.mrb[0].mxu0
      %v4260 = vadd.f32 0.0, %v4259
      %v4261 = vpop.f32.mrb[0].mxu0
      %4262 = vdwg.mxu0
      %v4264 = vsel %vm1599, %v3761, 0
      %4266 = vmatprep.subr.mxu0 0.0
      %4267 = vmatpush1.msra.mxu0 %v3764
      %4268 = vmatprep.subr.mxu0 0.0
      %4269 = vmatpush1.msra.mxu0 0.0
      %4270 = vmatprep.subr.mxu0 0.0
      %4271 = vmatpush1.msra.mxu0 0.0
      %4272 = vmatprep.subr.mxu0 0.0
      %4273 = vmatpush1.msra.mxu0 0.0
      %4274 = vmatprep.subr.mxu0 0.0
      %4275 = vmatpush1.msra.mxu0 0.0
      %4276 = vmatprep.subr.mxu0 0.0
      %4277 = vmatpush1.msra.mxu0 0.0
      %4278 = vmatprep.subr.mxu0 0.0
      %4279 = vmatpush1.msra.mxu0 0.0
      %4280 = vmatprep.subr.mxu0 0.0
      %4281 = vmatpush1.msra.mxu0 0.0
      %4282 = vmatprep.subr.mxu0 0.0
      %4283 = vmatpush1.msra.mxu0 0.0
      %4284 = vmatprep.subr.mxu0 0.0
      %4285 = vmatpush1.msra.mxu0 0.0
      %4286 = vmatprep.subr.mxu0 0.0
      %4287 = vmatpush1.msra.mxu0 0.0
      %4288 = vmatprep.subr.mxu0 0.0
      %4289 = vmatpush1.msra.mxu0 0.0
      %4290 = vmatprep.subr.mxu0 0.0
      %4291 = vmatpush1.msra.mxu0 0.0
      %4292 = vmatprep.subr.mxu0 0.0
      %4293 = vmatpush1.msra.mxu0 0.0
      %4294 = vmatprep.subr.mxu0 0.0
      %4295 = vmatpush1.msra.mxu0 0.0
      %4296 = vmatprep.subr.mxu0 0.0
      %4297 = vmatpush1.msra.mxu0 0.0
      %4298 = vmatprep.subr.mxu0 0.0
      %4299 = vmatpush1.msra.mxu0 0.0
      %4300 = vmatprep.subr.mxu0 0.0
      %4301 = vmatpush1.msra.mxu0 0.0
      %4302 = vmatprep.subr.mxu0 0.0
      %4303 = vmatpush1.msra.mxu0 0.0
      %4304 = vmatprep.subr.mxu0 0.0
      %4305 = vmatpush1.msra.mxu0 0.0
      %4306 = vmatprep.subr.mxu0 0.0
      %4307 = vmatpush1.msra.mxu0 0.0
      %4308 = vmatprep.subr.mxu0 0.0
      %4309 = vmatpush1.msra.mxu0 0.0
      %4310 = vmatprep.subr.mxu0 0.0
      %4311 = vmatpush1.msra.mxu0 0.0
      %4312 = vmatprep.subr.mxu0 0.0
      %4313 = vmatpush1.msra.mxu0 0.0
      %4314 = vmatprep.subr.mxu0 0.0
      %4315 = vmatpush1.msra.mxu0 0.0
      %4316 = vmatprep.subr.mxu0 0.0
      %4317 = vmatpush1.msra.mxu0 0.0
      %4318 = vmatprep.subr.mxu0 0.0
      %4319 = vmatpush1.msra.mxu0 0.0
      %4320 = vmatprep.subr.mxu0 0.0
      %4321 = vmatpush1.msra.mxu0 0.0
      %4322 = vmatprep.subr.mxu0 0.0
      %4323 = vmatpush1.msra.mxu0 0.0
      %4324 = vmatprep.subr.mxu0 0.0
      %4325 = vmatpush1.msra.mxu0 0.0
      %4326 = vmatprep.subr.mxu0 0.0
      %4327 = vmatpush1.msra.mxu0 0.0
      %4328 = vmatprep.subr.mxu0 0.0
      %4329 = vmatpush1.msra.mxu0 0.0
      %4330 = vmatprep.mubr.f32.mxu0 0.0
      %4331 = vmatmul.mubr.f32.gmra.mrb[0].mxu0 %v4264
      %v4332 = vpop.f32.mrb[0].mxu0
      %v4333 = vadd.f32 %v4260, %v4332
      %v4334 = vpop.f32.mrb[0].mxu0
      %4335 = vdwg.mxu0
      %s4336 = scalar_lea.vmem %s33, 64
      %v4337 = vld [vmem:[%s4336] sm:$0xff]
      %v4338 = vld [vmem:[%s4336 + $0x8] sm:$0xff]
      %v4339 = vld [vmem:[%s4336 + $0x10] sm:$0xff]
      %v4340 = vld [vmem:[%s4336 + $0x18] sm:$0xff]
      %s4341 = scalar_lea.vmem %s35, 2
      %v4342 = vld [vmem:[%s4341] sm:$0x1]
      %v4344 = vlaneseq
      %v4345 = vshrl.u32 %v4344, 7
      %v4346 = vsub.s32 0, %v4345
      %v4347 = vrot.slane %v4342, %v4346
      %4349 = vmatprep.subr.mxu0 0.0
      %4350 = vmatpush1.msra.mxu0 %v4337
      %4351 = vmatprep.subr.mxu0 0.0
      %4352 = vmatpush1.msra.mxu0 %v4338
      %4353 = vmatprep.subr.mxu0 0.0
      %4354 = vmatpush1.msra.mxu0 %v4339
      %4355 = vmatprep.subr.mxu0 0.0
      %4356 = vmatpush1.msra.mxu0 %v4340
      %4357 = vmatprep.subr.mxu0 0.0
      %4358 = vmatpush1.msra.mxu0 0.0
      %4359 = vmatprep.subr.mxu0 0.0
      %4360 = vmatpush1.msra.mxu0 0.0
      %4361 = vmatprep.subr.mxu0 0.0
      %4362 = vmatpush1.msra.mxu0 0.0
      %4363 = vmatprep.subr.mxu0 0.0
      %4364 = vmatpush1.msra.mxu0 0.0
      %4365 = vmatprep.subr.mxu0 0.0
      %4366 = vmatpush1.msra.mxu0 0.0
      %4367 = vmatprep.subr.mxu0 0.0
      %4368 = vmatpush1.msra.mxu0 0.0
      %4369 = vmatprep.subr.mxu0 0.0
      %4370 = vmatpush1.msra.mxu0 0.0
      %4371 = vmatprep.subr.mxu0 0.0
      %4372 = vmatpush1.msra.mxu0 0.0
      %4373 = vmatprep.subr.mxu0 0.0
      %4374 = vmatpush1.msra.mxu0 0.0
      %4375 = vmatprep.subr.mxu0 0.0
      %4376 = vmatpush1.msra.mxu0 0.0
      %4377 = vmatprep.subr.mxu0 0.0
      %4378 = vmatpush1.msra.mxu0 0.0
      %4379 = vmatprep.subr.mxu0 0.0
      %4380 = vmatpush1.msra.mxu0 0.0
      %4381 = vmatprep.subr.mxu0 0.0
      %4382 = vmatpush1.msra.mxu0 0.0
      %4383 = vmatprep.subr.mxu0 0.0
      %4384 = vmatpush1.msra.mxu0 0.0
      %4385 = vmatprep.subr.mxu0 0.0
      %4386 = vmatpush1.msra.mxu0 0.0
      %4387 = vmatprep.subr.mxu0 0.0
      %4388 = vmatpush1.msra.mxu0 0.0
      %4389 = vmatprep.subr.mxu0 0.0
      %4390 = vmatpush1.msra.mxu0 0.0
      %4391 = vmatprep.subr.mxu0 0.0
      %4392 = vmatpush1.msra.mxu0 0.0
      %4393 = vmatprep.subr.mxu0 0.0
      %4394 = vmatpush1.msra.mxu0 0.0
      %4395 = vmatprep.subr.mxu0 0.0
      %4396 = vmatpush1.msra.mxu0 0.0
      %4397 = vmatprep.subr.mxu0 0.0
      %4398 = vmatpush1.msra.mxu0 0.0
      %4399 = vmatprep.subr.mxu0 0.0
      %4400 = vmatpush1.msra.mxu0 0.0
      %4401 = vmatprep.subr.mxu0 0.0
      %4402 = vmatpush1.msra.mxu0 0.0
      %4403 = vmatprep.subr.mxu0 0.0
      %4404 = vmatpush1.msra.mxu0 0.0
      %4405 = vmatprep.subr.mxu0 0.0
      %4406 = vmatpush1.msra.mxu0 0.0
      %4407 = vmatprep.subr.mxu0 0.0
      %4408 = vmatpush1.msra.mxu0 0.0
      %4409 = vmatprep.subr.mxu0 0.0
      %4410 = vmatpush1.msra.mxu0 0.0
      %4411 = vmatprep.subr.mxu0 0.0
      %4412 = vmatpush1.msra.mxu0 0.0
      %4413 = vmatprep.mubr.f32.mxu0 0.0
      %4414 = vmatmul.mubr.f32.gmra.mrb[0].mxu0 %v3345
      %v4415 = vpop.f32.mrb[0].mxu0
      %v4416 = vadd.f32 %v4347, %v4415
      %v4417 = vpop.f32.mrb[0].mxu0
      %4418 = vdwg.mxu0
      %s4419 = scalar_lea.vmem %s33, 192
      %v4420 = vld [vmem:[%s4419] sm:$0xff]
      %v4421 = vld [vmem:[%s4419 + $0x8] sm:$0xff]
      %v4422 = vld [vmem:[%s4419 + $0x10] sm:$0xff]
      %v4423 = vld [vmem:[%s4419 + $0x18] sm:$0xff]
      %s4424 = scalar_lea.vmem %s35, 6
      %v4425 = vld [vmem:[%s4424] sm:$0x1]
      %v4427 = vlaneseq
      %v4428 = vshrl.u32 %v4427, 7
      %v4429 = vsub.s32 0, %v4428
      %v4430 = vrot.slane %v4425, %v4429
      %4432 = vmatprep.subr.mxu0 0.0
      %4433 = vmatpush1.msra.mxu0 %v4420
      %4434 = vmatprep.subr.mxu0 0.0
      %4435 = vmatpush1.msra.mxu0 %v4421
      %4436 = vmatprep.subr.mxu0 0.0
      %4437 = vmatpush1.msra.mxu0 %v4422
      %4438 = vmatprep.subr.mxu0 0.0
      %4439 = vmatpush1.msra.mxu0 %v4423
      %4440 = vmatprep.subr.mxu0 0.0
      %4441 = vmatpush1.msra.mxu0 0.0
      %4442 = vmatprep.subr.mxu0 0.0
      %4443 = vmatpush1.msra.mxu0 0.0
      %4444 = vmatprep.subr.mxu0 0.0
      %4445 = vmatpush1.msra.mxu0 0.0
      %4446 = vmatprep.subr.mxu0 0.0
      %4447 = vmatpush1.msra.mxu0 0.0
      %4448 = vmatprep.subr.mxu0 0.0
      %4449 = vmatpush1.msra.mxu0 0.0
      %4450 = vmatprep.subr.mxu0 0.0
      %4451 = vmatpush1.msra.mxu0 0.0
      %4452 = vmatprep.subr.mxu0 0.0
      %4453 = vmatpush1.msra.mxu0 0.0
      %4454 = vmatprep.subr.mxu0 0.0
      %4455 = vmatpush1.msra.mxu0 0.0
      %4456 = vmatprep.subr.mxu0 0.0
      %4457 = vmatpush1.msra.mxu0 0.0
      %4458 = vmatprep.subr.mxu0 0.0
      %4459 = vmatpush1.msra.mxu0 0.0
      %4460 = vmatprep.subr.mxu0 0.0
      %4461 = vmatpush1.msra.mxu0 0.0
      %4462 = vmatprep.subr.mxu0 0.0
      %4463 = vmatpush1.msra.mxu0 0.0
      %4464 = vmatprep.subr.mxu0 0.0
      %4465 = vmatpush1.msra.mxu0 0.0
      %4466 = vmatprep.subr.mxu0 0.0
      %4467 = vmatpush1.msra.mxu0 0.0
      %4468 = vmatprep.subr.mxu0 0.0
      %4469 = vmatpush1.msra.mxu0 0.0
      %4470 = vmatprep.subr.mxu0 0.0
      %4471 = vmatpush1.msra.mxu0 0.0
      %4472 = vmatprep.subr.mxu0 0.0
      %4473 = vmatpush1.msra.mxu0 0.0
      %4474 = vmatprep.subr.mxu0 0.0
      %4475 = vmatpush1.msra.mxu0 0.0
      %4476 = vmatprep.subr.mxu0 0.0
      %4477 = vmatpush1.msra.mxu0 0.0
      %4478 = vmatprep.subr.mxu0 0.0
      %4479 = vmatpush1.msra.mxu0 0.0
      %4480 = vmatprep.subr.mxu0 0.0
      %4481 = vmatpush1.msra.mxu0 0.0
      %4482 = vmatprep.subr.mxu0 0.0
      %4483 = vmatpush1.msra.mxu0 0.0
      %4484 = vmatprep.subr.mxu0 0.0
      %4485 = vmatpush1.msra.mxu0 0.0
      %4486 = vmatprep.subr.mxu0 0.0
      %4487 = vmatpush1.msra.mxu0 0.0
      %4488 = vmatprep.subr.mxu0 0.0
      %4489 = vmatpush1.msra.mxu0 0.0
      %4490 = vmatprep.subr.mxu0 0.0
      %4491 = vmatpush1.msra.mxu0 0.0
      %4492 = vmatprep.subr.mxu0 0.0
      %4493 = vmatpush1.msra.mxu0 0.0
      %4494 = vmatprep.subr.mxu0 0.0
      %4495 = vmatpush1.msra.mxu0 0.0
      %4496 = vmatprep.mubr.f32.mxu0 0.0
      %4497 = vmatmul.mubr.f32.gmra.mrb[0].mxu0 %v3431
      %v4498 = vpop.f32.mrb[0].mxu0
      %v4499 = vadd.f32 %v4430, %v4498
      %v4500 = vpop.f32.mrb[0].mxu0
      %4501 = vmatprep.mubr.f32.mxu0 0.0
      %4502 = vmatmul.mubr.f32.gmra.mrb[0].mxu0 %v3434
      %v4503 = vpop.f32.mrb[0].mxu0
      %v4504 = vadd.f32 %v4430, %v4503
      %v4505 = vpop.f32.mrb[0].mxu0
      %4506 = vdwg.mxu0
      %s4507 = scalar_lea.vmem %s33, 320
      %v4508 = vld [vmem:[%s4507] sm:$0xff]
      %v4509 = vld [vmem:[%s4507 + $0x8] sm:$0xff]
      %v4510 = vld [vmem:[%s4507 + $0x10] sm:$0xff]
      %v4511 = vld [vmem:[%s4507 + $0x18] sm:$0xff]
      %s4512 = scalar_lea.vmem %s35, 10
      %v4513 = vld [vmem:[%s4512] sm:$0x1]
      %v4515 = vlaneseq
      %v4516 = vshrl.u32 %v4515, 7
      %v4517 = vsub.s32 0, %v4516
      %v4518 = vrot.slane %v4513, %v4517
      %4520 = vmatprep.subr.mxu0 0.0
      %4521 = vmatpush1.msra.mxu0 %v4508
      %4522 = vmatprep.subr.mxu0 0.0
      %4523 = vmatpush1.msra.mxu0 %v4509
      %4524 = vmatprep.subr.mxu0 0.0
      %4525 = vmatpush1.msra.mxu0 %v4510
      %4526 = vmatprep.subr.mxu0 0.0
      %4527 = vmatpush1.msra.mxu0 %v4511
      %4528 = vmatprep.subr.mxu0 0.0
      %4529 = vmatpush1.msra.mxu0 0.0
      %4530 = vmatprep.subr.mxu0 0.0
      %4531 = vmatpush1.msra.mxu0 0.0
      %4532 = vmatprep.subr.mxu0 0.0
      %4533 = vmatpush1.msra.mxu0 0.0
      %4534 = vmatprep.subr.mxu0 0.0
      %4535 = vmatpush1.msra.mxu0 0.0
      %4536 = vmatprep.subr.mxu0 0.0
      %4537 = vmatpush1.msra.mxu0 0.0
      %4538 = vmatprep.subr.mxu0 0.0
      %4539 = vmatpush1.msra.mxu0 0.0
      %4540 = vmatprep.subr.mxu0 0.0
      %4541 = vmatpush1.msra.mxu0 0.0
      %4542 = vmatprep.subr.mxu0 0.0
      %4543 = vmatpush1.msra.mxu0 0.0
      %4544 = vmatprep.subr.mxu0 0.0
      %4545 = vmatpush1.msra.mxu0 0.0
      %4546 = vmatprep.subr.mxu0 0.0
      %4547 = vmatpush1.msra.mxu0 0.0
      %4548 = vmatprep.subr.mxu0 0.0
      %4549 = vmatpush1.msra.mxu0 0.0
      %4550 = vmatprep.subr.mxu0 0.0
      %4551 = vmatpush1.msra.mxu0 0.0
      %4552 = vmatprep.subr.mxu0 0.0
      %4553 = vmatpush1.msra.mxu0 0.0
      %4554 = vmatprep.subr.mxu0 0.0
      %4555 = vmatpush1.msra.mxu0 0.0
      %4556 = vmatprep.subr.mxu0 0.0
      %4557 = vmatpush1.msra.mxu0 0.0
      %4558 = vmatprep.subr.mxu0 0.0
      %4559 = vmatpush1.msra.mxu0 0.0
      %4560 = vmatprep.subr.mxu0 0.0
      %4561 = vmatpush1.msra.mxu0 0.0
      %4562 = vmatprep.subr.mxu0 0.0
      %4563 = vmatpush1.msra.mxu0 0.0
      %4564 = vmatprep.subr.mxu0 0.0
      %4565 = vmatpush1.msra.mxu0 0.0
      %4566 = vmatprep.subr.mxu0 0.0
      %4567 = vmatpush1.msra.mxu0 0.0
      %4568 = vmatprep.subr.mxu0 0.0
      %4569 = vmatpush1.msra.mxu0 0.0
      %4570 = vmatprep.subr.mxu0 0.0
      %4571 = vmatpush1.msra.mxu0 0.0
      %4572 = vmatprep.subr.mxu0 0.0
      %4573 = vmatpush1.msra.mxu0 0.0
      %4574 = vmatprep.subr.mxu0 0.0
      %4575 = vmatpush1.msra.mxu0 0.0
      %4576 = vmatprep.subr.mxu0 0.0
      %4577 = vmatpush1.msra.mxu0 0.0
      %4578 = vmatprep.subr.mxu0 0.0
      %4579 = vmatpush1.msra.mxu0 0.0
      %4580 = vmatprep.subr.mxu0 0.0
      %4581 = vmatpush1.msra.mxu0 0.0
      %4582 = vmatprep.subr.mxu0 0.0
      %4583 = vmatpush1.msra.mxu0 0.0
      %4584 = vmatprep.mubr.f32.mxu0 0.0
      %4585 = vmatmul.mubr.f32.gmra.mrb[0].mxu0 %v3431
      %v4586 = vpop.f32.mrb[0].mxu0
      %v4587 = vadd.f32 %v4518, %v4586
      %v4588 = vpop.f32.mrb[0].mxu0
      %4589 = vmatprep.mubr.f32.mxu0 0.0
      %4590 = vmatmul.mubr.f32.gmra.mrb[0].mxu0 %v3434
      %v4591 = vpop.f32.mrb[0].mxu0
      %v4592 = vadd.f32 %v4518, %v4591
      %v4593 = vpop.f32.mrb[0].mxu0
      %4594 = vdwg.mxu0
      %v4595 = vmul.f32 %v4416, 0.35355338
      %v4597 = vsel %vm1599, %v4595, 0
      %v4600 = vsel %vm1599, %v4499, 0
      %v4603 = vsel %vm1599, %v4504, 0
      %4605 = vmatprep.subr.mxu0 0.0
      %4606 = vmatpush1.xpose.msra.mxu0 %v4600
      %4607 = vmatprep.subr.mxu0 0.0
      %4608 = vmatpush1.xpose.msra.mxu0 %v4603
      %4609 = vmatprep.subr.mxu0 0.0
      %4610 = vmatpush1.xpose.msra.mxu0 0.0
      %4611 = vmatprep.subr.mxu0 0.0
      %4612 = vmatpush1.xpose.msra.mxu0 0.0
      %4613 = vmatprep.subr.mxu0 0.0
      %4614 = vmatpush1.xpose.msra.mxu0 0.0
      %4615 = vmatprep.subr.mxu0 0.0
      %4616 = vmatpush1.xpose.msra.mxu0 0.0
      %4617 = vmatprep.subr.mxu0 0.0
      %4618 = vmatpush1.xpose.msra.mxu0 0.0
      %4619 = vmatprep.subr.mxu0 0.0
      %4620 = vmatpush1.xpose.msra.mxu0 0.0
      %4621 = vmatprep.subr.mxu0 0.0
      %4622 = vmatpush1.xpose.msra.mxu0 0.0
      %4623 = vmatprep.subr.mxu0 0.0
      %4624 = vmatpush1.xpose.msra.mxu0 0.0
      %4625 = vmatprep.subr.mxu0 0.0
      %4626 = vmatpush1.xpose.msra.mxu0 0.0
      %4627 = vmatprep.subr.mxu0 0.0
      %4628 = vmatpush1.xpose.msra.mxu0 0.0
      %4629 = vmatprep.subr.mxu0 0.0
      %4630 = vmatpush1.xpose.msra.mxu0 0.0
      %4631 = vmatprep.subr.mxu0 0.0
      %4632 = vmatpush1.xpose.msra.mxu0 0.0
      %4633 = vmatprep.subr.mxu0 0.0
      %4634 = vmatpush1.xpose.msra.mxu0 0.0
      %4635 = vmatprep.subr.mxu0 0.0
      %4636 = vmatpush1.xpose.msra.mxu0 0.0
      %4637 = vmatprep.subr.mxu0 0.0
      %4638 = vmatpush1.xpose.msra.mxu0 0.0
      %4639 = vmatprep.subr.mxu0 0.0
      %4640 = vmatpush1.xpose.msra.mxu0 0.0
      %4641 = vmatprep.subr.mxu0 0.0
      %4642 = vmatpush1.xpose.msra.mxu0 0.0
      %4643 = vmatprep.subr.mxu0 0.0
      %4644 = vmatpush1.xpose.msra.mxu0 0.0
      %4645 = vmatprep.subr.mxu0 0.0
      %4646 = vmatpush1.xpose.msra.mxu0 0.0
      %4647 = vmatprep.subr.mxu0 0.0
      %4648 = vmatpush1.xpose.msra.mxu0 0.0
      %4649 = vmatprep.subr.mxu0 0.0
      %4650 = vmatpush1.xpose.msra.mxu0 0.0
      %4651 = vmatprep.subr.mxu0 0.0
      %4652 = vmatpush1.xpose.msra.mxu0 0.0
      %4653 = vmatprep.subr.mxu0 0.0
      %4654 = vmatpush1.xpose.msra.mxu0 0.0
      %4655 = vmatprep.subr.mxu0 0.0
      %4656 = vmatpush1.xpose.msra.mxu0 0.0
      %4657 = vmatprep.subr.mxu0 0.0
      %4658 = vmatpush1.xpose.msra.mxu0 0.0
      %4659 = vmatprep.subr.mxu0 0.0
      %4660 = vmatpush1.xpose.msra.mxu0 0.0
      %4661 = vmatprep.subr.mxu0 0.0
      %4662 = vmatpush1.xpose.msra.mxu0 0.0
      %4663 = vmatprep.subr.mxu0 0.0
      %4664 = vmatpush1.xpose.msra.mxu0 0.0
      %4665 = vmatprep.subr.mxu0 0.0
      %4666 = vmatpush1.xpose.msra.mxu0 0.0
      %4667 = vmatprep.subr.mxu0 0.0
      %4668 = vmatpush1.xpose.msra.mxu0 0.0
      %4669 = vmatprep.mubr.f32.mxu0 0.0
      %4670 = vmatmul.mubr.f32.gmra.mrb[0].mxu0 %v4597
      %v4671 = vpop.f32.mrb[0].mxu0
      %v4672 = vadd.f32 0.0, %v4671
      %v4673 = vpop.f32.mrb[0].mxu0
      %4674 = vdwg.mxu0
      %v4675 = vsel %vm3679, %v4672, -inf
      %4676 = vmax.xlane.f32.xlu0 %v4675
      %v4677 = vpop.xlane.xlu0 %4676
      %v4678 = vsub.f32 %v4672, %v4677
      %v4679 = vmul.f32 %v4678, 1.442695
      %v4680 = vpow.pop %v4679
      %v4681 = vsel %vm3679, %v4680, 0.0
      %4682 = vadd.xlane.f32.xlu0 %v4681
      %v4683 = vpop.xlane.xlu0 %4682
      %v4684 = vrcp.pop %v4683
      %v4685 = vmul.f32 %v4680, %v4684
      %v4687 = vsel %vm3679, %v4685, 0
      %4689 = vmatprep.subr.mxu0 0.0
      %4690 = vmatpush1.msra.mxu0 %v4587
      %4691 = vmatprep.subr.mxu0 0.0
      %4692 = vmatpush1.msra.mxu0 %v4592
      %4693 = vmatprep.subr.mxu0 0.0
      %4694 = vmatpush1.msra.mxu0 0.0
      %4695 = vmatprep.subr.mxu0 0.0
      %4696 = vmatpush1.msra.mxu0 0.0
      %4697 = vmatprep.subr.mxu0 0.0
      %4698 = vmatpush1.msra.mxu0 0.0
      %4699 = vmatprep.subr.mxu0 0.0
      %4700 = vmatpush1.msra.mxu0 0.0
      %4701 = vmatprep.subr.mxu0 0.0
      %4702 = vmatpush1.msra.mxu0 0.0
      %4703 = vmatprep.subr.mxu0 0.0
      %4704 = vmatpush1.msra.mxu0 0.0
      %4705 = vmatprep.subr.mxu0 0.0
      %4706 = vmatpush1.msra.mxu0 0.0
      %4707 = vmatprep.subr.mxu0 0.0
      %4708 = vmatpush1.msra.mxu0 0.0
      %4709 = vmatprep.subr.mxu0 0.0
      %4710 = vmatpush1.msra.mxu0 0.0
      %4711 = vmatprep.subr.mxu0 0.0
      %4712 = vmatpush1.msra.mxu0 0.0
      %4713 = vmatprep.subr.mxu0 0.0
      %4714 = vmatpush1.msra.mxu0 0.0
      %4715 = vmatprep.subr.mxu0 0.0
      %4716 = vmatpush1.msra.mxu0 0.0
      %4717 = vmatprep.subr.mxu0 0.0
      %4718 = vmatpush1.msra.mxu0 0.0
      %4719 = vmatprep.subr.mxu0 0.0
      %4720 = vmatpush1.msra.mxu0 0.0
      %4721 = vmatprep.subr.mxu0 0.0
      %4722 = vmatpush1.msra.mxu0 0.0
      %4723 = vmatprep.subr.mxu0 0.0
      %4724 = vmatpush1.msra.mxu0 0.0
      %4725 = vmatprep.subr.mxu0 0.0
      %4726 = vmatpush1.msra.mxu0 0.0
      %4727 = vmatprep.subr.mxu0 0.0
      %4728 = vmatpush1.msra.mxu0 0.0
      %4729 = vmatprep.subr.mxu0 0.0
      %4730 = vmatpush1.msra.mxu0 0.0
      %4731 = vmatprep.subr.mxu0 0.0
      %4732 = vmatpush1.msra.mxu0 0.0
      %4733 = vmatprep.subr.mxu0 0.0
      %4734 = vmatpush1.msra.mxu0 0.0
      %4735 = vmatprep.subr.mxu0 0.0
      %4736 = vmatpush1.msra.mxu0 0.0
      %4737 = vmatprep.subr.mxu0 0.0
      %4738 = vmatpush1.msra.mxu0 0.0
      %4739 = vmatprep.subr.mxu0 0.0
      %4740 = vmatpush1.msra.mxu0 0.0
      %4741 = vmatprep.subr.mxu0 0.0
      %4742 = vmatpush1.msra.mxu0 0.0
      %4743 = vmatprep.subr.mxu0 0.0
      %4744 = vmatpush1.msra.mxu0 0.0
      %4745 = vmatprep.subr.mxu0 0.0
      %4746 = vmatpush1.msra.mxu0 0.0
      %4747 = vmatprep.subr.mxu0 0.0
      %4748 = vmatpush1.msra.mxu0 0.0
      %4749 = vmatprep.subr.mxu0 0.0
      %4750 = vmatpush1.msra.mxu0 0.0
      %4751 = vmatprep.subr.mxu0 0.0
      %4752 = vmatpush1.msra.mxu0 0.0
      %4753 = vmatprep.mubr.f32.mxu0 0.0
      %4754 = vmatmul.mubr.f32.gmra.mrb[0].mxu0 %v4687
      %v4755 = vpop.f32.mrb[0].mxu0
      %v4756 = vadd.f32 0.0, %v4755
      %v4757 = vpop.f32.mrb[0].mxu0
      %4758 = vdwg.mxu0
      %s4759 = scalar_lea.vmem %s37, 16
      %v4760 = vld [vmem:[%s4759] sm:$0xff]
      %v4762 = vsel %vm1599, %v4756, 0
      %4764 = vmatprep.subr.mxu0 0.0
      %4765 = vmatpush1.msra.mxu0 %v4760
      %4766 = vmatprep.subr.mxu0 0.0
      %4767 = vmatpush1.msra.mxu0 0.0
      %4768 = vmatprep.subr.mxu0 0.0
      %4769 = vmatpush1.msra.mxu0 0.0
      %4770 = vmatprep.subr.mxu0 0.0
      %4771 = vmatpush1.msra.mxu0 0.0
      %4772 = vmatprep.subr.mxu0 0.0
      %4773 = vmatpush1.msra.mxu0 0.0
      %4774 = vmatprep.subr.mxu0 0.0
      %4775 = vmatpush1.msra.mxu0 0.0
      %4776 = vmatprep.subr.mxu0 0.0
      %4777 = vmatpush1.msra.mxu0 0.0
      %4778 = vmatprep.subr.mxu0 0.0
      %4779 = vmatpush1.msra.mxu0 0.0
      %4780 = vmatprep.subr.mxu0 0.0
      %4781 = vmatpush1.msra.mxu0 0.0
      %4782 = vmatprep.subr.mxu0 0.0
      %4783 = vmatpush1.msra.mxu0 0.0
      %4784 = vmatprep.subr.mxu0 0.0
      %4785 = vmatpush1.msra.mxu0 0.0
      %4786 = vmatprep.subr.mxu0 0.0
      %4787 = vmatpush1.msra.mxu0 0.0
      %4788 = vmatprep.subr.mxu0 0.0
      %4789 = vmatpush1.msra.mxu0 0.0
      %4790 = vmatprep.subr.mxu0 0.0
      %4791 = vmatpush1.msra.mxu0 0.0
      %4792 = vmatprep.subr.mxu0 0.0
      %4793 = vmatpush1.msra.mxu0 0.0
      %4794 = vmatprep.subr.mxu0 0.0
      %4795 = vmatpush1.msra.mxu0 0.0
      %4796 = vmatprep.subr.mxu0 0.0
      %4797 = vmatpush1.msra.mxu0 0.0
      %4798 = vmatprep.subr.mxu0 0.0
      %4799 = vmatpush1.msra.mxu0 0.0
      %4800 = vmatprep.subr.mxu0 0.0
      %4801 = vmatpush1.msra.mxu0 0.0
      %4802 = vmatprep.subr.mxu0 0.0
      %4803 = vmatpush1.msra.mxu0 0.0
      %4804 = vmatprep.subr.mxu0 0.0
      %4805 = vmatpush1.msra.mxu0 0.0
      %4806 = vmatprep.subr.mxu0 0.0
      %4807 = vmatpush1.msra.mxu0 0.0
      %4808 = vmatprep.subr.mxu0 0.0
      %4809 = vmatpush1.msra.mxu0 0.0
      %4810 = vmatprep.subr.mxu0 0.0
      %4811 = vmatpush1.msra.mxu0 0.0
      %4812 = vmatprep.subr.mxu0 0.0
      %4813 = vmatpush1.msra.mxu0 0.0
      %4814 = vmatprep.subr.mxu0 0.0
      %4815 = vmatpush1.msra.mxu0 0.0
      %4816 = vmatprep.subr.mxu0 0.0
      %4817 = vmatpush1.msra.mxu0 0.0
      %4818 = vmatprep.subr.mxu0 0.0
      %4819 = vmatpush1.msra.mxu0 0.0
      %4820 = vmatprep.subr.mxu0 0.0
      %4821 = vmatpush1.msra.mxu0 0.0
      %4822 = vmatprep.subr.mxu0 0.0
      %4823 = vmatpush1.msra.mxu0 0.0
      %4824 = vmatprep.subr.mxu0 0.0
      %4825 = vmatpush1.msra.mxu0 0.0
      %4826 = vmatprep.subr.mxu0 0.0
      %4827 = vmatpush1.msra.mxu0 0.0
      %4828 = vmatprep.mubr.f32.mxu0 0.0
      %4829 = vmatmul.mubr.f32.gmra.mrb[0].mxu0 %v4762
      %v4830 = vpop.f32.mrb[0].mxu0
      %v4831 = vadd.f32 0.0, %v4830
      %v4832 = vpop.f32.mrb[0].mxu0
      %4833 = vdwg.mxu0
      %v4834 = vadd.f32 %v4333, %v4831
      %s4835 = scalar_lea.vmem %s33, 96
      %v4836 = vld [vmem:[%s4835] sm:$0xff]
      %v4837 = vld [vmem:[%s4835 + $0x8] sm:$0xff]
      %v4838 = vld [vmem:[%s4835 + $0x10] sm:$0xff]
      %v4839 = vld [vmem:[%s4835 + $0x18] sm:$0xff]
      %s4840 = scalar_lea.vmem %s35, 3
      %v4841 = vld [vmem:[%s4840] sm:$0x1]
      %v4843 = vlaneseq
      %v4844 = vshrl.u32 %v4843, 7
      %v4845 = vsub.s32 0, %v4844
      %v4846 = vrot.slane %v4841, %v4845
      %4848 = vmatprep.subr.mxu0 0.0
      %4849 = vmatpush1.msra.mxu0 %v4836
      %4850 = vmatprep.subr.mxu0 0.0
      %4851 = vmatpush1.msra.mxu0 %v4837
      %4852 = vmatprep.subr.mxu0 0.0
      %4853 = vmatpush1.msra.mxu0 %v4838
      %4854 = vmatprep.subr.mxu0 0.0
      %4855 = vmatpush1.msra.mxu0 %v4839
      %4856 = vmatprep.subr.mxu0 0.0
      %4857 = vmatpush1.msra.mxu0 0.0
      %4858 = vmatprep.subr.mxu0 0.0
      %4859 = vmatpush1.msra.mxu0 0.0
      %4860 = vmatprep.subr.mxu0 0.0
      %4861 = vmatpush1.msra.mxu0 0.0
      %4862 = vmatprep.subr.mxu0 0.0
      %4863 = vmatpush1.msra.mxu0 0.0
      %4864 = vmatprep.subr.mxu0 0.0
      %4865 = vmatpush1.msra.mxu0 0.0
      %4866 = vmatprep.subr.mxu0 0.0
      %4867 = vmatpush1.msra.mxu0 0.0
      %4868 = vmatprep.subr.mxu0 0.0
      %4869 = vmatpush1.msra.mxu0 0.0
      %4870 = vmatprep.subr.mxu0 0.0
      %4871 = vmatpush1.msra.mxu0 0.0
      %4872 = vmatprep.subr.mxu0 0.0
      %4873 = vmatpush1.msra.mxu0 0.0
      %4874 = vmatprep.subr.mxu0 0.0
      %4875 = vmatpush1.msra.mxu0 0.0
      %4876 = vmatprep.subr.mxu0 0.0
      %4877 = vmatpush1.msra.mxu0 0.0
      %4878 = vmatprep.subr.mxu0 0.0
      %4879 = vmatpush1.msra.mxu0 0.0
      %4880 = vmatprep.subr.mxu0 0.0
      %4881 = vmatpush1.msra.mxu0 0.0
      %4882 = vmatprep.subr.mxu0 0.0
      %4883 = vmatpush1.msra.mxu0 0.0
      %4884 = vmatprep.subr.mxu0 0.0
      %4885 = vmatpush1.msra.mxu0 0.0
      %4886 = vmatprep.subr.mxu0 0.0
      %4887 = vmatpush1.msra.mxu0 0.0
      %4888 = vmatprep.subr.mxu0 0.0
      %4889 = vmatpush1.msra.mxu0 0.0
      %4890 = vmatprep.subr.mxu0 0.0
      %4891 = vmatpush1.msra.mxu0 0.0
      %4892 = vmatprep.subr.mxu0 0.0
      %4893 = vmatpush1.msra.mxu0 0.0
      %4894 = vmatprep.subr.mxu0 0.0
      %4895 = vmatpush1.msra.mxu0 0.0
      %4896 = vmatprep.subr.mxu0 0.0
      %4897 = vmatpush1.msra.mxu0 0.0
      %4898 = vmatprep.subr.mxu0 0.0
      %4899 = vmatpush1.msra.mxu0 0.0
      %4900 = vmatprep.subr.mxu0 0.0
      %4901 = vmatpush1.msra.mxu0 0.0
      %4902 = vmatprep.subr.mxu0 0.0
      %4903 = vmatpush1.msra.mxu0 0.0
      %4904 = vmatprep.subr.mxu0 0.0
      %4905 = vmatpush1.msra.mxu0 0.0
      %4906 = vmatprep.subr.mxu0 0.0
      %4907 = vmatpush1.msra.mxu0 0.0
      %4908 = vmatprep.subr.mxu0 0.0
      %4909 = vmatpush1.msra.mxu0 0.0
      %4910 = vmatprep.subr.mxu0 0.0
      %4911 = vmatpush1.msra.mxu0 0.0
      %4912 = vmatprep.mubr.f32.mxu0 0.0
      %4913 = vmatmul.mubr.f32.gmra.mrb[0].mxu0 %v3345
      %v4914 = vpop.f32.mrb[0].mxu0
      %v4915 = vadd.f32 %v4846, %v4914
      %v4916 = vpop.f32.mrb[0].mxu0
      %4917 = vdwg.mxu0
      %s4918 = scalar_lea.vmem %s33, 224
      %v4919 = vld [vmem:[%s4918] sm:$0xff]
      %v4920 = vld [vmem:[%s4918 + $0x8] sm:$0xff]
      %v4921 = vld [vmem:[%s4918 + $0x10] sm:$0xff]
      %v4922 = vld [vmem:[%s4918 + $0x18] sm:$0xff]
      %s4923 = scalar_lea.vmem %s35, 7
      %v4924 = vld [vmem:[%s4923] sm:$0x1]
      %v4926 = vlaneseq
      %v4927 = vshrl.u32 %v4926, 7
      %v4928 = vsub.s32 0, %v4927
      %v4929 = vrot.slane %v4924, %v4928
      %4931 = vmatprep.subr.mxu0 0.0
      %4932 = vmatpush1.msra.mxu0 %v4919
      %4933 = vmatprep.subr.mxu0 0.0
      %4934 = vmatpush1.msra.mxu0 %v4920
      %4935 = vmatprep.subr.mxu0 0.0
      %4936 = vmatpush1.msra.mxu0 %v4921
      %4937 = vmatprep.subr.mxu0 0.0
      %4938 = vmatpush1.msra.mxu0 %v4922
      %4939 = vmatprep.subr.mxu0 0.0
      %4940 = vmatpush1.msra.mxu0 0.0
      %4941 = vmatprep.subr.mxu0 0.0
      %4942 = vmatpush1.msra.mxu0 0.0
      %4943 = vmatprep.subr.mxu0 0.0
      %4944 = vmatpush1.msra.mxu0 0.0
      %4945 = vmatprep.subr.mxu0 0.0
      %4946 = vmatpush1.msra.mxu0 0.0
      %4947 = vmatprep.subr.mxu0 0.0
      %4948 = vmatpush1.msra.mxu0 0.0
      %4949 = vmatprep.subr.mxu0 0.0
      %4950 = vmatpush1.msra.mxu0 0.0
      %4951 = vmatprep.subr.mxu0 0.0
      %4952 = vmatpush1.msra.mxu0 0.0
      %4953 = vmatprep.subr.mxu0 0.0
      %4954 = vmatpush1.msra.mxu0 0.0
      %4955 = vmatprep.subr.mxu0 0.0
      %4956 = vmatpush1.msra.mxu0 0.0
      %4957 = vmatprep.subr.mxu0 0.0
      %4958 = vmatpush1.msra.mxu0 0.0
      %4959 = vmatprep.subr.mxu0 0.0
      %4960 = vmatpush1.msra.mxu0 0.0
      %4961 = vmatprep.subr.mxu0 0.0
      %4962 = vmatpush1.msra.mxu0 0.0
      %4963 = vmatprep.subr.mxu0 0.0
      %4964 = vmatpush1.msra.mxu0 0.0
      %4965 = vmatprep.subr.mxu0 0.0
      %4966 = vmatpush1.msra.mxu0 0.0
      %4967 = vmatprep.subr.mxu0 0.0
      %4968 = vmatpush1.msra.mxu0 0.0
      %4969 = vmatprep.subr.mxu0 0.0
      %4970 = vmatpush1.msra.mxu0 0.0
      %4971 = vmatprep.subr.mxu0 0.0
      %4972 = vmatpush1.msra.mxu0 0.0
      %4973 = vmatprep.subr.mxu0 0.0
      %4974 = vmatpush1.msra.mxu0 0.0
      %4975 = vmatprep.subr.mxu0 0.0
      %4976 = vmatpush1.msra.mxu0 0.0
      %4977 = vmatprep.subr.mxu0 0.0
      %4978 = vmatpush1.msra.mxu0 0.0
      %4979 = vmatprep.subr.mxu0 0.0
      %4980 = vmatpush1.msra.mxu0 0.0
      %4981 = vmatprep.subr.mxu0 0.0
      %4982 = vmatpush1.msra.mxu0 0.0
      %4983 = vmatprep.subr.mxu0 0.0
      %4984 = vmatpush1.msra.mxu0 0.0
      %4985 = vmatprep.subr.mxu0 0.0
      %4986 = vmatpush1.msra.mxu0 0.0
      %4987 = vmatprep.subr.mxu0 0.0
      %4988 = vmatpush1.msra.mxu0 0.0
      %4989 = vmatprep.subr.mxu0 0.0
      %4990 = vmatpush1.msra.mxu0 0.0
      %4991 = vmatprep.subr.mxu0 0.0
      %4992 = vmatpush1.msra.mxu0 0.0
      %4993 = vmatprep.subr.mxu0 0.0
      %4994 = vmatpush1.msra.mxu0 0.0
      %4995 = vmatprep.mubr.f32.mxu0 0.0
      %4996 = vmatmul.mubr.f32.gmra.mrb[0].mxu0 %v3431
      %v4997 = vpop.f32.mrb[0].mxu0
      %v4998 = vadd.f32 %v4929, %v4997
      %v4999 = vpop.f32.mrb[0].mxu0
      %5000 = vmatprep.mubr.f32.mxu0 0.0
      %5001 = vmatmul.mubr.f32.gmra.mrb[0].mxu0 %v3434
      %v5002 = vpop.f32.mrb[0].mxu0
      %v5003 = vadd.f32 %v4929, %v5002
      %v5004 = vpop.f32.mrb[0].mxu0
      %5005 = vdwg.mxu0
      %s5006 = scalar_lea.vmem %s33, 352
      %v5007 = vld [vmem:[%s5006] sm:$0xff]
      %v5008 = vld [vmem:[%s5006 + $0x8] sm:$0xff]
      %v5009 = vld [vmem:[%s5006 + $0x10] sm:$0xff]
      %v5010 = vld [vmem:[%s5006 + $0x18] sm:$0xff]
      %s5011 = scalar_lea.vmem %s35, 11
      %v5012 = vld [vmem:[%s5011] sm:$0x1]
      %v5014 = vlaneseq
      %v5015 = vshrl.u32 %v5014, 7
      %v5016 = vsub.s32 0, %v5015
      %v5017 = vrot.slane %v5012, %v5016
      %5019 = vmatprep.subr.mxu0 0.0
      %5020 = vmatpush1.msra.mxu0 %v5007
      %5021 = vmatprep.subr.mxu0 0.0
      %5022 = vmatpush1.msra.mxu0 %v5008
      %5023 = vmatprep.subr.mxu0 0.0
      %5024 = vmatpush1.msra.mxu0 %v5009
      %5025 = vmatprep.subr.mxu0 0.0
      %5026 = vmatpush1.msra.mxu0 %v5010
      %5027 = vmatprep.subr.mxu0 0.0
      %5028 = vmatpush1.msra.mxu0 0.0
      %5029 = vmatprep.subr.mxu0 0.0
      %5030 = vmatpush1.msra.mxu0 0.0
      %5031 = vmatprep.subr.mxu0 0.0
      %5032 = vmatpush1.msra.mxu0 0.0
      %5033 = vmatprep.subr.mxu0 0.0
      %5034 = vmatpush1.msra.mxu0 0.0
      %5035 = vmatprep.subr.mxu0 0.0
      %5036 = vmatpush1.msra.mxu0 0.0
      %5037 = vmatprep.subr.mxu0 0.0
      %5038 = vmatpush1.msra.mxu0 0.0
      %5039 = vmatprep.subr.mxu0 0.0
      %5040 = vmatpush1.msra.mxu0 0.0
      %5041 = vmatprep.subr.mxu0 0.0
      %5042 = vmatpush1.msra.mxu0 0.0
      %5043 = vmatprep.subr.mxu0 0.0
      %5044 = vmatpush1.msra.mxu0 0.0
      %5045 = vmatprep.subr.mxu0 0.0
      %5046 = vmatpush1.msra.mxu0 0.0
      %5047 = vmatprep.subr.mxu0 0.0
      %5048 = vmatpush1.msra.mxu0 0.0
      %5049 = vmatprep.subr.mxu0 0.0
      %5050 = vmatpush1.msra.mxu0 0.0
      %5051 = vmatprep.subr.mxu0 0.0
      %5052 = vmatpush1.msra.mxu0 0.0
      %5053 = vmatprep.subr.mxu0 0.0
      %5054 = vmatpush1.msra.mxu0 0.0
      %5055 = vmatprep.subr.mxu0 0.0
      %5056 = vmatpush1.msra.mxu0 0.0
      %5057 = vmatprep.subr.mxu0 0.0
      %5058 = vmatpush1.msra.mxu0 0.0
      %5059 = vmatprep.subr.mxu0 0.0
      %5060 = vmatpush1.msra.mxu0 0.0
      %5061 = vmatprep.subr.mxu0 0.0
      %5062 = vmatpush1.msra.mxu0 0.0
      %5063 = vmatprep.subr.mxu0 0.0
      %5064 = vmatpush1.msra.mxu0 0.0
      %5065 = vmatprep.subr.mxu0 0.0
      %5066 = vmatpush1.msra.mxu0 0.0
      %5067 = vmatprep.subr.mxu0 0.0
      %5068 = vmatpush1.msra.mxu0 0.0
      %5069 = vmatprep.subr.mxu0 0.0
      %5070 = vmatpush1.msra.mxu0 0.0
      %5071 = vmatprep.subr.mxu0 0.0
      %5072 = vmatpush1.msra.mxu0 0.0
      %5073 = vmatprep.subr.mxu0 0.0
      %5074 = vmatpush1.msra.mxu0 0.0
      %5075 = vmatprep.subr.mxu0 0.0
      %5076 = vmatpush1.msra.mxu0 0.0
      %5077 = vmatprep.subr.mxu0 0.0
      %5078 = vmatpush1.msra.mxu0 0.0
      %5079 = vmatprep.subr.mxu0 0.0
      %5080 = vmatpush1.msra.mxu0 0.0
      %5081 = vmatprep.subr.mxu0 0.0
      %5082 = vmatpush1.msra.mxu0 0.0
      %5083 = vmatprep.mubr.f32.mxu0 0.0
      %5084 = vmatmul.mubr.f32.gmra.mrb[0].mxu0 %v3431
      %v5085 = vpop.f32.mrb[0].mxu0
      %v5086 = vadd.f32 %v5017, %v5085
      %v5087 = vpop.f32.mrb[0].mxu0
      %5088 = vmatprep.mubr.f32.mxu0 0.0
      %5089 = vmatmul.mubr.f32.gmra.mrb[0].mxu0 %v3434
      %v5090 = vpop.f32.mrb[0].mxu0
      %v5091 = vadd.f32 %v5017, %v5090
      %v5092 = vpop.f32.mrb[0].mxu0
      %5093 = vdwg.mxu0
      %v5094 = vmul.f32 %v4915, 0.35355338
      %v5096 = vsel %vm1599, %v5094, 0
      %v5099 = vsel %vm1599, %v4998, 0
      %v5102 = vsel %vm1599, %v5003, 0
      %5104 = vmatprep.subr.mxu0 0.0
      %5105 = vmatpush1.xpose.msra.mxu0 %v5099
      %5106 = vmatprep.subr.mxu0 0.0
      %5107 = vmatpush1.xpose.msra.mxu0 %v5102
      %5108 = vmatprep.subr.mxu0 0.0
      %5109 = vmatpush1.xpose.msra.mxu0 0.0
      %5110 = vmatprep.subr.mxu0 0.0
      %5111 = vmatpush1.xpose.msra.mxu0 0.0
      %5112 = vmatprep.subr.mxu0 0.0
      %5113 = vmatpush1.xpose.msra.mxu0 0.0
      %5114 = vmatprep.subr.mxu0 0.0
      %5115 = vmatpush1.xpose.msra.mxu0 0.0
      %5116 = vmatprep.subr.mxu0 0.0
      %5117 = vmatpush1.xpose.msra.mxu0 0.0
      %5118 = vmatprep.subr.mxu0 0.0
      %5119 = vmatpush1.xpose.msra.mxu0 0.0
      %5120 = vmatprep.subr.mxu0 0.0
      %5121 = vmatpush1.xpose.msra.mxu0 0.0
      %5122 = vmatprep.subr.mxu0 0.0
      %5123 = vmatpush1.xpose.msra.mxu0 0.0
      %5124 = vmatprep.subr.mxu0 0.0
      %5125 = vmatpush1.xpose.msra.mxu0 0.0
      %5126 = vmatprep.subr.mxu0 0.0
      %5127 = vmatpush1.xpose.msra.mxu0 0.0
      %5128 = vmatprep.subr.mxu0 0.0
      %5129 = vmatpush1.xpose.msra.mxu0 0.0
      %5130 = vmatprep.subr.mxu0 0.0
      %5131 = vmatpush1.xpose.msra.mxu0 0.0
      %5132 = vmatprep.subr.mxu0 0.0
      %5133 = vmatpush1.xpose.msra.mxu0 0.0
      %5134 = vmatprep.subr.mxu0 0.0
      %5135 = vmatpush1.xpose.msra.mxu0 0.0
      %5136 = vmatprep.subr.mxu0 0.0
      %5137 = vmatpush1.xpose.msra.mxu0 0.0
      %5138 = vmatprep.subr.mxu0 0.0
      %5139 = vmatpush1.xpose.msra.mxu0 0.0
      %5140 = vmatprep.subr.mxu0 0.0
      %5141 = vmatpush1.xpose.msra.mxu0 0.0
      %5142 = vmatprep.subr.mxu0 0.0
      %5143 = vmatpush1.xpose.msra.mxu0 0.0
      %5144 = vmatprep.subr.mxu0 0.0
      %5145 = vmatpush1.xpose.msra.mxu0 0.0
      %5146 = vmatprep.subr.mxu0 0.0
      %5147 = vmatpush1.xpose.msra.mxu0 0.0
      %5148 = vmatprep.subr.mxu0 0.0
      %5149 = vmatpush1.xpose.msra.mxu0 0.0
      %5150 = vmatprep.subr.mxu0 0.0
      %5151 = vmatpush1.xpose.msra.mxu0 0.0
      %5152 = vmatprep.subr.mxu0 0.0
      %5153 = vmatpush1.xpose.msra.mxu0 0.0
      %5154 = vmatprep.subr.mxu0 0.0
      %5155 = vmatpush1.xpose.msra.mxu0 0.0
      %5156 = vmatprep.subr.mxu0 0.0
      %5157 = vmatpush1.xpose.msra.mxu0 0.0
      %5158 = vmatprep.subr.mxu0 0.0
      %5159 = vmatpush1.xpose.msra.mxu0 0.0
      %5160 = vmatprep.subr.mxu0 0.0
      %5161 = vmatpush1.xpose.msra.mxu0 0.0
      %5162 = vmatprep.subr.mxu0 0.0
      %5163 = vmatpush1.xpose.msra.mxu0 0.0
      %5164 = vmatprep.subr.mxu0 0.0
      %5165 = vmatpush1.xpose.msra.mxu0 0.0
      %5166 = vmatprep.subr.mxu0 0.0
      %5167 = vmatpush1.xpose.msra.mxu0 0.0
      %5168 = vmatprep.mubr.f32.mxu0 0.0
      %5169 = vmatmul.mubr.f32.gmra.mrb[0].mxu0 %v5096
      %v5170 = vpop.f32.mrb[0].mxu0
      %v5171 = vadd.f32 0.0, %v5170
      %v5172 = vpop.f32.mrb[0].mxu0
      %5173 = vdwg.mxu0
      %v5174 = vsel %vm3679, %v5171, -inf
      %5175 = vmax.xlane.f32.xlu0 %v5174
      %v5176 = vpop.xlane.xlu0 %5175
      %v5177 = vsub.f32 %v5171, %v5176
      %v5178 = vmul.f32 %v5177, 1.442695
      %v5179 = vpow.pop %v5178
      %v5180 = vsel %vm3679, %v5179, 0.0
      %5181 = vadd.xlane.f32.xlu0 %v5180
      %v5182 = vpop.xlane.xlu0 %5181
      %v5183 = vrcp.pop %v5182
      %v5184 = vmul.f32 %v5179, %v5183
      %v5186 = vsel %vm3679, %v5184, 0
      %5188 = vmatprep.subr.mxu0 0.0
      %5189 = vmatpush1.msra.mxu0 %v5086
      %5190 = vmatprep.subr.mxu0 0.0
      %5191 = vmatpush1.msra.mxu0 %v5091
      %5192 = vmatprep.subr.mxu0 0.0
      %5193 = vmatpush1.msra.mxu0 0.0
      %5194 = vmatprep.subr.mxu0 0.0
      %5195 = vmatpush1.msra.mxu0 0.0
      %5196 = vmatprep.subr.mxu0 0.0
      %5197 = vmatpush1.msra.mxu0 0.0
      %5198 = vmatprep.subr.mxu0 0.0
      %5199 = vmatpush1.msra.mxu0 0.0
      %5200 = vmatprep.subr.mxu0 0.0
      %5201 = vmatpush1.msra.mxu0 0.0
      %5202 = vmatprep.subr.mxu0 0.0
      %5203 = vmatpush1.msra.mxu0 0.0
      %5204 = vmatprep.subr.mxu0 0.0
      %5205 = vmatpush1.msra.mxu0 0.0
      %5206 = vmatprep.subr.mxu0 0.0
      %5207 = vmatpush1.msra.mxu0 0.0
      %5208 = vmatprep.subr.mxu0 0.0
      %5209 = vmatpush1.msra.mxu0 0.0
      %5210 = vmatprep.subr.mxu0 0.0
      %5211 = vmatpush1.msra.mxu0 0.0
      %5212 = vmatprep.subr.mxu0 0.0
      %5213 = vmatpush1.msra.mxu0 0.0
      %5214 = vmatprep.subr.mxu0 0.0
      %5215 = vmatpush1.msra.mxu0 0.0
      %5216 = vmatprep.subr.mxu0 0.0
      %5217 = vmatpush1.msra.mxu0 0.0
      %5218 = vmatprep.subr.mxu0 0.0
      %5219 = vmatpush1.msra.mxu0 0.0
      %5220 = vmatprep.subr.mxu0 0.0
      %5221 = vmatpush1.msra.mxu0 0.0
      %5222 = vmatprep.subr.mxu0 0.0
      %5223 = vmatpush1.msra.mxu0 0.0
      %5224 = vmatprep.subr.mxu0 0.0
      %5225 = vmatpush1.msra.mxu0 0.0
      %5226 = vmatprep.subr.mxu0 0.0
      %5227 = vmatpush1.msra.mxu0 0.0
      %5228 = vmatprep.subr.mxu0 0.0
      %5229 = vmatpush1.msra.mxu0 0.0
      %5230 = vmatprep.subr.mxu0 0.0
      %5231 = vmatpush1.msra.mxu0 0.0
      %5232 = vmatprep.subr.mxu0 0.0
      %5233 = vmatpush1.msra.mxu0 0.0
      %5234 = vmatprep.subr.mxu0 0.0
      %5235 = vmatpush1.msra.mxu0 0.0
      %5236 = vmatprep.subr.mxu0 0.0
      %5237 = vmatpush1.msra.mxu0 0.0
      %5238 = vmatprep.subr.mxu0 0.0
      %5239 = vmatpush1.msra.mxu0 0.0
      %5240 = vmatprep.subr.mxu0 0.0
      %5241 = vmatpush1.msra.mxu0 0.0
      %5242 = vmatprep.subr.mxu0 0.0
      %5243 = vmatpush1.msra.mxu0 0.0
      %5244 = vmatprep.subr.mxu0 0.0
      %5245 = vmatpush1.msra.mxu0 0.0
      %5246 = vmatprep.subr.mxu0 0.0
      %5247 = vmatpush1.msra.mxu0 0.0
      %5248 = vmatprep.subr.mxu0 0.0
      %5249 = vmatpush1.msra.mxu0 0.0
      %5250 = vmatprep.subr.mxu0 0.0
      %5251 = vmatpush1.msra.mxu0 0.0
      %5252 = vmatprep.mubr.f32.mxu0 0.0
      %5253 = vmatmul.mubr.f32.gmra.mrb[0].mxu0 %v5186
      %v5254 = vpop.f32.mrb[0].mxu0
      %v5255 = vadd.f32 0.0, %v5254
      %v5256 = vpop.f32.mrb[0].mxu0
      %5257 = vdwg.mxu0
      %s5258 = scalar_lea.vmem %s37, 24
      %v5259 = vld [vmem:[%s5258] sm:$0xff]
      %v5261 = vsel %vm1599, %v5255, 0
      %5263 = vmatprep.subr.mxu0 0.0
      %5264 = vmatpush1.msra.mxu0 %v5259
      %5265 = vmatprep.subr.mxu0 0.0
      %5266 = vmatpush1.msra.mxu0 0.0
      %5267 = vmatprep.subr.mxu0 0.0
      %5268 = vmatpush1.msra.mxu0 0.0
      %5269 = vmatprep.subr.mxu0 0.0
      %5270 = vmatpush1.msra.mxu0 0.0
      %5271 = vmatprep.subr.mxu0 0.0
      %5272 = vmatpush1.msra.mxu0 0.0
      %5273 = vmatprep.subr.mxu0 0.0
      %5274 = vmatpush1.msra.mxu0 0.0
      %5275 = vmatprep.subr.mxu0 0.0
      %5276 = vmatpush1.msra.mxu0 0.0
      %5277 = vmatprep.subr.mxu0 0.0
      %5278 = vmatpush1.msra.mxu0 0.0
      %5279 = vmatprep.subr.mxu0 0.0
      %5280 = vmatpush1.msra.mxu0 0.0
      %5281 = vmatprep.subr.mxu0 0.0
      %5282 = vmatpush1.msra.mxu0 0.0
      %5283 = vmatprep.subr.mxu0 0.0
      %5284 = vmatpush1.msra.mxu0 0.0
      %5285 = vmatprep.subr.mxu0 0.0
      %5286 = vmatpush1.msra.mxu0 0.0
      %5287 = vmatprep.subr.mxu0 0.0
      %5288 = vmatpush1.msra.mxu0 0.0
      %5289 = vmatprep.subr.mxu0 0.0
      %5290 = vmatpush1.msra.mxu0 0.0
      %5291 = vmatprep.subr.mxu0 0.0
      %5292 = vmatpush1.msra.mxu0 0.0
      %5293 = vmatprep.subr.mxu0 0.0
      %5294 = vmatpush1.msra.mxu0 0.0
      %5295 = vmatprep.subr.mxu0 0.0
      %5296 = vmatpush1.msra.mxu0 0.0
      %5297 = vmatprep.subr.mxu0 0.0
      %5298 = vmatpush1.msra.mxu0 0.0
      %5299 = vmatprep.subr.mxu0 0.0
      %5300 = vmatpush1.msra.mxu0 0.0
      %5301 = vmatprep.subr.mxu0 0.0
      %5302 = vmatpush1.msra.mxu0 0.0
      %5303 = vmatprep.subr.mxu0 0.0
      %5304 = vmatpush1.msra.mxu0 0.0
      %5305 = vmatprep.subr.mxu0 0.0
      %5306 = vmatpush1.msra.mxu0 0.0
      %5307 = vmatprep.subr.mxu0 0.0
      %5308 = vmatpush1.msra.mxu0 0.0
      %5309 = vmatprep.subr.mxu0 0.0
      %5310 = vmatpush1.msra.mxu0 0.0
      %5311 = vmatprep.subr.mxu0 0.0
      %5312 = vmatpush1.msra.mxu0 0.0
      %5313 = vmatprep.subr.mxu0 0.0
      %5314 = vmatpush1.msra.mxu0 0.0
      %5315 = vmatprep.subr.mxu0 0.0
      %5316 = vmatpush1.msra.mxu0 0.0
      %5317 = vmatprep.subr.mxu0 0.0
      %5318 = vmatpush1.msra.mxu0 0.0
      %5319 = vmatprep.subr.mxu0 0.0
      %5320 = vmatpush1.msra.mxu0 0.0
      %5321 = vmatprep.subr.mxu0 0.0
      %5322 = vmatpush1.msra.mxu0 0.0
      %5323 = vmatprep.subr.mxu0 0.0
      %5324 = vmatpush1.msra.mxu0 0.0
      %5325 = vmatprep.subr.mxu0 0.0
      %5326 = vmatpush1.msra.mxu0 0.0
      %5327 = vmatprep.mubr.f32.mxu0 0.0
      %5328 = vmatmul.mubr.f32.gmra.mrb[0].mxu0 %v5261
      %v5329 = vpop.f32.mrb[0].mxu0
      %v5330 = vadd.f32 0.0, %v5329
      %v5331 = vpop.f32.mrb[0].mxu0
      %5332 = vdwg.mxu0
      %v5333 = vadd.f32 %v4834, %v5330
      %v5334 = vld [vmem:[%s39] sm:$0x1]
      %v5336 = vlaneseq
      %v5337 = vshrl.u32 %v5336, 7
      %v5338 = vsub.s32 0, %v5337
      %v5339 = vrot.slane %v5334, %v5338
      %v5341 = vadd.f32 %v5333, %v5339
      %v5342 = vadd.f32 %v3329, %v5341
      %v5343 = vsel %vm1085, %v5342, 0.0
      %5344 = vadd.xlane.f32.xlu0 %v5343
      %v5345 = vpop.xlane.xlu0 %5344
      %v5346 = vmul.f32 %v5345, %v3303
      %v5347 = vsub.f32 %v5342, %v5346
      %v5348 = vmul.f32 %v5347, %v5347
      %v5349 = vsel %vm1085, %v5348, 0.0
      %5350 = vadd.xlane.f32.xlu0 %v5349
      %v5351 = vpop.xlane.xlu0 %5350
      %v5352 = vmul.f32 %v5351, %v3303
      %v5353 = vadd.f32 %v5352, 1e-05
      %v5354 = vrsqrt.pop %v5353
      %v5355 = vmul.f32 %v5347, %v5354
      %v5356 = vld [vmem:[%s53] sm:$0x1]
      %v5358 = vlaneseq
      %v5359 = vshrl.u32 %v5358, 7
      %v5360 = vsub.s32 0, %v5359
      %v5361 = vrot.slane %v5356, %v5360
      %v5363 = vmul.f32 %v5355, %v5361
      %v5364 = vld [vmem:[%s55] sm:$0x1]
      %v5366 = vlaneseq
      %v5367 = vshrl.u32 %v5366, 7
      %v5368 = vsub.s32 0, %v5367
      %v5369 = vrot.slane %v5364, %v5368
      %v5371 = vadd.f32 %v5363, %v5369
      %v5372 = vld [vmem:[%s41] sm:$0xff]
      %v5373 = vld [vmem:[%s41 + $0x8] sm:$0xff]
      %v5374 = vld [vmem:[%s41 + $0x10] sm:$0xff]
      %v5375 = vld [vmem:[%s41 + $0x18] sm:$0xff]
      %v5376 = vld [vmem:[%s43] sm:$0x1]
      %v5378 = vlaneseq
      %v5379 = vshrl.u32 %v5378, 7
      %v5380 = vsub.s32 0, %v5379
      %v5381 = vrot.slane %v5376, %v5380
      %v5384 = vsel %vm1085, %v5371, 0
      %5386 = vmatprep.subr.mxu0 0.0
      %5387 = vmatpush1.msra.mxu0 %v5372
      %5388 = vmatprep.subr.mxu0 0.0
      %5389 = vmatpush1.msra.mxu0 %v5373
      %5390 = vmatprep.subr.mxu0 0.0
      %5391 = vmatpush1.msra.mxu0 %v5374
      %5392 = vmatprep.subr.mxu0 0.0
      %5393 = vmatpush1.msra.mxu0 %v5375
      %5394 = vmatprep.subr.mxu0 0.0
      %5395 = vmatpush1.msra.mxu0 0.0
      %5396 = vmatprep.subr.mxu0 0.0
      %5397 = vmatpush1.msra.mxu0 0.0
      %5398 = vmatprep.subr.mxu0 0.0
      %5399 = vmatpush1.msra.mxu0 0.0
      %5400 = vmatprep.subr.mxu0 0.0
      %5401 = vmatpush1.msra.mxu0 0.0
      %5402 = vmatprep.subr.mxu0 0.0
      %5403 = vmatpush1.msra.mxu0 0.0
      %5404 = vmatprep.subr.mxu0 0.0
      %5405 = vmatpush1.msra.mxu0 0.0
      %5406 = vmatprep.subr.mxu0 0.0
      %5407 = vmatpush1.msra.mxu0 0.0
      %5408 = vmatprep.subr.mxu0 0.0
      %5409 = vmatpush1.msra.mxu0 0.0
      %5410 = vmatprep.subr.mxu0 0.0
      %5411 = vmatpush1.msra.mxu0 0.0
      %5412 = vmatprep.subr.mxu0 0.0
      %5413 = vmatpush1.msra.mxu0 0.0
      %5414 = vmatprep.subr.mxu0 0.0
      %5415 = vmatpush1.msra.mxu0 0.0
      %5416 = vmatprep.subr.mxu0 0.0
      %5417 = vmatpush1.msra.mxu0 0.0
      %5418 = vmatprep.subr.mxu0 0.0
      %5419 = vmatpush1.msra.mxu0 0.0
      %5420 = vmatprep.subr.mxu0 0.0
      %5421 = vmatpush1.msra.mxu0 0.0
      %5422 = vmatprep.subr.mxu0 0.0
      %5423 = vmatpush1.msra.mxu0 0.0
      %5424 = vmatprep.subr.mxu0 0.0
      %5425 = vmatpush1.msra.mxu0 0.0
      %5426 = vmatprep.subr.mxu0 0.0
      %5427 = vmatpush1.msra.mxu0 0.0
      %5428 = vmatprep.subr.mxu0 0.0
      %5429 = vmatpush1.msra.mxu0 0.0
      %5430 = vmatprep.subr.mxu0 0.0
      %5431 = vmatpush1.msra.mxu0 0.0
      %5432 = vmatprep.subr.mxu0 0.0
      %5433 = vmatpush1.msra.mxu0 0.0
      %5434 = vmatprep.subr.mxu0 0.0
      %5435 = vmatpush1.msra.mxu0 0.0
      %5436 = vmatprep.subr.mxu0 0.0
      %5437 = vmatpush1.msra.mxu0 0.0
      %5438 = vmatprep.subr.mxu0 0.0
      %5439 = vmatpush1.msra.mxu0 0.0
      %5440 = vmatprep.subr.mxu0 0.0
      %5441 = vmatpush1.msra.mxu0 0.0
      %5442 = vmatprep.subr.mxu0 0.0
      %5443 = vmatpush1.msra.mxu0 0.0
      %5444 = vmatprep.subr.mxu0 0.0
      %5445 = vmatpush1.msra.mxu0 0.0
      %5446 = vmatprep.subr.mxu0 0.0
      %5447 = vmatpush1.msra.mxu0 0.0
      %5448 = vmatprep.subr.mxu0 0.0
      %5449 = vmatpush1.msra.mxu0 0.0
      %5450 = vmatprep.mubr.f32.mxu0 0.0
      %5451 = vmatmul.mubr.f32.gmra.mrb[0].mxu0 %v5384
      %v5452 = vpop.f32.mrb[0].mxu0
      %v5453 = vadd.f32 %v5381, %v5452
      %v5454 = vpop.f32.mrb[0].mxu0
      %5455 = vdwg.mxu0
      %v5456 = vmax.f32 %v5453, 0.0
      %v5457 = vld [vmem:[%s45] sm:$0xff]
      %v5458 = vld [vmem:[%s45 + $0x8] sm:$0xff]
      %v5459 = vld [vmem:[%s45 + $0x10] sm:$0xff]
      %v5460 = vld [vmem:[%s45 + $0x18] sm:$0xff]
      %v5461 = vld [vmem:[%s45 + $0x20] sm:$0xff]
      %v5462 = vld [vmem:[%s45 + $0x28] sm:$0xff]
      %v5463 = vld [vmem:[%s45 + $0x30] sm:$0xff]
      %v5464 = vld [vmem:[%s45 + $0x38] sm:$0xff]
      %v5465 = vld [vmem:[%s47] sm:$0x1]
      %v5467 = vlaneseq
      %v5468 = vshrl.u32 %v5467, 7
      %v5469 = vsub.s32 0, %v5468
      %v5470 = vrot.slane %v5465, %v5469
      %vm5472 = vcmask 523264
      %v5474 = vsel %vm5472, %v5456, 0
      %5476 = vmatprep.subr.mxu0 0.0
      %5477 = vmatpush1.msra.mxu0 %v5457
      %5478 = vmatprep.subr.mxu0 0.0
      %5479 = vmatpush1.msra.mxu0 %v5458
      %5480 = vmatprep.subr.mxu0 0.0
      %5481 = vmatpush1.msra.mxu0 %v5459
      %5482 = vmatprep.subr.mxu0 0.0
      %5483 = vmatpush1.msra.mxu0 %v5460
      %5484 = vmatprep.subr.mxu0 0.0
      %5485 = vmatpush1.msra.mxu0 %v5461
      %5486 = vmatprep.subr.mxu0 0.0
      %5487 = vmatpush1.msra.mxu0 %v5462
      %5488 = vmatprep.subr.mxu0 0.0
      %5489 = vmatpush1.msra.mxu0 %v5463
      %5490 = vmatprep.subr.mxu0 0.0
      %5491 = vmatpush1.msra.mxu0 %v5464
      %5492 = vmatprep.subr.mxu0 0.0
      %5493 = vmatpush1.msra.mxu0 0.0
      %5494 = vmatprep.subr.mxu0 0.0
      %5495 = vmatpush1.msra.mxu0 0.0
      %5496 = vmatprep.subr.mxu0 0.0
      %5497 = vmatpush1.msra.mxu0 0.0
      %5498 = vmatprep.subr.mxu0 0.0
      %5499 = vmatpush1.msra.mxu0 0.0
      %5500 = vmatprep.subr.mxu0 0.0
      %5501 = vmatpush1.msra.mxu0 0.0
      %5502 = vmatprep.subr.mxu0 0.0
      %5503 = vmatpush1.msra.mxu0 0.0
      %5504 = vmatprep.subr.mxu0 0.0
      %5505 = vmatpush1.msra.mxu0 0.0
      %5506 = vmatprep.subr.mxu0 0.0
      %5507 = vmatpush1.msra.mxu0 0.0
      %5508 = vmatprep.subr.mxu0 0.0
      %5509 = vmatpush1.msra.mxu0 0.0
      %5510 = vmatprep.subr.mxu0 0.0
      %5511 = vmatpush1.msra.mxu0 0.0
      %5512 = vmatprep.subr.mxu0 0.0
      %5513 = vmatpush1.msra.mxu0 0.0
      %5514 = vmatprep.subr.mxu0 0.0
      %5515 = vmatpush1.msra.mxu0 0.0
      %5516 = vmatprep.subr.mxu0 0.0
      %5517 = vmatpush1.msra.mxu0 0.0
      %5518 = vmatprep.subr.mxu0 0.0
      %5519 = vmatpush1.msra.mxu0 0.0
      %5520 = vmatprep.subr.mxu0 0.0
      %5521 = vmatpush1.msra.mxu0 0.0
      %5522 = vmatprep.subr.mxu0 0.0
      %5523 = vmatpush1.msra.mxu0 0.0
      %5524 = vmatprep.subr.mxu0 0.0
      %5525 = vmatpush1.msra.mxu0 0.0
      %5526 = vmatprep.subr.mxu0 0.0
      %5527 = vmatpush1.msra.mxu0 0.0
      %5528 = vmatprep.subr.mxu0 0.0
      %5529 = vmatpush1.msra.mxu0 0.0
      %5530 = vmatprep.subr.mxu0 0.0
      %5531 = vmatpush1.msra.mxu0 0.0
      %5532 = vmatprep.subr.mxu0 0.0
      %5533 = vmatpush1.msra.mxu0 0.0
      %5534 = vmatprep.subr.mxu0 0.0
      %5535 = vmatpush1.msra.mxu0 0.0
      %5536 = vmatprep.subr.mxu0 0.0
      %5537 = vmatpush1.msra.mxu0 0.0
      %5538 = vmatprep.subr.mxu0 0.0
      %5539 = vmatpush1.msra.mxu0 0.0
      %5540 = vmatprep.mubr.f32.mxu0 0.0
      %5541 = vmatmul.mubr.f32.gmra.mrb[0].mxu0 %v5474
      %v5542 = vpop.f32.mrb[0].mxu0
      %v5543 = vadd.f32 %v5470, %v5542
      %v5544 = vpop.f32.mrb[0].mxu0
      %5545 = vdwg.mxu0
      %v5546 = vadd.f32 %v5371, %v5543
      %v5547 = vsel %vm1085, %v5546, 0.0
      %5548 = vadd.xlane.f32.xlu0 %v5547
      %v5549 = vpop.xlane.xlu0 %5548
      %v5550 = vmul.f32 %v5549, %v3303
      %v5551 = vsub.f32 %v5546, %v5550
      %v5552 = vmul.f32 %v5551, %v5551
      %v5553 = vsel %vm1085, %v5552, 0.0
      %5554 = vadd.xlane.f32.xlu0 %v5553
      %v5555 = vpop.xlane.xlu0 %5554
      %v5556 = vmul.f32 %v5555, %v3303
      %v5557 = vadd.f32 %v5556, 1e-05
      %v5558 = vrsqrt.pop %v5557
      %v5559 = vmul.f32 %v5551, %v5558
      %v5560 = vld [vmem:[%s57] sm:$0x1]
      %v5562 = vlaneseq
      %v5563 = vshrl.u32 %v5562, 7
      %v5564 = vsub.s32 0, %v5563
      %v5565 = vrot.slane %v5560, %v5564
      %v5567 = vmul.f32 %v5559, %v5565
      %v5568 = vld [vmem:[%s59] sm:$0x1]
      %v5570 = vlaneseq
      %v5571 = vshrl.u32 %v5570, 7
      %v5572 = vsub.s32 0, %v5571
      %v5573 = vrot.slane %v5568, %v5572
      %v5575 = vadd.f32 %v5567, %v5573
      %5576 = vst.msk [vmem:[%s982] sm:$0xff] %vm1085, %v5575
      %p5577 = scmp.lt.s32.totalorder %s72, 1
      %s5578 = scalar_select %p5577, %s72, 1
      %s5579 = smul.addr %s5578, 8
      %s5580 = scalar_lea.vmem %s61, %s5579
      // Predicated region
      $region141: #{point_transformer_forward.4} parent=139 // pred_check
        %p5581 = pneg %p740
      $region142: #{point_transformer_forward.4} parent=139 // pred_check_branch
        %5583 = sbr.rel (%p5581) target = $region144
      $region143: #{point_transformer_forward.4} parent=139 // pred_region
        _
      $region144: #{point_transformer_forward.4} parent=139 // pred_fallthru
        _
    $region140: #{point_transformer_forward.4} parent=5 // pred_fallthru
      _
    %p5584 = scmp.le.s32.totalorder 2, %s67
    // Predicated region
    $region145: #{point_transformer_forward.4} parent=5 // pred_check
      %p5585 = pneg %p5584
    $region146: #{point_transformer_forward.4} parent=5 // pred_check_branch
      %5587 = sbr.rel (%p5585) target = $region148
    $region147: #{point_transformer_forward.4} parent=5 // pred_region
      %s5588 = ssub.s32 %s67, 2
      // Predicated region
      $region149: #{point_transformer_forward.4} parent=147 // pred_check
        %p5589 = pneg %p746
      $region150: #{point_transformer_forward.4} parent=147 // pred_check_branch
        %5591 = sbr.rel (%p5589) target = $region152
      $region151: #{point_transformer_forward.4} parent=147 // pred_region
        %p5592 = scmp.lt.s32.totalorder %s73, 1
        %s5593 = scalar_select %p5592, %s73, 1
        %s5594 = smul.addr %s5593, 8
        %s5595 = scalar_lea.vmem %s61, %s5594
      $region152: #{point_transformer_forward.4} parent=147 // pred_fallthru
        _
    $region148: #{point_transformer_forward.4} parent=5 // pred_fallthru
      _
  $region6: #{point_transformer_forward.4} parent=0 // loop_footer
    %s71 = sadd.s32 1, %s67
  $region7: #{point_transformer_forward.4} parent=0 // loop_footer_branch
    %66 = sbr.rel target = $region3
  $region8: #{point_transformer_forward.4} parent=0 // loop_exit
    _

</llo_original>
